<compile_context>
chip_gen: v7x
topology: tpu7x:2x2x1
jax: 0.10.0
libtpu: 0.0.40
codegen_flags: <defaults>
</compile_context>

<pallas_src>
import math
import jax
import jax.numpy as jnp
from jax import lax
from jax.experimental import pallas as pl
from jax.experimental.pallas import tpu as pltpu

# ----------------------------- config (small) -------------------------------
B = 2             # batch
S = 8             # sequence length
HID = 32          # bert hidden_size
NUM_HEADS = 4
DH = HID // NUM_HEADS
FF = 64           # bert intermediate size
N_BERT_LAYERS = 2
VOCAB = 100
TYPE_VOCAB = 2
MAX_POS = 32
RNN_HIDDEN = 16   # config.rnn_hidden
N_LSTM_LAYERS = 2 # config.num_layers
NUM_CLASSES = 3
LN_EPS = 1e-12
ATT_SCALE = 1.0 / math.sqrt(DH)


# --------------------------- in-kernel helpers -------------------------------
def _sigmoid(x):
    return 1.0 / (1.0 + jnp.exp(-x))


def _gelu(x):
    # TODO(synk): original BERT uses exact erf-GELU; tanh approximation used here.
    return 0.5 * x * (1.0 + jnp.tanh(0.7978845608028654 *
                                     (x + 0.044715 * x * x * x)))


def _ln(x, g, b, eps=LN_EPS):
    mean = jnp.mean(x, axis=-1, keepdims=True)
    var = jnp.mean((x - mean) ** 2, axis=-1, keepdims=True)
    return (x - mean) * lax.rsqrt(var + eps) * g + b


# ------------------- fused BERT encoder layer (1 call/layer) -----------------
def _make_bert_layer_kernel(apply_input_ln):
    def kernel(x_ref, m_ref, wqkv_ref, bqkv_ref, wo_ref, bo_ref,
               ln0g_ref, ln0b_ref, ln1g_ref, ln1b_ref,
               wi_ref, bi_ref, wo2_ref, bo2_ref, ln2g_ref, ln2b_ref, o_ref):
        x = x_ref[...]                                     # (S, HID)
        if apply_input_ln:                                 # embedding LayerNorm fused here
            x = _ln(x, ln0g_ref[...], ln0b_ref[...])
        m = m_ref[...]                                     # (1, S) additive mask

        # fused QKV projection: one matmul, 96-lane output
        qkv = jnp.dot(x, wqkv_ref[...],
                      preferred_element_type=jnp.float32) + bqkv_ref[...]

        # all heads inside one grid step; output projection folded per-head
        acc = jnp.zeros((S, HID), jnp.float32)
        for h in range(NUM_HEADS):
            c0, c1 = h * DH, (h + 1) * DH
            qh = qkv[:, c0:c1]
            kh = qkv[:, HID + c0:HID + c1]
            vh = qkv[:, 2 * HID + c0:2 * HID + c1]
            s = jnp.dot(qh, kh.T, preferred_element_type=jnp.float32) * ATT_SCALE
            s = s + m
            s = s - jnp.max(s, axis=-1, keepdims=True)
            p = jnp.exp(s)
            p = p / jnp.sum(p, axis=-1, keepdims=True)
            ctx = jnp.dot(p, vh, preferred_element_type=jnp.float32)      # (S, DH)
            acc = acc + jnp.dot(ctx, wo_ref[c0:c1, :],
                                preferred_element_type=jnp.float32)       # (S, HID)

        attn_out = acc + bo_ref[...]
        h1 = _ln(attn_out + x, ln1g_ref[...], ln1b_ref[...])

        inter = _gelu(jnp.dot(h1, wi_ref[...],
                              preferred_element_type=jnp.float32) + bi_ref[...])
        ffo = jnp.dot(inter, wo2_ref[...],
                      preferred_element_type=jnp.float32) + bo2_ref[...]
        o_ref[...] = _ln(ffo + h1, ln2g_ref[...], ln2b_ref[...])
    return kernel


def bert_layer(x, mask_add, lp, ln0_g, ln0_b, apply_input_ln):
    """x: (B, S, HID); mask_add: (B, 1, S) additive mask. One pallas_call."""
    rep = lambda shape: pl.BlockSpec(shape, lambda b: (0,) * len(shape))
    return pl.pallas_call(
        _make_bert_layer_kernel(apply_input_ln),
        out_shape=jax.ShapeDtypeStruct((B, S, HID), jnp.float32),
        grid=(B,),
        in_specs=[
            pl.BlockSpec((None, S, HID), lambda b: (b, 0, 0)),   # x (per batch)
            pl.BlockSpec((None, 1, S), lambda b: (b, 0, 0)),     # additive mask
            rep((HID, 3 * HID)), rep((1, 3 * HID)),              # wqkv, bqkv
            rep((HID, HID)), rep((1, HID)),                      # wo, bo
            rep((1, HID)), rep((1, HID)),                        # emb LN g/b
            rep((1, HID)), rep((1, HID)),                        # ln1 g/b
            rep((HID, FF)), rep((1, FF)),                        # wi, bi
            rep((FF, HID)), rep((1, HID)),                       # wo2, bo2
            rep((1, HID)), rep((1, HID)),                        # ln2 g/b
        ],
        out_specs=pl.BlockSpec((None, S, HID), lambda b: (b, 0, 0)),
        compiler_params=pltpu.CompilerParams(dimension_semantics=("parallel",)),
    )(x, mask_add, lp["wqkv"], lp["bqkv"], lp["wo"], lp["bo"],
      ln0_g, ln0_b, lp["ln1_g"], lp["ln1_b"],
      lp["wi"], lp["bi"], lp["wo2"], lp["bo2"], lp["ln2_g"], lp["ln2_b"])


# --------- fused bidirectional LSTM layer (1 call/layer, grid over dir) -------
def _lstm_bidir_kernel(x_ref, wih_ref, bih_ref, whh_ref, o_ref, gx_sc):
    """One grid step = one direction (0=forward, 1=backward).
    Input projection done once into VMEM; time loop fully unrolled in-kernel."""
    d = pl.program_id(0)
    H = RNN_HIDDEN

    # gx[b*S + t, :] = x_t @ W_ih^T + (b_ih + b_hh), batch-major rows
    gx_sc[...] = jnp.dot(x_ref[...], wih_ref[...],
                         preferred_element_type=jnp.float32) + bih_ref[...]
    whh = whh_ref[...]                                   # (H, 4H)

    def step(t, carry):
        hs, cs = carry                                   # tuples of (1, H) per batch
        # time index: t for forward, S-1-t for backward (pure int arithmetic)
        t_idx = t * (1 - 2 * d) + d * (S - 1)
        new_hs, new_cs = [], []
        for b in range(B):
            g_in = gx_sc[pl.ds(b * S + t_idx, 1), :]     # (1, 4H)
            gates = g_in + jnp.dot(hs[b], whh, preferred_element_type=jnp.float32)
            sg = _sigmoid(gates)                         # full-slab EUP work
            th = jnp.tanh(gates)
            i_g = sg[:, 0:H]
            f_g = sg[:, H:2 * H]
            g_g = th[:, 2 * H:3 * H]
            o_g = sg[:, 3 * H:4 * H]
            c_new = f_g * cs[b] + i_g * g_g
            h_new = o_g * jnp.tanh(c_new)
            o_ref[pl.ds(b * S + t_idx, 1), :] = h_new
            new_hs.append(h_new)
            new_cs.append(c_new)
        return tuple(new_hs), tuple(new_cs)

    init = (tuple(jnp.zeros((1, H), jnp.float32) for _ in range(B)),
            tuple(jnp.zeros((1, H), jnp.float32) for _ in range(B)))
    lax.fori_loop(0, S, step, init, unroll=True)


def bilstm_layer(x2d, lp):
    """x2d: (B*S, IN) batch-major.  Returns (B*S, 2*RNN_HIDDEN) = [fwd | bwd]."""
    IN = x2d.shape[1]
    H = RNN_HIDDEN
    dirs = pl.pallas_call(
        _lstm_bidir_kernel,
        out_shape=jax.ShapeDtypeStruct((2, B * S, H), jnp.float32),
        grid=(2,),                                        # direction axis (parallel)
        in_specs=[
            pl.BlockSpec((B * S, IN), lambda d: (0, 0)),          # shared input
            pl.BlockSpec((None, IN, 4 * H), lambda d: (d, 0, 0)), # W_ih^T per dir
            pl.BlockSpec((None, 1, 4 * H), lambda d: (d, 0, 0)),  # b_ih + b_hh per dir
            pl.BlockSpec((None, H, 4 * H), lambda d: (d, 0, 0)),  # W_hh^T per dir
        ],
        out_specs=pl.BlockSpec((None, B * S, H), lambda d: (d, 0, 0)),
        scratch_shapes=[pltpu.VMEM((B * S, 4 * H), jnp.float32)],
        compiler_params=pltpu.CompilerParams(dimension_semantics=("parallel",)),
    )(x2d, lp["wih"], lp["bih"], lp["whh"])
    # concat forward/backward hidden along feature axis (cheap glue)
    return jnp.concatenate([dirs[0], dirs[1]], axis=-1)   # (B*S, 2H)


# ------------------------------ fc + softmax ---------------------------------
def fc_softmax(x, w, b):
    """softmax(x @ w + b, axis=1) for 2-D x."""
    M, K = x.shape
    N = w.shape[1]

    def kernel(x_ref, w_ref, b_ref, o_ref):
        y = jnp.dot(x_ref[...], w_ref[...],
                    preferred_element_type=jnp.float32) + b_ref[...]
        y = y - jnp.max(y, axis=-1, keepdims=True)
        e = jnp.exp(y)
        o_ref[...] = e / jnp.sum(e, axis=-1, keepdims=True)

    return pl.pallas_call(
        kernel,
        out_shape=jax.ShapeDtypeStruct((M, N), jnp.float32),
        grid=(1,),
        in_specs=[pl.BlockSpec((M, K), lambda i: (0, 0)),
                  pl.BlockSpec((K, N), lambda i: (0, 0)),
                  pl.BlockSpec((1, N), lambda i: (0, 0))],
        out_specs=pl.BlockSpec((M, N), lambda i: (0, 0)),
    )(x, w, b)


# ------------------------------ model glue -----------------------------------
def model_forward(params, context, types, mask):
    p = params["bert"]
    # embedding gather (glue); LayerNorm is fused into the first BERT-layer kernel
    emb = (p["word_emb"][context]
           + p["pos_emb"][jnp.arange(S)][None, :, :]
           + p["type_emb"][types])                                   # (B, S, HID)
    # TODO(synk): embedding/attention/hidden/LSTM dropouts are identity (eval mode).
    mask_add = ((1.0 - mask.astype(jnp.float32)) * -10000.0).reshape(B, 1, S)

    x = emb
    for li, lp in enumerate(p["layers"]):
        x = bert_layer(x, mask_add, lp, p["emb_ln_g"], p["emb_ln_b"],
                       apply_input_ln=(li == 0))

    out = x.reshape(B * S, HID)
    for lp in params["lstm"]:
        out = bilstm_layer(out, lp)

    last = out.reshape(B, S, 2 * RNN_HIDDEN)[:, -1, :]               # (B, 2H)
    return fc_softmax(last, params["fc_w"], params["fc_b"])          # softmax(dim=1)


# --------------------------- deterministic params ----------------------------
def init_params(key):
    keys = iter(jax.random.split(key, 256))

    def nrm(shape, scale=0.02):
        return (scale * jax.random.normal(next(keys), shape)).astype(jnp.float32)

    bert = {
        "word_emb": nrm((VOCAB, HID)),
        "pos_emb": nrm((MAX_POS, HID)),
        "type_emb": nrm((TYPE_VOCAB, HID)),
        "emb_ln_g": jnp.ones((1, HID), jnp.float32),
        "emb_ln_b": jnp.zeros((1, HID), jnp.float32),
        "layers": [],
    }
    for _ in range(N_BERT_LAYERS):
        wq, wk, wv = nrm((HID, HID)), nrm((HID, HID)), nrm((HID, HID))
        bq, bk, bv = nrm((HID,)), nrm((HID,)), nrm((HID,))
        bert["layers"].append({
            "wqkv": jnp.concatenate([wq, wk, wv], axis=1),              # (HID, 3*HID)
            "bqkv": jnp.concatenate([bq, bk, bv]).reshape(1, 3 * HID),
            "wo": nrm((HID, HID)), "bo": nrm((HID,)).reshape(1, HID),
            "ln1_g": jnp.ones((1, HID), jnp.float32),
            "ln1_b": jnp.zeros((1, HID), jnp.float32),
            "wi": nrm((HID, FF)), "bi": nrm((FF,)).reshape(1, FF),
            "wo2": nrm((FF, HID)), "bo2": nrm((HID,)).reshape(1, HID),
            "ln2_g": jnp.ones((1, HID), jnp.float32),
            "ln2_b": jnp.zeros((1, HID), jnp.float32),
        })

    lstm = []
    in_size = HID
    for _ in range(N_LSTM_LAYERS):
        w_ih_f = nrm((4 * RNN_HIDDEN, in_size), 0.1)
        w_hh_f = nrm((4 * RNN_HIDDEN, RNN_HIDDEN), 0.1)
        b_ih_f = nrm((4 * RNN_HIDDEN,), 0.1)
        b_hh_f = nrm((4 * RNN_HIDDEN,), 0.1)
        w_ih_b = nrm((4 * RNN_HIDDEN, in_size), 0.1)
        w_hh_b = nrm((4 * RNN_HIDDEN, RNN_HIDDEN), 0.1)
        b_ih_b = nrm((4 * RNN_HIDDEN,), 0.1)
        b_hh_b = nrm((4 * RNN_HIDDEN,), 0.1)
        lstm.append({
            # stacked [forward, backward], transposed for right-multiplication;
            # PyTorch gate order i, f, g, o; b_ih and b_hh pre-summed.
            "wih": jnp.stack([w_ih_f.T, w_ih_b.T]),                     # (2, IN, 4H)
            "bih": jnp.stack([(b_ih_f + b_hh_f).reshape(1, -1),
                              (b_ih_b + b_hh_b).reshape(1, -1)]),       # (2, 1, 4H)
            "whh": jnp.stack([w_hh_f.T, w_hh_b.T]),                     # (2, H, 4H)
        })
        in_size = 2 * RNN_HIDDEN

    return {
        "bert": bert,
        "lstm": lstm,
        "fc_w": nrm((2 * RNN_HIDDEN, NUM_CLASSES), 0.1),
        "fc_b": jnp.zeros((1, NUM_CLASSES), jnp.float32),
    }


# ---------------------------------- main -------------------------------------
if __name__ == "__main__":
    key = jax.random.PRNGKey(0)
    k_par, k_ctx, k_typ = jax.random.split(key, 3)

    params = init_params(k_par)

    context = jax.random.randint(k_ctx, (B, S), 0, VOCAB, dtype=jnp.int32)
    types = jax.random.randint(k_typ, (B, S), 0, TYPE_VOCAB, dtype=jnp.int32)
    mask = jnp.ones((B, S), jnp.int32).at[:, -1].set(0)   # pad last position

    fwd = jax.jit(model_forward)
    out = jax.block_until_ready(fwd(params, context, types, mask))

    assert out.shape == (B, NUM_CLASSES)
    assert bool(jnp.all(jnp.isfinite(out)))
    # rows of a softmax sum to 1
    assert bool(jnp.allclose(jnp.sum(out, axis=1), 1.0, atol=1e-5))
    print("KERNEL_OK")
</pallas_src>

<mosaic_0001>
module attributes {stable_mosaic.version = 11 : i64} {
  func.func @kernel(%arg0: i32, %arg1: memref<1x8x32xf32, #tpu.memory_space<vmem>>, %arg2: memref<1x1x8xf32, #tpu.memory_space<vmem>>, %arg3: memref<32x96xf32, #tpu.memory_space<vmem>>, %arg4: memref<1x96xf32, #tpu.memory_space<vmem>>, %arg5: memref<32x32xf32, #tpu.memory_space<vmem>>, %arg6: memref<1x32xf32, #tpu.memory_space<vmem>>, %arg7: memref<1x32xf32, #tpu.memory_space<vmem>>, %arg8: memref<1x32xf32, #tpu.memory_space<vmem>>, %arg9: memref<1x32xf32, #tpu.memory_space<vmem>>, %arg10: memref<1x32xf32, #tpu.memory_space<vmem>>, %arg11: memref<32x64xf32, #tpu.memory_space<vmem>>, %arg12: memref<1x64xf32, #tpu.memory_space<vmem>>, %arg13: memref<64x32xf32, #tpu.memory_space<vmem>>, %arg14: memref<1x32xf32, #tpu.memory_space<vmem>>, %arg15: memref<1x32xf32, #tpu.memory_space<vmem>>, %arg16: memref<1x32xf32, #tpu.memory_space<vmem>>, %arg17: memref<1x8x32xf32, #tpu.memory_space<vmem>>) attributes {dimension_semantics = [#tpu.dimension_semantics<parallel>], iteration_bounds = array<i64: 2>, scalar_prefetch = 0 : i64, scratch_operands = 0 : i64, tpu.core_type = #tpu.core_type<tc>, window_params = [{transform_indices = @transform_0, window_bounds = array<i64: 1, 8, 32>}, {transform_indices = @transform_1, window_bounds = array<i64: 1, 1, 8>}, {pipeline_mode = #tpu.pipeline_mode<synchronous>, transform_indices = @transform_2, window_bounds = array<i64: 32, 96>}, {pipeline_mode = #tpu.pipeline_mode<synchronous>, transform_indices = @transform_3, window_bounds = array<i64: 1, 96>}, {pipeline_mode = #tpu.pipeline_mode<synchronous>, transform_indices = @transform_4, window_bounds = array<i64: 32, 32>}, {pipeline_mode = #tpu.pipeline_mode<synchronous>, transform_indices = @transform_5, window_bounds = array<i64: 1, 32>}, {pipeline_mode = #tpu.pipeline_mode<synchronous>, transform_indices = @transform_6, window_bounds = array<i64: 1, 32>}, {pipeline_mode = #tpu.pipeline_mode<synchronous>, transform_indices = @transform_7, window_bounds = array<i64: 1, 32>}, {pipeline_mode = #tpu.pipeline_mode<synchronous>, transform_indices = @transform_8, window_bounds = array<i64: 1, 32>}, {pipeline_mode = #tpu.pipeline_mode<synchronous>, transform_indices = @transform_9, window_bounds = array<i64: 1, 32>}, {pipeline_mode = #tpu.pipeline_mode<synchronous>, transform_indices = @transform_10, window_bounds = array<i64: 32, 64>}, {pipeline_mode = #tpu.pipeline_mode<synchronous>, transform_indices = @transform_11, window_bounds = array<i64: 1, 64>}, {pipeline_mode = #tpu.pipeline_mode<synchronous>, transform_indices = @transform_12, window_bounds = array<i64: 64, 32>}, {pipeline_mode = #tpu.pipeline_mode<synchronous>, transform_indices = @transform_13, window_bounds = array<i64: 1, 32>}, {pipeline_mode = #tpu.pipeline_mode<synchronous>, transform_indices = @transform_14, window_bounds = array<i64: 1, 32>}, {pipeline_mode = #tpu.pipeline_mode<synchronous>, transform_indices = @transform_15, window_bounds = array<i64: 1, 32>}, {transform_indices = @transform_16, window_bounds = array<i64: 1, 8, 32>}]} {
    %c0 = arith.constant 0 : index
    %c0_0 = arith.constant 0 : index
    %c0_1 = arith.constant 0 : index
    %0 = vector.load %arg1[%c0, %c0_0, %c0_1] : memref<1x8x32xf32, #tpu.memory_space<vmem>>, vector<1x8x32xf32>
    %1 = vector.shape_cast %0 : vector<1x8x32xf32> to vector<8x32xf32>
    %c0_2 = arith.constant 0 : index
    %c0_3 = arith.constant 0 : index
    %2 = vector.load %arg7[%c0_2, %c0_3] : memref<1x32xf32, #tpu.memory_space<vmem>>, vector<1x32xf32>
    %c0_4 = arith.constant 0 : index
    %c0_5 = arith.constant 0 : index
    %3 = vector.load %arg8[%c0_4, %c0_5] : memref<1x32xf32, #tpu.memory_space<vmem>>, vector<1x32xf32>
    %cst = arith.constant dense<0.000000e+00> : vector<8xf32>
    %4 = vector.multi_reduction <add>, %1, %cst [1] : vector<8x32xf32> to vector<8xf32>
    %5 = vector.shape_cast %4 : vector<8xf32> to vector<8x1xf32>
    %cst_6 = arith.constant 3.200000e+01 : f32
    %6 = vector.broadcast %cst_6 : f32 to vector<8x1xf32>
    %7 = arith.divf %5, %6 : vector<8x1xf32>
    %8 = vector.broadcast %7 : vector<8x1xf32> to vector<8x32xf32>
    %9 = arith.subf %1, %8 : vector<8x32xf32>
    %10 = arith.mulf %9, %9 : vector<8x32xf32>
    %cst_7 = arith.constant dense<0.000000e+00> : vector<8xf32>
    %11 = vector.multi_reduction <add>, %10, %cst_7 [1] : vector<8x32xf32> to vector<8xf32>
    %12 = vector.shape_cast %11 : vector<8xf32> to vector<8x1xf32>
    %cst_8 = arith.constant 3.200000e+01 : f32
    %13 = vector.broadcast %cst_8 : f32 to vector<8x1xf32>
    %14 = arith.divf %12, %13 : vector<8x1xf32>
    %15 = vector.broadcast %7 : vector<8x1xf32> to vector<8x32xf32>
    %16 = arith.subf %1, %15 : vector<8x32xf32>
    %cst_9 = arith.constant 9.99999996E-13 : f32
    %17 = vector.broadcast %cst_9 : f32 to vector<8x1xf32>
    %18 = arith.addf %14, %17 : vector<8x1xf32>
    %19 = math.rsqrt %18 : vector<8x1xf32>
    %20 = vector.broadcast %19 : vector<8x1xf32> to vector<8x32xf32>
    %21 = arith.mulf %16, %20 : vector<8x32xf32>
    %22 = vector.broadcast %2 : vector<1x32xf32> to vector<8x32xf32>
    %23 = arith.mulf %21, %22 : vector<8x32xf32>
    %24 = vector.broadcast %3 : vector<1x32xf32> to vector<8x32xf32>
    %25 = arith.addf %23, %24 : vector<8x32xf32>
    %c0_10 = arith.constant 0 : index
    %c0_11 = arith.constant 0 : index
    %c0_12 = arith.constant 0 : index
    %26 = vector.load %arg2[%c0_10, %c0_11, %c0_12] : memref<1x1x8xf32, #tpu.memory_space<vmem>>, vector<1x1x8xf32>
    %27 = vector.shape_cast %26 : vector<1x1x8xf32> to vector<1x8xf32>
    %c0_13 = arith.constant 0 : index
    %c0_14 = arith.constant 0 : index
    %28 = vector.load %arg3[%c0_13, %c0_14] : memref<32x96xf32, #tpu.memory_space<vmem>>, vector<32x96xf32>
    %cst_15 = arith.constant dense<0.000000e+00> : vector<8x96xf32>
    %29 = tpu.matmul %25, %28, %cst_15 {dimension_numbers = #tpu.dot_dimension_numbers<[1], [0], [0], [1], [0, 0, 1, 1], [], []>} : vector<8x32xf32>, vector<32x96xf32>, vector<8x96xf32> -> vector<8x96xf32>
    %c0_16 = arith.constant 0 : index
    %c0_17 = arith.constant 0 : index
    %30 = vector.load %arg4[%c0_16, %c0_17] : memref<1x96xf32, #tpu.memory_space<vmem>>, vector<1x96xf32>
    %31 = vector.broadcast %30 : vector<1x96xf32> to vector<8x96xf32>
    %32 = arith.addf %29, %31 : vector<8x96xf32>
    %cst_18 = arith.constant 0.000000e+00 : f32
    %33 = vector.broadcast %cst_18 : f32 to vector<8x32xf32>
    %34 = vector.extract_strided_slice %32 {offsets = [0, 0], sizes = [8, 8], strides = [1, 1]} : vector<8x96xf32> to vector<8x8xf32>
    %35 = vector.extract_strided_slice %32 {offsets = [0, 32], sizes = [8, 8], strides = [1, 1]} : vector<8x96xf32> to vector<8x8xf32>
    %36 = vector.extract_strided_slice %32 {offsets = [0, 64], sizes = [8, 8], strides = [1, 1]} : vector<8x96xf32> to vector<8x8xf32>
    %37 = tpu.transpose %35, [1, 0] : vector<8x8xf32> -> vector<8x8xf32>
    %cst_19 = arith.constant dense<0.000000e+00> : vector<8x8xf32>
    %38 = tpu.matmul %34, %37, %cst_19 {dimension_numbers = #tpu.dot_dimension_numbers<[1], [0], [0], [1], [0, 0, 1, 1], [], []>} : vector<8x8xf32>, vector<8x8xf32>, vector<8x8xf32> -> vector<8x8xf32>
    %cst_20 = arith.constant 0.353553385 : f32
    %39 = vector.broadcast %cst_20 : f32 to vector<8x8xf32>
    %40 = arith.mulf %38, %39 : vector<8x8xf32>
    %41 = vector.broadcast %27 : vector<1x8xf32> to vector<8x8xf32>
    %42 = arith.addf %40, %41 : vector<8x8xf32>
    %cst_21 = arith.constant dense<0xFF800000> : vector<8xf32>
    %43 = vector.multi_reduction <maximumf>, %42, %cst_21 [1] : vector<8x8xf32> to vector<8xf32>
    %44 = vector.shape_cast %43 : vector<8xf32> to vector<8x1xf32>
    %45 = vector.broadcast %44 : vector<8x1xf32> to vector<8x8xf32>
    %46 = arith.subf %42, %45 : vector<8x8xf32>
    %47 = math.exp %46 : vector<8x8xf32>
    %cst_22 = arith.constant dense<0.000000e+00> : vector<8xf32>
    %48 = vector.multi_reduction <add>, %47, %cst_22 [1] : vector<8x8xf32> to vector<8xf32>
    %49 = vector.shape_cast %48 : vector<8xf32> to vector<8x1xf32>
    %50 = vector.broadcast %49 : vector<8x1xf32> to vector<8x8xf32>
    %51 = arith.divf %47, %50 : vector<8x8xf32>
    %cst_23 = arith.constant dense<0.000000e+00> : vector<8x8xf32>
    %52 = tpu.matmul %51, %36, %cst_23 {dimension_numbers = #tpu.dot_dimension_numbers<[1], [0], [0], [1], [0, 0, 1, 1], [], []>} : vector<8x8xf32>, vector<8x8xf32>, vector<8x8xf32> -> vector<8x8xf32>
    %c0_24 = arith.constant 0 : index
    %c0_25 = arith.constant 0 : index
    %53 = vector.load %arg5[%c0_24, %c0_25] : memref<32x32xf32, #tpu.memory_space<vmem>>, vector<8x32xf32>
    %cst_26 = arith.constant dense<0.000000e+00> : vector<8x32xf32>
    %54 = tpu.matmul %52, %53, %cst_26 {dimension_numbers = #tpu.dot_dimension_numbers<[1], [0], [0], [1], [0, 0, 1, 1], [], []>} : vector<8x8xf32>, vector<8x32xf32>, vector<8x32xf32> -> vector<8x32xf32>
    %55 = arith.addf %33, %54 : vector<8x32xf32>
    %56 = vector.extract_strided_slice %32 {offsets = [0, 8], sizes = [8, 8], strides = [1, 1]} : vector<8x96xf32> to vector<8x8xf32>
    %57 = vector.extract_strided_slice %32 {offsets = [0, 40], sizes = [8, 8], strides = [1, 1]} : vector<8x96xf32> to vector<8x8xf32>
    %58 = vector.extract_strided_slice %32 {offsets = [0, 72], sizes = [8, 8], strides = [1, 1]} : vector<8x96xf32> to vector<8x8xf32>
    %59 = tpu.transpose %57, [1, 0] : vector<8x8xf32> -> vector<8x8xf32>
    %cst_27 = arith.constant dense<0.000000e+00> : vector<8x8xf32>
    %60 = tpu.matmul %56, %59, %cst_27 {dimension_numbers = #tpu.dot_dimension_numbers<[1], [0], [0], [1], [0, 0, 1, 1], [], []>} : vector<8x8xf32>, vector<8x8xf32>, vector<8x8xf32> -> vector<8x8xf32>
    %cst_28 = arith.constant 0.353553385 : f32
    %61 = vector.broadcast %cst_28 : f32 to vector<8x8xf32>
    %62 = arith.mulf %60, %61 : vector<8x8xf32>
    %63 = vector.broadcast %27 : vector<1x8xf32> to vector<8x8xf32>
    %64 = arith.addf %62, %63 : vector<8x8xf32>
    %cst_29 = arith.constant dense<0xFF800000> : vector<8xf32>
    %65 = vector.multi_reduction <maximumf>, %64, %cst_29 [1] : vector<8x8xf32> to vector<8xf32>
    %66 = vector.shape_cast %65 : vector<8xf32> to vector<8x1xf32>
    %67 = vector.broadcast %66 : vector<8x1xf32> to vector<8x8xf32>
    %68 = arith.subf %64, %67 : vector<8x8xf32>
    %69 = math.exp %68 : vector<8x8xf32>
    %cst_30 = arith.constant dense<0.000000e+00> : vector<8xf32>
    %70 = vector.multi_reduction <add>, %69, %cst_30 [1] : vector<8x8xf32> to vector<8xf32>
    %71 = vector.shape_cast %70 : vector<8xf32> to vector<8x1xf32>
    %72 = vector.broadcast %71 : vector<8x1xf32> to vector<8x8xf32>
    %73 = arith.divf %69, %72 : vector<8x8xf32>
    %cst_31 = arith.constant dense<0.000000e+00> : vector<8x8xf32>
    %74 = tpu.matmul %73, %58, %cst_31 {dimension_numbers = #tpu.dot_dimension_numbers<[1], [0], [0], [1], [0, 0, 1, 1], [], []>} : vector<8x8xf32>, vector<8x8xf32>, vector<8x8xf32> -> vector<8x8xf32>
    %c8 = arith.constant 8 : index
    %c0_32 = arith.constant 0 : index
    %75 = vector.load %arg5[%c8, %c0_32] : memref<32x32xf32, #tpu.memory_space<vmem>>, vector<8x32xf32>
    %cst_33 = arith.constant dense<0.000000e+00> : vector<8x32xf32>
    %76 = tpu.matmul %74, %75, %cst_33 {dimension_numbers = #tpu.dot_dimension_numbers<[1], [0], [0], [1], [0, 0, 1, 1], [], []>} : vector<8x8xf32>, vector<8x32xf32>, vector<8x32xf32> -> vector<8x32xf32>
    %77 = arith.addf %55, %76 : vector<8x32xf32>
    %78 = vector.extract_strided_slice %32 {offsets = [0, 16], sizes = [8, 8], strides = [1, 1]} : vector<8x96xf32> to vector<8x8xf32>
    %79 = vector.extract_strided_slice %32 {offsets = [0, 48], sizes = [8, 8], strides = [1, 1]} : vector<8x96xf32> to vector<8x8xf32>
    %80 = vector.extract_strided_slice %32 {offsets = [0, 80], sizes = [8, 8], strides = [1, 1]} : vector<8x96xf32> to vector<8x8xf32>
    %81 = tpu.transpose %79, [1, 0] : vector<8x8xf32> -> vector<8x8xf32>
    %cst_34 = arith.constant dense<0.000000e+00> : vector<8x8xf32>
    %82 = tpu.matmul %78, %81, %cst_34 {dimension_numbers = #tpu.dot_dimension_numbers<[1], [0], [0], [1], [0, 0, 1, 1], [], []>} : vector<8x8xf32>, vector<8x8xf32>, vector<8x8xf32> -> vector<8x8xf32>
    %cst_35 = arith.constant 0.353553385 : f32
    %83 = vector.broadcast %cst_35 : f32 to vector<8x8xf32>
    %84 = arith.mulf %82, %83 : vector<8x8xf32>
    %85 = vector.broadcast %27 : vector<1x8xf32> to vector<8x8xf32>
    %86 = arith.addf %84, %85 : vector<8x8xf32>
    %cst_36 = arith.constant dense<0xFF800000> : vector<8xf32>
    %87 = vector.multi_reduction <maximumf>, %86, %cst_36 [1] : vector<8x8xf32> to vector<8xf32>
    %88 = vector.shape_cast %87 : vector<8xf32> to vector<8x1xf32>
    %89 = vector.broadcast %88 : vector<8x1xf32> to vector<8x8xf32>
    %90 = arith.subf %86, %89 : vector<8x8xf32>
    %91 = math.exp %90 : vector<8x8xf32>
    %cst_37 = arith.constant dense<0.000000e+00> : vector<8xf32>
    %92 = vector.multi_reduction <add>, %91, %cst_37 [1] : vector<8x8xf32> to vector<8xf32>
    %93 = vector.shape_cast %92 : vector<8xf32> to vector<8x1xf32>
    %94 = vector.broadcast %93 : vector<8x1xf32> to vector<8x8xf32>
    %95 = arith.divf %91, %94 : vector<8x8xf32>
    %cst_38 = arith.constant dense<0.000000e+00> : vector<8x8xf32>
    %96 = tpu.matmul %95, %80, %cst_38 {dimension_numbers = #tpu.dot_dimension_numbers<[1], [0], [0], [1], [0, 0, 1, 1], [], []>} : vector<8x8xf32>, vector<8x8xf32>, vector<8x8xf32> -> vector<8x8xf32>
    %c16 = arith.constant 16 : index
    %c0_39 = arith.constant 0 : index
    %97 = vector.load %arg5[%c16, %c0_39] : memref<32x32xf32, #tpu.memory_space<vmem>>, vector<8x32xf32>
    %cst_40 = arith.constant dense<0.000000e+00> : vector<8x32xf32>
    %98 = tpu.matmul %96, %97, %cst_40 {dimension_numbers = #tpu.dot_dimension_numbers<[1], [0], [0], [1], [0, 0, 1, 1], [], []>} : vector<8x8xf32>, vector<8x32xf32>, vector<8x32xf32> -> vector<8x32xf32>
    %99 = arith.addf %77, %98 : vector<8x32xf32>
    %100 = vector.extract_strided_slice %32 {offsets = [0, 24], sizes = [8, 8], strides = [1, 1]} : vector<8x96xf32> to vector<8x8xf32>
    %101 = vector.extract_strided_slice %32 {offsets = [0, 56], sizes = [8, 8], strides = [1, 1]} : vector<8x96xf32> to vector<8x8xf32>
    %102 = vector.extract_strided_slice %32 {offsets = [0, 88], sizes = [8, 8], strides = [1, 1]} : vector<8x96xf32> to vector<8x8xf32>
    %103 = tpu.transpose %101, [1, 0] : vector<8x8xf32> -> vector<8x8xf32>
    %cst_41 = arith.constant dense<0.000000e+00> : vector<8x8xf32>
    %104 = tpu.matmul %100, %103, %cst_41 {dimension_numbers = #tpu.dot_dimension_numbers<[1], [0], [0], [1], [0, 0, 1, 1], [], []>} : vector<8x8xf32>, vector<8x8xf32>, vector<8x8xf32> -> vector<8x8xf32>
    %cst_42 = arith.constant 0.353553385 : f32
    %105 = vector.broadcast %cst_42 : f32 to vector<8x8xf32>
    %106 = arith.mulf %104, %105 : vector<8x8xf32>
    %107 = vector.broadcast %27 : vector<1x8xf32> to vector<8x8xf32>
    %108 = arith.addf %106, %107 : vector<8x8xf32>
    %cst_43 = arith.constant dense<0xFF800000> : vector<8xf32>
    %109 = vector.multi_reduction <maximumf>, %108, %cst_43 [1] : vector<8x8xf32> to vector<8xf32>
    %110 = vector.shape_cast %109 : vector<8xf32> to vector<8x1xf32>
    %111 = vector.broadcast %110 : vector<8x1xf32> to vector<8x8xf32>
    %112 = arith.subf %108, %111 : vector<8x8xf32>
    %113 = math.exp %112 : vector<8x8xf32>
    %cst_44 = arith.constant dense<0.000000e+00> : vector<8xf32>
    %114 = vector.multi_reduction <add>, %113, %cst_44 [1] : vector<8x8xf32> to vector<8xf32>
    %115 = vector.shape_cast %114 : vector<8xf32> to vector<8x1xf32>
    %116 = vector.broadcast %115 : vector<8x1xf32> to vector<8x8xf32>
    %117 = arith.divf %113, %116 : vector<8x8xf32>
    %cst_45 = arith.constant dense<0.000000e+00> : vector<8x8xf32>
    %118 = tpu.matmul %117, %102, %cst_45 {dimension_numbers = #tpu.dot_dimension_numbers<[1], [0], [0], [1], [0, 0, 1, 1], [], []>} : vector<8x8xf32>, vector<8x8xf32>, vector<8x8xf32> -> vector<8x8xf32>
    %c24 = arith.constant 24 : index
    %c0_46 = arith.constant 0 : index
    %119 = vector.load %arg5[%c24, %c0_46] : memref<32x32xf32, #tpu.memory_space<vmem>>, vector<8x32xf32>
    %cst_47 = arith.constant dense<0.000000e+00> : vector<8x32xf32>
    %120 = tpu.matmul %118, %119, %cst_47 {dimension_numbers = #tpu.dot_dimension_numbers<[1], [0], [0], [1], [0, 0, 1, 1], [], []>} : vector<8x8xf32>, vector<8x32xf32>, vector<8x32xf32> -> vector<8x32xf32>
    %121 = arith.addf %99, %120 : vector<8x32xf32>
    %c0_48 = arith.constant 0 : index
    %c0_49 = arith.constant 0 : index
    %122 = vector.load %arg6[%c0_48, %c0_49] : memref<1x32xf32, #tpu.memory_space<vmem>>, vector<1x32xf32>
    %123 = vector.broadcast %122 : vector<1x32xf32> to vector<8x32xf32>
    %124 = arith.addf %121, %123 : vector<8x32xf32>
    %125 = arith.addf %124, %25 : vector<8x32xf32>
    %c0_50 = arith.constant 0 : index
    %c0_51 = arith.constant 0 : index
    %126 = vector.load %arg9[%c0_50, %c0_51] : memref<1x32xf32, #tpu.memory_space<vmem>>, vector<1x32xf32>
    %c0_52 = arith.constant 0 : index
    %c0_53 = arith.constant 0 : index
    %127 = vector.load %arg10[%c0_52, %c0_53] : memref<1x32xf32, #tpu.memory_space<vmem>>, vector<1x32xf32>
    %cst_54 = arith.constant dense<0.000000e+00> : vector<8xf32>
    %128 = vector.multi_reduction <add>, %125, %cst_54 [1] : vector<8x32xf32> to vector<8xf32>
    %129 = vector.shape_cast %128 : vector<8xf32> to vector<8x1xf32>
    %cst_55 = arith.constant 3.200000e+01 : f32
    %130 = vector.broadcast %cst_55 : f32 to vector<8x1xf32>
    %131 = arith.divf %129, %130 : vector<8x1xf32>
    %132 = vector.broadcast %131 : vector<8x1xf32> to vector<8x32xf32>
    %133 = arith.subf %125, %132 : vector<8x32xf32>
    %134 = arith.mulf %133, %133 : vector<8x32xf32>
    %cst_56 = arith.constant dense<0.000000e+00> : vector<8xf32>
    %135 = vector.multi_reduction <add>, %134, %cst_56 [1] : vector<8x32xf32> to vector<8xf32>
    %136 = vector.shape_cast %135 : vector<8xf32> to vector<8x1xf32>
    %cst_57 = arith.constant 3.200000e+01 : f32
    %137 = vector.broadcast %cst_57 : f32 to vector<8x1xf32>
    %138 = arith.divf %136, %137 : vector<8x1xf32>
    %139 = vector.broadcast %131 : vector<8x1xf32> to vector<8x32xf32>
    %140 = arith.subf %125, %139 : vector<8x32xf32>
    %cst_58 = arith.constant 9.99999996E-13 : f32
    %141 = vector.broadcast %cst_58 : f32 to vector<8x1xf32>
    %142 = arith.addf %138, %141 : vector<8x1xf32>
    %143 = math.rsqrt %142 : vector<8x1xf32>
    %144 = vector.broadcast %143 : vector<8x1xf32> to vector<8x32xf32>
    %145 = arith.mulf %140, %144 : vector<8x32xf32>
    %146 = vector.broadcast %126 : vector<1x32xf32> to vector<8x32xf32>
    %147 = arith.mulf %145, %146 : vector<8x32xf32>
    %148 = vector.broadcast %127 : vector<1x32xf32> to vector<8x32xf32>
    %149 = arith.addf %147, %148 : vector<8x32xf32>
    %c0_59 = arith.constant 0 : index
    %c0_60 = arith.constant 0 : index
    %150 = vector.load %arg11[%c0_59, %c0_60] : memref<32x64xf32, #tpu.memory_space<vmem>>, vector<32x64xf32>
    %cst_61 = arith.constant dense<0.000000e+00> : vector<8x64xf32>
    %151 = tpu.matmul %149, %150, %cst_61 {dimension_numbers = #tpu.dot_dimension_numbers<[1], [0], [0], [1], [0, 0, 1, 1], [], []>} : vector<8x32xf32>, vector<32x64xf32>, vector<8x64xf32> -> vector<8x64xf32>
    %c0_62 = arith.constant 0 : index
    %c0_63 = arith.constant 0 : index
    %152 = vector.load %arg12[%c0_62, %c0_63] : memref<1x64xf32, #tpu.memory_space<vmem>>, vector<1x64xf32>
    %153 = vector.broadcast %152 : vector<1x64xf32> to vector<8x64xf32>
    %154 = arith.addf %151, %153 : vector<8x64xf32>
    %cst_64 = arith.constant 5.000000e-01 : f32
    %155 = vector.broadcast %cst_64 : f32 to vector<8x64xf32>
    %156 = arith.mulf %155, %154 : vector<8x64xf32>
    %cst_65 = arith.constant 4.471500e-02 : f32
    %157 = vector.broadcast %cst_65 : f32 to vector<8x64xf32>
    %158 = arith.mulf %157, %154 : vector<8x64xf32>
    %159 = arith.mulf %158, %154 : vector<8x64xf32>
    %160 = arith.mulf %159, %154 : vector<8x64xf32>
    %161 = arith.addf %154, %160 : vector<8x64xf32>
    %cst_66 = arith.constant 0.797884583 : f32
    %162 = vector.broadcast %cst_66 : f32 to vector<8x64xf32>
    %163 = arith.mulf %162, %161 : vector<8x64xf32>
    %164 = math.tanh %163 : vector<8x64xf32>
    %cst_67 = arith.constant 1.000000e+00 : f32
    %165 = vector.broadcast %cst_67 : f32 to vector<8x64xf32>
    %166 = arith.addf %165, %164 : vector<8x64xf32>
    %167 = arith.mulf %156, %166 : vector<8x64xf32>
    %c0_68 = arith.constant 0 : index
    %c0_69 = arith.constant 0 : index
    %168 = vector.load %arg13[%c0_68, %c0_69] : memref<64x32xf32, #tpu.memory_space<vmem>>, vector<64x32xf32>
    %cst_70 = arith.constant dense<0.000000e+00> : vector<8x32xf32>
    %169 = tpu.matmul %167, %168, %cst_70 {dimension_numbers = #tpu.dot_dimension_numbers<[1], [0], [0], [1], [0, 0, 1, 1], [], []>} : vector<8x64xf32>, vector<64x32xf32>, vector<8x32xf32> -> vector<8x32xf32>
    %c0_71 = arith.constant 0 : index
    %c0_72 = arith.constant 0 : index
    %170 = vector.load %arg14[%c0_71, %c0_72] : memref<1x32xf32, #tpu.memory_space<vmem>>, vector<1x32xf32>
    %171 = vector.broadcast %170 : vector<1x32xf32> to vector<8x32xf32>
    %172 = arith.addf %169, %171 : vector<8x32xf32>
    %173 = arith.addf %172, %149 : vector<8x32xf32>
    %c0_73 = arith.constant 0 : index
    %c0_74 = arith.constant 0 : index
    %174 = vector.load %arg15[%c0_73, %c0_74] : memref<1x32xf32, #tpu.memory_space<vmem>>, vector<1x32xf32>
    %c0_75 = arith.constant 0 : index
    %c0_76 = arith.constant 0 : index
    %175 = vector.load %arg16[%c0_75, %c0_76] : memref<1x32xf32, #tpu.memory_space<vmem>>, vector<1x32xf32>
    %cst_77 = arith.constant dense<0.000000e+00> : vector<8xf32>
    %176 = vector.multi_reduction <add>, %173, %cst_77 [1] : vector<8x32xf32> to vector<8xf32>
    %177 = vector.shape_cast %176 : vector<8xf32> to vector<8x1xf32>
    %cst_78 = arith.constant 3.200000e+01 : f32
    %178 = vector.broadcast %cst_78 : f32 to vector<8x1xf32>
    %179 = arith.divf %177, %178 : vector<8x1xf32>
    %180 = vector.broadcast %179 : vector<8x1xf32> to vector<8x32xf32>
    %181 = arith.subf %173, %180 : vector<8x32xf32>
    %182 = arith.mulf %181, %181 : vector<8x32xf32>
    %cst_79 = arith.constant dense<0.000000e+00> : vector<8xf32>
    %183 = vector.multi_reduction <add>, %182, %cst_79 [1] : vector<8x32xf32> to vector<8xf32>
    %184 = vector.shape_cast %183 : vector<8xf32> to vector<8x1xf32>
    %cst_80 = arith.constant 3.200000e+01 : f32
    %185 = vector.broadcast %cst_80 : f32 to vector<8x1xf32>
    %186 = arith.divf %184, %185 : vector<8x1xf32>
    %187 = vector.broadcast %179 : vector<8x1xf32> to vector<8x32xf32>
    %188 = arith.subf %173, %187 : vector<8x32xf32>
    %cst_81 = arith.constant 9.99999996E-13 : f32
    %189 = vector.broadcast %cst_81 : f32 to vector<8x1xf32>
    %190 = arith.addf %186, %189 : vector<8x1xf32>
    %191 = math.rsqrt %190 : vector<8x1xf32>
    %192 = vector.broadcast %191 : vector<8x1xf32> to vector<8x32xf32>
    %193 = arith.mulf %188, %192 : vector<8x32xf32>
    %194 = vector.broadcast %174 : vector<1x32xf32> to vector<8x32xf32>
    %195 = arith.mulf %193, %194 : vector<8x32xf32>
    %196 = vector.broadcast %175 : vector<1x32xf32> to vector<8x32xf32>
    %197 = arith.addf %195, %196 : vector<8x32xf32>
    %c0_82 = arith.constant 0 : index
    %c0_83 = arith.constant 0 : index
    %c0_84 = arith.constant 0 : index
    %198 = vector.load %arg17[%c0_82, %c0_83, %c0_84] : memref<1x8x32xf32, #tpu.memory_space<vmem>>, vector<1x8x32xf32>
    %199 = vector.shape_cast %198 : vector<1x8x32xf32> to vector<8x32xf32>
    %200 = vector.shape_cast %197 : vector<8x32xf32> to vector<1x8x32xf32>
    tpu.vector_store %arg17[%c0_82, %c0_83, %c0_84], %200 {strides = array<i32>} : memref<1x8x32xf32, #tpu.memory_space<vmem>>, vector<1x8x32xf32>,
    return
  }
  func.func @transform_0(%arg0: i32) -> (i32, i32, i32) {
    %c0_i32 = arith.constant 0 : i32
    %c0_i32_0 = arith.constant 0 : i32
    %c0_i32_1 = arith.constant 0 : i32
    return %arg0, %c0_i32, %c0_i32_0 : i32, i32, i32
  }
  func.func @transform_1(%arg0: i32) -> (i32, i32, i32) {
    %c0_i32 = arith.constant 0 : i32
    %c0_i32_0 = arith.constant 0 : i32
    %c0_i32_1 = arith.constant 0 : i32
    return %arg0, %c0_i32, %c0_i32_0 : i32, i32, i32
  }
  func.func @transform_2(%arg0: i32) -> (i32, i32) {
    %c0_i32 = arith.constant 0 : i32
    %c0_i32_0 = arith.constant 0 : i32
    %c0_i32_1 = arith.constant 0 : i32
    return %c0_i32, %c0_i32_0 : i32, i32
  }
  func.func @transform_3(%arg0: i32) -> (i32, i32) {
    %c0_i32 = arith.constant 0 : i32
    %c0_i32_0 = arith.constant 0 : i32
    %c0_i32_1 = arith.constant 0 : i32
    return %c0_i32, %c0_i32_0 : i32, i32
  }
  func.func @transform_4(%arg0: i32) -> (i32, i32) {
    %c0_i32 = arith.constant 0 : i32
    %c0_i32_0 = arith.constant 0 : i32
    %c0_i32_1 = arith.constant 0 : i32
    return %c0_i32, %c0_i32_0 : i32, i32
  }
  func.func @transform_5(%arg0: i32) -> (i32, i32) {
    %c0_i32 = arith.constant 0 : i32
    %c0_i32_0 = arith.constant 0 : i32
    %c0_i32_1 = arith.constant 0 : i32
    return %c0_i32, %c0_i32_0 : i32, i32
  }
  func.func @transform_6(%arg0: i32) -> (i32, i32) {
    %c0_i32 = arith.constant 0 : i32
    %c0_i32_0 = arith.constant 0 : i32
    %c0_i32_1 = arith.constant 0 : i32
    return %c0_i32, %c0_i32_0 : i32, i32
  }
  func.func @transform_7(%arg0: i32) -> (i32, i32) {
    %c0_i32 = arith.constant 0 : i32
    %c0_i32_0 = arith.constant 0 : i32
    %c0_i32_1 = arith.constant 0 : i32
    return %c0_i32, %c0_i32_0 : i32, i32
  }
  func.func @transform_8(%arg0: i32) -> (i32, i32) {
    %c0_i32 = arith.constant 0 : i32
    %c0_i32_0 = arith.constant 0 : i32
    %c0_i32_1 = arith.constant 0 : i32
    return %c0_i32, %c0_i32_0 : i32, i32
  }
  func.func @transform_9(%arg0: i32) -> (i32, i32) {
    %c0_i32 = arith.constant 0 : i32
    %c0_i32_0 = arith.constant 0 : i32
    %c0_i32_1 = arith.constant 0 : i32
    return %c0_i32, %c0_i32_0 : i32, i32
  }
  func.func @transform_10(%arg0: i32) -> (i32, i32) {
    %c0_i32 = arith.constant 0 : i32
    %c0_i32_0 = arith.constant 0 : i32
    %c0_i32_1 = arith.constant 0 : i32
    return %c0_i32, %c0_i32_0 : i32, i32
  }
  func.func @transform_11(%arg0: i32) -> (i32, i32) {
    %c0_i32 = arith.constant 0 : i32
    %c0_i32_0 = arith.constant 0 : i32
    %c0_i32_1 = arith.constant 0 : i32
    return %c0_i32, %c0_i32_0 : i32, i32
  }
  func.func @transform_12(%arg0: i32) -> (i32, i32) {
    %c0_i32 = arith.constant 0 : i32
    %c0_i32_0 = arith.constant 0 : i32
    %c0_i32_1 = arith.constant 0 : i32
    return %c0_i32, %c0_i32_0 : i32, i32
  }
  func.func @transform_13(%arg0: i32) -> (i32, i32) {
    %c0_i32 = arith.constant 0 : i32
    %c0_i32_0 = arith.constant 0 : i32
    %c0_i32_1 = arith.constant 0 : i32
    return %c0_i32, %c0_i32_0 : i32, i32
  }
  func.func @transform_14(%arg0: i32) -> (i32, i32) {
    %c0_i32 = arith.constant 0 : i32
    %c0_i32_0 = arith.constant 0 : i32
    %c0_i32_1 = arith.constant 0 : i32
    return %c0_i32, %c0_i32_0 : i32, i32
  }
  func.func @transform_15(%arg0: i32) -> (i32, i32) {
    %c0_i32 = arith.constant 0 : i32
    %c0_i32_0 = arith.constant 0 : i32
    %c0_i32_1 = arith.constant 0 : i32
    return %c0_i32, %c0_i32_0 : i32, i32
  }
  func.func @transform_16(%arg0: i32) -> (i32, i32, i32) {
    %c0_i32 = arith.constant 0 : i32
    %c0_i32_0 = arith.constant 0 : i32
    %c0_i32_1 = arith.constant 0 : i32
    return %arg0, %c0_i32, %c0_i32_0 : i32, i32, i32
  }
}

module attributes {stable_mosaic.version = 11 : i64} {
  func.func @kernel(%arg0: i32, %arg1: memref<1x8x32xf32, #tpu.memory_space<vmem>>, %arg2: memref<1x1x8xf32, #tpu.memory_space<vmem>>, %arg3: memref<32x96xf32, #tpu.memory_space<vmem>>, %arg4: memref<1x96xf32, #tpu.memory_space<vmem>>, %arg5: memref<32x32xf32, #tpu.memory_space<vmem>>, %arg6: memref<1x32xf32, #tpu.memory_space<vmem>>, %arg7: memref<1x32xf32, #tpu.memory_space<vmem>>, %arg8: memref<1x32xf32, #tpu.memory_space<vmem>>, %arg9: memref<1x32xf32, #tpu.memory_space<vmem>>, %arg10: memref<1x32xf32, #tpu.memory_space<vmem>>, %arg11: memref<32x64xf32, #tpu.memory_space<vmem>>, %arg12: memref<1x64xf32, #tpu.memory_space<vmem>>, %arg13: memref<64x32xf32, #tpu.memory_space<vmem>>, %arg14: memref<1x32xf32, #tpu.memory_space<vmem>>, %arg15: memref<1x32xf32, #tpu.memory_space<vmem>>, %arg16: memref<1x32xf32, #tpu.memory_space<vmem>>, %arg17: memref<1x8x32xf32, #tpu.memory_space<vmem>>) attributes {dimension_semantics = [#tpu.dimension_semantics<parallel>], iteration_bounds = array<i64: 2>, scalar_prefetch = 0 : i64, scratch_operands = 0 : i64, tpu.core_type = #tpu.core_type<tc>, window_params = [{transform_indices = @transform_0, window_bounds = array<i64: 1, 8, 32>}, {transform_indices = @transform_1, window_bounds = array<i64: 1, 1, 8>}, {pipeline_mode = #tpu.pipeline_mode<synchronous>, transform_indices = @transform_2, window_bounds = array<i64: 32, 96>}, {pipeline_mode = #tpu.pipeline_mode<synchronous>, transform_indices = @transform_3, window_bounds = array<i64: 1, 96>}, {pipeline_mode = #tpu.pipeline_mode<synchronous>, transform_indices = @transform_4, window_bounds = array<i64: 32, 32>}, {pipeline_mode = #tpu.pipeline_mode<synchronous>, transform_indices = @transform_5, window_bounds = array<i64: 1, 32>}, {pipeline_mode = #tpu.pipeline_mode<synchronous>, transform_indices = @transform_6, window_bounds = array<i64: 1, 32>}, {pipeline_mode = #tpu.pipeline_mode<synchronous>, transform_indices = @transform_7, window_bounds = array<i64: 1, 32>}, {pipeline_mode = #tpu.pipeline_mode<synchronous>, transform_indices = @transform_8, window_bounds = array<i64: 1, 32>}, {pipeline_mode = #tpu.pipeline_mode<synchronous>, transform_indices = @transform_9, window_bounds = array<i64: 1, 32>}, {pipeline_mode = #tpu.pipeline_mode<synchronous>, transform_indices = @transform_10, window_bounds = array<i64: 32, 64>}, {pipeline_mode = #tpu.pipeline_mode<synchronous>, transform_indices = @transform_11, window_bounds = array<i64: 1, 64>}, {pipeline_mode = #tpu.pipeline_mode<synchronous>, transform_indices = @transform_12, window_bounds = array<i64: 64, 32>}, {pipeline_mode = #tpu.pipeline_mode<synchronous>, transform_indices = @transform_13, window_bounds = array<i64: 1, 32>}, {pipeline_mode = #tpu.pipeline_mode<synchronous>, transform_indices = @transform_14, window_bounds = array<i64: 1, 32>}, {pipeline_mode = #tpu.pipeline_mode<synchronous>, transform_indices = @transform_15, window_bounds = array<i64: 1, 32>}, {transform_indices = @transform_16, window_bounds = array<i64: 1, 8, 32>}]} {
    %c0 = arith.constant 0 : index
    %c0_0 = arith.constant 0 : index
    %c0_1 = arith.constant 0 : index
    %0 = vector.load %arg1[%c0, %c0_0, %c0_1] : memref<1x8x32xf32, #tpu.memory_space<vmem>>, vector<1x8x32xf32>
    %1 = vector.shape_cast %0 : vector<1x8x32xf32> to vector<8x32xf32>
    %c0_2 = arith.constant 0 : index
    %c0_3 = arith.constant 0 : index
    %c0_4 = arith.constant 0 : index
    %2 = vector.load %arg2[%c0_2, %c0_3, %c0_4] : memref<1x1x8xf32, #tpu.memory_space<vmem>>, vector<1x1x8xf32>
    %3 = vector.shape_cast %2 : vector<1x1x8xf32> to vector<1x8xf32>
    %c0_5 = arith.constant 0 : index
    %c0_6 = arith.constant 0 : index
    %4 = vector.load %arg3[%c0_5, %c0_6] : memref<32x96xf32, #tpu.memory_space<vmem>>, vector<32x96xf32>
    %cst = arith.constant dense<0.000000e+00> : vector<8x96xf32>
    %5 = tpu.matmul %1, %4, %cst {dimension_numbers = #tpu.dot_dimension_numbers<[1], [0], [0], [1], [0, 0, 1, 1], [], []>} : vector<8x32xf32>, vector<32x96xf32>, vector<8x96xf32> -> vector<8x96xf32>
    %c0_7 = arith.constant 0 : index
    %c0_8 = arith.constant 0 : index
    %6 = vector.load %arg4[%c0_7, %c0_8] : memref<1x96xf32, #tpu.memory_space<vmem>>, vector<1x96xf32>
    %7 = vector.broadcast %6 : vector<1x96xf32> to vector<8x96xf32>
    %8 = arith.addf %5, %7 : vector<8x96xf32>
    %cst_9 = arith.constant 0.000000e+00 : f32
    %9 = vector.broadcast %cst_9 : f32 to vector<8x32xf32>
    %10 = vector.extract_strided_slice %8 {offsets = [0, 0], sizes = [8, 8], strides = [1, 1]} : vector<8x96xf32> to vector<8x8xf32>
    %11 = vector.extract_strided_slice %8 {offsets = [0, 32], sizes = [8, 8], strides = [1, 1]} : vector<8x96xf32> to vector<8x8xf32>
    %12 = vector.extract_strided_slice %8 {offsets = [0, 64], sizes = [8, 8], strides = [1, 1]} : vector<8x96xf32> to vector<8x8xf32>
    %13 = tpu.transpose %11, [1, 0] : vector<8x8xf32> -> vector<8x8xf32>
    %cst_10 = arith.constant dense<0.000000e+00> : vector<8x8xf32>
    %14 = tpu.matmul %10, %13, %cst_10 {dimension_numbers = #tpu.dot_dimension_numbers<[1], [0], [0], [1], [0, 0, 1, 1], [], []>} : vector<8x8xf32>, vector<8x8xf32>, vector<8x8xf32> -> vector<8x8xf32>
    %cst_11 = arith.constant 0.353553385 : f32
    %15 = vector.broadcast %cst_11 : f32 to vector<8x8xf32>
    %16 = arith.mulf %14, %15 : vector<8x8xf32>
    %17 = vector.broadcast %3 : vector<1x8xf32> to vector<8x8xf32>
    %18 = arith.addf %16, %17 : vector<8x8xf32>
    %cst_12 = arith.constant dense<0xFF800000> : vector<8xf32>
    %19 = vector.multi_reduction <maximumf>, %18, %cst_12 [1] : vector<8x8xf32> to vector<8xf32>
    %20 = vector.shape_cast %19 : vector<8xf32> to vector<8x1xf32>
    %21 = vector.broadcast %20 : vector<8x1xf32> to vector<8x8xf32>
    %22 = arith.subf %18, %21 : vector<8x8xf32>
    %23 = math.exp %22 : vector<8x8xf32>
    %cst_13 = arith.constant dense<0.000000e+00> : vector<8xf32>
    %24 = vector.multi_reduction <add>, %23, %cst_13 [1] : vector<8x8xf32> to vector<8xf32>
    %25 = vector.shape_cast %24 : vector<8xf32> to vector<8x1xf32>
    %26 = vector.broadcast %25 : vector<8x1xf32> to vector<8x8xf32>
    %27 = arith.divf %23, %26 : vector<8x8xf32>
    %cst_14 = arith.constant dense<0.000000e+00> : vector<8x8xf32>
    %28 = tpu.matmul %27, %12, %cst_14 {dimension_numbers = #tpu.dot_dimension_numbers<[1], [0], [0], [1], [0, 0, 1, 1], [], []>} : vector<8x8xf32>, vector<8x8xf32>, vector<8x8xf32> -> vector<8x8xf32>
    %c0_15 = arith.constant 0 : index
    %c0_16 = arith.constant 0 : index
    %29 = vector.load %arg5[%c0_15, %c0_16] : memref<32x32xf32, #tpu.memory_space<vmem>>, vector<8x32xf32>
    %cst_17 = arith.constant dense<0.000000e+00> : vector<8x32xf32>
    %30 = tpu.matmul %28, %29, %cst_17 {dimension_numbers = #tpu.dot_dimension_numbers<[1], [0], [0], [1], [0, 0, 1, 1], [], []>} : vector<8x8xf32>, vector<8x32xf32>, vector<8x32xf32> -> vector<8x32xf32>
    %31 = arith.addf %9, %30 : vector<8x32xf32>
    %32 = vector.extract_strided_slice %8 {offsets = [0, 8], sizes = [8, 8], strides = [1, 1]} : vector<8x96xf32> to vector<8x8xf32>
    %33 = vector.extract_strided_slice %8 {offsets = [0, 40], sizes = [8, 8], strides = [1, 1]} : vector<8x96xf32> to vector<8x8xf32>
    %34 = vector.extract_strided_slice %8 {offsets = [0, 72], sizes = [8, 8], strides = [1, 1]} : vector<8x96xf32> to vector<8x8xf32>
    %35 = tpu.transpose %33, [1, 0] : vector<8x8xf32> -> vector<8x8xf32>
    %cst_18 = arith.constant dense<0.000000e+00> : vector<8x8xf32>
    %36 = tpu.matmul %32, %35, %cst_18 {dimension_numbers = #tpu.dot_dimension_numbers<[1], [0], [0], [1], [0, 0, 1, 1], [], []>} : vector<8x8xf32>, vector<8x8xf32>, vector<8x8xf32> -> vector<8x8xf32>
    %cst_19 = arith.constant 0.353553385 : f32
    %37 = vector.broadcast %cst_19 : f32 to vector<8x8xf32>
    %38 = arith.mulf %36, %37 : vector<8x8xf32>
    %39 = vector.broadcast %3 : vector<1x8xf32> to vector<8x8xf32>
    %40 = arith.addf %38, %39 : vector<8x8xf32>
    %cst_20 = arith.constant dense<0xFF800000> : vector<8xf32>
    %41 = vector.multi_reduction <maximumf>, %40, %cst_20 [1] : vector<8x8xf32> to vector<8xf32>
    %42 = vector.shape_cast %41 : vector<8xf32> to vector<8x1xf32>
    %43 = vector.broadcast %42 : vector<8x1xf32> to vector<8x8xf32>
    %44 = arith.subf %40, %43 : vector<8x8xf32>
    %45 = math.exp %44 : vector<8x8xf32>
    %cst_21 = arith.constant dense<0.000000e+00> : vector<8xf32>
    %46 = vector.multi_reduction <add>, %45, %cst_21 [1] : vector<8x8xf32> to vector<8xf32>
    %47 = vector.shape_cast %46 : vector<8xf32> to vector<8x1xf32>
    %48 = vector.broadcast %47 : vector<8x1xf32> to vector<8x8xf32>
    %49 = arith.divf %45, %48 : vector<8x8xf32>
    %cst_22 = arith.constant dense<0.000000e+00> : vector<8x8xf32>
    %50 = tpu.matmul %49, %34, %cst_22 {dimension_numbers = #tpu.dot_dimension_numbers<[1], [0], [0], [1], [0, 0, 1, 1], [], []>} : vector<8x8xf32>, vector<8x8xf32>, vector<8x8xf32> -> vector<8x8xf32>
    %c8 = arith.constant 8 : index
    %c0_23 = arith.constant 0 : index
    %51 = vector.load %arg5[%c8, %c0_23] : memref<32x32xf32, #tpu.memory_space<vmem>>, vector<8x32xf32>
    %cst_24 = arith.constant dense<0.000000e+00> : vector<8x32xf32>
    %52 = tpu.matmul %50, %51, %cst_24 {dimension_numbers = #tpu.dot_dimension_numbers<[1], [0], [0], [1], [0, 0, 1, 1], [], []>} : vector<8x8xf32>, vector<8x32xf32>, vector<8x32xf32> -> vector<8x32xf32>
    %53 = arith.addf %31, %52 : vector<8x32xf32>
    %54 = vector.extract_strided_slice %8 {offsets = [0, 16], sizes = [8, 8], strides = [1, 1]} : vector<8x96xf32> to vector<8x8xf32>
    %55 = vector.extract_strided_slice %8 {offsets = [0, 48], sizes = [8, 8], strides = [1, 1]} : vector<8x96xf32> to vector<8x8xf32>
    %56 = vector.extract_strided_slice %8 {offsets = [0, 80], sizes = [8, 8], strides = [1, 1]} : vector<8x96xf32> to vector<8x8xf32>
    %57 = tpu.transpose %55, [1, 0] : vector<8x8xf32> -> vector<8x8xf32>
    %cst_25 = arith.constant dense<0.000000e+00> : vector<8x8xf32>
    %58 = tpu.matmul %54, %57, %cst_25 {dimension_numbers = #tpu.dot_dimension_numbers<[1], [0], [0], [1], [0, 0, 1, 1], [], []>} : vector<8x8xf32>, vector<8x8xf32>, vector<8x8xf32> -> vector<8x8xf32>
    %cst_26 = arith.constant 0.353553385 : f32
    %59 = vector.broadcast %cst_26 : f32 to vector<8x8xf32>
    %60 = arith.mulf %58, %59 : vector<8x8xf32>
    %61 = vector.broadcast %3 : vector<1x8xf32> to vector<8x8xf32>
    %62 = arith.addf %60, %61 : vector<8x8xf32>
    %cst_27 = arith.constant dense<0xFF800000> : vector<8xf32>
    %63 = vector.multi_reduction <maximumf>, %62, %cst_27 [1] : vector<8x8xf32> to vector<8xf32>
    %64 = vector.shape_cast %63 : vector<8xf32> to vector<8x1xf32>
    %65 = vector.broadcast %64 : vector<8x1xf32> to vector<8x8xf32>
    %66 = arith.subf %62, %65 : vector<8x8xf32>
    %67 = math.exp %66 : vector<8x8xf32>
    %cst_28 = arith.constant dense<0.000000e+00> : vector<8xf32>
    %68 = vector.multi_reduction <add>, %67, %cst_28 [1] : vector<8x8xf32> to vector<8xf32>
    %69 = vector.shape_cast %68 : vector<8xf32> to vector<8x1xf32>
    %70 = vector.broadcast %69 : vector<8x1xf32> to vector<8x8xf32>
    %71 = arith.divf %67, %70 : vector<8x8xf32>
    %cst_29 = arith.constant dense<0.000000e+00> : vector<8x8xf32>
    %72 = tpu.matmul %71, %56, %cst_29 {dimension_numbers = #tpu.dot_dimension_numbers<[1], [0], [0], [1], [0, 0, 1, 1], [], []>} : vector<8x8xf32>, vector<8x8xf32>, vector<8x8xf32> -> vector<8x8xf32>
    %c16 = arith.constant 16 : index
    %c0_30 = arith.constant 0 : index
    %73 = vector.load %arg5[%c16, %c0_30] : memref<32x32xf32, #tpu.memory_space<vmem>>, vector<8x32xf32>
    %cst_31 = arith.constant dense<0.000000e+00> : vector<8x32xf32>
    %74 = tpu.matmul %72, %73, %cst_31 {dimension_numbers = #tpu.dot_dimension_numbers<[1], [0], [0], [1], [0, 0, 1, 1], [], []>} : vector<8x8xf32>, vector<8x32xf32>, vector<8x32xf32> -> vector<8x32xf32>
    %75 = arith.addf %53, %74 : vector<8x32xf32>
    %76 = vector.extract_strided_slice %8 {offsets = [0, 24], sizes = [8, 8], strides = [1, 1]} : vector<8x96xf32> to vector<8x8xf32>
    %77 = vector.extract_strided_slice %8 {offsets = [0, 56], sizes = [8, 8], strides = [1, 1]} : vector<8x96xf32> to vector<8x8xf32>
    %78 = vector.extract_strided_slice %8 {offsets = [0, 88], sizes = [8, 8], strides = [1, 1]} : vector<8x96xf32> to vector<8x8xf32>
    %79 = tpu.transpose %77, [1, 0] : vector<8x8xf32> -> vector<8x8xf32>
    %cst_32 = arith.constant dense<0.000000e+00> : vector<8x8xf32>
    %80 = tpu.matmul %76, %79, %cst_32 {dimension_numbers = #tpu.dot_dimension_numbers<[1], [0], [0], [1], [0, 0, 1, 1], [], []>} : vector<8x8xf32>, vector<8x8xf32>, vector<8x8xf32> -> vector<8x8xf32>
    %cst_33 = arith.constant 0.353553385 : f32
    %81 = vector.broadcast %cst_33 : f32 to vector<8x8xf32>
    %82 = arith.mulf %80, %81 : vector<8x8xf32>
    %83 = vector.broadcast %3 : vector<1x8xf32> to vector<8x8xf32>
    %84 = arith.addf %82, %83 : vector<8x8xf32>
    %cst_34 = arith.constant dense<0xFF800000> : vector<8xf32>
    %85 = vector.multi_reduction <maximumf>, %84, %cst_34 [1] : vector<8x8xf32> to vector<8xf32>
    %86 = vector.shape_cast %85 : vector<8xf32> to vector<8x1xf32>
    %87 = vector.broadcast %86 : vector<8x1xf32> to vector<8x8xf32>
    %88 = arith.subf %84, %87 : vector<8x8xf32>
    %89 = math.exp %88 : vector<8x8xf32>
    %cst_35 = arith.constant dense<0.000000e+00> : vector<8xf32>
    %90 = vector.multi_reduction <add>, %89, %cst_35 [1] : vector<8x8xf32> to vector<8xf32>
    %91 = vector.shape_cast %90 : vector<8xf32> to vector<8x1xf32>
    %92 = vector.broadcast %91 : vector<8x1xf32> to vector<8x8xf32>
    %93 = arith.divf %89, %92 : vector<8x8xf32>
    %cst_36 = arith.constant dense<0.000000e+00> : vector<8x8xf32>
    %94 = tpu.matmul %93, %78, %cst_36 {dimension_numbers = #tpu.dot_dimension_numbers<[1], [0], [0], [1], [0, 0, 1, 1], [], []>} : vector<8x8xf32>, vector<8x8xf32>, vector<8x8xf32> -> vector<8x8xf32>
    %c24 = arith.constant 24 : index
    %c0_37 = arith.constant 0 : index
    %95 = vector.load %arg5[%c24, %c0_37] : memref<32x32xf32, #tpu.memory_space<vmem>>, vector<8x32xf32>
    %cst_38 = arith.constant dense<0.000000e+00> : vector<8x32xf32>
    %96 = tpu.matmul %94, %95, %cst_38 {dimension_numbers = #tpu.dot_dimension_numbers<[1], [0], [0], [1], [0, 0, 1, 1], [], []>} : vector<8x8xf32>, vector<8x32xf32>, vector<8x32xf32> -> vector<8x32xf32>
    %97 = arith.addf %75, %96 : vector<8x32xf32>
    %c0_39 = arith.constant 0 : index
    %c0_40 = arith.constant 0 : index
    %98 = vector.load %arg6[%c0_39, %c0_40] : memref<1x32xf32, #tpu.memory_space<vmem>>, vector<1x32xf32>
    %99 = vector.broadcast %98 : vector<1x32xf32> to vector<8x32xf32>
    %100 = arith.addf %97, %99 : vector<8x32xf32>
    %101 = arith.addf %100, %1 : vector<8x32xf32>
    %c0_41 = arith.constant 0 : index
    %c0_42 = arith.constant 0 : index
    %102 = vector.load %arg9[%c0_41, %c0_42] : memref<1x32xf32, #tpu.memory_space<vmem>>, vector<1x32xf32>
    %c0_43 = arith.constant 0 : index
    %c0_44 = arith.constant 0 : index
    %103 = vector.load %arg10[%c0_43, %c0_44] : memref<1x32xf32, #tpu.memory_space<vmem>>, vector<1x32xf32>
    %cst_45 = arith.constant dense<0.000000e+00> : vector<8xf32>
    %104 = vector.multi_reduction <add>, %101, %cst_45 [1] : vector<8x32xf32> to vector<8xf32>
    %105 = vector.shape_cast %104 : vector<8xf32> to vector<8x1xf32>
    %cst_46 = arith.constant 3.200000e+01 : f32
    %106 = vector.broadcast %cst_46 : f32 to vector<8x1xf32>
    %107 = arith.divf %105, %106 : vector<8x1xf32>
    %108 = vector.broadcast %107 : vector<8x1xf32> to vector<8x32xf32>
    %109 = arith.subf %101, %108 : vector<8x32xf32>
    %110 = arith.mulf %109, %109 : vector<8x32xf32>
    %cst_47 = arith.constant dense<0.000000e+00> : vector<8xf32>
    %111 = vector.multi_reduction <add>, %110, %cst_47 [1] : vector<8x32xf32> to vector<8xf32>
    %112 = vector.shape_cast %111 : vector<8xf32> to vector<8x1xf32>
    %cst_48 = arith.constant 3.200000e+01 : f32
    %113 = vector.broadcast %cst_48 : f32 to vector<8x1xf32>
    %114 = arith.divf %112, %113 : vector<8x1xf32>
    %115 = vector.broadcast %107 : vector<8x1xf32> to vector<8x32xf32>
    %116 = arith.subf %101, %115 : vector<8x32xf32>
    %cst_49 = arith.constant 9.99999996E-13 : f32
    %117 = vector.broadcast %cst_49 : f32 to vector<8x1xf32>
    %118 = arith.addf %114, %117 : vector<8x1xf32>
    %119 = math.rsqrt %118 : vector<8x1xf32>
    %120 = vector.broadcast %119 : vector<8x1xf32> to vector<8x32xf32>
    %121 = arith.mulf %116, %120 : vector<8x32xf32>
    %122 = vector.broadcast %102 : vector<1x32xf32> to vector<8x32xf32>
    %123 = arith.mulf %121, %122 : vector<8x32xf32>
    %124 = vector.broadcast %103 : vector<1x32xf32> to vector<8x32xf32>
    %125 = arith.addf %123, %124 : vector<8x32xf32>
    %c0_50 = arith.constant 0 : index
    %c0_51 = arith.constant 0 : index
    %126 = vector.load %arg11[%c0_50, %c0_51] : memref<32x64xf32, #tpu.memory_space<vmem>>, vector<32x64xf32>
    %cst_52 = arith.constant dense<0.000000e+00> : vector<8x64xf32>
    %127 = tpu.matmul %125, %126, %cst_52 {dimension_numbers = #tpu.dot_dimension_numbers<[1], [0], [0], [1], [0, 0, 1, 1], [], []>} : vector<8x32xf32>, vector<32x64xf32>, vector<8x64xf32> -> vector<8x64xf32>
    %c0_53 = arith.constant 0 : index
    %c0_54 = arith.constant 0 : index
    %128 = vector.load %arg12[%c0_53, %c0_54] : memref<1x64xf32, #tpu.memory_space<vmem>>, vector<1x64xf32>
    %129 = vector.broadcast %128 : vector<1x64xf32> to vector<8x64xf32>
    %130 = arith.addf %127, %129 : vector<8x64xf32>
    %cst_55 = arith.constant 5.000000e-01 : f32
    %131 = vector.broadcast %cst_55 : f32 to vector<8x64xf32>
    %132 = arith.mulf %131, %130 : vector<8x64xf32>
    %cst_56 = arith.constant 4.471500e-02 : f32
    %133 = vector.broadcast %cst_56 : f32 to vector<8x64xf32>
    %134 = arith.mulf %133, %130 : vector<8x64xf32>
    %135 = arith.mulf %134, %130 : vector<8x64xf32>
    %136 = arith.mulf %135, %130 : vector<8x64xf32>
    %137 = arith.addf %130, %136 : vector<8x64xf32>
    %cst_57 = arith.constant 0.797884583 : f32
    %138 = vector.broadcast %cst_57 : f32 to vector<8x64xf32>
    %139 = arith.mulf %138, %137 : vector<8x64xf32>
    %140 = math.tanh %139 : vector<8x64xf32>
    %cst_58 = arith.constant 1.000000e+00 : f32
    %141 = vector.broadcast %cst_58 : f32 to vector<8x64xf32>
    %142 = arith.addf %141, %140 : vector<8x64xf32>
    %143 = arith.mulf %132, %142 : vector<8x64xf32>
    %c0_59 = arith.constant 0 : index
    %c0_60 = arith.constant 0 : index
    %144 = vector.load %arg13[%c0_59, %c0_60] : memref<64x32xf32, #tpu.memory_space<vmem>>, vector<64x32xf32>
    %cst_61 = arith.constant dense<0.000000e+00> : vector<8x32xf32>
    %145 = tpu.matmul %143, %144, %cst_61 {dimension_numbers = #tpu.dot_dimension_numbers<[1], [0], [0], [1], [0, 0, 1, 1], [], []>} : vector<8x64xf32>, vector<64x32xf32>, vector<8x32xf32> -> vector<8x32xf32>
    %c0_62 = arith.constant 0 : index
    %c0_63 = arith.constant 0 : index
    %146 = vector.load %arg14[%c0_62, %c0_63] : memref<1x32xf32, #tpu.memory_space<vmem>>, vector<1x32xf32>
    %147 = vector.broadcast %146 : vector<1x32xf32> to vector<8x32xf32>
    %148 = arith.addf %145, %147 : vector<8x32xf32>
    %149 = arith.addf %148, %125 : vector<8x32xf32>
    %c0_64 = arith.constant 0 : index
    %c0_65 = arith.constant 0 : index
    %150 = vector.load %arg15[%c0_64, %c0_65] : memref<1x32xf32, #tpu.memory_space<vmem>>, vector<1x32xf32>
    %c0_66 = arith.constant 0 : index
    %c0_67 = arith.constant 0 : index
    %151 = vector.load %arg16[%c0_66, %c0_67] : memref<1x32xf32, #tpu.memory_space<vmem>>, vector<1x32xf32>
    %cst_68 = arith.constant dense<0.000000e+00> : vector<8xf32>
    %152 = vector.multi_reduction <add>, %149, %cst_68 [1] : vector<8x32xf32> to vector<8xf32>
    %153 = vector.shape_cast %152 : vector<8xf32> to vector<8x1xf32>
    %cst_69 = arith.constant 3.200000e+01 : f32
    %154 = vector.broadcast %cst_69 : f32 to vector<8x1xf32>
    %155 = arith.divf %153, %154 : vector<8x1xf32>
    %156 = vector.broadcast %155 : vector<8x1xf32> to vector<8x32xf32>
    %157 = arith.subf %149, %156 : vector<8x32xf32>
    %158 = arith.mulf %157, %157 : vector<8x32xf32>
    %cst_70 = arith.constant dense<0.000000e+00> : vector<8xf32>
    %159 = vector.multi_reduction <add>, %158, %cst_70 [1] : vector<8x32xf32> to vector<8xf32>
    %160 = vector.shape_cast %159 : vector<8xf32> to vector<8x1xf32>
    %cst_71 = arith.constant 3.200000e+01 : f32
    %161 = vector.broadcast %cst_71 : f32 to vector<8x1xf32>
    %162 = arith.divf %160, %161 : vector<8x1xf32>
    %163 = vector.broadcast %155 : vector<8x1xf32> to vector<8x32xf32>
    %164 = arith.subf %149, %163 : vector<8x32xf32>
    %cst_72 = arith.constant 9.99999996E-13 : f32
    %165 = vector.broadcast %cst_72 : f32 to vector<8x1xf32>
    %166 = arith.addf %162, %165 : vector<8x1xf32>
    %167 = math.rsqrt %166 : vector<8x1xf32>
    %168 = vector.broadcast %167 : vector<8x1xf32> to vector<8x32xf32>
    %169 = arith.mulf %164, %168 : vector<8x32xf32>
    %170 = vector.broadcast %150 : vector<1x32xf32> to vector<8x32xf32>
    %171 = arith.mulf %169, %170 : vector<8x32xf32>
    %172 = vector.broadcast %151 : vector<1x32xf32> to vector<8x32xf32>
    %173 = arith.addf %171, %172 : vector<8x32xf32>
    %c0_73 = arith.constant 0 : index
    %c0_74 = arith.constant 0 : index
    %c0_75 = arith.constant 0 : index
    %174 = vector.load %arg17[%c0_73, %c0_74, %c0_75] : memref<1x8x32xf32, #tpu.memory_space<vmem>>, vector<1x8x32xf32>
    %175 = vector.shape_cast %174 : vector<1x8x32xf32> to vector<8x32xf32>
    %176 = vector.shape_cast %173 : vector<8x32xf32> to vector<1x8x32xf32>
    tpu.vector_store %arg17[%c0_73, %c0_74, %c0_75], %176 {strides = array<i32>} : memref<1x8x32xf32, #tpu.memory_space<vmem>>, vector<1x8x32xf32>,
    return
  }
  func.func @transform_0(%arg0: i32) -> (i32, i32, i32) {
    %c0_i32 = arith.constant 0 : i32
    %c0_i32_0 = arith.constant 0 : i32
    %c0_i32_1 = arith.constant 0 : i32
    return %arg0, %c0_i32, %c0_i32_0 : i32, i32, i32
  }
  func.func @transform_1(%arg0: i32) -> (i32, i32, i32) {
    %c0_i32 = arith.constant 0 : i32
    %c0_i32_0 = arith.constant 0 : i32
    %c0_i32_1 = arith.constant 0 : i32
    return %arg0, %c0_i32, %c0_i32_0 : i32, i32, i32
  }
  func.func @transform_2(%arg0: i32) -> (i32, i32) {
    %c0_i32 = arith.constant 0 : i32
    %c0_i32_0 = arith.constant 0 : i32
    %c0_i32_1 = arith.constant 0 : i32
    return %c0_i32, %c0_i32_0 : i32, i32
  }
  func.func @transform_3(%arg0: i32) -> (i32, i32) {
    %c0_i32 = arith.constant 0 : i32
    %c0_i32_0 = arith.constant 0 : i32
    %c0_i32_1 = arith.constant 0 : i32
    return %c0_i32, %c0_i32_0 : i32, i32
  }
  func.func @transform_4(%arg0: i32) -> (i32, i32) {
    %c0_i32 = arith.constant 0 : i32
    %c0_i32_0 = arith.constant 0 : i32
    %c0_i32_1 = arith.constant 0 : i32
    return %c0_i32, %c0_i32_0 : i32, i32
  }
  func.func @transform_5(%arg0: i32) -> (i32, i32) {
    %c0_i32 = arith.constant 0 : i32
    %c0_i32_0 = arith.constant 0 : i32
    %c0_i32_1 = arith.constant 0 : i32
    return %c0_i32, %c0_i32_0 : i32, i32
  }
  func.func @transform_6(%arg0: i32) -> (i32, i32) {
    %c0_i32 = arith.constant 0 : i32
    %c0_i32_0 = arith.constant 0 : i32
    %c0_i32_1 = arith.constant 0 : i32
    return %c0_i32, %c0_i32_0 : i32, i32
  }
  func.func @transform_7(%arg0: i32) -> (i32, i32) {
    %c0_i32 = arith.constant 0 : i32
    %c0_i32_0 = arith.constant 0 : i32
    %c0_i32_1 = arith.constant 0 : i32
    return %c0_i32, %c0_i32_0 : i32, i32
  }
  func.func @transform_8(%arg0: i32) -> (i32, i32) {
    %c0_i32 = arith.constant 0 : i32
    %c0_i32_0 = arith.constant 0 : i32
    %c0_i32_1 = arith.constant 0 : i32
    return %c0_i32, %c0_i32_0 : i32, i32
  }
  func.func @transform_9(%arg0: i32) -> (i32, i32) {
    %c0_i32 = arith.constant 0 : i32
    %c0_i32_0 = arith.constant 0 : i32
    %c0_i32_1 = arith.constant 0 : i32
    return %c0_i32, %c0_i32_0 : i32, i32
  }
  func.func @transform_10(%arg0: i32) -> (i32, i32) {
    %c0_i32 = arith.constant 0 : i32
    %c0_i32_0 = arith.constant 0 : i32
    %c0_i32_1 = arith.constant 0 : i32
    return %c0_i32, %c0_i32_0 : i32, i32
  }
  func.func @transform_11(%arg0: i32) -> (i32, i32) {
    %c0_i32 = arith.constant 0 : i32
    %c0_i32_0 = arith.constant 0 : i32
    %c0_i32_1 = arith.constant 0 : i32
    return %c0_i32, %c0_i32_0 : i32, i32
  }
  func.func @transform_12(%arg0: i32) -> (i32, i32) {
    %c0_i32 = arith.constant 0 : i32
    %c0_i32_0 = arith.constant 0 : i32
    %c0_i32_1 = arith.constant 0 : i32
    return %c0_i32, %c0_i32_0 : i32, i32
  }
  func.func @transform_13(%arg0: i32) -> (i32, i32) {
    %c0_i32 = arith.constant 0 : i32
    %c0_i32_0 = arith.constant 0 : i32
    %c0_i32_1 = arith.constant 0 : i32
    return %c0_i32, %c0_i32_0 : i32, i32
  }
  func.func @transform_14(%arg0: i32) -> (i32, i32) {
    %c0_i32 = arith.constant 0 : i32
    %c0_i32_0 = arith.constant 0 : i32
    %c0_i32_1 = arith.constant 0 : i32
    return %c0_i32, %c0_i32_0 : i32, i32
  }
  func.func @transform_15(%arg0: i32) -> (i32, i32) {
    %c0_i32 = arith.constant 0 : i32
    %c0_i32_0 = arith.constant 0 : i32
    %c0_i32_1 = arith.constant 0 : i32
    return %c0_i32, %c0_i32_0 : i32, i32
  }
  func.func @transform_16(%arg0: i32) -> (i32, i32, i32) {
    %c0_i32 = arith.constant 0 : i32
    %c0_i32_0 = arith.constant 0 : i32
    %c0_i32_1 = arith.constant 0 : i32
    return %arg0, %c0_i32, %c0_i32_0 : i32, i32, i32
  }
}

module attributes {stable_mosaic.version = 11 : i64} {
  func.func @_lstm_bidir_kernel(%arg0: i32, %arg1: memref<16x32xf32, #tpu.memory_space<vmem>>, %arg2: memref<1x32x64xf32, #tpu.memory_space<vmem>>, %arg3: memref<1x1x64xf32, #tpu.memory_space<vmem>>, %arg4: memref<1x16x64xf32, #tpu.memory_space<vmem>>, %arg5: memref<1x16x16xf32, #tpu.memory_space<vmem>>, %arg6: memref<16x64xf32, #tpu.memory_space<vmem>>) attributes {dimension_semantics = [#tpu.dimension_semantics<parallel>], iteration_bounds = array<i64: 2>, scalar_prefetch = 0 : i64, scratch_operands = 1 : i64, tpu.core_type = #tpu.core_type<tc>, window_params = [{pipeline_mode = #tpu.pipeline_mode<synchronous>, transform_indices = @transform_0, window_bounds = array<i64: 16, 32>}, {transform_indices = @transform_1, window_bounds = array<i64: 1, 32, 64>}, {transform_indices = @transform_2, window_bounds = array<i64: 1, 1, 64>}, {transform_indices = @transform_3, window_bounds = array<i64: 1, 16, 64>}, {transform_indices = @transform_4, window_bounds = array<i64: 1, 16, 16>}]} {
    %c0 = arith.constant 0 : index
    %c0_0 = arith.constant 0 : index
    %0 = vector.load %arg1[%c0, %c0_0] : memref<16x32xf32, #tpu.memory_space<vmem>>, vector<16x32xf32>
    %c0_1 = arith.constant 0 : index
    %c0_2 = arith.constant 0 : index
    %c0_3 = arith.constant 0 : index
    %1 = vector.load %arg2[%c0_1, %c0_2, %c0_3] : memref<1x32x64xf32, #tpu.memory_space<vmem>>, vector<1x32x64xf32>
    %2 = vector.shape_cast %1 : vector<1x32x64xf32> to vector<32x64xf32>
    %cst = arith.constant dense<0.000000e+00> : vector<16x64xf32>
    %3 = tpu.matmul %0, %2, %cst {dimension_numbers = #tpu.dot_dimension_numbers<[1], [0], [0], [1], [0, 0, 1, 1], [], []>} : vector<16x32xf32>, vector<32x64xf32>, vector<16x64xf32> -> vector<16x64xf32>
    %c0_4 = arith.constant 0 : index
    %c0_5 = arith.constant 0 : index
    %c0_6 = arith.constant 0 : index
    %4 = vector.load %arg3[%c0_4, %c0_5, %c0_6] : memref<1x1x64xf32, #tpu.memory_space<vmem>>, vector<1x1x64xf32>
    %5 = vector.shape_cast %4 : vector<1x1x64xf32> to vector<1x64xf32>
    %6 = vector.broadcast %5 : vector<1x64xf32> to vector<16x64xf32>
    %7 = arith.addf %3, %6 : vector<16x64xf32>
    %c0_7 = arith.constant 0 : index
    %c0_8 = arith.constant 0 : index
    %8 = vector.load %arg6[%c0_7, %c0_8] : memref<16x64xf32, #tpu.memory_space<vmem>>, vector<16x64xf32>
    tpu.vector_store %arg6[%c0_7, %c0_8], %7 {strides = array<i32>} : memref<16x64xf32, #tpu.memory_space<vmem>>, vector<16x64xf32>,
    %c0_9 = arith.constant 0 : index
    %c0_10 = arith.constant 0 : index
    %c0_11 = arith.constant 0 : index
    %9 = vector.load %arg4[%c0_9, %c0_10, %c0_11] : memref<1x16x64xf32, #tpu.memory_space<vmem>>, vector<1x16x64xf32>
    %10 = vector.shape_cast %9 : vector<1x16x64xf32> to vector<16x64xf32>
    %cst_12 = arith.constant 0.000000e+00 : f32
    %11 = vector.broadcast %cst_12 : f32 to vector<1x16xf32>
    %cst_13 = arith.constant 0.000000e+00 : f32
    %12 = vector.broadcast %cst_13 : f32 to vector<1x16xf32>
    %cst_14 = arith.constant 0.000000e+00 : f32
    %13 = vector.broadcast %cst_14 : f32 to vector<1x16xf32>
    %cst_15 = arith.constant 0.000000e+00 : f32
    %14 = vector.broadcast %cst_15 : f32 to vector<1x16xf32>
    %c0_i32 = arith.constant 0 : i32
    %c2_i32 = arith.constant 2 : i32
    %15 = arith.muli %c2_i32, %arg0 : i32
    %c1_i32 = arith.constant 1 : i32
    %16 = arith.subi %c1_i32, %15 : i32
    %17 = arith.muli %c0_i32, %16 : i32
    %c7_i32 = arith.constant 7 : i32
    %18 = arith.muli %arg0, %c7_i32 : i32
    %19 = arith.addi %17, %18 : i32
    %c0_i32_16 = arith.constant 0 : i32
    %20 = arith.addi %c0_i32_16, %19 : i32
    %21 = arith.index_cast %20 : i32 to index
    %c0_17 = arith.constant 0 : index
    %22 = vector.load %arg6[%21, %c0_17] : memref<16x64xf32, #tpu.memory_space<vmem>>, vector<1x64xf32>
    %cst_18 = arith.constant dense<0.000000e+00> : vector<1x64xf32>
    %23 = tpu.matmul %11, %10, %cst_18 {dimension_numbers = #tpu.dot_dimension_numbers<[1], [0], [0], [1], [0, 0, 1, 1], [], []>} : vector<1x16xf32>, vector<16x64xf32>, vector<1x64xf32> -> vector<1x64xf32>
    %24 = arith.addf %22, %23 : vector<1x64xf32>
    %cst_19 = arith.constant 0.000000e+00 : f32
    %25 = vector.broadcast %cst_19 : f32 to vector<1x64xf32>
    %26 = arith.subf %25, %24 : vector<1x64xf32>
    %27 = math.exp %26 : vector<1x64xf32>
    %cst_20 = arith.constant 1.000000e+00 : f32
    %28 = vector.broadcast %cst_20 : f32 to vector<1x64xf32>
    %29 = arith.addf %28, %27 : vector<1x64xf32>
    %cst_21 = arith.constant 1.000000e+00 : f32
    %30 = vector.broadcast %cst_21 : f32 to vector<1x64xf32>
    %31 = arith.divf %30, %29 : vector<1x64xf32>
    %32 = math.tanh %24 : vector<1x64xf32>
    %33 = vector.extract_strided_slice %31 {offsets = [0, 0], sizes = [1, 16], strides = [1, 1]} : vector<1x64xf32> to vector<1x16xf32>
    %34 = vector.extract_strided_slice %31 {offsets = [0, 16], sizes = [1, 16], strides = [1, 1]} : vector<1x64xf32> to vector<1x16xf32>
    %35 = vector.extract_strided_slice %32 {offsets = [0, 32], sizes = [1, 16], strides = [1, 1]} : vector<1x64xf32> to vector<1x16xf32>
    %36 = vector.extract_strided_slice %31 {offsets = [0, 48], sizes = [1, 16], strides = [1, 1]} : vector<1x64xf32> to vector<1x16xf32>
    %37 = arith.mulf %34, %13 : vector<1x16xf32>
    %38 = arith.mulf %33, %35 : vector<1x16xf32>
    %39 = arith.addf %37, %38 : vector<1x16xf32>
    %40 = math.tanh %39 : vector<1x16xf32>
    %41 = arith.mulf %36, %40 : vector<1x16xf32>
    %c0_i32_22 = arith.constant 0 : i32
    %42 = arith.addi %c0_i32_22, %19 : i32
    %c0_23 = arith.constant 0 : index
    %43 = arith.index_cast %42 : i32 to index
    %c0_24 = arith.constant 0 : index
    %44 = vector.load %arg5[%c0_23, %43, %c0_24] : memref<1x16x16xf32, #tpu.memory_space<vmem>>, vector<1x1x16xf32>
    %45 = vector.shape_cast %44 : vector<1x1x16xf32> to vector<1x16xf32>
    %46 = vector.shape_cast %41 : vector<1x16xf32> to vector<1x1x16xf32>
    tpu.vector_store %arg5[%c0_23, %43, %c0_24], %46 {strides = array<i32>} : memref<1x16x16xf32, #tpu.memory_space<vmem>>, vector<1x1x16xf32>,
    %c8_i32 = arith.constant 8 : i32
    %47 = arith.addi %c8_i32, %19 : i32
    %48 = arith.index_cast %47 : i32 to index
    %c0_25 = arith.constant 0 : index
    %49 = vector.load %arg6[%48, %c0_25] : memref<16x64xf32, #tpu.memory_space<vmem>>, vector<1x64xf32>
    %cst_26 = arith.constant dense<0.000000e+00> : vector<1x64xf32>
    %50 = tpu.matmul %12, %10, %cst_26 {dimension_numbers = #tpu.dot_dimension_numbers<[1], [0], [0], [1], [0, 0, 1, 1], [], []>} : vector<1x16xf32>, vector<16x64xf32>, vector<1x64xf32> -> vector<1x64xf32>
    %51 = arith.addf %49, %50 : vector<1x64xf32>
    %cst_27 = arith.constant 0.000000e+00 : f32
    %52 = vector.broadcast %cst_27 : f32 to vector<1x64xf32>
    %53 = arith.subf %52, %51 : vector<1x64xf32>
    %54 = math.exp %53 : vector<1x64xf32>
    %cst_28 = arith.constant 1.000000e+00 : f32
    %55 = vector.broadcast %cst_28 : f32 to vector<1x64xf32>
    %56 = arith.addf %55, %54 : vector<1x64xf32>
    %cst_29 = arith.constant 1.000000e+00 : f32
    %57 = vector.broadcast %cst_29 : f32 to vector<1x64xf32>
    %58 = arith.divf %57, %56 : vector<1x64xf32>
    %59 = math.tanh %51 : vector<1x64xf32>
    %60 = vector.extract_strided_slice %58 {offsets = [0, 0], sizes = [1, 16], strides = [1, 1]} : vector<1x64xf32> to vector<1x16xf32>
    %61 = vector.extract_strided_slice %58 {offsets = [0, 16], sizes = [1, 16], strides = [1, 1]} : vector<1x64xf32> to vector<1x16xf32>
    %62 = vector.extract_strided_slice %59 {offsets = [0, 32], sizes = [1, 16], strides = [1, 1]} : vector<1x64xf32> to vector<1x16xf32>
    %63 = vector.extract_strided_slice %58 {offsets = [0, 48], sizes = [1, 16], strides = [1, 1]} : vector<1x64xf32> to vector<1x16xf32>
    %64 = arith.mulf %61, %14 : vector<1x16xf32>
    %65 = arith.mulf %60, %62 : vector<1x16xf32>
    %66 = arith.addf %64, %65 : vector<1x16xf32>
    %67 = math.tanh %66 : vector<1x16xf32>
    %68 = arith.mulf %63, %67 : vector<1x16xf32>
    %c8_i32_30 = arith.constant 8 : i32
    %69 = arith.addi %c8_i32_30, %19 : i32
    %c0_31 = arith.constant 0 : index
    %70 = arith.index_cast %69 : i32 to index
    %c0_32 = arith.constant 0 : index
    %71 = vector.load %arg5[%c0_31, %70, %c0_32] : memref<1x16x16xf32, #tpu.memory_space<vmem>>, vector<1x1x16xf32>
    %72 = vector.shape_cast %71 : vector<1x1x16xf32> to vector<1x16xf32>
    %73 = vector.shape_cast %68 : vector<1x16xf32> to vector<1x1x16xf32>
    tpu.vector_store %arg5[%c0_31, %70, %c0_32], %73 {strides = array<i32>} : memref<1x16x16xf32, #tpu.memory_space<vmem>>, vector<1x1x16xf32>,
    %c1_i32_33 = arith.constant 1 : i32
    %c2_i32_34 = arith.constant 2 : i32
    %74 = arith.muli %c2_i32_34, %arg0 : i32
    %c1_i32_35 = arith.constant 1 : i32
    %75 = arith.subi %c1_i32_35, %74 : i32
    %76 = arith.muli %c1_i32_33, %75 : i32
    %c7_i32_36 = arith.constant 7 : i32
    %77 = arith.muli %arg0, %c7_i32_36 : i32
    %78 = arith.addi %76, %77 : i32
    %c0_i32_37 = arith.constant 0 : i32
    %79 = arith.addi %c0_i32_37, %78 : i32
    %80 = arith.index_cast %79 : i32 to index
    %c0_38 = arith.constant 0 : index
    %81 = vector.load %arg6[%80, %c0_38] : memref<16x64xf32, #tpu.memory_space<vmem>>, vector<1x64xf32>
    %cst_39 = arith.constant dense<0.000000e+00> : vector<1x64xf32>
    %82 = tpu.matmul %41, %10, %cst_39 {dimension_numbers = #tpu.dot_dimension_numbers<[1], [0], [0], [1], [0, 0, 1, 1], [], []>} : vector<1x16xf32>, vector<16x64xf32>, vector<1x64xf32> -> vector<1x64xf32>
    %83 = arith.addf %81, %82 : vector<1x64xf32>
    %cst_40 = arith.constant 0.000000e+00 : f32
    %84 = vector.broadcast %cst_40 : f32 to vector<1x64xf32>
    %85 = arith.subf %84, %83 : vector<1x64xf32>
    %86 = math.exp %85 : vector<1x64xf32>
    %cst_41 = arith.constant 1.000000e+00 : f32
    %87 = vector.broadcast %cst_41 : f32 to vector<1x64xf32>
    %88 = arith.addf %87, %86 : vector<1x64xf32>
    %cst_42 = arith.constant 1.000000e+00 : f32
    %89 = vector.broadcast %cst_42 : f32 to vector<1x64xf32>
    %90 = arith.divf %89, %88 : vector<1x64xf32>
    %91 = math.tanh %83 : vector<1x64xf32>
    %92 = vector.extract_strided_slice %90 {offsets = [0, 0], sizes = [1, 16], strides = [1, 1]} : vector<1x64xf32> to vector<1x16xf32>
    %93 = vector.extract_strided_slice %90 {offsets = [0, 16], sizes = [1, 16], strides = [1, 1]} : vector<1x64xf32> to vector<1x16xf32>
    %94 = vector.extract_strided_slice %91 {offsets = [0, 32], sizes = [1, 16], strides = [1, 1]} : vector<1x64xf32> to vector<1x16xf32>
    %95 = vector.extract_strided_slice %90 {offsets = [0, 48], sizes = [1, 16], strides = [1, 1]} : vector<1x64xf32> to vector<1x16xf32>
    %96 = arith.mulf %93, %39 : vector<1x16xf32>
    %97 = arith.mulf %92, %94 : vector<1x16xf32>
    %98 = arith.addf %96, %97 : vector<1x16xf32>
    %99 = math.tanh %98 : vector<1x16xf32>
    %100 = arith.mulf %95, %99 : vector<1x16xf32>
    %c0_i32_43 = arith.constant 0 : i32
    %101 = arith.addi %c0_i32_43, %78 : i32
    %c0_44 = arith.constant 0 : index
    %102 = arith.index_cast %101 : i32 to index
    %c0_45 = arith.constant 0 : index
    %103 = vector.load %arg5[%c0_44, %102, %c0_45] : memref<1x16x16xf32, #tpu.memory_space<vmem>>, vector<1x1x16xf32>
    %104 = vector.shape_cast %103 : vector<1x1x16xf32> to vector<1x16xf32>
    %105 = vector.shape_cast %100 : vector<1x16xf32> to vector<1x1x16xf32>
    tpu.vector_store %arg5[%c0_44, %102, %c0_45], %105 {strides = array<i32>} : memref<1x16x16xf32, #tpu.memory_space<vmem>>, vector<1x1x16xf32>,
    %c8_i32_46 = arith.constant 8 : i32
    %106 = arith.addi %c8_i32_46, %78 : i32
    %107 = arith.index_cast %106 : i32 to index
    %c0_47 = arith.constant 0 : index
    %108 = vector.load %arg6[%107, %c0_47] : memref<16x64xf32, #tpu.memory_space<vmem>>, vector<1x64xf32>
    %cst_48 = arith.constant dense<0.000000e+00> : vector<1x64xf32>
    %109 = tpu.matmul %68, %10, %cst_48 {dimension_numbers = #tpu.dot_dimension_numbers<[1], [0], [0], [1], [0, 0, 1, 1], [], []>} : vector<1x16xf32>, vector<16x64xf32>, vector<1x64xf32> -> vector<1x64xf32>
    %110 = arith.addf %108, %109 : vector<1x64xf32>
    %cst_49 = arith.constant 0.000000e+00 : f32
    %111 = vector.broadcast %cst_49 : f32 to vector<1x64xf32>
    %112 = arith.subf %111, %110 : vector<1x64xf32>
    %113 = math.exp %112 : vector<1x64xf32>
    %cst_50 = arith.constant 1.000000e+00 : f32
    %114 = vector.broadcast %cst_50 : f32 to vector<1x64xf32>
    %115 = arith.addf %114, %113 : vector<1x64xf32>
    %cst_51 = arith.constant 1.000000e+00 : f32
    %116 = vector.broadcast %cst_51 : f32 to vector<1x64xf32>
    %117 = arith.divf %116, %115 : vector<1x64xf32>
    %118 = math.tanh %110 : vector<1x64xf32>
    %119 = vector.extract_strided_slice %117 {offsets = [0, 0], sizes = [1, 16], strides = [1, 1]} : vector<1x64xf32> to vector<1x16xf32>
    %120 = vector.extract_strided_slice %117 {offsets = [0, 16], sizes = [1, 16], strides = [1, 1]} : vector<1x64xf32> to vector<1x16xf32>
    %121 = vector.extract_strided_slice %118 {offsets = [0, 32], sizes = [1, 16], strides = [1, 1]} : vector<1x64xf32> to vector<1x16xf32>
    %122 = vector.extract_strided_slice %117 {offsets = [0, 48], sizes = [1, 16], strides = [1, 1]} : vector<1x64xf32> to vector<1x16xf32>
    %123 = arith.mulf %120, %66 : vector<1x16xf32>
    %124 = arith.mulf %119, %121 : vector<1x16xf32>
    %125 = arith.addf %123, %124 : vector<1x16xf32>
    %126 = math.tanh %125 : vector<1x16xf32>
    %127 = arith.mulf %122, %126 : vector<1x16xf32>
    %c8_i32_52 = arith.constant 8 : i32
    %128 = arith.addi %c8_i32_52, %78 : i32
    %c0_53 = arith.constant 0 : index
    %129 = arith.index_cast %128 : i32 to index
    %c0_54 = arith.constant 0 : index
    %130 = vector.load %arg5[%c0_53, %129, %c0_54] : memref<1x16x16xf32, #tpu.memory_space<vmem>>, vector<1x1x16xf32>
    %131 = vector.shape_cast %130 : vector<1x1x16xf32> to vector<1x16xf32>
    %132 = vector.shape_cast %127 : vector<1x16xf32> to vector<1x1x16xf32>
    tpu.vector_store %arg5[%c0_53, %129, %c0_54], %132 {strides = array<i32>} : memref<1x16x16xf32, #tpu.memory_space<vmem>>, vector<1x1x16xf32>,
    %c2_i32_55 = arith.constant 2 : i32
    %c2_i32_56 = arith.constant 2 : i32
    %133 = arith.muli %c2_i32_56, %arg0 : i32
    %c1_i32_57 = arith.constant 1 : i32
    %134 = arith.subi %c1_i32_57, %133 : i32
    %135 = arith.muli %c2_i32_55, %134 : i32
    %c7_i32_58 = arith.constant 7 : i32
    %136 = arith.muli %arg0, %c7_i32_58 : i32
    %137 = arith.addi %135, %136 : i32
    %c0_i32_59 = arith.constant 0 : i32
    %138 = arith.addi %c0_i32_59, %137 : i32
    %139 = arith.index_cast %138 : i32 to index
    %c0_60 = arith.constant 0 : index
    %140 = vector.load %arg6[%139, %c0_60] : memref<16x64xf32, #tpu.memory_space<vmem>>, vector<1x64xf32>
    %cst_61 = arith.constant dense<0.000000e+00> : vector<1x64xf32>
    %141 = tpu.matmul %100, %10, %cst_61 {dimension_numbers = #tpu.dot_dimension_numbers<[1], [0], [0], [1], [0, 0, 1, 1], [], []>} : vector<1x16xf32>, vector<16x64xf32>, vector<1x64xf32> -> vector<1x64xf32>
    %142 = arith.addf %140, %141 : vector<1x64xf32>
    %cst_62 = arith.constant 0.000000e+00 : f32
    %143 = vector.broadcast %cst_62 : f32 to vector<1x64xf32>
    %144 = arith.subf %143, %142 : vector<1x64xf32>
    %145 = math.exp %144 : vector<1x64xf32>
    %cst_63 = arith.constant 1.000000e+00 : f32
    %146 = vector.broadcast %cst_63 : f32 to vector<1x64xf32>
    %147 = arith.addf %146, %145 : vector<1x64xf32>
    %cst_64 = arith.constant 1.000000e+00 : f32
    %148 = vector.broadcast %cst_64 : f32 to vector<1x64xf32>
    %149 = arith.divf %148, %147 : vector<1x64xf32>
    %150 = math.tanh %142 : vector<1x64xf32>
    %151 = vector.extract_strided_slice %149 {offsets = [0, 0], sizes = [1, 16], strides = [1, 1]} : vector<1x64xf32> to vector<1x16xf32>
    %152 = vector.extract_strided_slice %149 {offsets = [0, 16], sizes = [1, 16], strides = [1, 1]} : vector<1x64xf32> to vector<1x16xf32>
    %153 = vector.extract_strided_slice %150 {offsets = [0, 32], sizes = [1, 16], strides = [1, 1]} : vector<1x64xf32> to vector<1x16xf32>
    %154 = vector.extract_strided_slice %149 {offsets = [0, 48], sizes = [1, 16], strides = [1, 1]} : vector<1x64xf32> to vector<1x16xf32>
    %155 = arith.mulf %152, %98 : vector<1x16xf32>
    %156 = arith.mulf %151, %153 : vector<1x16xf32>
    %157 = arith.addf %155, %156 : vector<1x16xf32>
    %158 = math.tanh %157 : vector<1x16xf32>
    %159 = arith.mulf %154, %158 : vector<1x16xf32>
    %c0_i32_65 = arith.constant 0 : i32
    %160 = arith.addi %c0_i32_65, %137 : i32
    %c0_66 = arith.constant 0 : index
    %161 = arith.index_cast %160 : i32 to index
    %c0_67 = arith.constant 0 : index
    %162 = vector.load %arg5[%c0_66, %161, %c0_67] : memref<1x16x16xf32, #tpu.memory_space<vmem>>, vector<1x1x16xf32>
    %163 = vector.shape_cast %162 : vector<1x1x16xf32> to vector<1x16xf32>
    %164 = vector.shape_cast %159 : vector<1x16xf32> to vector<1x1x16xf32>
    tpu.vector_store %arg5[%c0_66, %161, %c0_67], %164 {strides = array<i32>} : memref<1x16x16xf32, #tpu.memory_space<vmem>>, vector<1x1x16xf32>,
    %c8_i32_68 = arith.constant 8 : i32
    %165 = arith.addi %c8_i32_68, %137 : i32
    %166 = arith.index_cast %165 : i32 to index
    %c0_69 = arith.constant 0 : index
    %167 = vector.load %arg6[%166, %c0_69] : memref<16x64xf32, #tpu.memory_space<vmem>>, vector<1x64xf32>
    %cst_70 = arith.constant dense<0.000000e+00> : vector<1x64xf32>
    %168 = tpu.matmul %127, %10, %cst_70 {dimension_numbers = #tpu.dot_dimension_numbers<[1], [0], [0], [1], [0, 0, 1, 1], [], []>} : vector<1x16xf32>, vector<16x64xf32>, vector<1x64xf32> -> vector<1x64xf32>
    %169 = arith.addf %167, %168 : vector<1x64xf32>
    %cst_71 = arith.constant 0.000000e+00 : f32
    %170 = vector.broadcast %cst_71 : f32 to vector<1x64xf32>
    %171 = arith.subf %170, %169 : vector<1x64xf32>
    %172 = math.exp %171 : vector<1x64xf32>
    %cst_72 = arith.constant 1.000000e+00 : f32
    %173 = vector.broadcast %cst_72 : f32 to vector<1x64xf32>
    %174 = arith.addf %173, %172 : vector<1x64xf32>
    %cst_73 = arith.constant 1.000000e+00 : f32
    %175 = vector.broadcast %cst_73 : f32 to vector<1x64xf32>
    %176 = arith.divf %175, %174 : vector<1x64xf32>
    %177 = math.tanh %169 : vector<1x64xf32>
    %178 = vector.extract_strided_slice %176 {offsets = [0, 0], sizes = [1, 16], strides = [1, 1]} : vector<1x64xf32> to vector<1x16xf32>
    %179 = vector.extract_strided_slice %176 {offsets = [0, 16], sizes = [1, 16], strides = [1, 1]} : vector<1x64xf32> to vector<1x16xf32>
    %180 = vector.extract_strided_slice %177 {offsets = [0, 32], sizes = [1, 16], strides = [1, 1]} : vector<1x64xf32> to vector<1x16xf32>
    %181 = vector.extract_strided_slice %176 {offsets = [0, 48], sizes = [1, 16], strides = [1, 1]} : vector<1x64xf32> to vector<1x16xf32>
    %182 = arith.mulf %179, %125 : vector<1x16xf32>
    %183 = arith.mulf %178, %180 : vector<1x16xf32>
    %184 = arith.addf %182, %183 : vector<1x16xf32>
    %185 = math.tanh %184 : vector<1x16xf32>
    %186 = arith.mulf %181, %185 : vector<1x16xf32>
    %c8_i32_74 = arith.constant 8 : i32
    %187 = arith.addi %c8_i32_74, %137 : i32
    %c0_75 = arith.constant 0 : index
    %188 = arith.index_cast %187 : i32 to index
    %c0_76 = arith.constant 0 : index
    %189 = vector.load %arg5[%c0_75, %188, %c0_76] : memref<1x16x16xf32, #tpu.memory_space<vmem>>, vector<1x1x16xf32>
    %190 = vector.shape_cast %189 : vector<1x1x16xf32> to vector<1x16xf32>
    %191 = vector.shape_cast %186 : vector<1x16xf32> to vector<1x1x16xf32>
    tpu.vector_store %arg5[%c0_75, %188, %c0_76], %191 {strides = array<i32>} : memref<1x16x16xf32, #tpu.memory_space<vmem>>, vector<1x1x16xf32>,
    %c3_i32 = arith.constant 3 : i32
    %c2_i32_77 = arith.constant 2 : i32
    %192 = arith.muli %c2_i32_77, %arg0 : i32
    %c1_i32_78 = arith.constant 1 : i32
    %193 = arith.subi %c1_i32_78, %192 : i32
    %194 = arith.muli %c3_i32, %193 : i32
    %c7_i32_79 = arith.constant 7 : i32
    %195 = arith.muli %arg0, %c7_i32_79 : i32
    %196 = arith.addi %194, %195 : i32
    %c0_i32_80 = arith.constant 0 : i32
    %197 = arith.addi %c0_i32_80, %196 : i32
    %198 = arith.index_cast %197 : i32 to index
    %c0_81 = arith.constant 0 : index
    %199 = vector.load %arg6[%198, %c0_81] : memref<16x64xf32, #tpu.memory_space<vmem>>, vector<1x64xf32>
    %cst_82 = arith.constant dense<0.000000e+00> : vector<1x64xf32>
    %200 = tpu.matmul %159, %10, %cst_82 {dimension_numbers = #tpu.dot_dimension_numbers<[1], [0], [0], [1], [0, 0, 1, 1], [], []>} : vector<1x16xf32>, vector<16x64xf32>, vector<1x64xf32> -> vector<1x64xf32>
    %201 = arith.addf %199, %200 : vector<1x64xf32>
    %cst_83 = arith.constant 0.000000e+00 : f32
    %202 = vector.broadcast %cst_83 : f32 to vector<1x64xf32>
    %203 = arith.subf %202, %201 : vector<1x64xf32>
    %204 = math.exp %203 : vector<1x64xf32>
    %cst_84 = arith.constant 1.000000e+00 : f32
    %205 = vector.broadcast %cst_84 : f32 to vector<1x64xf32>
    %206 = arith.addf %205, %204 : vector<1x64xf32>
    %cst_85 = arith.constant 1.000000e+00 : f32
    %207 = vector.broadcast %cst_85 : f32 to vector<1x64xf32>
    %208 = arith.divf %207, %206 : vector<1x64xf32>
    %209 = math.tanh %201 : vector<1x64xf32>
    %210 = vector.extract_strided_slice %208 {offsets = [0, 0], sizes = [1, 16], strides = [1, 1]} : vector<1x64xf32> to vector<1x16xf32>
    %211 = vector.extract_strided_slice %208 {offsets = [0, 16], sizes = [1, 16], strides = [1, 1]} : vector<1x64xf32> to vector<1x16xf32>
    %212 = vector.extract_strided_slice %209 {offsets = [0, 32], sizes = [1, 16], strides = [1, 1]} : vector<1x64xf32> to vector<1x16xf32>
    %213 = vector.extract_strided_slice %208 {offsets = [0, 48], sizes = [1, 16], strides = [1, 1]} : vector<1x64xf32> to vector<1x16xf32>
    %214 = arith.mulf %211, %157 : vector<1x16xf32>
    %215 = arith.mulf %210, %212 : vector<1x16xf32>
    %216 = arith.addf %214, %215 : vector<1x16xf32>
    %217 = math.tanh %216 : vector<1x16xf32>
    %218 = arith.mulf %213, %217 : vector<1x16xf32>
    %c0_i32_86 = arith.constant 0 : i32
    %219 = arith.addi %c0_i32_86, %196 : i32
    %c0_87 = arith.constant 0 : index
    %220 = arith.index_cast %219 : i32 to index
    %c0_88 = arith.constant 0 : index
    %221 = vector.load %arg5[%c0_87, %220, %c0_88] : memref<1x16x16xf32, #tpu.memory_space<vmem>>, vector<1x1x16xf32>
    %222 = vector.shape_cast %221 : vector<1x1x16xf32> to vector<1x16xf32>
    %223 = vector.shape_cast %218 : vector<1x16xf32> to vector<1x1x16xf32>
    tpu.vector_store %arg5[%c0_87, %220, %c0_88], %223 {strides = array<i32>} : memref<1x16x16xf32, #tpu.memory_space<vmem>>, vector<1x1x16xf32>,
    %c8_i32_89 = arith.constant 8 : i32
    %224 = arith.addi %c8_i32_89, %196 : i32
    %225 = arith.index_cast %224 : i32 to index
    %c0_90 = arith.constant 0 : index
    %226 = vector.load %arg6[%225, %c0_90] : memref<16x64xf32, #tpu.memory_space<vmem>>, vector<1x64xf32>
    %cst_91 = arith.constant dense<0.000000e+00> : vector<1x64xf32>
    %227 = tpu.matmul %186, %10, %cst_91 {dimension_numbers = #tpu.dot_dimension_numbers<[1], [0], [0], [1], [0, 0, 1, 1], [], []>} : vector<1x16xf32>, vector<16x64xf32>, vector<1x64xf32> -> vector<1x64xf32>
    %228 = arith.addf %226, %227 : vector<1x64xf32>
    %cst_92 = arith.constant 0.000000e+00 : f32
    %229 = vector.broadcast %cst_92 : f32 to vector<1x64xf32>
    %230 = arith.subf %229, %228 : vector<1x64xf32>
    %231 = math.exp %230 : vector<1x64xf32>
    %cst_93 = arith.constant 1.000000e+00 : f32
    %232 = vector.broadcast %cst_93 : f32 to vector<1x64xf32>
    %233 = arith.addf %232, %231 : vector<1x64xf32>
    %cst_94 = arith.constant 1.000000e+00 : f32
    %234 = vector.broadcast %cst_94 : f32 to vector<1x64xf32>
    %235 = arith.divf %234, %233 : vector<1x64xf32>
    %236 = math.tanh %228 : vector<1x64xf32>
    %237 = vector.extract_strided_slice %235 {offsets = [0, 0], sizes = [1, 16], strides = [1, 1]} : vector<1x64xf32> to vector<1x16xf32>
    %238 = vector.extract_strided_slice %235 {offsets = [0, 16], sizes = [1, 16], strides = [1, 1]} : vector<1x64xf32> to vector<1x16xf32>
    %239 = vector.extract_strided_slice %236 {offsets = [0, 32], sizes = [1, 16], strides = [1, 1]} : vector<1x64xf32> to vector<1x16xf32>
    %240 = vector.extract_strided_slice %235 {offsets = [0, 48], sizes = [1, 16], strides = [1, 1]} : vector<1x64xf32> to vector<1x16xf32>
    %241 = arith.mulf %238, %184 : vector<1x16xf32>
    %242 = arith.mulf %237, %239 : vector<1x16xf32>
    %243 = arith.addf %241, %242 : vector<1x16xf32>
    %244 = math.tanh %243 : vector<1x16xf32>
    %245 = arith.mulf %240, %244 : vector<1x16xf32>
    %c8_i32_95 = arith.constant 8 : i32
    %246 = arith.addi %c8_i32_95, %196 : i32
    %c0_96 = arith.constant 0 : index
    %247 = arith.index_cast %246 : i32 to index
    %c0_97 = arith.constant 0 : index
    %248 = vector.load %arg5[%c0_96, %247, %c0_97] : memref<1x16x16xf32, #tpu.memory_space<vmem>>, vector<1x1x16xf32>
    %249 = vector.shape_cast %248 : vector<1x1x16xf32> to vector<1x16xf32>
    %250 = vector.shape_cast %245 : vector<1x16xf32> to vector<1x1x16xf32>
    tpu.vector_store %arg5[%c0_96, %247, %c0_97], %250 {strides = array<i32>} : memref<1x16x16xf32, #tpu.memory_space<vmem>>, vector<1x1x16xf32>,
    %c4_i32 = arith.constant 4 : i32
    %c2_i32_98 = arith.constant 2 : i32
    %251 = arith.muli %c2_i32_98, %arg0 : i32
    %c1_i32_99 = arith.constant 1 : i32
    %252 = arith.subi %c1_i32_99, %251 : i32
    %253 = arith.muli %c4_i32, %252 : i32
    %c7_i32_100 = arith.constant 7 : i32
    %254 = arith.muli %arg0, %c7_i32_100 : i32
    %255 = arith.addi %253, %254 : i32
    %c0_i32_101 = arith.constant 0 : i32
    %256 = arith.addi %c0_i32_101, %255 : i32
    %257 = arith.index_cast %256 : i32 to index
    %c0_102 = arith.constant 0 : index
    %258 = vector.load %arg6[%257, %c0_102] : memref<16x64xf32, #tpu.memory_space<vmem>>, vector<1x64xf32>
    %cst_103 = arith.constant dense<0.000000e+00> : vector<1x64xf32>
    %259 = tpu.matmul %218, %10, %cst_103 {dimension_numbers = #tpu.dot_dimension_numbers<[1], [0], [0], [1], [0, 0, 1, 1], [], []>} : vector<1x16xf32>, vector<16x64xf32>, vector<1x64xf32> -> vector<1x64xf32>
    %260 = arith.addf %258, %259 : vector<1x64xf32>
    %cst_104 = arith.constant 0.000000e+00 : f32
    %261 = vector.broadcast %cst_104 : f32 to vector<1x64xf32>
    %262 = arith.subf %261, %260 : vector<1x64xf32>
    %263 = math.exp %262 : vector<1x64xf32>
    %cst_105 = arith.constant 1.000000e+00 : f32
    %264 = vector.broadcast %cst_105 : f32 to vector<1x64xf32>
    %265 = arith.addf %264, %263 : vector<1x64xf32>
    %cst_106 = arith.constant 1.000000e+00 : f32
    %266 = vector.broadcast %cst_106 : f32 to vector<1x64xf32>
    %267 = arith.divf %266, %265 : vector<1x64xf32>
    %268 = math.tanh %260 : vector<1x64xf32>
    %269 = vector.extract_strided_slice %267 {offsets = [0, 0], sizes = [1, 16], strides = [1, 1]} : vector<1x64xf32> to vector<1x16xf32>
    %270 = vector.extract_strided_slice %267 {offsets = [0, 16], sizes = [1, 16], strides = [1, 1]} : vector<1x64xf32> to vector<1x16xf32>
    %271 = vector.extract_strided_slice %268 {offsets = [0, 32], sizes = [1, 16], strides = [1, 1]} : vector<1x64xf32> to vector<1x16xf32>
    %272 = vector.extract_strided_slice %267 {offsets = [0, 48], sizes = [1, 16], strides = [1, 1]} : vector<1x64xf32> to vector<1x16xf32>
    %273 = arith.mulf %270, %216 : vector<1x16xf32>
    %274 = arith.mulf %269, %271 : vector<1x16xf32>
    %275 = arith.addf %273, %274 : vector<1x16xf32>
    %276 = math.tanh %275 : vector<1x16xf32>
    %277 = arith.mulf %272, %276 : vector<1x16xf32>
    %c0_i32_107 = arith.constant 0 : i32
    %278 = arith.addi %c0_i32_107, %255 : i32
    %c0_108 = arith.constant 0 : index
    %279 = arith.index_cast %278 : i32 to index
    %c0_109 = arith.constant 0 : index
    %280 = vector.load %arg5[%c0_108, %279, %c0_109] : memref<1x16x16xf32, #tpu.memory_space<vmem>>, vector<1x1x16xf32>
    %281 = vector.shape_cast %280 : vector<1x1x16xf32> to vector<1x16xf32>
    %282 = vector.shape_cast %277 : vector<1x16xf32> to vector<1x1x16xf32>
    tpu.vector_store %arg5[%c0_108, %279, %c0_109], %282 {strides = array<i32>} : memref<1x16x16xf32, #tpu.memory_space<vmem>>, vector<1x1x16xf32>,
    %c8_i32_110 = arith.constant 8 : i32
    %283 = arith.addi %c8_i32_110, %255 : i32
    %284 = arith.index_cast %283 : i32 to index
    %c0_111 = arith.constant 0 : index
    %285 = vector.load %arg6[%284, %c0_111] : memref<16x64xf32, #tpu.memory_space<vmem>>, vector<1x64xf32>
    %cst_112 = arith.constant dense<0.000000e+00> : vector<1x64xf32>
    %286 = tpu.matmul %245, %10, %cst_112 {dimension_numbers = #tpu.dot_dimension_numbers<[1], [0], [0], [1], [0, 0, 1, 1], [], []>} : vector<1x16xf32>, vector<16x64xf32>, vector<1x64xf32> -> vector<1x64xf32>
    %287 = arith.addf %285, %286 : vector<1x64xf32>
    %cst_113 = arith.constant 0.000000e+00 : f32
    %288 = vector.broadcast %cst_113 : f32 to vector<1x64xf32>
    %289 = arith.subf %288, %287 : vector<1x64xf32>
    %290 = math.exp %289 : vector<1x64xf32>
    %cst_114 = arith.constant 1.000000e+00 : f32
    %291 = vector.broadcast %cst_114 : f32 to vector<1x64xf32>
    %292 = arith.addf %291, %290 : vector<1x64xf32>
    %cst_115 = arith.constant 1.000000e+00 : f32
    %293 = vector.broadcast %cst_115 : f32 to vector<1x64xf32>
    %294 = arith.divf %293, %292 : vector<1x64xf32>
    %295 = math.tanh %287 : vector<1x64xf32>
    %296 = vector.extract_strided_slice %294 {offsets = [0, 0], sizes = [1, 16], strides = [1, 1]} : vector<1x64xf32> to vector<1x16xf32>
    %297 = vector.extract_strided_slice %294 {offsets = [0, 16], sizes = [1, 16], strides = [1, 1]} : vector<1x64xf32> to vector<1x16xf32>
    %298 = vector.extract_strided_slice %295 {offsets = [0, 32], sizes = [1, 16], strides = [1, 1]} : vector<1x64xf32> to vector<1x16xf32>
    %299 = vector.extract_strided_slice %294 {offsets = [0, 48], sizes = [1, 16], strides = [1, 1]} : vector<1x64xf32> to vector<1x16xf32>
    %300 = arith.mulf %297, %243 : vector<1x16xf32>
    %301 = arith.mulf %296, %298 : vector<1x16xf32>
    %302 = arith.addf %300, %301 : vector<1x16xf32>
    %303 = math.tanh %302 : vector<1x16xf32>
    %304 = arith.mulf %299, %303 : vector<1x16xf32>
    %c8_i32_116 = arith.constant 8 : i32
    %305 = arith.addi %c8_i32_116, %255 : i32
    %c0_117 = arith.constant 0 : index
    %306 = arith.index_cast %305 : i32 to index
    %c0_118 = arith.constant 0 : index
    %307 = vector.load %arg5[%c0_117, %306, %c0_118] : memref<1x16x16xf32, #tpu.memory_space<vmem>>, vector<1x1x16xf32>
    %308 = vector.shape_cast %307 : vector<1x1x16xf32> to vector<1x16xf32>
    %309 = vector.shape_cast %304 : vector<1x16xf32> to vector<1x1x16xf32>
    tpu.vector_store %arg5[%c0_117, %306, %c0_118], %309 {strides = array<i32>} : memref<1x16x16xf32, #tpu.memory_space<vmem>>, vector<1x1x16xf32>,
    %c5_i32 = arith.constant 5 : i32
    %c2_i32_119 = arith.constant 2 : i32
    %310 = arith.muli %c2_i32_119, %arg0 : i32
    %c1_i32_120 = arith.constant 1 : i32
    %311 = arith.subi %c1_i32_120, %310 : i32
    %312 = arith.muli %c5_i32, %311 : i32
    %c7_i32_121 = arith.constant 7 : i32
    %313 = arith.muli %arg0, %c7_i32_121 : i32
    %314 = arith.addi %312, %313 : i32
    %c0_i32_122 = arith.constant 0 : i32
    %315 = arith.addi %c0_i32_122, %314 : i32
    %316 = arith.index_cast %315 : i32 to index
    %c0_123 = arith.constant 0 : index
    %317 = vector.load %arg6[%316, %c0_123] : memref<16x64xf32, #tpu.memory_space<vmem>>, vector<1x64xf32>
    %cst_124 = arith.constant dense<0.000000e+00> : vector<1x64xf32>
    %318 = tpu.matmul %277, %10, %cst_124 {dimension_numbers = #tpu.dot_dimension_numbers<[1], [0], [0], [1], [0, 0, 1, 1], [], []>} : vector<1x16xf32>, vector<16x64xf32>, vector<1x64xf32> -> vector<1x64xf32>
    %319 = arith.addf %317, %318 : vector<1x64xf32>
    %cst_125 = arith.constant 0.000000e+00 : f32
    %320 = vector.broadcast %cst_125 : f32 to vector<1x64xf32>
    %321 = arith.subf %320, %319 : vector<1x64xf32>
    %322 = math.exp %321 : vector<1x64xf32>
    %cst_126 = arith.constant 1.000000e+00 : f32
    %323 = vector.broadcast %cst_126 : f32 to vector<1x64xf32>
    %324 = arith.addf %323, %322 : vector<1x64xf32>
    %cst_127 = arith.constant 1.000000e+00 : f32
    %325 = vector.broadcast %cst_127 : f32 to vector<1x64xf32>
    %326 = arith.divf %325, %324 : vector<1x64xf32>
    %327 = math.tanh %319 : vector<1x64xf32>
    %328 = vector.extract_strided_slice %326 {offsets = [0, 0], sizes = [1, 16], strides = [1, 1]} : vector<1x64xf32> to vector<1x16xf32>
    %329 = vector.extract_strided_slice %326 {offsets = [0, 16], sizes = [1, 16], strides = [1, 1]} : vector<1x64xf32> to vector<1x16xf32>
    %330 = vector.extract_strided_slice %327 {offsets = [0, 32], sizes = [1, 16], strides = [1, 1]} : vector<1x64xf32> to vector<1x16xf32>
    %331 = vector.extract_strided_slice %326 {offsets = [0, 48], sizes = [1, 16], strides = [1, 1]} : vector<1x64xf32> to vector<1x16xf32>
    %332 = arith.mulf %329, %275 : vector<1x16xf32>
    %333 = arith.mulf %328, %330 : vector<1x16xf32>
    %334 = arith.addf %332, %333 : vector<1x16xf32>
    %335 = math.tanh %334 : vector<1x16xf32>
    %336 = arith.mulf %331, %335 : vector<1x16xf32>
    %c0_i32_128 = arith.constant 0 : i32
    %337 = arith.addi %c0_i32_128, %314 : i32
    %c0_129 = arith.constant 0 : index
    %338 = arith.index_cast %337 : i32 to index
    %c0_130 = arith.constant 0 : index
    %339 = vector.load %arg5[%c0_129, %338, %c0_130] : memref<1x16x16xf32, #tpu.memory_space<vmem>>, vector<1x1x16xf32>
    %340 = vector.shape_cast %339 : vector<1x1x16xf32> to vector<1x16xf32>
    %341 = vector.shape_cast %336 : vector<1x16xf32> to vector<1x1x16xf32>
    tpu.vector_store %arg5[%c0_129, %338, %c0_130], %341 {strides = array<i32>} : memref<1x16x16xf32, #tpu.memory_space<vmem>>, vector<1x1x16xf32>,
    %c8_i32_131 = arith.constant 8 : i32
    %342 = arith.addi %c8_i32_131, %314 : i32
    %343 = arith.index_cast %342 : i32 to index
    %c0_132 = arith.constant 0 : index
    %344 = vector.load %arg6[%343, %c0_132] : memref<16x64xf32, #tpu.memory_space<vmem>>, vector<1x64xf32>
    %cst_133 = arith.constant dense<0.000000e+00> : vector<1x64xf32>
    %345 = tpu.matmul %304, %10, %cst_133 {dimension_numbers = #tpu.dot_dimension_numbers<[1], [0], [0], [1], [0, 0, 1, 1], [], []>} : vector<1x16xf32>, vector<16x64xf32>, vector<1x64xf32> -> vector<1x64xf32>
    %346 = arith.addf %344, %345 : vector<1x64xf32>
    %cst_134 = arith.constant 0.000000e+00 : f32
    %347 = vector.broadcast %cst_134 : f32 to vector<1x64xf32>
    %348 = arith.subf %347, %346 : vector<1x64xf32>
    %349 = math.exp %348 : vector<1x64xf32>
    %cst_135 = arith.constant 1.000000e+00 : f32
    %350 = vector.broadcast %cst_135 : f32 to vector<1x64xf32>
    %351 = arith.addf %350, %349 : vector<1x64xf32>
    %cst_136 = arith.constant 1.000000e+00 : f32
    %352 = vector.broadcast %cst_136 : f32 to vector<1x64xf32>
    %353 = arith.divf %352, %351 : vector<1x64xf32>
    %354 = math.tanh %346 : vector<1x64xf32>
    %355 = vector.extract_strided_slice %353 {offsets = [0, 0], sizes = [1, 16], strides = [1, 1]} : vector<1x64xf32> to vector<1x16xf32>
    %356 = vector.extract_strided_slice %353 {offsets = [0, 16], sizes = [1, 16], strides = [1, 1]} : vector<1x64xf32> to vector<1x16xf32>
    %357 = vector.extract_strided_slice %354 {offsets = [0, 32], sizes = [1, 16], strides = [1, 1]} : vector<1x64xf32> to vector<1x16xf32>
    %358 = vector.extract_strided_slice %353 {offsets = [0, 48], sizes = [1, 16], strides = [1, 1]} : vector<1x64xf32> to vector<1x16xf32>
    %359 = arith.mulf %356, %302 : vector<1x16xf32>
    %360 = arith.mulf %355, %357 : vector<1x16xf32>
    %361 = arith.addf %359, %360 : vector<1x16xf32>
    %362 = math.tanh %361 : vector<1x16xf32>
    %363 = arith.mulf %358, %362 : vector<1x16xf32>
    %c8_i32_137 = arith.constant 8 : i32
    %364 = arith.addi %c8_i32_137, %314 : i32
    %c0_138 = arith.constant 0 : index
    %365 = arith.index_cast %364 : i32 to index
    %c0_139 = arith.constant 0 : index
    %366 = vector.load %arg5[%c0_138, %365, %c0_139] : memref<1x16x16xf32, #tpu.memory_space<vmem>>, vector<1x1x16xf32>
    %367 = vector.shape_cast %366 : vector<1x1x16xf32> to vector<1x16xf32>
    %368 = vector.shape_cast %363 : vector<1x16xf32> to vector<1x1x16xf32>
    tpu.vector_store %arg5[%c0_138, %365, %c0_139], %368 {strides = array<i32>} : memref<1x16x16xf32, #tpu.memory_space<vmem>>, vector<1x1x16xf32>,
    %c6_i32 = arith.constant 6 : i32
    %c2_i32_140 = arith.constant 2 : i32
    %369 = arith.muli %c2_i32_140, %arg0 : i32
    %c1_i32_141 = arith.constant 1 : i32
    %370 = arith.subi %c1_i32_141, %369 : i32
    %371 = arith.muli %c6_i32, %370 : i32
    %c7_i32_142 = arith.constant 7 : i32
    %372 = arith.muli %arg0, %c7_i32_142 : i32
    %373 = arith.addi %371, %372 : i32
    %c0_i32_143 = arith.constant 0 : i32
    %374 = arith.addi %c0_i32_143, %373 : i32
    %375 = arith.index_cast %374 : i32 to index
    %c0_144 = arith.constant 0 : index
    %376 = vector.load %arg6[%375, %c0_144] : memref<16x64xf32, #tpu.memory_space<vmem>>, vector<1x64xf32>
    %cst_145 = arith.constant dense<0.000000e+00> : vector<1x64xf32>
    %377 = tpu.matmul %336, %10, %cst_145 {dimension_numbers = #tpu.dot_dimension_numbers<[1], [0], [0], [1], [0, 0, 1, 1], [], []>} : vector<1x16xf32>, vector<16x64xf32>, vector<1x64xf32> -> vector<1x64xf32>
    %378 = arith.addf %376, %377 : vector<1x64xf32>
    %cst_146 = arith.constant 0.000000e+00 : f32
    %379 = vector.broadcast %cst_146 : f32 to vector<1x64xf32>
    %380 = arith.subf %379, %378 : vector<1x64xf32>
    %381 = math.exp %380 : vector<1x64xf32>
    %cst_147 = arith.constant 1.000000e+00 : f32
    %382 = vector.broadcast %cst_147 : f32 to vector<1x64xf32>
    %383 = arith.addf %382, %381 : vector<1x64xf32>
    %cst_148 = arith.constant 1.000000e+00 : f32
    %384 = vector.broadcast %cst_148 : f32 to vector<1x64xf32>
    %385 = arith.divf %384, %383 : vector<1x64xf32>
    %386 = math.tanh %378 : vector<1x64xf32>
    %387 = vector.extract_strided_slice %385 {offsets = [0, 0], sizes = [1, 16], strides = [1, 1]} : vector<1x64xf32> to vector<1x16xf32>
    %388 = vector.extract_strided_slice %385 {offsets = [0, 16], sizes = [1, 16], strides = [1, 1]} : vector<1x64xf32> to vector<1x16xf32>
    %389 = vector.extract_strided_slice %386 {offsets = [0, 32], sizes = [1, 16], strides = [1, 1]} : vector<1x64xf32> to vector<1x16xf32>
    %390 = vector.extract_strided_slice %385 {offsets = [0, 48], sizes = [1, 16], strides = [1, 1]} : vector<1x64xf32> to vector<1x16xf32>
    %391 = arith.mulf %388, %334 : vector<1x16xf32>
    %392 = arith.mulf %387, %389 : vector<1x16xf32>
    %393 = arith.addf %391, %392 : vector<1x16xf32>
    %394 = math.tanh %393 : vector<1x16xf32>
    %395 = arith.mulf %390, %394 : vector<1x16xf32>
    %c0_i32_149 = arith.constant 0 : i32
    %396 = arith.addi %c0_i32_149, %373 : i32
    %c0_150 = arith.constant 0 : index
    %397 = arith.index_cast %396 : i32 to index
    %c0_151 = arith.constant 0 : index
    %398 = vector.load %arg5[%c0_150, %397, %c0_151] : memref<1x16x16xf32, #tpu.memory_space<vmem>>, vector<1x1x16xf32>
    %399 = vector.shape_cast %398 : vector<1x1x16xf32> to vector<1x16xf32>
    %400 = vector.shape_cast %395 : vector<1x16xf32> to vector<1x1x16xf32>
    tpu.vector_store %arg5[%c0_150, %397, %c0_151], %400 {strides = array<i32>} : memref<1x16x16xf32, #tpu.memory_space<vmem>>, vector<1x1x16xf32>,
    %c8_i32_152 = arith.constant 8 : i32
    %401 = arith.addi %c8_i32_152, %373 : i32
    %402 = arith.index_cast %401 : i32 to index
    %c0_153 = arith.constant 0 : index
    %403 = vector.load %arg6[%402, %c0_153] : memref<16x64xf32, #tpu.memory_space<vmem>>, vector<1x64xf32>
    %cst_154 = arith.constant dense<0.000000e+00> : vector<1x64xf32>
    %404 = tpu.matmul %363, %10, %cst_154 {dimension_numbers = #tpu.dot_dimension_numbers<[1], [0], [0], [1], [0, 0, 1, 1], [], []>} : vector<1x16xf32>, vector<16x64xf32>, vector<1x64xf32> -> vector<1x64xf32>
    %405 = arith.addf %403, %404 : vector<1x64xf32>
    %cst_155 = arith.constant 0.000000e+00 : f32
    %406 = vector.broadcast %cst_155 : f32 to vector<1x64xf32>
    %407 = arith.subf %406, %405 : vector<1x64xf32>
    %408 = math.exp %407 : vector<1x64xf32>
    %cst_156 = arith.constant 1.000000e+00 : f32
    %409 = vector.broadcast %cst_156 : f32 to vector<1x64xf32>
    %410 = arith.addf %409, %408 : vector<1x64xf32>
    %cst_157 = arith.constant 1.000000e+00 : f32
    %411 = vector.broadcast %cst_157 : f32 to vector<1x64xf32>
    %412 = arith.divf %411, %410 : vector<1x64xf32>
    %413 = math.tanh %405 : vector<1x64xf32>
    %414 = vector.extract_strided_slice %412 {offsets = [0, 0], sizes = [1, 16], strides = [1, 1]} : vector<1x64xf32> to vector<1x16xf32>
    %415 = vector.extract_strided_slice %412 {offsets = [0, 16], sizes = [1, 16], strides = [1, 1]} : vector<1x64xf32> to vector<1x16xf32>
    %416 = vector.extract_strided_slice %413 {offsets = [0, 32], sizes = [1, 16], strides = [1, 1]} : vector<1x64xf32> to vector<1x16xf32>
    %417 = vector.extract_strided_slice %412 {offsets = [0, 48], sizes = [1, 16], strides = [1, 1]} : vector<1x64xf32> to vector<1x16xf32>
    %418 = arith.mulf %415, %361 : vector<1x16xf32>
    %419 = arith.mulf %414, %416 : vector<1x16xf32>
    %420 = arith.addf %418, %419 : vector<1x16xf32>
    %421 = math.tanh %420 : vector<1x16xf32>
    %422 = arith.mulf %417, %421 : vector<1x16xf32>
    %c8_i32_158 = arith.constant 8 : i32
    %423 = arith.addi %c8_i32_158, %373 : i32
    %c0_159 = arith.constant 0 : index
    %424 = arith.index_cast %423 : i32 to index
    %c0_160 = arith.constant 0 : index
    %425 = vector.load %arg5[%c0_159, %424, %c0_160] : memref<1x16x16xf32, #tpu.memory_space<vmem>>, vector<1x1x16xf32>
    %426 = vector.shape_cast %425 : vector<1x1x16xf32> to vector<1x16xf32>
    %427 = vector.shape_cast %422 : vector<1x16xf32> to vector<1x1x16xf32>
    tpu.vector_store %arg5[%c0_159, %424, %c0_160], %427 {strides = array<i32>} : memref<1x16x16xf32, #tpu.memory_space<vmem>>, vector<1x1x16xf32>,
    %c7_i32_161 = arith.constant 7 : i32
    %c2_i32_162 = arith.constant 2 : i32
    %428 = arith.muli %c2_i32_162, %arg0 : i32
    %c1_i32_163 = arith.constant 1 : i32
    %429 = arith.subi %c1_i32_163, %428 : i32
    %430 = arith.muli %c7_i32_161, %429 : i32
    %c7_i32_164 = arith.constant 7 : i32
    %431 = arith.muli %arg0, %c7_i32_164 : i32
    %432 = arith.addi %430, %431 : i32
    %c0_i32_165 = arith.constant 0 : i32
    %433 = arith.addi %c0_i32_165, %432 : i32
    %434 = arith.index_cast %433 : i32 to index
    %c0_166 = arith.constant 0 : index
    %435 = vector.load %arg6[%434, %c0_166] : memref<16x64xf32, #tpu.memory_space<vmem>>, vector<1x64xf32>
    %cst_167 = arith.constant dense<0.000000e+00> : vector<1x64xf32>
    %436 = tpu.matmul %395, %10, %cst_167 {dimension_numbers = #tpu.dot_dimension_numbers<[1], [0], [0], [1], [0, 0, 1, 1], [], []>} : vector<1x16xf32>, vector<16x64xf32>, vector<1x64xf32> -> vector<1x64xf32>
    %437 = arith.addf %435, %436 : vector<1x64xf32>
    %cst_168 = arith.constant 0.000000e+00 : f32
    %438 = vector.broadcast %cst_168 : f32 to vector<1x64xf32>
    %439 = arith.subf %438, %437 : vector<1x64xf32>
    %440 = math.exp %439 : vector<1x64xf32>
    %cst_169 = arith.constant 1.000000e+00 : f32
    %441 = vector.broadcast %cst_169 : f32 to vector<1x64xf32>
    %442 = arith.addf %441, %440 : vector<1x64xf32>
    %cst_170 = arith.constant 1.000000e+00 : f32
    %443 = vector.broadcast %cst_170 : f32 to vector<1x64xf32>
    %444 = arith.divf %443, %442 : vector<1x64xf32>
    %445 = math.tanh %437 : vector<1x64xf32>
    %446 = vector.extract_strided_slice %444 {offsets = [0, 0], sizes = [1, 16], strides = [1, 1]} : vector<1x64xf32> to vector<1x16xf32>
    %447 = vector.extract_strided_slice %444 {offsets = [0, 16], sizes = [1, 16], strides = [1, 1]} : vector<1x64xf32> to vector<1x16xf32>
    %448 = vector.extract_strided_slice %445 {offsets = [0, 32], sizes = [1, 16], strides = [1, 1]} : vector<1x64xf32> to vector<1x16xf32>
    %449 = vector.extract_strided_slice %444 {offsets = [0, 48], sizes = [1, 16], strides = [1, 1]} : vector<1x64xf32> to vector<1x16xf32>
    %450 = arith.mulf %447, %393 : vector<1x16xf32>
    %451 = arith.mulf %446, %448 : vector<1x16xf32>
    %452 = arith.addf %450, %451 : vector<1x16xf32>
    %453 = math.tanh %452 : vector<1x16xf32>
    %454 = arith.mulf %449, %453 : vector<1x16xf32>
    %c0_i32_171 = arith.constant 0 : i32
    %455 = arith.addi %c0_i32_171, %432 : i32
    %c0_172 = arith.constant 0 : index
    %456 = arith.index_cast %455 : i32 to index
    %c0_173 = arith.constant 0 : index
    %457 = vector.load %arg5[%c0_172, %456, %c0_173] : memref<1x16x16xf32, #tpu.memory_space<vmem>>, vector<1x1x16xf32>
    %458 = vector.shape_cast %457 : vector<1x1x16xf32> to vector<1x16xf32>
    %459 = vector.shape_cast %454 : vector<1x16xf32> to vector<1x1x16xf32>
    tpu.vector_store %arg5[%c0_172, %456, %c0_173], %459 {strides = array<i32>} : memref<1x16x16xf32, #tpu.memory_space<vmem>>, vector<1x1x16xf32>,
    %c8_i32_174 = arith.constant 8 : i32
    %460 = arith.addi %c8_i32_174, %432 : i32
    %461 = arith.index_cast %460 : i32 to index
    %c0_175 = arith.constant 0 : index
    %462 = vector.load %arg6[%461, %c0_175] : memref<16x64xf32, #tpu.memory_space<vmem>>, vector<1x64xf32>
    %cst_176 = arith.constant dense<0.000000e+00> : vector<1x64xf32>
    %463 = tpu.matmul %422, %10, %cst_176 {dimension_numbers = #tpu.dot_dimension_numbers<[1], [0], [0], [1], [0, 0, 1, 1], [], []>} : vector<1x16xf32>, vector<16x64xf32>, vector<1x64xf32> -> vector<1x64xf32>
    %464 = arith.addf %462, %463 : vector<1x64xf32>
    %cst_177 = arith.constant 0.000000e+00 : f32
    %465 = vector.broadcast %cst_177 : f32 to vector<1x64xf32>
    %466 = arith.subf %465, %464 : vector<1x64xf32>
    %467 = math.exp %466 : vector<1x64xf32>
    %cst_178 = arith.constant 1.000000e+00 : f32
    %468 = vector.broadcast %cst_178 : f32 to vector<1x64xf32>
    %469 = arith.addf %468, %467 : vector<1x64xf32>
    %cst_179 = arith.constant 1.000000e+00 : f32
    %470 = vector.broadcast %cst_179 : f32 to vector<1x64xf32>
    %471 = arith.divf %470, %469 : vector<1x64xf32>
    %472 = math.tanh %464 : vector<1x64xf32>
    %473 = vector.extract_strided_slice %471 {offsets = [0, 0], sizes = [1, 16], strides = [1, 1]} : vector<1x64xf32> to vector<1x16xf32>
    %474 = vector.extract_strided_slice %471 {offsets = [0, 16], sizes = [1, 16], strides = [1, 1]} : vector<1x64xf32> to vector<1x16xf32>
    %475 = vector.extract_strided_slice %472 {offsets = [0, 32], sizes = [1, 16], strides = [1, 1]} : vector<1x64xf32> to vector<1x16xf32>
    %476 = vector.extract_strided_slice %471 {offsets = [0, 48], sizes = [1, 16], strides = [1, 1]} : vector<1x64xf32> to vector<1x16xf32>
    %477 = arith.mulf %474, %420 : vector<1x16xf32>
    %478 = arith.mulf %473, %475 : vector<1x16xf32>
    %479 = arith.addf %477, %478 : vector<1x16xf32>
    %480 = math.tanh %479 : vector<1x16xf32>
    %481 = arith.mulf %476, %480 : vector<1x16xf32>
    %c8_i32_180 = arith.constant 8 : i32
    %482 = arith.addi %c8_i32_180, %432 : i32
    %c0_181 = arith.constant 0 : index
    %483 = arith.index_cast %482 : i32 to index
    %c0_182 = arith.constant 0 : index
    %484 = vector.load %arg5[%c0_181, %483, %c0_182] : memref<1x16x16xf32, #tpu.memory_space<vmem>>, vector<1x1x16xf32>
    %485 = vector.shape_cast %484 : vector<1x1x16xf32> to vector<1x16xf32>
    %486 = vector.shape_cast %481 : vector<1x16xf32> to vector<1x1x16xf32>
    tpu.vector_store %arg5[%c0_181, %483, %c0_182], %486 {strides = array<i32>} : memref<1x16x16xf32, #tpu.memory_space<vmem>>, vector<1x1x16xf32>,
    %c8_i32_183 = arith.constant 8 : i32
    return
  }
  func.func @transform_0(%arg0: i32) -> (i32, i32) {
    %c0_i32 = arith.constant 0 : i32
    %c0_i32_0 = arith.constant 0 : i32
    %c0_i32_1 = arith.constant 0 : i32
    return %c0_i32, %c0_i32_0 : i32, i32
  }
  func.func @transform_1(%arg0: i32) -> (i32, i32, i32) {
    %c0_i32 = arith.constant 0 : i32
    %c0_i32_0 = arith.constant 0 : i32
    %c0_i32_1 = arith.constant 0 : i32
    return %arg0, %c0_i32, %c0_i32_0 : i32, i32, i32
  }
  func.func @transform_2(%arg0: i32) -> (i32, i32, i32) {
    %c0_i32 = arith.constant 0 : i32
    %c0_i32_0 = arith.constant 0 : i32
    %c0_i32_1 = arith.constant 0 : i32
    return %arg0, %c0_i32, %c0_i32_0 : i32, i32, i32
  }
  func.func @transform_3(%arg0: i32) -> (i32, i32, i32) {
    %c0_i32 = arith.constant 0 : i32
    %c0_i32_0 = arith.constant 0 : i32
    %c0_i32_1 = arith.constant 0 : i32
    return %arg0, %c0_i32, %c0_i32_0 : i32, i32, i32
  }
  func.func @transform_4(%arg0: i32) -> (i32, i32, i32) {
    %c0_i32 = arith.constant 0 : i32
    %c0_i32_0 = arith.constant 0 : i32
    %c0_i32_1 = arith.constant 0 : i32
    return %arg0, %c0_i32, %c0_i32_0 : i32, i32, i32
  }
}

module attributes {stable_mosaic.version = 11 : i64} {
  func.func @kernel(%arg0: i32, %arg1: memref<2x32xf32, #tpu.memory_space<vmem>>, %arg2: memref<32x3xf32, #tpu.memory_space<vmem>>, %arg3: memref<1x3xf32, #tpu.memory_space<vmem>>, %arg4: memref<2x3xf32, #tpu.memory_space<vmem>>) attributes {dimension_semantics = [#tpu.dimension_semantics<arbitrary>], iteration_bounds = array<i64: 1>, scalar_prefetch = 0 : i64, scratch_operands = 0 : i64, tpu.core_type = #tpu.core_type<tc>, window_params = [{pipeline_mode = #tpu.pipeline_mode<synchronous>, transform_indices = @transform_0, window_bounds = array<i64: 2, 32>}, {pipeline_mode = #tpu.pipeline_mode<synchronous>, transform_indices = @transform_1, window_bounds = array<i64: 32, 3>}, {pipeline_mode = #tpu.pipeline_mode<synchronous>, transform_indices = @transform_2, window_bounds = array<i64: 1, 3>}, {pipeline_mode = #tpu.pipeline_mode<synchronous>, transform_indices = @transform_3, window_bounds = array<i64: 2, 3>}]} {
    %c0 = arith.constant 0 : index
    %c0_0 = arith.constant 0 : index
    %0 = vector.load %arg1[%c0, %c0_0] : memref<2x32xf32, #tpu.memory_space<vmem>>, vector<2x32xf32>
    %c0_1 = arith.constant 0 : index
    %c0_2 = arith.constant 0 : index
    %1 = vector.load %arg2[%c0_1, %c0_2] : memref<32x3xf32, #tpu.memory_space<vmem>>, vector<32x3xf32>
    %cst = arith.constant dense<0.000000e+00> : vector<2x3xf32>
    %2 = tpu.matmul %0, %1, %cst {dimension_numbers = #tpu.dot_dimension_numbers<[1], [0], [0], [1], [0, 0, 1, 1], [], []>} : vector<2x32xf32>, vector<32x3xf32>, vector<2x3xf32> -> vector<2x3xf32>
    %c0_3 = arith.constant 0 : index
    %c0_4 = arith.constant 0 : index
    %3 = vector.load %arg3[%c0_3, %c0_4] : memref<1x3xf32, #tpu.memory_space<vmem>>, vector<1x3xf32>
    %4 = vector.broadcast %3 : vector<1x3xf32> to vector<2x3xf32>
    %5 = arith.addf %2, %4 : vector<2x3xf32>
    %cst_5 = arith.constant dense<0xFF800000> : vector<2xf32>
    %6 = vector.multi_reduction <maximumf>, %5, %cst_5 [1] : vector<2x3xf32> to vector<2xf32>
    %7 = vector.shape_cast %6 : vector<2xf32> to vector<2x1xf32>
    %8 = vector.broadcast %7 : vector<2x1xf32> to vector<2x3xf32>
    %9 = arith.subf %5, %8 : vector<2x3xf32>
    %10 = math.exp %9 : vector<2x3xf32>
    %cst_6 = arith.constant dense<0.000000e+00> : vector<2xf32>
    %11 = vector.multi_reduction <add>, %10, %cst_6 [1] : vector<2x3xf32> to vector<2xf32>
    %12 = vector.shape_cast %11 : vector<2xf32> to vector<2x1xf32>
    %13 = vector.broadcast %12 : vector<2x1xf32> to vector<2x3xf32>
    %14 = arith.divf %10, %13 : vector<2x3xf32>
    %c0_7 = arith.constant 0 : index
    %c0_8 = arith.constant 0 : index
    %15 = vector.load %arg4[%c0_7, %c0_8] : memref<2x3xf32, #tpu.memory_space<vmem>>, vector<2x3xf32>
    tpu.vector_store %arg4[%c0_7, %c0_8], %14 {strides = array<i32>} : memref<2x3xf32, #tpu.memory_space<vmem>>, vector<2x3xf32>,
    return
  }
  func.func @transform_0(%arg0: i32) -> (i32, i32) {
    %c0_i32 = arith.constant 0 : i32
    %c0_i32_0 = arith.constant 0 : i32
    %c0_i32_1 = arith.constant 0 : i32
    return %c0_i32, %c0_i32_0 : i32, i32
  }
  func.func @transform_1(%arg0: i32) -> (i32, i32) {
    %c0_i32 = arith.constant 0 : i32
    %c0_i32_0 = arith.constant 0 : i32
    %c0_i32_1 = arith.constant 0 : i32
    return %c0_i32, %c0_i32_0 : i32, i32
  }
  func.func @transform_2(%arg0: i32) -> (i32, i32) {
    %c0_i32 = arith.constant 0 : i32
    %c0_i32_0 = arith.constant 0 : i32
    %c0_i32_1 = arith.constant 0 : i32
    return %c0_i32, %c0_i32_0 : i32, i32
  }
  func.func @transform_3(%arg0: i32) -> (i32, i32) {
    %c0_i32 = arith.constant 0 : i32
    %c0_i32_0 = arith.constant 0 : i32
    %c0_i32_1 = arith.constant 0 : i32
    return %c0_i32, %c0_i32_0 : i32, i32
  }
}

</mosaic_0001>

<llo_original>
// kernel: model_forward.9
$region0: #{model_forward.9}
  #allocation0 [shape = 'u32[]', space=smem, size = 0x4, offset = 0x4, fixed_abs, tag = 'smem constant byte address 0x4 - core index']
  #allocation1 [shape = 'u32[144,128]{1,0:T(1,128)}', space=vmem, size = 0x12000, scoped, tag = 'internal scratch']
  %s0 = inlined_call_operand.vmem [shape: f32[2,32], index: 0, kind: input, shape index: {}]
  %s1 = inlined_call_operand.vmem [shape: f32[32,3], index: 1, kind: input, shape index: {}]
  %s2 = inlined_call_operand.vmem [shape: f32[1,3], index: 2, kind: input, shape index: {}]
  %s3 = inlined_call_operand.hbm [shape: f32[2,3], index: 3, kind: output, shape index: {}]
  %s4 = sld [smem:[#allocation0]]
  $region22: #{model_forward.9} parent=0
    _
  %s6 = ssub.s32 1, %s4
  %s7 = scalar_select 0, %s6, %s4
  $region1: #{model_forward.9} parent=0
    #allocation2 [shape = 'u8[1024]{0}', space=vmem, size = 0x400, scoped, tag = 'output window, operand 0, single buffered']
    #allocation3 [shape = 's32[1]{0}', space=sflag, size = 0x4, scoped, tag = 'scoped memory for model_forward.9']
    %8 = vsyncpa [#allocation3], 0
    // Predicated region
    $region2: #{model_forward.9} parent=1 // pred_check
      _
    $region3: #{model_forward.9} parent=1 // pred_check_branch
      %10 = sbr.rel (0) target = $region5
    $region4: #{model_forward.9} parent=1 // pred_region
      _
    $region5: #{model_forward.9} parent=1 // pred_fallthru
      _
    // Predicated region
    $region6: #{model_forward.9} parent=1 // pred_check
      _
    $region7: #{model_forward.9} parent=1 // pred_check_branch
      %12 = sbr.rel (0) target = $region9
    $region8: #{model_forward.9} parent=1 // pred_region
      _
    $region9: #{model_forward.9} parent=1 // pred_fallthru
      _
    // Predicated region
    $region10: #{model_forward.9} parent=1 // pred_check
      _
    $region11: #{model_forward.9} parent=1 // pred_check_branch
      %14 = sbr.rel (0) target = $region13
    $region12: #{model_forward.9} parent=1 // pred_region
      _
    $region13: #{model_forward.9} parent=1 // pred_fallthru
      _
    %v15 = vld [vmem:[%s0] sm:$0x3]
    %v16 = vld [vmem:[%s1] sm:$0xff]
    %v17 = vld [vmem:[%s1 + $0x8] sm:$0xff]
    %v18 = vld [vmem:[%s1 + $0x10] sm:$0xff]
    %v19 = vld [vmem:[%s1 + $0x18] sm:$0xff]
    %v20 = vld [vmem:[%s2] sm:$0x1]
    %v22 = vlaneseq
    %v23 = vshrl.u32 %v22, 7
    %v24 = vsub.s32 0, %v23
    %v25 = vrot.slane %v20, %v24
    %vm27 = vcmask 261120
    %v29 = vsel %vm27, %v15, 0
    %31 = vmatprep.subr.mxu0 0.0
    %32 = vmatpush1.msra.mxu0 %v16
    %33 = vmatprep.subr.mxu0 0.0
    %34 = vmatpush1.msra.mxu0 %v17
    %35 = vmatprep.subr.mxu0 0.0
    %36 = vmatpush1.msra.mxu0 %v18
    %37 = vmatprep.subr.mxu0 0.0
    %38 = vmatpush1.msra.mxu0 %v19
    %39 = vmatprep.subr.mxu0 0.0
    %40 = vmatpush1.msra.mxu0 0.0
    %41 = vmatprep.subr.mxu0 0.0
    %42 = vmatpush1.msra.mxu0 0.0
    %43 = vmatprep.subr.mxu0 0.0
    %44 = vmatpush1.msra.mxu0 0.0
    %45 = vmatprep.subr.mxu0 0.0
    %46 = vmatpush1.msra.mxu0 0.0
    %47 = vmatprep.subr.mxu0 0.0
    %48 = vmatpush1.msra.mxu0 0.0
    %49 = vmatprep.subr.mxu0 0.0
    %50 = vmatpush1.msra.mxu0 0.0
    %51 = vmatprep.subr.mxu0 0.0
    %52 = vmatpush1.msra.mxu0 0.0
    %53 = vmatprep.subr.mxu0 0.0
    %54 = vmatpush1.msra.mxu0 0.0
    %55 = vmatprep.subr.mxu0 0.0
    %56 = vmatpush1.msra.mxu0 0.0
    %57 = vmatprep.subr.mxu0 0.0
    %58 = vmatpush1.msra.mxu0 0.0
    %59 = vmatprep.subr.mxu0 0.0
    %60 = vmatpush1.msra.mxu0 0.0
    %61 = vmatprep.subr.mxu0 0.0
    %62 = vmatpush1.msra.mxu0 0.0
    %63 = vmatprep.subr.mxu0 0.0
    %64 = vmatpush1.msra.mxu0 0.0
    %65 = vmatprep.subr.mxu0 0.0
    %66 = vmatpush1.msra.mxu0 0.0
    %67 = vmatprep.subr.mxu0 0.0
    %68 = vmatpush1.msra.mxu0 0.0
    %69 = vmatprep.subr.mxu0 0.0
    %70 = vmatpush1.msra.mxu0 0.0
    %71 = vmatprep.subr.mxu0 0.0
    %72 = vmatpush1.msra.mxu0 0.0
    %73 = vmatprep.subr.mxu0 0.0
    %74 = vmatpush1.msra.mxu0 0.0
    %75 = vmatprep.subr.mxu0 0.0
    %76 = vmatpush1.msra.mxu0 0.0
    %77 = vmatprep.subr.mxu0 0.0
    %78 = vmatpush1.msra.mxu0 0.0
    %79 = vmatprep.subr.mxu0 0.0
    %80 = vmatpush1.msra.mxu0 0.0
    %81 = vmatprep.subr.mxu0 0.0
    %82 = vmatpush1.msra.mxu0 0.0
    %83 = vmatprep.subr.mxu0 0.0
    %84 = vmatpush1.msra.mxu0 0.0
    %85 = vmatprep.subr.mxu0 0.0
    %86 = vmatpush1.msra.mxu0 0.0
    %87 = vmatprep.subr.mxu0 0.0
    %88 = vmatpush1.msra.mxu0 0.0
    %89 = vmatprep.subr.mxu0 0.0
    %90 = vmatpush1.msra.mxu0 0.0
    %91 = vmatprep.subr.mxu0 0.0
    %92 = vmatpush1.msra.mxu0 0.0
    %93 = vmatprep.subr.mxu0 0.0
    %94 = vmatpush1.msra.mxu0 0.0
    %95 = vmatprep.mubr.f32.mxu0 0.0
    %96 = vmatmul.mubr.f32.gmra.mrb[0].mxu0 %v29
    %v97 = vpop.f32.mrb[0].mxu0
    %v98 = vadd.f32 %v25, %v97
    %v99 = vpop.f32.mrb[0].mxu0
    %100 = vdwg.mxu0
    %vm101 = vcmask 17408
    %v102 = vsel %vm101, %v98, -inf
    %103 = vmax.xlane.f32.xlu0 %v102
    %v104 = vpop.xlane.xlu0 %103
    %v105 = vsub.f32 %v98, %v104
    %v106 = vmul.f32 %v105, 1.442695
    %v107 = vpow.pop %v106
    %v108 = vsel %vm101, %v107, 0.0
    %109 = vadd.xlane.f32.xlu0 %v108
    %v110 = vpop.xlane.xlu0 %109
    %v111 = vrcp.pop %v110
    %v112 = vmul.f32 %v107, %v111
    %113 = vst.msk [vmem:[#allocation2] sm:$0x3] %vm101, %v112
    // Predicated region
    $region14: #{model_forward.9} parent=1 // pred_check
      _
    $region15: #{model_forward.9} parent=1 // pred_check_branch
      %115 = sbr.rel (0) target = $region17
    $region16: #{model_forward.9} parent=1 // pred_region
      %s117 = ssub.s32 32, 32
      %118 = vsyncadd [#allocation3], %s117
      %s120 = sshll.u32 [#allocation2], 4
      %s121 = int_to_ptr.vmem [resolvable:$true] %s120
      %123 = dma.vmem_to_hbm [thread:$0]  %s121, 32, %s3, [#allocation3]
    $region17: #{model_forward.9} parent=1 // pred_fallthru
      _
    // Predicated region
    $region18: #{model_forward.9} parent=1 // pred_check
      _
    $region19: #{model_forward.9} parent=1 // pred_check_branch
      %125 = sbr.rel (0) target = $region21
    $region20: #{model_forward.9} parent=1 // pred_region
      %126 = dma.done [#allocation3], 32
    $region21: #{model_forward.9} parent=1 // pred_fallthru
      _
    %127 = vsyncpa [#allocation3], 1

// kernel: model_forward.6
$region0: #{model_forward.6}
  #allocation0 [shape = 'u32[]', space=smem, size = 0x4, offset = 0x4, fixed_abs, tag = 'smem constant byte address 0x4 - core index']
  #allocation1 [shape = 'u32[144,128]{1,0:T(1,128)}', space=vmem, size = 0x12000, scoped, tag = 'internal scratch']
  %s0 = inlined_call_operand.vmem [shape: f32[2,8,32], index: 0, kind: input, shape index: {}]
  %s1 = inlined_call_operand.vmem [shape: f32[2,1,8], index: 1, kind: input, shape index: {}]
  %s2 = inlined_call_operand.vmem [shape: f32[32,96], index: 2, kind: input, shape index: {}]
  %s3 = inlined_call_operand.vmem [shape: f32[1,96], index: 3, kind: input, shape index: {}]
  %s4 = inlined_call_operand.vmem [shape: f32[32,32], index: 4, kind: input, shape index: {}]
  %s5 = inlined_call_operand.vmem [shape: f32[1,32], index: 5, kind: input, shape index: {}]
  %s6 = inlined_call_operand.vmem [shape: f32[1,32], index: 6, kind: input, shape index: {}]
  %s7 = inlined_call_operand.vmem [shape: f32[1,32], index: 7, kind: input, shape index: {}]
  %s8 = inlined_call_operand.vmem [shape: f32[1,32], index: 8, kind: input, shape index: {}]
  %s9 = inlined_call_operand.vmem [shape: f32[1,32], index: 9, kind: input, shape index: {}]
  %s10 = inlined_call_operand.vmem [shape: f32[32,64], index: 10, kind: input, shape index: {}]
  %s11 = inlined_call_operand.vmem [shape: f32[1,64], index: 11, kind: input, shape index: {}]
  %s12 = inlined_call_operand.vmem [shape: f32[64,32], index: 12, kind: input, shape index: {}]
  %s13 = inlined_call_operand.vmem [shape: f32[1,32], index: 13, kind: input, shape index: {}]
  %s14 = inlined_call_operand.vmem [shape: f32[1,32], index: 14, kind: input, shape index: {}]
  %s15 = inlined_call_operand.vmem [shape: f32[1,32], index: 15, kind: input, shape index: {}]
  %s16 = inlined_call_operand.vmem [shape: f32[2,8,32], index: 16, kind: output, shape index: {}]
  %s17 = sld [smem:[#allocation0]]
  $region97: #{model_forward.6} parent=0
    _
  %s19 = ssub.s32 1, %s17
  %s20 = scalar_select 0, %s19, %s17
  loop: start=0, step=1, limit=4
  $region2: #{model_forward.6} parent=0 // loop_pre_header
    _
  $region3: #{model_forward.6} parent=0 // loop_header
    %s22 = sphi 0, %s26
    %p23 = scmp.ge.s32.totalorder %s22, 4
    %s32 = sphi 0, %s34
    %s35 = sphi 0, %s32
    %s36 = sphi 0, %s35
    %s52 = sphi 0, %s36
    %s58 = sphi 0, %s60
    %s61 = sphi 0, %s58
    %s62 = sphi 0, %s61
    %s78 = sphi 0, %s62
    %s82 = sphi 0, %s82
    %s84 = sphi 0, %s82
    %s85 = sphi 0, %s84
    %s99 = sphi 0, %s85
    %s103 = sphi 0, %s103
    %s105 = sphi 0, %s103
    %s106 = sphi 0, %s105
    %s120 = sphi 0, %s106
    %s124 = sphi 0, %s124
    %s126 = sphi 0, %s124
    %s127 = sphi 0, %s126
    %s141 = sphi 0, %s127
    %s145 = sphi 0, %s145
    %s147 = sphi 0, %s145
    %s148 = sphi 0, %s147
    %s162 = sphi 0, %s148
    %s166 = sphi 0, %s166
    %s168 = sphi 0, %s166
    %s169 = sphi 0, %s168
    %s183 = sphi 0, %s169
    %s187 = sphi 0, %s187
    %s189 = sphi 0, %s187
    %s190 = sphi 0, %s189
    %s204 = sphi 0, %s190
    %s208 = sphi 0, %s208
    %s210 = sphi 0, %s208
    %s211 = sphi 0, %s210
    %s225 = sphi 0, %s211
    %s229 = sphi 0, %s229
    %s231 = sphi 0, %s229
    %s232 = sphi 0, %s231
    %s246 = sphi 0, %s232
    %s250 = sphi 0, %s250
    %s252 = sphi 0, %s250
    %s253 = sphi 0, %s252
    %s267 = sphi 0, %s253
    %s271 = sphi 0, %s271
    %s273 = sphi 0, %s271
    %s274 = sphi 0, %s273
    %s288 = sphi 0, %s274
    %s292 = sphi 0, %s292
    %s294 = sphi 0, %s292
    %s295 = sphi 0, %s294
    %s309 = sphi 0, %s295
    %s313 = sphi 0, %s313
    %s315 = sphi 0, %s313
    %s316 = sphi 0, %s315
    %s330 = sphi 0, %s316
    %s334 = sphi 0, %s334
    %s336 = sphi 0, %s334
    %s337 = sphi 0, %s336
    %s351 = sphi 0, %s337
    %s355 = sphi 0, %s355
    %s357 = sphi 0, %s355
    %s358 = sphi 0, %s357
    %s372 = sphi 0, %s358
    %s378 = sphi 0, %s380
    %s381 = sphi 0, %s378
    %s382 = sphi 0, %s381
    %s398 = sphi 0, %s382
  $region4: #{model_forward.6} parent=0 // loop_header_branch
    %25 = sbr.rel (%p23) target = $region8
  $region5: #{model_forward.6} parent=0 // loop_body
    %s27 = ssub.s32 %s22, 1
    %s28 = ssub.s32 %s22, 2
    %s29 = sadd.s32 %s22, 1
    %s30 = ssub.s32 %s22, %s29
    %p31 = scmp.eq.s32.totalorder %s30, 0
    %s33 = sadd.s32 %s32, 1
    %s34 = scalar_select %p31, %s32, %s33
    %p37 = pneg %p31
    %p38 = scmp.eq.s32.totalorder %s22, 1
    %p39 = por %p37, %p38
    %p40 = scmp.ne.s32.totalorder %s32, %s35
    %p41 = scmp.eq.s32.totalorder %s22, 0
    %p42 = por %p40, %p41
    %p43 = scmp.ne.s32.totalorder %s32, %s35
    %p44 = scmp.eq.s32.totalorder %s27, 1
    %p45 = por %p43, %p44
    %p46 = scmp.ne.s32.totalorder %s35, %s36
    %p47 = scmp.eq.s32.totalorder %s27, 0
    %p48 = por %p46, %p47
    %p49 = scmp.ne.s32.totalorder %s35, %s36
    %p50 = scmp.eq.s32.totalorder %s28, 1
    %p51 = por %p49, %p50
    %p53 = scmp.ne.s32.totalorder %s36, %s52
    %p54 = scmp.eq.s32.totalorder %s28, 0
    %p55 = por %p53, %p54
    %s56 = ssub.s32 %s22, %s29
    %p57 = scmp.eq.s32.totalorder %s56, 0
    %s59 = sadd.s32 %s58, 1
    %s60 = scalar_select %p57, %s58, %s59
    %p63 = pneg %p57
    %p64 = scmp.eq.s32.totalorder %s22, 1
    %p65 = por %p63, %p64
    %p66 = scmp.ne.s32.totalorder %s58, %s61
    %p67 = scmp.eq.s32.totalorder %s22, 0
    %p68 = por %p66, %p67
    %p69 = scmp.ne.s32.totalorder %s58, %s61
    %p70 = scmp.eq.s32.totalorder %s27, 1
    %p71 = por %p69, %p70
    %p72 = scmp.ne.s32.totalorder %s61, %s62
    %p73 = scmp.eq.s32.totalorder %s27, 0
    %p74 = por %p72, %p73
    %p75 = scmp.ne.s32.totalorder %s61, %s62
    %p76 = scmp.eq.s32.totalorder %s28, 1
    %p77 = por %p75, %p76
    %p79 = scmp.ne.s32.totalorder %s62, %s78
    %p80 = scmp.eq.s32.totalorder %s28, 0
    %p81 = por %p79, %p80
    %s83 = sadd.s32 %s82, 1
    %p86 = scmp.eq.s32.totalorder %s22, 1
    %p87 = scmp.ne.s32.totalorder %s82, %s84
    %p88 = scmp.eq.s32.totalorder %s22, 0
    %p89 = por %p87, %p88
    %p90 = scmp.ne.s32.totalorder %s82, %s84
    %p91 = scmp.eq.s32.totalorder %s27, 1
    %p92 = por %p90, %p91
    %p93 = scmp.ne.s32.totalorder %s84, %s85
    %p94 = scmp.eq.s32.totalorder %s27, 0
    %p95 = por %p93, %p94
    %p96 = scmp.ne.s32.totalorder %s84, %s85
    %p97 = scmp.eq.s32.totalorder %s28, 1
    %p98 = por %p96, %p97
    %p100 = scmp.ne.s32.totalorder %s85, %s99
    %p101 = scmp.eq.s32.totalorder %s28, 0
    %p102 = por %p100, %p101
    %s104 = sadd.s32 %s103, 1
    %p107 = scmp.eq.s32.totalorder %s22, 1
    %p108 = scmp.ne.s32.totalorder %s103, %s105
    %p109 = scmp.eq.s32.totalorder %s22, 0
    %p110 = por %p108, %p109
    %p111 = scmp.ne.s32.totalorder %s103, %s105
    %p112 = scmp.eq.s32.totalorder %s27, 1
    %p113 = por %p111, %p112
    %p114 = scmp.ne.s32.totalorder %s105, %s106
    %p115 = scmp.eq.s32.totalorder %s27, 0
    %p116 = por %p114, %p115
    %p117 = scmp.ne.s32.totalorder %s105, %s106
    %p118 = scmp.eq.s32.totalorder %s28, 1
    %p119 = por %p117, %p118
    %p121 = scmp.ne.s32.totalorder %s106, %s120
    %p122 = scmp.eq.s32.totalorder %s28, 0
    %p123 = por %p121, %p122
    %s125 = sadd.s32 %s124, 1
    %p128 = scmp.eq.s32.totalorder %s22, 1
    %p129 = scmp.ne.s32.totalorder %s124, %s126
    %p130 = scmp.eq.s32.totalorder %s22, 0
    %p131 = por %p129, %p130
    %p132 = scmp.ne.s32.totalorder %s124, %s126
    %p133 = scmp.eq.s32.totalorder %s27, 1
    %p134 = por %p132, %p133
    %p135 = scmp.ne.s32.totalorder %s126, %s127
    %p136 = scmp.eq.s32.totalorder %s27, 0
    %p137 = por %p135, %p136
    %p138 = scmp.ne.s32.totalorder %s126, %s127
    %p139 = scmp.eq.s32.totalorder %s28, 1
    %p140 = por %p138, %p139
    %p142 = scmp.ne.s32.totalorder %s127, %s141
    %p143 = scmp.eq.s32.totalorder %s28, 0
    %p144 = por %p142, %p143
    %s146 = sadd.s32 %s145, 1
    %p149 = scmp.eq.s32.totalorder %s22, 1
    %p150 = scmp.ne.s32.totalorder %s145, %s147
    %p151 = scmp.eq.s32.totalorder %s22, 0
    %p152 = por %p150, %p151
    %p153 = scmp.ne.s32.totalorder %s145, %s147
    %p154 = scmp.eq.s32.totalorder %s27, 1
    %p155 = por %p153, %p154
    %p156 = scmp.ne.s32.totalorder %s147, %s148
    %p157 = scmp.eq.s32.totalorder %s27, 0
    %p158 = por %p156, %p157
    %p159 = scmp.ne.s32.totalorder %s147, %s148
    %p160 = scmp.eq.s32.totalorder %s28, 1
    %p161 = por %p159, %p160
    %p163 = scmp.ne.s32.totalorder %s148, %s162
    %p164 = scmp.eq.s32.totalorder %s28, 0
    %p165 = por %p163, %p164
    %s167 = sadd.s32 %s166, 1
    %p170 = scmp.eq.s32.totalorder %s22, 1
    %p171 = scmp.ne.s32.totalorder %s166, %s168
    %p172 = scmp.eq.s32.totalorder %s22, 0
    %p173 = por %p171, %p172
    %p174 = scmp.ne.s32.totalorder %s166, %s168
    %p175 = scmp.eq.s32.totalorder %s27, 1
    %p176 = por %p174, %p175
    %p177 = scmp.ne.s32.totalorder %s168, %s169
    %p178 = scmp.eq.s32.totalorder %s27, 0
    %p179 = por %p177, %p178
    %p180 = scmp.ne.s32.totalorder %s168, %s169
    %p181 = scmp.eq.s32.totalorder %s28, 1
    %p182 = por %p180, %p181
    %p184 = scmp.ne.s32.totalorder %s169, %s183
    %p185 = scmp.eq.s32.totalorder %s28, 0
    %p186 = por %p184, %p185
    %s188 = sadd.s32 %s187, 1
    %p191 = scmp.eq.s32.totalorder %s22, 1
    %p192 = scmp.ne.s32.totalorder %s187, %s189
    %p193 = scmp.eq.s32.totalorder %s22, 0
    %p194 = por %p192, %p193
    %p195 = scmp.ne.s32.totalorder %s187, %s189
    %p196 = scmp.eq.s32.totalorder %s27, 1
    %p197 = por %p195, %p196
    %p198 = scmp.ne.s32.totalorder %s189, %s190
    %p199 = scmp.eq.s32.totalorder %s27, 0
    %p200 = por %p198, %p199
    %p201 = scmp.ne.s32.totalorder %s189, %s190
    %p202 = scmp.eq.s32.totalorder %s28, 1
    %p203 = por %p201, %p202
    %p205 = scmp.ne.s32.totalorder %s190, %s204
    %p206 = scmp.eq.s32.totalorder %s28, 0
    %p207 = por %p205, %p206
    %s209 = sadd.s32 %s208, 1
    %p212 = scmp.eq.s32.totalorder %s22, 1
    %p213 = scmp.ne.s32.totalorder %s208, %s210
    %p214 = scmp.eq.s32.totalorder %s22, 0
    %p215 = por %p213, %p214
    %p216 = scmp.ne.s32.totalorder %s208, %s210
    %p217 = scmp.eq.s32.totalorder %s27, 1
    %p218 = por %p216, %p217
    %p219 = scmp.ne.s32.totalorder %s210, %s211
    %p220 = scmp.eq.s32.totalorder %s27, 0
    %p221 = por %p219, %p220
    %p222 = scmp.ne.s32.totalorder %s210, %s211
    %p223 = scmp.eq.s32.totalorder %s28, 1
    %p224 = por %p222, %p223
    %p226 = scmp.ne.s32.totalorder %s211, %s225
    %p227 = scmp.eq.s32.totalorder %s28, 0
    %p228 = por %p226, %p227
    %s230 = sadd.s32 %s229, 1
    %p233 = scmp.eq.s32.totalorder %s22, 1
    %p234 = scmp.ne.s32.totalorder %s229, %s231
    %p235 = scmp.eq.s32.totalorder %s22, 0
    %p236 = por %p234, %p235
    %p237 = scmp.ne.s32.totalorder %s229, %s231
    %p238 = scmp.eq.s32.totalorder %s27, 1
    %p239 = por %p237, %p238
    %p240 = scmp.ne.s32.totalorder %s231, %s232
    %p241 = scmp.eq.s32.totalorder %s27, 0
    %p242 = por %p240, %p241
    %p243 = scmp.ne.s32.totalorder %s231, %s232
    %p244 = scmp.eq.s32.totalorder %s28, 1
    %p245 = por %p243, %p244
    %p247 = scmp.ne.s32.totalorder %s232, %s246
    %p248 = scmp.eq.s32.totalorder %s28, 0
    %p249 = por %p247, %p248
    %s251 = sadd.s32 %s250, 1
    %p254 = scmp.eq.s32.totalorder %s22, 1
    %p255 = scmp.ne.s32.totalorder %s250, %s252
    %p256 = scmp.eq.s32.totalorder %s22, 0
    %p257 = por %p255, %p256
    %p258 = scmp.ne.s32.totalorder %s250, %s252
    %p259 = scmp.eq.s32.totalorder %s27, 1
    %p260 = por %p258, %p259
    %p261 = scmp.ne.s32.totalorder %s252, %s253
    %p262 = scmp.eq.s32.totalorder %s27, 0
    %p263 = por %p261, %p262
    %p264 = scmp.ne.s32.totalorder %s252, %s253
    %p265 = scmp.eq.s32.totalorder %s28, 1
    %p266 = por %p264, %p265
    %p268 = scmp.ne.s32.totalorder %s253, %s267
    %p269 = scmp.eq.s32.totalorder %s28, 0
    %p270 = por %p268, %p269
    %s272 = sadd.s32 %s271, 1
    %p275 = scmp.eq.s32.totalorder %s22, 1
    %p276 = scmp.ne.s32.totalorder %s271, %s273
    %p277 = scmp.eq.s32.totalorder %s22, 0
    %p278 = por %p276, %p277
    %p279 = scmp.ne.s32.totalorder %s271, %s273
    %p280 = scmp.eq.s32.totalorder %s27, 1
    %p281 = por %p279, %p280
    %p282 = scmp.ne.s32.totalorder %s273, %s274
    %p283 = scmp.eq.s32.totalorder %s27, 0
    %p284 = por %p282, %p283
    %p285 = scmp.ne.s32.totalorder %s273, %s274
    %p286 = scmp.eq.s32.totalorder %s28, 1
    %p287 = por %p285, %p286
    %p289 = scmp.ne.s32.totalorder %s274, %s288
    %p290 = scmp.eq.s32.totalorder %s28, 0
    %p291 = por %p289, %p290
    %s293 = sadd.s32 %s292, 1
    %p296 = scmp.eq.s32.totalorder %s22, 1
    %p297 = scmp.ne.s32.totalorder %s292, %s294
    %p298 = scmp.eq.s32.totalorder %s22, 0
    %p299 = por %p297, %p298
    %p300 = scmp.ne.s32.totalorder %s292, %s294
    %p301 = scmp.eq.s32.totalorder %s27, 1
    %p302 = por %p300, %p301
    %p303 = scmp.ne.s32.totalorder %s294, %s295
    %p304 = scmp.eq.s32.totalorder %s27, 0
    %p305 = por %p303, %p304
    %p306 = scmp.ne.s32.totalorder %s294, %s295
    %p307 = scmp.eq.s32.totalorder %s28, 1
    %p308 = por %p306, %p307
    %p310 = scmp.ne.s32.totalorder %s295, %s309
    %p311 = scmp.eq.s32.totalorder %s28, 0
    %p312 = por %p310, %p311
    %s314 = sadd.s32 %s313, 1
    %p317 = scmp.eq.s32.totalorder %s22, 1
    %p318 = scmp.ne.s32.totalorder %s313, %s315
    %p319 = scmp.eq.s32.totalorder %s22, 0
    %p320 = por %p318, %p319
    %p321 = scmp.ne.s32.totalorder %s313, %s315
    %p322 = scmp.eq.s32.totalorder %s27, 1
    %p323 = por %p321, %p322
    %p324 = scmp.ne.s32.totalorder %s315, %s316
    %p325 = scmp.eq.s32.totalorder %s27, 0
    %p326 = por %p324, %p325
    %p327 = scmp.ne.s32.totalorder %s315, %s316
    %p328 = scmp.eq.s32.totalorder %s28, 1
    %p329 = por %p327, %p328
    %p331 = scmp.ne.s32.totalorder %s316, %s330
    %p332 = scmp.eq.s32.totalorder %s28, 0
    %p333 = por %p331, %p332
    %s335 = sadd.s32 %s334, 1
    %p338 = scmp.eq.s32.totalorder %s22, 1
    %p339 = scmp.ne.s32.totalorder %s334, %s336
    %p340 = scmp.eq.s32.totalorder %s22, 0
    %p341 = por %p339, %p340
    %p342 = scmp.ne.s32.totalorder %s334, %s336
    %p343 = scmp.eq.s32.totalorder %s27, 1
    %p344 = por %p342, %p343
    %p345 = scmp.ne.s32.totalorder %s336, %s337
    %p346 = scmp.eq.s32.totalorder %s27, 0
    %p347 = por %p345, %p346
    %p348 = scmp.ne.s32.totalorder %s336, %s337
    %p349 = scmp.eq.s32.totalorder %s28, 1
    %p350 = por %p348, %p349
    %p352 = scmp.ne.s32.totalorder %s337, %s351
    %p353 = scmp.eq.s32.totalorder %s28, 0
    %p354 = por %p352, %p353
    %s356 = sadd.s32 %s355, 1
    %p359 = scmp.eq.s32.totalorder %s22, 1
    %p360 = scmp.ne.s32.totalorder %s355, %s357
    %p361 = scmp.eq.s32.totalorder %s22, 0
    %p362 = por %p360, %p361
    %p363 = scmp.ne.s32.totalorder %s355, %s357
    %p364 = scmp.eq.s32.totalorder %s27, 1
    %p365 = por %p363, %p364
    %p366 = scmp.ne.s32.totalorder %s357, %s358
    %p367 = scmp.eq.s32.totalorder %s27, 0
    %p368 = por %p366, %p367
    %p369 = scmp.ne.s32.totalorder %s357, %s358
    %p370 = scmp.eq.s32.totalorder %s28, 1
    %p371 = por %p369, %p370
    %p373 = scmp.ne.s32.totalorder %s358, %s372
    %p374 = scmp.eq.s32.totalorder %s28, 0
    %p375 = por %p373, %p374
    %s376 = ssub.s32 %s22, %s29
    %p377 = scmp.eq.s32.totalorder %s376, 0
    %s379 = sadd.s32 %s378, 1
    %s380 = scalar_select %p377, %s378, %s379
    %p383 = pneg %p377
    %p384 = scmp.eq.s32.totalorder %s22, 1
    %p385 = por %p383, %p384
    %p386 = scmp.ne.s32.totalorder %s378, %s381
    %p387 = scmp.eq.s32.totalorder %s22, 0
    %p388 = por %p386, %p387
    %p389 = scmp.ne.s32.totalorder %s378, %s381
    %p390 = scmp.eq.s32.totalorder %s27, 1
    %p391 = por %p389, %p390
    %p392 = scmp.ne.s32.totalorder %s381, %s382
    %p393 = scmp.eq.s32.totalorder %s27, 0
    %p394 = por %p392, %p393
    %p395 = scmp.ne.s32.totalorder %s381, %s382
    %p396 = scmp.eq.s32.totalorder %s28, 1
    %p397 = por %p395, %p396
    %p399 = scmp.ne.s32.totalorder %s382, %s398
    %p400 = scmp.eq.s32.totalorder %s28, 0
    %p401 = por %p399, %p400
    %p402 = scmp.le.s32.totalorder 1, %s22
    %p403 = scmp.lt.s32.totalorder %s22, 3
    %p404 = pnand %p402, %p403
    %p405 = pneg %p404
    // Predicated region
    $region9: #{model_forward.6} parent=5 // pred_check
      _
    $region10: #{model_forward.6} parent=5 // pred_check_branch
      %407 = sbr.rel (%p404) target = $region12
    $region11: #{model_forward.6} parent=5 // pred_region
      %s408 = ssub.s32 %s22, 1
      // Predicated region
      $region13: #{model_forward.6} parent=11 // pred_check
        %p409 = pneg %p95
      $region14: #{model_forward.6} parent=11 // pred_check_branch
        %411 = sbr.rel (%p409) target = $region16
      $region15: #{model_forward.6} parent=11 // pred_region
        _
      $region16: #{model_forward.6} parent=11 // pred_fallthru
        _
      // Predicated region
      $region17: #{model_forward.6} parent=11 // pred_check
        %p412 = pneg %p116
      $region18: #{model_forward.6} parent=11 // pred_check_branch
        %414 = sbr.rel (%p412) target = $region20
      $region19: #{model_forward.6} parent=11 // pred_region
        _
      $region20: #{model_forward.6} parent=11 // pred_fallthru
        _
      // Predicated region
      $region21: #{model_forward.6} parent=11 // pred_check
        %p415 = pneg %p137
      $region22: #{model_forward.6} parent=11 // pred_check_branch
        %417 = sbr.rel (%p415) target = $region24
      $region23: #{model_forward.6} parent=11 // pred_region
        _
      $region24: #{model_forward.6} parent=11 // pred_fallthru
        _
      // Predicated region
      $region25: #{model_forward.6} parent=11 // pred_check
        %p418 = pneg %p158
      $region26: #{model_forward.6} parent=11 // pred_check_branch
        %420 = sbr.rel (%p418) target = $region28
      $region27: #{model_forward.6} parent=11 // pred_region
        _
      $region28: #{model_forward.6} parent=11 // pred_fallthru
        _
      // Predicated region
      $region29: #{model_forward.6} parent=11 // pred_check
        %p421 = pneg %p179
      $region30: #{model_forward.6} parent=11 // pred_check_branch
        %423 = sbr.rel (%p421) target = $region32
      $region31: #{model_forward.6} parent=11 // pred_region
        _
      $region32: #{model_forward.6} parent=11 // pred_fallthru
        _
      // Predicated region
      $region33: #{model_forward.6} parent=11 // pred_check
        %p424 = pneg %p200
      $region34: #{model_forward.6} parent=11 // pred_check_branch
        %426 = sbr.rel (%p424) target = $region36
      $region35: #{model_forward.6} parent=11 // pred_region
        _
      $region36: #{model_forward.6} parent=11 // pred_fallthru
        _
      // Predicated region
      $region37: #{model_forward.6} parent=11 // pred_check
        %p427 = pneg %p221
      $region38: #{model_forward.6} parent=11 // pred_check_branch
        %429 = sbr.rel (%p427) target = $region40
      $region39: #{model_forward.6} parent=11 // pred_region
        _
      $region40: #{model_forward.6} parent=11 // pred_fallthru
        _
      // Predicated region
      $region41: #{model_forward.6} parent=11 // pred_check
        %p430 = pneg %p242
      $region42: #{model_forward.6} parent=11 // pred_check_branch
        %432 = sbr.rel (%p430) target = $region44
      $region43: #{model_forward.6} parent=11 // pred_region
        _
      $region44: #{model_forward.6} parent=11 // pred_fallthru
        _
      // Predicated region
      $region45: #{model_forward.6} parent=11 // pred_check
        %p433 = pneg %p263
      $region46: #{model_forward.6} parent=11 // pred_check_branch
        %435 = sbr.rel (%p433) target = $region48
      $region47: #{model_forward.6} parent=11 // pred_region
        _
      $region48: #{model_forward.6} parent=11 // pred_fallthru
        _
      // Predicated region
      $region49: #{model_forward.6} parent=11 // pred_check
        %p436 = pneg %p284
      $region50: #{model_forward.6} parent=11 // pred_check_branch
        %438 = sbr.rel (%p436) target = $region52
      $region51: #{model_forward.6} parent=11 // pred_region
        _
      $region52: #{model_forward.6} parent=11 // pred_fallthru
        _
      // Predicated region
      $region53: #{model_forward.6} parent=11 // pred_check
        %p439 = pneg %p305
      $region54: #{model_forward.6} parent=11 // pred_check_branch
        %441 = sbr.rel (%p439) target = $region56
      $region55: #{model_forward.6} parent=11 // pred_region
        _
      $region56: #{model_forward.6} parent=11 // pred_fallthru
        _
      // Predicated region
      $region57: #{model_forward.6} parent=11 // pred_check
        %p442 = pneg %p326
      $region58: #{model_forward.6} parent=11 // pred_check_branch
        %444 = sbr.rel (%p442) target = $region60
      $region59: #{model_forward.6} parent=11 // pred_region
        _
      $region60: #{model_forward.6} parent=11 // pred_fallthru
        _
      // Predicated region
      $region61: #{model_forward.6} parent=11 // pred_check
        %p445 = pneg %p347
      $region62: #{model_forward.6} parent=11 // pred_check_branch
        %447 = sbr.rel (%p445) target = $region64
      $region63: #{model_forward.6} parent=11 // pred_region
        _
      $region64: #{model_forward.6} parent=11 // pred_fallthru
        _
      // Predicated region
      $region65: #{model_forward.6} parent=11 // pred_check
        %p448 = pneg %p368
      $region66: #{model_forward.6} parent=11 // pred_check_branch
        %450 = sbr.rel (%p448) target = $region68
      $region67: #{model_forward.6} parent=11 // pred_region
        _
      $region68: #{model_forward.6} parent=11 // pred_fallthru
        _
    $region12: #{model_forward.6} parent=5 // pred_fallthru
      _
    %p451 = scmp.lt.s32.totalorder %s22, 2
    // Predicated region
    $region69: #{model_forward.6} parent=5 // pred_check
      %p452 = pneg %p451
    $region70: #{model_forward.6} parent=5 // pred_check_branch
      %454 = sbr.rel (%p452) target = $region72
    $region71: #{model_forward.6} parent=5 // pred_region
      // Predicated region
      $region73: #{model_forward.6} parent=71 // pred_check
        %p455 = pneg %p42
      $region74: #{model_forward.6} parent=71 // pred_check_branch
        %457 = sbr.rel (%p455) target = $region76
      $region75: #{model_forward.6} parent=71 // pred_region
        %p458 = scmp.lt.s32.totalorder %s22, 1
        %s459 = scalar_select %p458, %s22, 1
        %s460 = smul.addr %s459, 8
        %s461 = scalar_lea.vmem %s0, %s460
      $region76: #{model_forward.6} parent=71 // pred_fallthru
        _
      // Predicated region
      $region77: #{model_forward.6} parent=71 // pred_check
        %p462 = pneg %p68
      $region78: #{model_forward.6} parent=71 // pred_check_branch
        %464 = sbr.rel (%p462) target = $region80
      $region79: #{model_forward.6} parent=71 // pred_region
        %p465 = scmp.lt.s32.totalorder %s22, 1
        %s466 = scalar_select %p465, %s22, 1
        %s467 = scalar_lea.vmem %s1, %s466
      $region80: #{model_forward.6} parent=71 // pred_fallthru
        _
    $region72: #{model_forward.6} parent=5 // pred_fallthru
      _
    %p468 = scmp.le.s32.totalorder 1, %s22
    %p469 = scmp.lt.s32.totalorder %s22, 3
    %p470 = pnand %p468, %p469
    %p471 = pneg %p470
    // Predicated region
    $region81: #{model_forward.6} parent=5 // pred_check
      _
    $region82: #{model_forward.6} parent=5 // pred_check_branch
      %473 = sbr.rel (%p470) target = $region84
    $region83: #{model_forward.6} parent=5 // pred_region
      %s474 = ssub.s32 %s22, 1
      %p475 = scmp.lt.s32.totalorder %s27, 1
      %s476 = scalar_select %p475, %s27, 1
      %s477 = smul.addr %s476, 8
      %s478 = scalar_lea.vmem %s0, %s477
      %p479 = pneg %p48
      %p480 = pneg %p45
      %p481 = scmp.lt.s32.totalorder %s27, 1
      %s482 = scalar_select %p481, %s27, 1
      %s483 = scalar_lea.vmem %s1, %s482
      %p484 = pneg %p74
      %p485 = pneg %p71
      %p486 = pneg %p95
      %p487 = pneg %p92
      %p488 = pneg %p116
      %p489 = pneg %p113
      %p490 = pneg %p137
      %p491 = pneg %p134
      %p492 = pneg %p158
      %p493 = pneg %p155
      %p494 = pneg %p179
      %p495 = pneg %p176
      %p496 = pneg %p200
      %p497 = pneg %p197
      %p498 = pneg %p221
      %p499 = pneg %p218
      %p500 = pneg %p242
      %p501 = pneg %p239
      %p502 = pneg %p263
      %p503 = pneg %p260
      %p504 = pneg %p284
      %p505 = pneg %p281
      %p506 = pneg %p305
      %p507 = pneg %p302
      %p508 = pneg %p326
      %p509 = pneg %p323
      %p510 = pneg %p347
      %p511 = pneg %p344
      %p512 = pneg %p368
      %p513 = pneg %p365
      %p514 = pneg %p394
      %p515 = pneg %p391
      %p516 = scmp.lt.s32.totalorder %s27, 1
      %s517 = scalar_select %p516, %s27, 1
      %s518 = smul.addr %s517, 8
      %s519 = scalar_lea.vmem %s16, %s518
      %p520 = scmp.lt.s32.totalorder %s27, 1
      %s521 = scalar_select %p520, %s27, 1
      %s522 = smul.addr %s521, 8
      %s523 = scalar_lea.vmem %s0, %s522
      %p524 = scmp.lt.s32.totalorder %s27, 1
      %s525 = scalar_select %p524, %s27, 1
      %s526 = scalar_lea.vmem %s1, %s525
      %p527 = scmp.lt.s32.totalorder %s27, 1
      %s528 = scalar_select %p527, %s27, 1
      %s529 = smul.addr %s528, 8
      %s530 = scalar_lea.vmem %s16, %s529
      %v531 = vld [vmem:[%s523] sm:$0xff]
      %v532 = vld [vmem:[%s526] sm:$0x1]
      %v533 = vld [vmem:[%s2] sm:$0xff]
      %v534 = vld [vmem:[%s2 + $0x8] sm:$0xff]
      %v535 = vld [vmem:[%s2 + $0x10] sm:$0xff]
      %v536 = vld [vmem:[%s2 + $0x18] sm:$0xff]
      %v537 = vld [vmem:[%s3] sm:$0x1]
      %v539 = vlaneseq
      %v540 = vshrl.u32 %v539, 7
      %v541 = vsub.s32 0, %v540
      %v542 = vrot.slane %v537, %v541
      %vm544 = vcmask 261120
      %v546 = vsel %vm544, %v531, 0
      %548 = vmatprep.subr.mxu0 0.0
      %549 = vmatpush1.msra.mxu0 %v533
      %550 = vmatprep.subr.mxu0 0.0
      %551 = vmatpush1.msra.mxu0 %v534
      %552 = vmatprep.subr.mxu0 0.0
      %553 = vmatpush1.msra.mxu0 %v535
      %554 = vmatprep.subr.mxu0 0.0
      %555 = vmatpush1.msra.mxu0 %v536
      %556 = vmatprep.subr.mxu0 0.0
      %557 = vmatpush1.msra.mxu0 0.0
      %558 = vmatprep.subr.mxu0 0.0
      %559 = vmatpush1.msra.mxu0 0.0
      %560 = vmatprep.subr.mxu0 0.0
      %561 = vmatpush1.msra.mxu0 0.0
      %562 = vmatprep.subr.mxu0 0.0
      %563 = vmatpush1.msra.mxu0 0.0
      %564 = vmatprep.subr.mxu0 0.0
      %565 = vmatpush1.msra.mxu0 0.0
      %566 = vmatprep.subr.mxu0 0.0
      %567 = vmatpush1.msra.mxu0 0.0
      %568 = vmatprep.subr.mxu0 0.0
      %569 = vmatpush1.msra.mxu0 0.0
      %570 = vmatprep.subr.mxu0 0.0
      %571 = vmatpush1.msra.mxu0 0.0
      %572 = vmatprep.subr.mxu0 0.0
      %573 = vmatpush1.msra.mxu0 0.0
      %574 = vmatprep.subr.mxu0 0.0
      %575 = vmatpush1.msra.mxu0 0.0
      %576 = vmatprep.subr.mxu0 0.0
      %577 = vmatpush1.msra.mxu0 0.0
      %578 = vmatprep.subr.mxu0 0.0
      %579 = vmatpush1.msra.mxu0 0.0
      %580 = vmatprep.subr.mxu0 0.0
      %581 = vmatpush1.msra.mxu0 0.0
      %582 = vmatprep.subr.mxu0 0.0
      %583 = vmatpush1.msra.mxu0 0.0
      %584 = vmatprep.subr.mxu0 0.0
      %585 = vmatpush1.msra.mxu0 0.0
      %586 = vmatprep.subr.mxu0 0.0
      %587 = vmatpush1.msra.mxu0 0.0
      %588 = vmatprep.subr.mxu0 0.0
      %589 = vmatpush1.msra.mxu0 0.0
      %590 = vmatprep.subr.mxu0 0.0
      %591 = vmatpush1.msra.mxu0 0.0
      %592 = vmatprep.subr.mxu0 0.0
      %593 = vmatpush1.msra.mxu0 0.0
      %594 = vmatprep.subr.mxu0 0.0
      %595 = vmatpush1.msra.mxu0 0.0
      %596 = vmatprep.subr.mxu0 0.0
      %597 = vmatpush1.msra.mxu0 0.0
      %598 = vmatprep.subr.mxu0 0.0
      %599 = vmatpush1.msra.mxu0 0.0
      %600 = vmatprep.subr.mxu0 0.0
      %601 = vmatpush1.msra.mxu0 0.0
      %602 = vmatprep.subr.mxu0 0.0
      %603 = vmatpush1.msra.mxu0 0.0
      %604 = vmatprep.subr.mxu0 0.0
      %605 = vmatpush1.msra.mxu0 0.0
      %606 = vmatprep.subr.mxu0 0.0
      %607 = vmatpush1.msra.mxu0 0.0
      %608 = vmatprep.subr.mxu0 0.0
      %609 = vmatpush1.msra.mxu0 0.0
      %610 = vmatprep.subr.mxu0 0.0
      %611 = vmatpush1.msra.mxu0 0.0
      %612 = vmatprep.mubr.f32.mxu0 0.0
      %613 = vmatmul.mubr.f32.gmra.mrb[0].mxu0 %v546
      %v614 = vpop.f32.mrb[0].mxu0
      %v615 = vadd.f32 %v542, %v614
      %v616 = vpop.f32.mrb[0].mxu0
      %617 = vdwg.mxu0
      %619 = vrot.lane.b32.xlu0 %v615, 96
      %v620 = vpop.permute.xlu0 %619
      %vm621 = vcmask 64512
      %v622 = vsel %vm621, %v615, 0
      %v624 = vsel %vm621, %v620, 0
      %626 = vmatprep.subr.mxu0 0.0
      %627 = vmatpush1.xpose.msra.mxu0 %v624
      %628 = vmatprep.subr.mxu0 0.0
      %629 = vmatpush1.xpose.msra.mxu0 0.0
      %630 = vmatprep.subr.mxu0 0.0
      %631 = vmatpush1.xpose.msra.mxu0 0.0
      %632 = vmatprep.subr.mxu0 0.0
      %633 = vmatpush1.xpose.msra.mxu0 0.0
      %634 = vmatprep.subr.mxu0 0.0
      %635 = vmatpush1.xpose.msra.mxu0 0.0
      %636 = vmatprep.subr.mxu0 0.0
      %637 = vmatpush1.xpose.msra.mxu0 0.0
      %638 = vmatprep.subr.mxu0 0.0
      %639 = vmatpush1.xpose.msra.mxu0 0.0
      %640 = vmatprep.subr.mxu0 0.0
      %641 = vmatpush1.xpose.msra.mxu0 0.0
      %642 = vmatprep.subr.mxu0 0.0
      %643 = vmatpush1.xpose.msra.mxu0 0.0
      %644 = vmatprep.subr.mxu0 0.0
      %645 = vmatpush1.xpose.msra.mxu0 0.0
      %646 = vmatprep.subr.mxu0 0.0
      %647 = vmatpush1.xpose.msra.mxu0 0.0
      %648 = vmatprep.subr.mxu0 0.0
      %649 = vmatpush1.xpose.msra.mxu0 0.0
      %650 = vmatprep.subr.mxu0 0.0
      %651 = vmatpush1.xpose.msra.mxu0 0.0
      %652 = vmatprep.subr.mxu0 0.0
      %653 = vmatpush1.xpose.msra.mxu0 0.0
      %654 = vmatprep.subr.mxu0 0.0
      %655 = vmatpush1.xpose.msra.mxu0 0.0
      %656 = vmatprep.subr.mxu0 0.0
      %657 = vmatpush1.xpose.msra.mxu0 0.0
      %658 = vmatprep.subr.mxu0 0.0
      %659 = vmatpush1.xpose.msra.mxu0 0.0
      %660 = vmatprep.subr.mxu0 0.0
      %661 = vmatpush1.xpose.msra.mxu0 0.0
      %662 = vmatprep.subr.mxu0 0.0
      %663 = vmatpush1.xpose.msra.mxu0 0.0
      %664 = vmatprep.subr.mxu0 0.0
      %665 = vmatpush1.xpose.msra.mxu0 0.0
      %666 = vmatprep.subr.mxu0 0.0
      %667 = vmatpush1.xpose.msra.mxu0 0.0
      %668 = vmatprep.subr.mxu0 0.0
      %669 = vmatpush1.xpose.msra.mxu0 0.0
      %670 = vmatprep.subr.mxu0 0.0
      %671 = vmatpush1.xpose.msra.mxu0 0.0
      %672 = vmatprep.subr.mxu0 0.0
      %673 = vmatpush1.xpose.msra.mxu0 0.0
      %674 = vmatprep.subr.mxu0 0.0
      %675 = vmatpush1.xpose.msra.mxu0 0.0
      %676 = vmatprep.subr.mxu0 0.0
      %677 = vmatpush1.xpose.msra.mxu0 0.0
      %678 = vmatprep.subr.mxu0 0.0
      %679 = vmatpush1.xpose.msra.mxu0 0.0
      %680 = vmatprep.subr.mxu0 0.0
      %681 = vmatpush1.xpose.msra.mxu0 0.0
      %682 = vmatprep.subr.mxu0 0.0
      %683 = vmatpush1.xpose.msra.mxu0 0.0
      %684 = vmatprep.subr.mxu0 0.0
      %685 = vmatpush1.xpose.msra.mxu0 0.0
      %686 = vmatprep.subr.mxu0 0.0
      %687 = vmatpush1.xpose.msra.mxu0 0.0
      %688 = vmatprep.subr.mxu0 0.0
      %689 = vmatpush1.xpose.msra.mxu0 0.0
      %690 = vmatprep.mubr.f32.mxu0 0.0
      %691 = vmatmul.mubr.f32.gmra.mrb[0].mxu0 %v622
      %v692 = vpop.f32.mrb[0].mxu0
      %v693 = vadd.f32 0.0, %v692
      %v694 = vpop.f32.mrb[0].mxu0
      %695 = vdwg.mxu0
      %v696 = vmul.f32 %v693, 0.35355338
      %v698 = vlaneseq
      %v699 = vshrl.u32 %v698, 7
      %v700 = vsub.s32 0, %v699
      %v701 = vrot.slane %v532, %v700
      %v703 = vadd.f32 %v696, %v701
      %v704 = vsel %vm621, %v703, -inf
      %705 = vmax.xlane.f32.xlu0 %v704
      %v706 = vpop.xlane.xlu0 %705
      %v707 = vsub.f32 %v703, %v706
      %v708 = vmul.f32 %v707, 1.442695
      %v709 = vpow.pop %v708
      %v710 = vsel %vm621, %v709, 0.0
      %711 = vadd.xlane.f32.xlu0 %v710
      %v712 = vpop.xlane.xlu0 %711
      %v713 = vrcp.pop %v712
      %v714 = vmul.f32 %v709, %v713
      %715 = vrot.lane.b32.xlu0 %v615, 64
      %v716 = vpop.permute.xlu0 %715
      %v719 = vsel %vm621, %v714, 0
      %721 = vmatprep.subr.mxu0 0.0
      %722 = vmatpush1.msra.mxu0 %v716
      %723 = vmatprep.subr.mxu0 0.0
      %724 = vmatpush1.msra.mxu0 0.0
      %725 = vmatprep.subr.mxu0 0.0
      %726 = vmatpush1.msra.mxu0 0.0
      %727 = vmatprep.subr.mxu0 0.0
      %728 = vmatpush1.msra.mxu0 0.0
      %729 = vmatprep.subr.mxu0 0.0
      %730 = vmatpush1.msra.mxu0 0.0
      %731 = vmatprep.subr.mxu0 0.0
      %732 = vmatpush1.msra.mxu0 0.0
      %733 = vmatprep.subr.mxu0 0.0
      %734 = vmatpush1.msra.mxu0 0.0
      %735 = vmatprep.subr.mxu0 0.0
      %736 = vmatpush1.msra.mxu0 0.0
      %737 = vmatprep.subr.mxu0 0.0
      %738 = vmatpush1.msra.mxu0 0.0
      %739 = vmatprep.subr.mxu0 0.0
      %740 = vmatpush1.msra.mxu0 0.0
      %741 = vmatprep.subr.mxu0 0.0
      %742 = vmatpush1.msra.mxu0 0.0
      %743 = vmatprep.subr.mxu0 0.0
      %744 = vmatpush1.msra.mxu0 0.0
      %745 = vmatprep.subr.mxu0 0.0
      %746 = vmatpush1.msra.mxu0 0.0
      %747 = vmatprep.subr.mxu0 0.0
      %748 = vmatpush1.msra.mxu0 0.0
      %749 = vmatprep.subr.mxu0 0.0
      %750 = vmatpush1.msra.mxu0 0.0
      %751 = vmatprep.subr.mxu0 0.0
      %752 = vmatpush1.msra.mxu0 0.0
      %753 = vmatprep.subr.mxu0 0.0
      %754 = vmatpush1.msra.mxu0 0.0
      %755 = vmatprep.subr.mxu0 0.0
      %756 = vmatpush1.msra.mxu0 0.0
      %757 = vmatprep.subr.mxu0 0.0
      %758 = vmatpush1.msra.mxu0 0.0
      %759 = vmatprep.subr.mxu0 0.0
      %760 = vmatpush1.msra.mxu0 0.0
      %761 = vmatprep.subr.mxu0 0.0
      %762 = vmatpush1.msra.mxu0 0.0
      %763 = vmatprep.subr.mxu0 0.0
      %764 = vmatpush1.msra.mxu0 0.0
      %765 = vmatprep.subr.mxu0 0.0
      %766 = vmatpush1.msra.mxu0 0.0
      %767 = vmatprep.subr.mxu0 0.0
      %768 = vmatpush1.msra.mxu0 0.0
      %769 = vmatprep.subr.mxu0 0.0
      %770 = vmatpush1.msra.mxu0 0.0
      %771 = vmatprep.subr.mxu0 0.0
      %772 = vmatpush1.msra.mxu0 0.0
      %773 = vmatprep.subr.mxu0 0.0
      %774 = vmatpush1.msra.mxu0 0.0
      %775 = vmatprep.subr.mxu0 0.0
      %776 = vmatpush1.msra.mxu0 0.0
      %777 = vmatprep.subr.mxu0 0.0
      %778 = vmatpush1.msra.mxu0 0.0
      %779 = vmatprep.subr.mxu0 0.0
      %780 = vmatpush1.msra.mxu0 0.0
      %781 = vmatprep.subr.mxu0 0.0
      %782 = vmatpush1.msra.mxu0 0.0
      %783 = vmatprep.subr.mxu0 0.0
      %784 = vmatpush1.msra.mxu0 0.0
      %785 = vmatprep.mubr.f32.mxu0 0.0
      %786 = vmatmul.mubr.f32.gmra.mrb[0].mxu0 %v719
      %v787 = vpop.f32.mrb[0].mxu0
      %v788 = vadd.f32 0.0, %v787
      %v789 = vpop.f32.mrb[0].mxu0
      %790 = vdwg.mxu0
      %v791 = vld [vmem:[%s4] sm:$0xff]
      %792 = vrot.lane.b32.xlu0 %v615, 120
      %v793 = vpop.permute.xlu0 %792
      %794 = vrot.lane.b32.xlu0 %v615, 88
      %v795 = vpop.permute.xlu0 %794
      %v796 = vsel %vm621, %v793, 0
      %v798 = vsel %vm621, %v795, 0
      %800 = vmatprep.subr.mxu0 0.0
      %801 = vmatpush1.xpose.msra.mxu0 %v798
      %802 = vmatprep.subr.mxu0 0.0
      %803 = vmatpush1.xpose.msra.mxu0 0.0
      %804 = vmatprep.subr.mxu0 0.0
      %805 = vmatpush1.xpose.msra.mxu0 0.0
      %806 = vmatprep.subr.mxu0 0.0
      %807 = vmatpush1.xpose.msra.mxu0 0.0
      %808 = vmatprep.subr.mxu0 0.0
      %809 = vmatpush1.xpose.msra.mxu0 0.0
      %810 = vmatprep.subr.mxu0 0.0
      %811 = vmatpush1.xpose.msra.mxu0 0.0
      %812 = vmatprep.subr.mxu0 0.0
      %813 = vmatpush1.xpose.msra.mxu0 0.0
      %814 = vmatprep.subr.mxu0 0.0
      %815 = vmatpush1.xpose.msra.mxu0 0.0
      %816 = vmatprep.subr.mxu0 0.0
      %817 = vmatpush1.xpose.msra.mxu0 0.0
      %818 = vmatprep.subr.mxu0 0.0
      %819 = vmatpush1.xpose.msra.mxu0 0.0
      %820 = vmatprep.subr.mxu0 0.0
      %821 = vmatpush1.xpose.msra.mxu0 0.0
      %822 = vmatprep.subr.mxu0 0.0
      %823 = vmatpush1.xpose.msra.mxu0 0.0
      %824 = vmatprep.subr.mxu0 0.0
      %825 = vmatpush1.xpose.msra.mxu0 0.0
      %826 = vmatprep.subr.mxu0 0.0
      %827 = vmatpush1.xpose.msra.mxu0 0.0
      %828 = vmatprep.subr.mxu0 0.0
      %829 = vmatpush1.xpose.msra.mxu0 0.0
      %830 = vmatprep.subr.mxu0 0.0
      %831 = vmatpush1.xpose.msra.mxu0 0.0
      %832 = vmatprep.subr.mxu0 0.0
      %833 = vmatpush1.xpose.msra.mxu0 0.0
      %834 = vmatprep.subr.mxu0 0.0
      %835 = vmatpush1.xpose.msra.mxu0 0.0
      %836 = vmatprep.subr.mxu0 0.0
      %837 = vmatpush1.xpose.msra.mxu0 0.0
      %838 = vmatprep.subr.mxu0 0.0
      %839 = vmatpush1.xpose.msra.mxu0 0.0
      %840 = vmatprep.subr.mxu0 0.0
      %841 = vmatpush1.xpose.msra.mxu0 0.0
      %842 = vmatprep.subr.mxu0 0.0
      %843 = vmatpush1.xpose.msra.mxu0 0.0
      %844 = vmatprep.subr.mxu0 0.0
      %845 = vmatpush1.xpose.msra.mxu0 0.0
      %846 = vmatprep.subr.mxu0 0.0
      %847 = vmatpush1.xpose.msra.mxu0 0.0
      %848 = vmatprep.subr.mxu0 0.0
      %849 = vmatpush1.xpose.msra.mxu0 0.0
      %850 = vmatprep.subr.mxu0 0.0
      %851 = vmatpush1.xpose.msra.mxu0 0.0
      %852 = vmatprep.subr.mxu0 0.0
      %853 = vmatpush1.xpose.msra.mxu0 0.0
      %854 = vmatprep.subr.mxu0 0.0
      %855 = vmatpush1.xpose.msra.mxu0 0.0
      %856 = vmatprep.subr.mxu0 0.0
      %857 = vmatpush1.xpose.msra.mxu0 0.0
      %858 = vmatprep.subr.mxu0 0.0
      %859 = vmatpush1.xpose.msra.mxu0 0.0
      %860 = vmatprep.subr.mxu0 0.0
      %861 = vmatpush1.xpose.msra.mxu0 0.0
      %862 = vmatprep.subr.mxu0 0.0
      %863 = vmatpush1.xpose.msra.mxu0 0.0
      %864 = vmatprep.mubr.f32.mxu0 0.0
      %865 = vmatmul.mubr.f32.gmra.mrb[0].mxu0 %v796
      %v866 = vpop.f32.mrb[0].mxu0
      %v867 = vadd.f32 0.0, %v866
      %v868 = vpop.f32.mrb[0].mxu0
      %869 = vdwg.mxu0
      %v870 = vmul.f32 %v867, 0.35355338
      %v871 = vadd.f32 %v870, %v701
      %v872 = vsel %vm621, %v871, -inf
      %873 = vmax.xlane.f32.xlu0 %v872
      %v874 = vpop.xlane.xlu0 %873
      %v875 = vsub.f32 %v871, %v874
      %v876 = vmul.f32 %v875, 1.442695
      %v877 = vpow.pop %v876
      %v878 = vsel %vm621, %v877, 0.0
      %879 = vadd.xlane.f32.xlu0 %v878
      %v880 = vpop.xlane.xlu0 %879
      %v881 = vrcp.pop %v880
      %v882 = vmul.f32 %v877, %v881
      %883 = vrot.lane.b32.xlu0 %v615, 56
      %v884 = vpop.permute.xlu0 %883
      %v887 = vsel %vm621, %v882, 0
      %889 = vmatprep.subr.mxu0 0.0
      %890 = vmatpush1.msra.mxu0 %v884
      %891 = vmatprep.subr.mxu0 0.0
      %892 = vmatpush1.msra.mxu0 0.0
      %893 = vmatprep.subr.mxu0 0.0
      %894 = vmatpush1.msra.mxu0 0.0
      %895 = vmatprep.subr.mxu0 0.0
      %896 = vmatpush1.msra.mxu0 0.0
      %897 = vmatprep.subr.mxu0 0.0
      %898 = vmatpush1.msra.mxu0 0.0
      %899 = vmatprep.subr.mxu0 0.0
      %900 = vmatpush1.msra.mxu0 0.0
      %901 = vmatprep.subr.mxu0 0.0
      %902 = vmatpush1.msra.mxu0 0.0
      %903 = vmatprep.subr.mxu0 0.0
      %904 = vmatpush1.msra.mxu0 0.0
      %905 = vmatprep.subr.mxu0 0.0
      %906 = vmatpush1.msra.mxu0 0.0
      %907 = vmatprep.subr.mxu0 0.0
      %908 = vmatpush1.msra.mxu0 0.0
      %909 = vmatprep.subr.mxu0 0.0
      %910 = vmatpush1.msra.mxu0 0.0
      %911 = vmatprep.subr.mxu0 0.0
      %912 = vmatpush1.msra.mxu0 0.0
      %913 = vmatprep.subr.mxu0 0.0
      %914 = vmatpush1.msra.mxu0 0.0
      %915 = vmatprep.subr.mxu0 0.0
      %916 = vmatpush1.msra.mxu0 0.0
      %917 = vmatprep.subr.mxu0 0.0
      %918 = vmatpush1.msra.mxu0 0.0
      %919 = vmatprep.subr.mxu0 0.0
      %920 = vmatpush1.msra.mxu0 0.0
      %921 = vmatprep.subr.mxu0 0.0
      %922 = vmatpush1.msra.mxu0 0.0
      %923 = vmatprep.subr.mxu0 0.0
      %924 = vmatpush1.msra.mxu0 0.0
      %925 = vmatprep.subr.mxu0 0.0
      %926 = vmatpush1.msra.mxu0 0.0
      %927 = vmatprep.subr.mxu0 0.0
      %928 = vmatpush1.msra.mxu0 0.0
      %929 = vmatprep.subr.mxu0 0.0
      %930 = vmatpush1.msra.mxu0 0.0
      %931 = vmatprep.subr.mxu0 0.0
      %932 = vmatpush1.msra.mxu0 0.0
      %933 = vmatprep.subr.mxu0 0.0
      %934 = vmatpush1.msra.mxu0 0.0
      %935 = vmatprep.subr.mxu0 0.0
      %936 = vmatpush1.msra.mxu0 0.0
      %937 = vmatprep.subr.mxu0 0.0
      %938 = vmatpush1.msra.mxu0 0.0
      %939 = vmatprep.subr.mxu0 0.0
      %940 = vmatpush1.msra.mxu0 0.0
      %941 = vmatprep.subr.mxu0 0.0
      %942 = vmatpush1.msra.mxu0 0.0
      %943 = vmatprep.subr.mxu0 0.0
      %944 = vmatpush1.msra.mxu0 0.0
      %945 = vmatprep.subr.mxu0 0.0
      %946 = vmatpush1.msra.mxu0 0.0
      %947 = vmatprep.subr.mxu0 0.0
      %948 = vmatpush1.msra.mxu0 0.0
      %949 = vmatprep.subr.mxu0 0.0
      %950 = vmatpush1.msra.mxu0 0.0
      %951 = vmatprep.subr.mxu0 0.0
      %952 = vmatpush1.msra.mxu0 0.0
      %953 = vmatprep.mubr.f32.mxu0 0.0
      %954 = vmatmul.mubr.f32.gmra.mrb[0].mxu0 %v887
      %v955 = vpop.f32.mrb[0].mxu0
      %v956 = vadd.f32 0.0, %v955
      %v957 = vpop.f32.mrb[0].mxu0
      %958 = vdwg.mxu0
      %v959 = vld [vmem:[%s4 + $0x8] sm:$0xff]
      %v961 = vsel %vm621, %v956, 0
      %963 = vmatprep.subr.mxu0 0.0
      %964 = vmatpush1.msra.mxu0 %v959
      %965 = vmatprep.subr.mxu0 0.0
      %966 = vmatpush1.msra.mxu0 0.0
      %967 = vmatprep.subr.mxu0 0.0
      %968 = vmatpush1.msra.mxu0 0.0
      %969 = vmatprep.subr.mxu0 0.0
      %970 = vmatpush1.msra.mxu0 0.0
      %971 = vmatprep.subr.mxu0 0.0
      %972 = vmatpush1.msra.mxu0 0.0
      %973 = vmatprep.subr.mxu0 0.0
      %974 = vmatpush1.msra.mxu0 0.0
      %975 = vmatprep.subr.mxu0 0.0
      %976 = vmatpush1.msra.mxu0 0.0
      %977 = vmatprep.subr.mxu0 0.0
      %978 = vmatpush1.msra.mxu0 0.0
      %979 = vmatprep.subr.mxu0 0.0
      %980 = vmatpush1.msra.mxu0 0.0
      %981 = vmatprep.subr.mxu0 0.0
      %982 = vmatpush1.msra.mxu0 0.0
      %983 = vmatprep.subr.mxu0 0.0
      %984 = vmatpush1.msra.mxu0 0.0
      %985 = vmatprep.subr.mxu0 0.0
      %986 = vmatpush1.msra.mxu0 0.0
      %987 = vmatprep.subr.mxu0 0.0
      %988 = vmatpush1.msra.mxu0 0.0
      %989 = vmatprep.subr.mxu0 0.0
      %990 = vmatpush1.msra.mxu0 0.0
      %991 = vmatprep.subr.mxu0 0.0
      %992 = vmatpush1.msra.mxu0 0.0
      %993 = vmatprep.subr.mxu0 0.0
      %994 = vmatpush1.msra.mxu0 0.0
      %995 = vmatprep.subr.mxu0 0.0
      %996 = vmatpush1.msra.mxu0 0.0
      %997 = vmatprep.subr.mxu0 0.0
      %998 = vmatpush1.msra.mxu0 0.0
      %999 = vmatprep.subr.mxu0 0.0
      %1000 = vmatpush1.msra.mxu0 0.0
      %1001 = vmatprep.subr.mxu0 0.0
      %1002 = vmatpush1.msra.mxu0 0.0
      %1003 = vmatprep.subr.mxu0 0.0
      %1004 = vmatpush1.msra.mxu0 0.0
      %1005 = vmatprep.subr.mxu0 0.0
      %1006 = vmatpush1.msra.mxu0 0.0
      %1007 = vmatprep.subr.mxu0 0.0
      %1008 = vmatpush1.msra.mxu0 0.0
      %1009 = vmatprep.subr.mxu0 0.0
      %1010 = vmatpush1.msra.mxu0 0.0
      %1011 = vmatprep.subr.mxu0 0.0
      %1012 = vmatpush1.msra.mxu0 0.0
      %1013 = vmatprep.subr.mxu0 0.0
      %1014 = vmatpush1.msra.mxu0 0.0
      %1015 = vmatprep.subr.mxu0 0.0
      %1016 = vmatpush1.msra.mxu0 0.0
      %1017 = vmatprep.subr.mxu0 0.0
      %1018 = vmatpush1.msra.mxu0 0.0
      %1019 = vmatprep.subr.mxu0 0.0
      %1020 = vmatpush1.msra.mxu0 0.0
      %1021 = vmatprep.subr.mxu0 0.0
      %1022 = vmatpush1.msra.mxu0 0.0
      %1023 = vmatprep.subr.mxu0 0.0
      %1024 = vmatpush1.msra.mxu0 0.0
      %1025 = vmatprep.subr.mxu0 0.0
      %1026 = vmatpush1.msra.mxu0 0.0
      %1027 = vmatprep.mubr.f32.mxu0 0.0
      %1028 = vmatmul.mubr.f32.gmra.mrb[0].mxu0 %v961
      %v1029 = vpop.f32.mrb[0].mxu0
      %v1030 = vadd.f32 0.0, %v1029
      %v1031 = vpop.f32.mrb[0].mxu0
      %1032 = vdwg.mxu0
      %v1034 = vsel %vm621, %v788, 0
      %1036 = vmatprep.subr.mxu0 0.0
      %1037 = vmatpush1.msra.mxu0 %v791
      %1038 = vmatprep.subr.mxu0 0.0
      %1039 = vmatpush1.msra.mxu0 0.0
      %1040 = vmatprep.subr.mxu0 0.0
      %1041 = vmatpush1.msra.mxu0 0.0
      %1042 = vmatprep.subr.mxu0 0.0
      %1043 = vmatpush1.msra.mxu0 0.0
      %1044 = vmatprep.subr.mxu0 0.0
      %1045 = vmatpush1.msra.mxu0 0.0
      %1046 = vmatprep.subr.mxu0 0.0
      %1047 = vmatpush1.msra.mxu0 0.0
      %1048 = vmatprep.subr.mxu0 0.0
      %1049 = vmatpush1.msra.mxu0 0.0
      %1050 = vmatprep.subr.mxu0 0.0
      %1051 = vmatpush1.msra.mxu0 0.0
      %1052 = vmatprep.subr.mxu0 0.0
      %1053 = vmatpush1.msra.mxu0 0.0
      %1054 = vmatprep.subr.mxu0 0.0
      %1055 = vmatpush1.msra.mxu0 0.0
      %1056 = vmatprep.subr.mxu0 0.0
      %1057 = vmatpush1.msra.mxu0 0.0
      %1058 = vmatprep.subr.mxu0 0.0
      %1059 = vmatpush1.msra.mxu0 0.0
      %1060 = vmatprep.subr.mxu0 0.0
      %1061 = vmatpush1.msra.mxu0 0.0
      %1062 = vmatprep.subr.mxu0 0.0
      %1063 = vmatpush1.msra.mxu0 0.0
      %1064 = vmatprep.subr.mxu0 0.0
      %1065 = vmatpush1.msra.mxu0 0.0
      %1066 = vmatprep.subr.mxu0 0.0
      %1067 = vmatpush1.msra.mxu0 0.0
      %1068 = vmatprep.subr.mxu0 0.0
      %1069 = vmatpush1.msra.mxu0 0.0
      %1070 = vmatprep.subr.mxu0 0.0
      %1071 = vmatpush1.msra.mxu0 0.0
      %1072 = vmatprep.subr.mxu0 0.0
      %1073 = vmatpush1.msra.mxu0 0.0
      %1074 = vmatprep.subr.mxu0 0.0
      %1075 = vmatpush1.msra.mxu0 0.0
      %1076 = vmatprep.subr.mxu0 0.0
      %1077 = vmatpush1.msra.mxu0 0.0
      %1078 = vmatprep.subr.mxu0 0.0
      %1079 = vmatpush1.msra.mxu0 0.0
      %1080 = vmatprep.subr.mxu0 0.0
      %1081 = vmatpush1.msra.mxu0 0.0
      %1082 = vmatprep.subr.mxu0 0.0
      %1083 = vmatpush1.msra.mxu0 0.0
      %1084 = vmatprep.subr.mxu0 0.0
      %1085 = vmatpush1.msra.mxu0 0.0
      %1086 = vmatprep.subr.mxu0 0.0
      %1087 = vmatpush1.msra.mxu0 0.0
      %1088 = vmatprep.subr.mxu0 0.0
      %1089 = vmatpush1.msra.mxu0 0.0
      %1090 = vmatprep.subr.mxu0 0.0
      %1091 = vmatpush1.msra.mxu0 0.0
      %1092 = vmatprep.subr.mxu0 0.0
      %1093 = vmatpush1.msra.mxu0 0.0
      %1094 = vmatprep.subr.mxu0 0.0
      %1095 = vmatpush1.msra.mxu0 0.0
      %1096 = vmatprep.subr.mxu0 0.0
      %1097 = vmatpush1.msra.mxu0 0.0
      %1098 = vmatprep.subr.mxu0 0.0
      %1099 = vmatpush1.msra.mxu0 0.0
      %1100 = vmatprep.mubr.f32.mxu0 0.0
      %1101 = vmatmul.mubr.f32.gmra.mrb[0].mxu0 %v1034
      %v1102 = vpop.f32.mrb[0].mxu0
      %v1103 = vadd.f32 %v1030, %v1102
      %v1104 = vpop.f32.mrb[0].mxu0
      %1105 = vdwg.mxu0
      %1106 = vrot.lane.b32.xlu0 %v615, 112
      %v1107 = vpop.permute.xlu0 %1106
      %1108 = vrot.lane.b32.xlu0 %v615, 80
      %v1109 = vpop.permute.xlu0 %1108
      %v1110 = vsel %vm621, %v1107, 0
      %v1112 = vsel %vm621, %v1109, 0
      %1114 = vmatprep.subr.mxu0 0.0
      %1115 = vmatpush1.xpose.msra.mxu0 %v1112
      %1116 = vmatprep.subr.mxu0 0.0
      %1117 = vmatpush1.xpose.msra.mxu0 0.0
      %1118 = vmatprep.subr.mxu0 0.0
      %1119 = vmatpush1.xpose.msra.mxu0 0.0
      %1120 = vmatprep.subr.mxu0 0.0
      %1121 = vmatpush1.xpose.msra.mxu0 0.0
      %1122 = vmatprep.subr.mxu0 0.0
      %1123 = vmatpush1.xpose.msra.mxu0 0.0
      %1124 = vmatprep.subr.mxu0 0.0
      %1125 = vmatpush1.xpose.msra.mxu0 0.0
      %1126 = vmatprep.subr.mxu0 0.0
      %1127 = vmatpush1.xpose.msra.mxu0 0.0
      %1128 = vmatprep.subr.mxu0 0.0
      %1129 = vmatpush1.xpose.msra.mxu0 0.0
      %1130 = vmatprep.subr.mxu0 0.0
      %1131 = vmatpush1.xpose.msra.mxu0 0.0
      %1132 = vmatprep.subr.mxu0 0.0
      %1133 = vmatpush1.xpose.msra.mxu0 0.0
      %1134 = vmatprep.subr.mxu0 0.0
      %1135 = vmatpush1.xpose.msra.mxu0 0.0
      %1136 = vmatprep.subr.mxu0 0.0
      %1137 = vmatpush1.xpose.msra.mxu0 0.0
      %1138 = vmatprep.subr.mxu0 0.0
      %1139 = vmatpush1.xpose.msra.mxu0 0.0
      %1140 = vmatprep.subr.mxu0 0.0
      %1141 = vmatpush1.xpose.msra.mxu0 0.0
      %1142 = vmatprep.subr.mxu0 0.0
      %1143 = vmatpush1.xpose.msra.mxu0 0.0
      %1144 = vmatprep.subr.mxu0 0.0
      %1145 = vmatpush1.xpose.msra.mxu0 0.0
      %1146 = vmatprep.subr.mxu0 0.0
      %1147 = vmatpush1.xpose.msra.mxu0 0.0
      %1148 = vmatprep.subr.mxu0 0.0
      %1149 = vmatpush1.xpose.msra.mxu0 0.0
      %1150 = vmatprep.subr.mxu0 0.0
      %1151 = vmatpush1.xpose.msra.mxu0 0.0
      %1152 = vmatprep.subr.mxu0 0.0
      %1153 = vmatpush1.xpose.msra.mxu0 0.0
      %1154 = vmatprep.subr.mxu0 0.0
      %1155 = vmatpush1.xpose.msra.mxu0 0.0
      %1156 = vmatprep.subr.mxu0 0.0
      %1157 = vmatpush1.xpose.msra.mxu0 0.0
      %1158 = vmatprep.subr.mxu0 0.0
      %1159 = vmatpush1.xpose.msra.mxu0 0.0
      %1160 = vmatprep.subr.mxu0 0.0
      %1161 = vmatpush1.xpose.msra.mxu0 0.0
      %1162 = vmatprep.subr.mxu0 0.0
      %1163 = vmatpush1.xpose.msra.mxu0 0.0
      %1164 = vmatprep.subr.mxu0 0.0
      %1165 = vmatpush1.xpose.msra.mxu0 0.0
      %1166 = vmatprep.subr.mxu0 0.0
      %1167 = vmatpush1.xpose.msra.mxu0 0.0
      %1168 = vmatprep.subr.mxu0 0.0
      %1169 = vmatpush1.xpose.msra.mxu0 0.0
      %1170 = vmatprep.subr.mxu0 0.0
      %1171 = vmatpush1.xpose.msra.mxu0 0.0
      %1172 = vmatprep.subr.mxu0 0.0
      %1173 = vmatpush1.xpose.msra.mxu0 0.0
      %1174 = vmatprep.subr.mxu0 0.0
      %1175 = vmatpush1.xpose.msra.mxu0 0.0
      %1176 = vmatprep.subr.mxu0 0.0
      %1177 = vmatpush1.xpose.msra.mxu0 0.0
      %1178 = vmatprep.mubr.f32.mxu0 0.0
      %1179 = vmatmul.mubr.f32.gmra.mrb[0].mxu0 %v1110
      %v1180 = vpop.f32.mrb[0].mxu0
      %v1181 = vadd.f32 0.0, %v1180
      %v1182 = vpop.f32.mrb[0].mxu0
      %1183 = vdwg.mxu0
      %v1184 = vmul.f32 %v1181, 0.35355338
      %v1185 = vadd.f32 %v1184, %v701
      %v1186 = vsel %vm621, %v1185, -inf
      %1187 = vmax.xlane.f32.xlu0 %v1186
      %v1188 = vpop.xlane.xlu0 %1187
      %v1189 = vsub.f32 %v1185, %v1188
      %v1190 = vmul.f32 %v1189, 1.442695
      %v1191 = vpow.pop %v1190
      %v1192 = vsel %vm621, %v1191, 0.0
      %1193 = vadd.xlane.f32.xlu0 %v1192
      %v1194 = vpop.xlane.xlu0 %1193
      %v1195 = vrcp.pop %v1194
      %v1196 = vmul.f32 %v1191, %v1195
      %1197 = vrot.lane.b32.xlu0 %v615, 48
      %v1198 = vpop.permute.xlu0 %1197
      %v1201 = vsel %vm621, %v1196, 0
      %1203 = vmatprep.subr.mxu0 0.0
      %1204 = vmatpush1.msra.mxu0 %v1198
      %1205 = vmatprep.subr.mxu0 0.0
      %1206 = vmatpush1.msra.mxu0 0.0
      %1207 = vmatprep.subr.mxu0 0.0
      %1208 = vmatpush1.msra.mxu0 0.0
      %1209 = vmatprep.subr.mxu0 0.0
      %1210 = vmatpush1.msra.mxu0 0.0
      %1211 = vmatprep.subr.mxu0 0.0
      %1212 = vmatpush1.msra.mxu0 0.0
      %1213 = vmatprep.subr.mxu0 0.0
      %1214 = vmatpush1.msra.mxu0 0.0
      %1215 = vmatprep.subr.mxu0 0.0
      %1216 = vmatpush1.msra.mxu0 0.0
      %1217 = vmatprep.subr.mxu0 0.0
      %1218 = vmatpush1.msra.mxu0 0.0
      %1219 = vmatprep.subr.mxu0 0.0
      %1220 = vmatpush1.msra.mxu0 0.0
      %1221 = vmatprep.subr.mxu0 0.0
      %1222 = vmatpush1.msra.mxu0 0.0
      %1223 = vmatprep.subr.mxu0 0.0
      %1224 = vmatpush1.msra.mxu0 0.0
      %1225 = vmatprep.subr.mxu0 0.0
      %1226 = vmatpush1.msra.mxu0 0.0
      %1227 = vmatprep.subr.mxu0 0.0
      %1228 = vmatpush1.msra.mxu0 0.0
      %1229 = vmatprep.subr.mxu0 0.0
      %1230 = vmatpush1.msra.mxu0 0.0
      %1231 = vmatprep.subr.mxu0 0.0
      %1232 = vmatpush1.msra.mxu0 0.0
      %1233 = vmatprep.subr.mxu0 0.0
      %1234 = vmatpush1.msra.mxu0 0.0
      %1235 = vmatprep.subr.mxu0 0.0
      %1236 = vmatpush1.msra.mxu0 0.0
      %1237 = vmatprep.subr.mxu0 0.0
      %1238 = vmatpush1.msra.mxu0 0.0
      %1239 = vmatprep.subr.mxu0 0.0
      %1240 = vmatpush1.msra.mxu0 0.0
      %1241 = vmatprep.subr.mxu0 0.0
      %1242 = vmatpush1.msra.mxu0 0.0
      %1243 = vmatprep.subr.mxu0 0.0
      %1244 = vmatpush1.msra.mxu0 0.0
      %1245 = vmatprep.subr.mxu0 0.0
      %1246 = vmatpush1.msra.mxu0 0.0
      %1247 = vmatprep.subr.mxu0 0.0
      %1248 = vmatpush1.msra.mxu0 0.0
      %1249 = vmatprep.subr.mxu0 0.0
      %1250 = vmatpush1.msra.mxu0 0.0
      %1251 = vmatprep.subr.mxu0 0.0
      %1252 = vmatpush1.msra.mxu0 0.0
      %1253 = vmatprep.subr.mxu0 0.0
      %1254 = vmatpush1.msra.mxu0 0.0
      %1255 = vmatprep.subr.mxu0 0.0
      %1256 = vmatpush1.msra.mxu0 0.0
      %1257 = vmatprep.subr.mxu0 0.0
      %1258 = vmatpush1.msra.mxu0 0.0
      %1259 = vmatprep.subr.mxu0 0.0
      %1260 = vmatpush1.msra.mxu0 0.0
      %1261 = vmatprep.subr.mxu0 0.0
      %1262 = vmatpush1.msra.mxu0 0.0
      %1263 = vmatprep.subr.mxu0 0.0
      %1264 = vmatpush1.msra.mxu0 0.0
      %1265 = vmatprep.subr.mxu0 0.0
      %1266 = vmatpush1.msra.mxu0 0.0
      %1267 = vmatprep.mubr.f32.mxu0 0.0
      %1268 = vmatmul.mubr.f32.gmra.mrb[0].mxu0 %v1201
      %v1269 = vpop.f32.mrb[0].mxu0
      %v1270 = vadd.f32 0.0, %v1269
      %v1271 = vpop.f32.mrb[0].mxu0
      %1272 = vdwg.mxu0
      %v1273 = vld [vmem:[%s4 + $0x10] sm:$0xff]
      %v1275 = vsel %vm621, %v1270, 0
      %1277 = vmatprep.subr.mxu0 0.0
      %1278 = vmatpush1.msra.mxu0 %v1273
      %1279 = vmatprep.subr.mxu0 0.0
      %1280 = vmatpush1.msra.mxu0 0.0
      %1281 = vmatprep.subr.mxu0 0.0
      %1282 = vmatpush1.msra.mxu0 0.0
      %1283 = vmatprep.subr.mxu0 0.0
      %1284 = vmatpush1.msra.mxu0 0.0
      %1285 = vmatprep.subr.mxu0 0.0
      %1286 = vmatpush1.msra.mxu0 0.0
      %1287 = vmatprep.subr.mxu0 0.0
      %1288 = vmatpush1.msra.mxu0 0.0
      %1289 = vmatprep.subr.mxu0 0.0
      %1290 = vmatpush1.msra.mxu0 0.0
      %1291 = vmatprep.subr.mxu0 0.0
      %1292 = vmatpush1.msra.mxu0 0.0
      %1293 = vmatprep.subr.mxu0 0.0
      %1294 = vmatpush1.msra.mxu0 0.0
      %1295 = vmatprep.subr.mxu0 0.0
      %1296 = vmatpush1.msra.mxu0 0.0
      %1297 = vmatprep.subr.mxu0 0.0
      %1298 = vmatpush1.msra.mxu0 0.0
      %1299 = vmatprep.subr.mxu0 0.0
      %1300 = vmatpush1.msra.mxu0 0.0
      %1301 = vmatprep.subr.mxu0 0.0
      %1302 = vmatpush1.msra.mxu0 0.0
      %1303 = vmatprep.subr.mxu0 0.0
      %1304 = vmatpush1.msra.mxu0 0.0
      %1305 = vmatprep.subr.mxu0 0.0
      %1306 = vmatpush1.msra.mxu0 0.0
      %1307 = vmatprep.subr.mxu0 0.0
      %1308 = vmatpush1.msra.mxu0 0.0
      %1309 = vmatprep.subr.mxu0 0.0
      %1310 = vmatpush1.msra.mxu0 0.0
      %1311 = vmatprep.subr.mxu0 0.0
      %1312 = vmatpush1.msra.mxu0 0.0
      %1313 = vmatprep.subr.mxu0 0.0
      %1314 = vmatpush1.msra.mxu0 0.0
      %1315 = vmatprep.subr.mxu0 0.0
      %1316 = vmatpush1.msra.mxu0 0.0
      %1317 = vmatprep.subr.mxu0 0.0
      %1318 = vmatpush1.msra.mxu0 0.0
      %1319 = vmatprep.subr.mxu0 0.0
      %1320 = vmatpush1.msra.mxu0 0.0
      %1321 = vmatprep.subr.mxu0 0.0
      %1322 = vmatpush1.msra.mxu0 0.0
      %1323 = vmatprep.subr.mxu0 0.0
      %1324 = vmatpush1.msra.mxu0 0.0
      %1325 = vmatprep.subr.mxu0 0.0
      %1326 = vmatpush1.msra.mxu0 0.0
      %1327 = vmatprep.subr.mxu0 0.0
      %1328 = vmatpush1.msra.mxu0 0.0
      %1329 = vmatprep.subr.mxu0 0.0
      %1330 = vmatpush1.msra.mxu0 0.0
      %1331 = vmatprep.subr.mxu0 0.0
      %1332 = vmatpush1.msra.mxu0 0.0
      %1333 = vmatprep.subr.mxu0 0.0
      %1334 = vmatpush1.msra.mxu0 0.0
      %1335 = vmatprep.subr.mxu0 0.0
      %1336 = vmatpush1.msra.mxu0 0.0
      %1337 = vmatprep.subr.mxu0 0.0
      %1338 = vmatpush1.msra.mxu0 0.0
      %1339 = vmatprep.subr.mxu0 0.0
      %1340 = vmatpush1.msra.mxu0 0.0
      %1341 = vmatprep.mubr.f32.mxu0 0.0
      %1342 = vmatmul.mubr.f32.gmra.mrb[0].mxu0 %v1275
      %v1343 = vpop.f32.mrb[0].mxu0
      %v1344 = vadd.f32 0.0, %v1343
      %v1345 = vpop.f32.mrb[0].mxu0
      %1346 = vdwg.mxu0
      %v1347 = vadd.f32 %v1103, %v1344
      %1348 = vrot.lane.b32.xlu0 %v615, 104
      %v1349 = vpop.permute.xlu0 %1348
      %1350 = vrot.lane.b32.xlu0 %v615, 72
      %v1351 = vpop.permute.xlu0 %1350
      %v1352 = vsel %vm621, %v1349, 0
      %v1354 = vsel %vm621, %v1351, 0
      %1356 = vmatprep.subr.mxu0 0.0
      %1357 = vmatpush1.xpose.msra.mxu0 %v1354
      %1358 = vmatprep.subr.mxu0 0.0
      %1359 = vmatpush1.xpose.msra.mxu0 0.0
      %1360 = vmatprep.subr.mxu0 0.0
      %1361 = vmatpush1.xpose.msra.mxu0 0.0
      %1362 = vmatprep.subr.mxu0 0.0
      %1363 = vmatpush1.xpose.msra.mxu0 0.0
      %1364 = vmatprep.subr.mxu0 0.0
      %1365 = vmatpush1.xpose.msra.mxu0 0.0
      %1366 = vmatprep.subr.mxu0 0.0
      %1367 = vmatpush1.xpose.msra.mxu0 0.0
      %1368 = vmatprep.subr.mxu0 0.0
      %1369 = vmatpush1.xpose.msra.mxu0 0.0
      %1370 = vmatprep.subr.mxu0 0.0
      %1371 = vmatpush1.xpose.msra.mxu0 0.0
      %1372 = vmatprep.subr.mxu0 0.0
      %1373 = vmatpush1.xpose.msra.mxu0 0.0
      %1374 = vmatprep.subr.mxu0 0.0
      %1375 = vmatpush1.xpose.msra.mxu0 0.0
      %1376 = vmatprep.subr.mxu0 0.0
      %1377 = vmatpush1.xpose.msra.mxu0 0.0
      %1378 = vmatprep.subr.mxu0 0.0
      %1379 = vmatpush1.xpose.msra.mxu0 0.0
      %1380 = vmatprep.subr.mxu0 0.0
      %1381 = vmatpush1.xpose.msra.mxu0 0.0
      %1382 = vmatprep.subr.mxu0 0.0
      %1383 = vmatpush1.xpose.msra.mxu0 0.0
      %1384 = vmatprep.subr.mxu0 0.0
      %1385 = vmatpush1.xpose.msra.mxu0 0.0
      %1386 = vmatprep.subr.mxu0 0.0
      %1387 = vmatpush1.xpose.msra.mxu0 0.0
      %1388 = vmatprep.subr.mxu0 0.0
      %1389 = vmatpush1.xpose.msra.mxu0 0.0
      %1390 = vmatprep.subr.mxu0 0.0
      %1391 = vmatpush1.xpose.msra.mxu0 0.0
      %1392 = vmatprep.subr.mxu0 0.0
      %1393 = vmatpush1.xpose.msra.mxu0 0.0
      %1394 = vmatprep.subr.mxu0 0.0
      %1395 = vmatpush1.xpose.msra.mxu0 0.0
      %1396 = vmatprep.subr.mxu0 0.0
      %1397 = vmatpush1.xpose.msra.mxu0 0.0
      %1398 = vmatprep.subr.mxu0 0.0
      %1399 = vmatpush1.xpose.msra.mxu0 0.0
      %1400 = vmatprep.subr.mxu0 0.0
      %1401 = vmatpush1.xpose.msra.mxu0 0.0
      %1402 = vmatprep.subr.mxu0 0.0
      %1403 = vmatpush1.xpose.msra.mxu0 0.0
      %1404 = vmatprep.subr.mxu0 0.0
      %1405 = vmatpush1.xpose.msra.mxu0 0.0
      %1406 = vmatprep.subr.mxu0 0.0
      %1407 = vmatpush1.xpose.msra.mxu0 0.0
      %1408 = vmatprep.subr.mxu0 0.0
      %1409 = vmatpush1.xpose.msra.mxu0 0.0
      %1410 = vmatprep.subr.mxu0 0.0
      %1411 = vmatpush1.xpose.msra.mxu0 0.0
      %1412 = vmatprep.subr.mxu0 0.0
      %1413 = vmatpush1.xpose.msra.mxu0 0.0
      %1414 = vmatprep.subr.mxu0 0.0
      %1415 = vmatpush1.xpose.msra.mxu0 0.0
      %1416 = vmatprep.subr.mxu0 0.0
      %1417 = vmatpush1.xpose.msra.mxu0 0.0
      %1418 = vmatprep.subr.mxu0 0.0
      %1419 = vmatpush1.xpose.msra.mxu0 0.0
      %1420 = vmatprep.mubr.f32.mxu0 0.0
      %1421 = vmatmul.mubr.f32.gmra.mrb[0].mxu0 %v1352
      %v1422 = vpop.f32.mrb[0].mxu0
      %v1423 = vadd.f32 0.0, %v1422
      %v1424 = vpop.f32.mrb[0].mxu0
      %1425 = vdwg.mxu0
      %v1426 = vmul.f32 %v1423, 0.35355338
      %v1427 = vadd.f32 %v1426, %v701
      %v1428 = vsel %vm621, %v1427, -inf
      %1429 = vmax.xlane.f32.xlu0 %v1428
      %v1430 = vpop.xlane.xlu0 %1429
      %v1431 = vsub.f32 %v1427, %v1430
      %v1432 = vmul.f32 %v1431, 1.442695
      %v1433 = vpow.pop %v1432
      %v1434 = vsel %vm621, %v1433, 0.0
      %1435 = vadd.xlane.f32.xlu0 %v1434
      %v1436 = vpop.xlane.xlu0 %1435
      %v1437 = vrcp.pop %v1436
      %v1438 = vmul.f32 %v1433, %v1437
      %1439 = vrot.lane.b32.xlu0 %v615, 40
      %v1440 = vpop.permute.xlu0 %1439
      %v1443 = vsel %vm621, %v1438, 0
      %1445 = vmatprep.subr.mxu0 0.0
      %1446 = vmatpush1.msra.mxu0 %v1440
      %1447 = vmatprep.subr.mxu0 0.0
      %1448 = vmatpush1.msra.mxu0 0.0
      %1449 = vmatprep.subr.mxu0 0.0
      %1450 = vmatpush1.msra.mxu0 0.0
      %1451 = vmatprep.subr.mxu0 0.0
      %1452 = vmatpush1.msra.mxu0 0.0
      %1453 = vmatprep.subr.mxu0 0.0
      %1454 = vmatpush1.msra.mxu0 0.0
      %1455 = vmatprep.subr.mxu0 0.0
      %1456 = vmatpush1.msra.mxu0 0.0
      %1457 = vmatprep.subr.mxu0 0.0
      %1458 = vmatpush1.msra.mxu0 0.0
      %1459 = vmatprep.subr.mxu0 0.0
      %1460 = vmatpush1.msra.mxu0 0.0
      %1461 = vmatprep.subr.mxu0 0.0
      %1462 = vmatpush1.msra.mxu0 0.0
      %1463 = vmatprep.subr.mxu0 0.0
      %1464 = vmatpush1.msra.mxu0 0.0
      %1465 = vmatprep.subr.mxu0 0.0
      %1466 = vmatpush1.msra.mxu0 0.0
      %1467 = vmatprep.subr.mxu0 0.0
      %1468 = vmatpush1.msra.mxu0 0.0
      %1469 = vmatprep.subr.mxu0 0.0
      %1470 = vmatpush1.msra.mxu0 0.0
      %1471 = vmatprep.subr.mxu0 0.0
      %1472 = vmatpush1.msra.mxu0 0.0
      %1473 = vmatprep.subr.mxu0 0.0
      %1474 = vmatpush1.msra.mxu0 0.0
      %1475 = vmatprep.subr.mxu0 0.0
      %1476 = vmatpush1.msra.mxu0 0.0
      %1477 = vmatprep.subr.mxu0 0.0
      %1478 = vmatpush1.msra.mxu0 0.0
      %1479 = vmatprep.subr.mxu0 0.0
      %1480 = vmatpush1.msra.mxu0 0.0
      %1481 = vmatprep.subr.mxu0 0.0
      %1482 = vmatpush1.msra.mxu0 0.0
      %1483 = vmatprep.subr.mxu0 0.0
      %1484 = vmatpush1.msra.mxu0 0.0
      %1485 = vmatprep.subr.mxu0 0.0
      %1486 = vmatpush1.msra.mxu0 0.0
      %1487 = vmatprep.subr.mxu0 0.0
      %1488 = vmatpush1.msra.mxu0 0.0
      %1489 = vmatprep.subr.mxu0 0.0
      %1490 = vmatpush1.msra.mxu0 0.0
      %1491 = vmatprep.subr.mxu0 0.0
      %1492 = vmatpush1.msra.mxu0 0.0
      %1493 = vmatprep.subr.mxu0 0.0
      %1494 = vmatpush1.msra.mxu0 0.0
      %1495 = vmatprep.subr.mxu0 0.0
      %1496 = vmatpush1.msra.mxu0 0.0
      %1497 = vmatprep.subr.mxu0 0.0
      %1498 = vmatpush1.msra.mxu0 0.0
      %1499 = vmatprep.subr.mxu0 0.0
      %1500 = vmatpush1.msra.mxu0 0.0
      %1501 = vmatprep.subr.mxu0 0.0
      %1502 = vmatpush1.msra.mxu0 0.0
      %1503 = vmatprep.subr.mxu0 0.0
      %1504 = vmatpush1.msra.mxu0 0.0
      %1505 = vmatprep.subr.mxu0 0.0
      %1506 = vmatpush1.msra.mxu0 0.0
      %1507 = vmatprep.subr.mxu0 0.0
      %1508 = vmatpush1.msra.mxu0 0.0
      %1509 = vmatprep.mubr.f32.mxu0 0.0
      %1510 = vmatmul.mubr.f32.gmra.mrb[0].mxu0 %v1443
      %v1511 = vpop.f32.mrb[0].mxu0
      %v1512 = vadd.f32 0.0, %v1511
      %v1513 = vpop.f32.mrb[0].mxu0
      %1514 = vdwg.mxu0
      %v1515 = vld [vmem:[%s4 + $0x18] sm:$0xff]
      %v1517 = vsel %vm621, %v1512, 0
      %1519 = vmatprep.subr.mxu0 0.0
      %1520 = vmatpush1.msra.mxu0 %v1515
      %1521 = vmatprep.subr.mxu0 0.0
      %1522 = vmatpush1.msra.mxu0 0.0
      %1523 = vmatprep.subr.mxu0 0.0
      %1524 = vmatpush1.msra.mxu0 0.0
      %1525 = vmatprep.subr.mxu0 0.0
      %1526 = vmatpush1.msra.mxu0 0.0
      %1527 = vmatprep.subr.mxu0 0.0
      %1528 = vmatpush1.msra.mxu0 0.0
      %1529 = vmatprep.subr.mxu0 0.0
      %1530 = vmatpush1.msra.mxu0 0.0
      %1531 = vmatprep.subr.mxu0 0.0
      %1532 = vmatpush1.msra.mxu0 0.0
      %1533 = vmatprep.subr.mxu0 0.0
      %1534 = vmatpush1.msra.mxu0 0.0
      %1535 = vmatprep.subr.mxu0 0.0
      %1536 = vmatpush1.msra.mxu0 0.0
      %1537 = vmatprep.subr.mxu0 0.0
      %1538 = vmatpush1.msra.mxu0 0.0
      %1539 = vmatprep.subr.mxu0 0.0
      %1540 = vmatpush1.msra.mxu0 0.0
      %1541 = vmatprep.subr.mxu0 0.0
      %1542 = vmatpush1.msra.mxu0 0.0
      %1543 = vmatprep.subr.mxu0 0.0
      %1544 = vmatpush1.msra.mxu0 0.0
      %1545 = vmatprep.subr.mxu0 0.0
      %1546 = vmatpush1.msra.mxu0 0.0
      %1547 = vmatprep.subr.mxu0 0.0
      %1548 = vmatpush1.msra.mxu0 0.0
      %1549 = vmatprep.subr.mxu0 0.0
      %1550 = vmatpush1.msra.mxu0 0.0
      %1551 = vmatprep.subr.mxu0 0.0
      %1552 = vmatpush1.msra.mxu0 0.0
      %1553 = vmatprep.subr.mxu0 0.0
      %1554 = vmatpush1.msra.mxu0 0.0
      %1555 = vmatprep.subr.mxu0 0.0
      %1556 = vmatpush1.msra.mxu0 0.0
      %1557 = vmatprep.subr.mxu0 0.0
      %1558 = vmatpush1.msra.mxu0 0.0
      %1559 = vmatprep.subr.mxu0 0.0
      %1560 = vmatpush1.msra.mxu0 0.0
      %1561 = vmatprep.subr.mxu0 0.0
      %1562 = vmatpush1.msra.mxu0 0.0
      %1563 = vmatprep.subr.mxu0 0.0
      %1564 = vmatpush1.msra.mxu0 0.0
      %1565 = vmatprep.subr.mxu0 0.0
      %1566 = vmatpush1.msra.mxu0 0.0
      %1567 = vmatprep.subr.mxu0 0.0
      %1568 = vmatpush1.msra.mxu0 0.0
      %1569 = vmatprep.subr.mxu0 0.0
      %1570 = vmatpush1.msra.mxu0 0.0
      %1571 = vmatprep.subr.mxu0 0.0
      %1572 = vmatpush1.msra.mxu0 0.0
      %1573 = vmatprep.subr.mxu0 0.0
      %1574 = vmatpush1.msra.mxu0 0.0
      %1575 = vmatprep.subr.mxu0 0.0
      %1576 = vmatpush1.msra.mxu0 0.0
      %1577 = vmatprep.subr.mxu0 0.0
      %1578 = vmatpush1.msra.mxu0 0.0
      %1579 = vmatprep.subr.mxu0 0.0
      %1580 = vmatpush1.msra.mxu0 0.0
      %1581 = vmatprep.subr.mxu0 0.0
      %1582 = vmatpush1.msra.mxu0 0.0
      %1583 = vmatprep.mubr.f32.mxu0 0.0
      %1584 = vmatmul.mubr.f32.gmra.mrb[0].mxu0 %v1517
      %v1585 = vpop.f32.mrb[0].mxu0
      %v1586 = vadd.f32 0.0, %v1585
      %v1587 = vpop.f32.mrb[0].mxu0
      %1588 = vdwg.mxu0
      %v1589 = vadd.f32 %v1347, %v1586
      %v1590 = vld [vmem:[%s5] sm:$0x1]
      %v1592 = vlaneseq
      %v1593 = vshrl.u32 %v1592, 7
      %v1594 = vsub.s32 0, %v1593
      %v1595 = vrot.slane %v1590, %v1594
      %v1597 = vadd.f32 %v1589, %v1595
      %v1598 = vadd.f32 %v1597, %v531
      %v1599 = vld [vmem:[%s8] sm:$0x1]
      %v1600 = vld [vmem:[%s9] sm:$0x1]
      %v1601 = vsel %vm544, %v1598, 0.0
      %1602 = vadd.xlane.f32.xlu0 %v1601
      %v1603 = vpop.xlane.xlu0 %1602
      %v1604 = vrcp.pop 32.0
      %v1605 = vmul.f32 %v1603, %v1604
      %v1606 = vsub.f32 %v1598, %v1605
      %v1607 = vmul.f32 %v1606, %v1606
      %v1608 = vsel %vm544, %v1607, 0.0
      %1609 = vadd.xlane.f32.xlu0 %v1608
      %v1610 = vpop.xlane.xlu0 %1609
      %v1611 = vmul.f32 %v1610, %v1604
      %v1612 = vadd.f32 %v1611, 1e-12
      %v1613 = vrsqrt.pop %v1612
      %v1614 = vmul.f32 %v1606, %v1613
      %v1616 = vlaneseq
      %v1617 = vshrl.u32 %v1616, 7
      %v1618 = vsub.s32 0, %v1617
      %v1619 = vrot.slane %v1599, %v1618
      %v1621 = vmul.f32 %v1614, %v1619
      %v1623 = vlaneseq
      %v1624 = vshrl.u32 %v1623, 7
      %v1625 = vsub.s32 0, %v1624
      %v1626 = vrot.slane %v1600, %v1625
      %v1628 = vadd.f32 %v1621, %v1626
      %v1629 = vld [vmem:[%s10] sm:$0xff]
      %v1630 = vld [vmem:[%s10 + $0x8] sm:$0xff]
      %v1631 = vld [vmem:[%s10 + $0x10] sm:$0xff]
      %v1632 = vld [vmem:[%s10 + $0x18] sm:$0xff]
      %v1633 = vld [vmem:[%s11] sm:$0x1]
      %v1635 = vlaneseq
      %v1636 = vshrl.u32 %v1635, 7
      %v1637 = vsub.s32 0, %v1636
      %v1638 = vrot.slane %v1633, %v1637
      %v1641 = vsel %vm544, %v1628, 0
      %1643 = vmatprep.subr.mxu0 0.0
      %1644 = vmatpush1.msra.mxu0 %v1629
      %1645 = vmatprep.subr.mxu0 0.0
      %1646 = vmatpush1.msra.mxu0 %v1630
      %1647 = vmatprep.subr.mxu0 0.0
      %1648 = vmatpush1.msra.mxu0 %v1631
      %1649 = vmatprep.subr.mxu0 0.0
      %1650 = vmatpush1.msra.mxu0 %v1632
      %1651 = vmatprep.subr.mxu0 0.0
      %1652 = vmatpush1.msra.mxu0 0.0
      %1653 = vmatprep.subr.mxu0 0.0
      %1654 = vmatpush1.msra.mxu0 0.0
      %1655 = vmatprep.subr.mxu0 0.0
      %1656 = vmatpush1.msra.mxu0 0.0
      %1657 = vmatprep.subr.mxu0 0.0
      %1658 = vmatpush1.msra.mxu0 0.0
      %1659 = vmatprep.subr.mxu0 0.0
      %1660 = vmatpush1.msra.mxu0 0.0
      %1661 = vmatprep.subr.mxu0 0.0
      %1662 = vmatpush1.msra.mxu0 0.0
      %1663 = vmatprep.subr.mxu0 0.0
      %1664 = vmatpush1.msra.mxu0 0.0
      %1665 = vmatprep.subr.mxu0 0.0
      %1666 = vmatpush1.msra.mxu0 0.0
      %1667 = vmatprep.subr.mxu0 0.0
      %1668 = vmatpush1.msra.mxu0 0.0
      %1669 = vmatprep.subr.mxu0 0.0
      %1670 = vmatpush1.msra.mxu0 0.0
      %1671 = vmatprep.subr.mxu0 0.0
      %1672 = vmatpush1.msra.mxu0 0.0
      %1673 = vmatprep.subr.mxu0 0.0
      %1674 = vmatpush1.msra.mxu0 0.0
      %1675 = vmatprep.subr.mxu0 0.0
      %1676 = vmatpush1.msra.mxu0 0.0
      %1677 = vmatprep.subr.mxu0 0.0
      %1678 = vmatpush1.msra.mxu0 0.0
      %1679 = vmatprep.subr.mxu0 0.0
      %1680 = vmatpush1.msra.mxu0 0.0
      %1681 = vmatprep.subr.mxu0 0.0
      %1682 = vmatpush1.msra.mxu0 0.0
      %1683 = vmatprep.subr.mxu0 0.0
      %1684 = vmatpush1.msra.mxu0 0.0
      %1685 = vmatprep.subr.mxu0 0.0
      %1686 = vmatpush1.msra.mxu0 0.0
      %1687 = vmatprep.subr.mxu0 0.0
      %1688 = vmatpush1.msra.mxu0 0.0
      %1689 = vmatprep.subr.mxu0 0.0
      %1690 = vmatpush1.msra.mxu0 0.0
      %1691 = vmatprep.subr.mxu0 0.0
      %1692 = vmatpush1.msra.mxu0 0.0
      %1693 = vmatprep.subr.mxu0 0.0
      %1694 = vmatpush1.msra.mxu0 0.0
      %1695 = vmatprep.subr.mxu0 0.0
      %1696 = vmatpush1.msra.mxu0 0.0
      %1697 = vmatprep.subr.mxu0 0.0
      %1698 = vmatpush1.msra.mxu0 0.0
      %1699 = vmatprep.subr.mxu0 0.0
      %1700 = vmatpush1.msra.mxu0 0.0
      %1701 = vmatprep.subr.mxu0 0.0
      %1702 = vmatpush1.msra.mxu0 0.0
      %1703 = vmatprep.subr.mxu0 0.0
      %1704 = vmatpush1.msra.mxu0 0.0
      %1705 = vmatprep.subr.mxu0 0.0
      %1706 = vmatpush1.msra.mxu0 0.0
      %1707 = vmatprep.mubr.f32.mxu0 0.0
      %1708 = vmatmul.mubr.f32.gmra.mrb[0].mxu0 %v1641
      %v1709 = vpop.f32.mrb[0].mxu0
      %v1710 = vadd.f32 %v1638, %v1709
      %v1711 = vpop.f32.mrb[0].mxu0
      %1712 = vdwg.mxu0
      %v1713 = vmul.f32 %v1710, 0.5
      %v1714 = vmul.f32 %v1710, 0.044715
      %v1715 = vmul.f32 %v1714, %v1710
      %v1716 = vmul.f32 %v1715, %v1710
      %v1717 = vadd.f32 %v1710, %v1716
      %v1718 = vmul.f32 %v1717, 0.7978846
      %v1719 = vtanh.pop %v1718
      %v1720 = vadd.f32 %v1719, 1.0
      %v1721 = vmul.f32 %v1713, %v1720
      %v1722 = vld [vmem:[%s12] sm:$0xff]
      %v1723 = vld [vmem:[%s12 + $0x8] sm:$0xff]
      %v1724 = vld [vmem:[%s12 + $0x10] sm:$0xff]
      %v1725 = vld [vmem:[%s12 + $0x18] sm:$0xff]
      %v1726 = vld [vmem:[%s12 + $0x20] sm:$0xff]
      %v1727 = vld [vmem:[%s12 + $0x28] sm:$0xff]
      %v1728 = vld [vmem:[%s12 + $0x30] sm:$0xff]
      %v1729 = vld [vmem:[%s12 + $0x38] sm:$0xff]
      %v1730 = vld [vmem:[%s13] sm:$0x1]
      %v1732 = vlaneseq
      %v1733 = vshrl.u32 %v1732, 7
      %v1734 = vsub.s32 0, %v1733
      %v1735 = vrot.slane %v1730, %v1734
      %vm1737 = vcmask 523264
      %v1739 = vsel %vm1737, %v1721, 0
      %1741 = vmatprep.subr.mxu0 0.0
      %1742 = vmatpush1.msra.mxu0 %v1722
      %1743 = vmatprep.subr.mxu0 0.0
      %1744 = vmatpush1.msra.mxu0 %v1723
      %1745 = vmatprep.subr.mxu0 0.0
      %1746 = vmatpush1.msra.mxu0 %v1724
      %1747 = vmatprep.subr.mxu0 0.0
      %1748 = vmatpush1.msra.mxu0 %v1725
      %1749 = vmatprep.subr.mxu0 0.0
      %1750 = vmatpush1.msra.mxu0 %v1726
      %1751 = vmatprep.subr.mxu0 0.0
      %1752 = vmatpush1.msra.mxu0 %v1727
      %1753 = vmatprep.subr.mxu0 0.0
      %1754 = vmatpush1.msra.mxu0 %v1728
      %1755 = vmatprep.subr.mxu0 0.0
      %1756 = vmatpush1.msra.mxu0 %v1729
      %1757 = vmatprep.subr.mxu0 0.0
      %1758 = vmatpush1.msra.mxu0 0.0
      %1759 = vmatprep.subr.mxu0 0.0
      %1760 = vmatpush1.msra.mxu0 0.0
      %1761 = vmatprep.subr.mxu0 0.0
      %1762 = vmatpush1.msra.mxu0 0.0
      %1763 = vmatprep.subr.mxu0 0.0
      %1764 = vmatpush1.msra.mxu0 0.0
      %1765 = vmatprep.subr.mxu0 0.0
      %1766 = vmatpush1.msra.mxu0 0.0
      %1767 = vmatprep.subr.mxu0 0.0
      %1768 = vmatpush1.msra.mxu0 0.0
      %1769 = vmatprep.subr.mxu0 0.0
      %1770 = vmatpush1.msra.mxu0 0.0
      %1771 = vmatprep.subr.mxu0 0.0
      %1772 = vmatpush1.msra.mxu0 0.0
      %1773 = vmatprep.subr.mxu0 0.0
      %1774 = vmatpush1.msra.mxu0 0.0
      %1775 = vmatprep.subr.mxu0 0.0
      %1776 = vmatpush1.msra.mxu0 0.0
      %1777 = vmatprep.subr.mxu0 0.0
      %1778 = vmatpush1.msra.mxu0 0.0
      %1779 = vmatprep.subr.mxu0 0.0
      %1780 = vmatpush1.msra.mxu0 0.0
      %1781 = vmatprep.subr.mxu0 0.0
      %1782 = vmatpush1.msra.mxu0 0.0
      %1783 = vmatprep.subr.mxu0 0.0
      %1784 = vmatpush1.msra.mxu0 0.0
      %1785 = vmatprep.subr.mxu0 0.0
      %1786 = vmatpush1.msra.mxu0 0.0
      %1787 = vmatprep.subr.mxu0 0.0
      %1788 = vmatpush1.msra.mxu0 0.0
      %1789 = vmatprep.subr.mxu0 0.0
      %1790 = vmatpush1.msra.mxu0 0.0
      %1791 = vmatprep.subr.mxu0 0.0
      %1792 = vmatpush1.msra.mxu0 0.0
      %1793 = vmatprep.subr.mxu0 0.0
      %1794 = vmatpush1.msra.mxu0 0.0
      %1795 = vmatprep.subr.mxu0 0.0
      %1796 = vmatpush1.msra.mxu0 0.0
      %1797 = vmatprep.subr.mxu0 0.0
      %1798 = vmatpush1.msra.mxu0 0.0
      %1799 = vmatprep.subr.mxu0 0.0
      %1800 = vmatpush1.msra.mxu0 0.0
      %1801 = vmatprep.subr.mxu0 0.0
      %1802 = vmatpush1.msra.mxu0 0.0
      %1803 = vmatprep.subr.mxu0 0.0
      %1804 = vmatpush1.msra.mxu0 0.0
      %1805 = vmatprep.mubr.f32.mxu0 0.0
      %1806 = vmatmul.mubr.f32.gmra.mrb[0].mxu0 %v1739
      %v1807 = vpop.f32.mrb[0].mxu0
      %v1808 = vadd.f32 %v1735, %v1807
      %v1809 = vpop.f32.mrb[0].mxu0
      %1810 = vdwg.mxu0
      %v1811 = vadd.f32 %v1808, %v1628
      %v1812 = vld [vmem:[%s14] sm:$0x1]
      %v1813 = vld [vmem:[%s15] sm:$0x1]
      %v1814 = vsel %vm544, %v1811, 0.0
      %1815 = vadd.xlane.f32.xlu0 %v1814
      %v1816 = vpop.xlane.xlu0 %1815
      %v1817 = vmul.f32 %v1816, %v1604
      %v1818 = vsub.f32 %v1811, %v1817
      %v1819 = vmul.f32 %v1818, %v1818
      %v1820 = vsel %vm544, %v1819, 0.0
      %1821 = vadd.xlane.f32.xlu0 %v1820
      %v1822 = vpop.xlane.xlu0 %1821
      %v1823 = vmul.f32 %v1822, %v1604
      %v1824 = vadd.f32 %v1823, 1e-12
      %v1825 = vrsqrt.pop %v1824
      %v1826 = vmul.f32 %v1818, %v1825
      %v1828 = vlaneseq
      %v1829 = vshrl.u32 %v1828, 7
      %v1830 = vsub.s32 0, %v1829
      %v1831 = vrot.slane %v1812, %v1830
      %v1833 = vmul.f32 %v1826, %v1831
      %v1835 = vlaneseq
      %v1836 = vshrl.u32 %v1835, 7
      %v1837 = vsub.s32 0, %v1836
      %v1838 = vrot.slane %v1813, %v1837
      %v1840 = vadd.f32 %v1833, %v1838
      %1841 = vst.msk [vmem:[%s530] sm:$0xff] %vm544, %v1840
      %p1842 = scmp.lt.s32.totalorder %s27, 1
      %s1843 = scalar_select %p1842, %s27, 1
      %s1844 = smul.addr %s1843, 8
      %s1845 = scalar_lea.vmem %s16, %s1844
      // Predicated region
      $region85: #{model_forward.6} parent=83 // pred_check
        %p1846 = pneg %p391
      $region86: #{model_forward.6} parent=83 // pred_check_branch
        %1848 = sbr.rel (%p1846) target = $region88
      $region87: #{model_forward.6} parent=83 // pred_region
        _
      $region88: #{model_forward.6} parent=83 // pred_fallthru
        _
    $region84: #{model_forward.6} parent=5 // pred_fallthru
      _
    %p1849 = scmp.le.s32.totalorder 2, %s22
    // Predicated region
    $region89: #{model_forward.6} parent=5 // pred_check
      %p1850 = pneg %p1849
    $region90: #{model_forward.6} parent=5 // pred_check_branch
      %1852 = sbr.rel (%p1850) target = $region92
    $region91: #{model_forward.6} parent=5 // pred_region
      %s1853 = ssub.s32 %s22, 2
      // Predicated region
      $region93: #{model_forward.6} parent=91 // pred_check
        %p1854 = pneg %p397
      $region94: #{model_forward.6} parent=91 // pred_check_branch
        %1856 = sbr.rel (%p1854) target = $region96
      $region95: #{model_forward.6} parent=91 // pred_region
        %p1857 = scmp.lt.s32.totalorder %s28, 1
        %s1858 = scalar_select %p1857, %s28, 1
        %s1859 = smul.addr %s1858, 8
        %s1860 = scalar_lea.vmem %s16, %s1859
      $region96: #{model_forward.6} parent=91 // pred_fallthru
        _
    $region92: #{model_forward.6} parent=5 // pred_fallthru
      _
  $region6: #{model_forward.6} parent=0 // loop_footer
    %s26 = sadd.s32 1, %s22
  $region7: #{model_forward.6} parent=0 // loop_footer_branch
    %21 = sbr.rel target = $region3
  $region8: #{model_forward.6} parent=0 // loop_exit
    _

// kernel: model_forward.5
$region0: #{model_forward.5}
  #allocation0 [shape = 'u32[]', space=smem, size = 0x4, offset = 0x4, fixed_abs, tag = 'smem constant byte address 0x4 - core index']
  #allocation1 [shape = 'u32[144,128]{1,0:T(1,128)}', space=vmem, size = 0x12000, scoped, tag = 'internal scratch']
  %s0 = inlined_call_operand.vmem [shape: f32[2,8,32], index: 0, kind: input, shape index: {}]
  %s1 = inlined_call_operand.vmem [shape: f32[2,1,8], index: 1, kind: input, shape index: {}]
  %s2 = inlined_call_operand.vmem [shape: f32[32,96], index: 2, kind: input, shape index: {}]
  %s3 = inlined_call_operand.vmem [shape: f32[1,96], index: 3, kind: input, shape index: {}]
  %s4 = inlined_call_operand.vmem [shape: f32[32,32], index: 4, kind: input, shape index: {}]
  %s5 = inlined_call_operand.vmem [shape: f32[1,32], index: 5, kind: input, shape index: {}]
  %s6 = inlined_call_operand.vmem [shape: f32[1,32], index: 6, kind: input, shape index: {}]
  %s7 = inlined_call_operand.vmem [shape: f32[1,32], index: 7, kind: input, shape index: {}]
  %s8 = inlined_call_operand.vmem [shape: f32[1,32], index: 8, kind: input, shape index: {}]
  %s9 = inlined_call_operand.vmem [shape: f32[1,32], index: 9, kind: input, shape index: {}]
  %s10 = inlined_call_operand.vmem [shape: f32[32,64], index: 10, kind: input, shape index: {}]
  %s11 = inlined_call_operand.vmem [shape: f32[1,64], index: 11, kind: input, shape index: {}]
  %s12 = inlined_call_operand.vmem [shape: f32[64,32], index: 12, kind: input, shape index: {}]
  %s13 = inlined_call_operand.vmem [shape: f32[1,32], index: 13, kind: input, shape index: {}]
  %s14 = inlined_call_operand.vmem [shape: f32[1,32], index: 14, kind: input, shape index: {}]
  %s15 = inlined_call_operand.vmem [shape: f32[1,32], index: 15, kind: input, shape index: {}]
  %s16 = inlined_call_operand.vmem [shape: f32[2,8,32], index: 16, kind: output, shape index: {}]
  %s17 = sld [smem:[#allocation0]]
  $region97: #{model_forward.5} parent=0
    _
  %s19 = ssub.s32 1, %s17
  %s20 = scalar_select 0, %s19, %s17
  loop: start=0, step=1, limit=4
  $region2: #{model_forward.5} parent=0 // loop_pre_header
    _
  $region3: #{model_forward.5} parent=0 // loop_header
    %s22 = sphi 0, %s26
    %p23 = scmp.ge.s32.totalorder %s22, 4
    %s32 = sphi 0, %s34
    %s35 = sphi 0, %s32
    %s36 = sphi 0, %s35
    %s52 = sphi 0, %s36
    %s58 = sphi 0, %s60
    %s61 = sphi 0, %s58
    %s62 = sphi 0, %s61
    %s78 = sphi 0, %s62
    %s82 = sphi 0, %s82
    %s84 = sphi 0, %s82
    %s85 = sphi 0, %s84
    %s99 = sphi 0, %s85
    %s103 = sphi 0, %s103
    %s105 = sphi 0, %s103
    %s106 = sphi 0, %s105
    %s120 = sphi 0, %s106
    %s124 = sphi 0, %s124
    %s126 = sphi 0, %s124
    %s127 = sphi 0, %s126
    %s141 = sphi 0, %s127
    %s145 = sphi 0, %s145
    %s147 = sphi 0, %s145
    %s148 = sphi 0, %s147
    %s162 = sphi 0, %s148
    %s166 = sphi 0, %s166
    %s168 = sphi 0, %s166
    %s169 = sphi 0, %s168
    %s183 = sphi 0, %s169
    %s187 = sphi 0, %s187
    %s189 = sphi 0, %s187
    %s190 = sphi 0, %s189
    %s204 = sphi 0, %s190
    %s208 = sphi 0, %s208
    %s210 = sphi 0, %s208
    %s211 = sphi 0, %s210
    %s225 = sphi 0, %s211
    %s229 = sphi 0, %s229
    %s231 = sphi 0, %s229
    %s232 = sphi 0, %s231
    %s246 = sphi 0, %s232
    %s250 = sphi 0, %s250
    %s252 = sphi 0, %s250
    %s253 = sphi 0, %s252
    %s267 = sphi 0, %s253
    %s271 = sphi 0, %s271
    %s273 = sphi 0, %s271
    %s274 = sphi 0, %s273
    %s288 = sphi 0, %s274
    %s292 = sphi 0, %s292
    %s294 = sphi 0, %s292
    %s295 = sphi 0, %s294
    %s309 = sphi 0, %s295
    %s313 = sphi 0, %s313
    %s315 = sphi 0, %s313
    %s316 = sphi 0, %s315
    %s330 = sphi 0, %s316
    %s334 = sphi 0, %s334
    %s336 = sphi 0, %s334
    %s337 = sphi 0, %s336
    %s351 = sphi 0, %s337
    %s355 = sphi 0, %s355
    %s357 = sphi 0, %s355
    %s358 = sphi 0, %s357
    %s372 = sphi 0, %s358
    %s378 = sphi 0, %s380
    %s381 = sphi 0, %s378
    %s382 = sphi 0, %s381
    %s398 = sphi 0, %s382
  $region4: #{model_forward.5} parent=0 // loop_header_branch
    %25 = sbr.rel (%p23) target = $region8
  $region5: #{model_forward.5} parent=0 // loop_body
    %s27 = ssub.s32 %s22, 1
    %s28 = ssub.s32 %s22, 2
    %s29 = sadd.s32 %s22, 1
    %s30 = ssub.s32 %s22, %s29
    %p31 = scmp.eq.s32.totalorder %s30, 0
    %s33 = sadd.s32 %s32, 1
    %s34 = scalar_select %p31, %s32, %s33
    %p37 = pneg %p31
    %p38 = scmp.eq.s32.totalorder %s22, 1
    %p39 = por %p37, %p38
    %p40 = scmp.ne.s32.totalorder %s32, %s35
    %p41 = scmp.eq.s32.totalorder %s22, 0
    %p42 = por %p40, %p41
    %p43 = scmp.ne.s32.totalorder %s32, %s35
    %p44 = scmp.eq.s32.totalorder %s27, 1
    %p45 = por %p43, %p44
    %p46 = scmp.ne.s32.totalorder %s35, %s36
    %p47 = scmp.eq.s32.totalorder %s27, 0
    %p48 = por %p46, %p47
    %p49 = scmp.ne.s32.totalorder %s35, %s36
    %p50 = scmp.eq.s32.totalorder %s28, 1
    %p51 = por %p49, %p50
    %p53 = scmp.ne.s32.totalorder %s36, %s52
    %p54 = scmp.eq.s32.totalorder %s28, 0
    %p55 = por %p53, %p54
    %s56 = ssub.s32 %s22, %s29
    %p57 = scmp.eq.s32.totalorder %s56, 0
    %s59 = sadd.s32 %s58, 1
    %s60 = scalar_select %p57, %s58, %s59
    %p63 = pneg %p57
    %p64 = scmp.eq.s32.totalorder %s22, 1
    %p65 = por %p63, %p64
    %p66 = scmp.ne.s32.totalorder %s58, %s61
    %p67 = scmp.eq.s32.totalorder %s22, 0
    %p68 = por %p66, %p67
    %p69 = scmp.ne.s32.totalorder %s58, %s61
    %p70 = scmp.eq.s32.totalorder %s27, 1
    %p71 = por %p69, %p70
    %p72 = scmp.ne.s32.totalorder %s61, %s62
    %p73 = scmp.eq.s32.totalorder %s27, 0
    %p74 = por %p72, %p73
    %p75 = scmp.ne.s32.totalorder %s61, %s62
    %p76 = scmp.eq.s32.totalorder %s28, 1
    %p77 = por %p75, %p76
    %p79 = scmp.ne.s32.totalorder %s62, %s78
    %p80 = scmp.eq.s32.totalorder %s28, 0
    %p81 = por %p79, %p80
    %s83 = sadd.s32 %s82, 1
    %p86 = scmp.eq.s32.totalorder %s22, 1
    %p87 = scmp.ne.s32.totalorder %s82, %s84
    %p88 = scmp.eq.s32.totalorder %s22, 0
    %p89 = por %p87, %p88
    %p90 = scmp.ne.s32.totalorder %s82, %s84
    %p91 = scmp.eq.s32.totalorder %s27, 1
    %p92 = por %p90, %p91
    %p93 = scmp.ne.s32.totalorder %s84, %s85
    %p94 = scmp.eq.s32.totalorder %s27, 0
    %p95 = por %p93, %p94
    %p96 = scmp.ne.s32.totalorder %s84, %s85
    %p97 = scmp.eq.s32.totalorder %s28, 1
    %p98 = por %p96, %p97
    %p100 = scmp.ne.s32.totalorder %s85, %s99
    %p101 = scmp.eq.s32.totalorder %s28, 0
    %p102 = por %p100, %p101
    %s104 = sadd.s32 %s103, 1
    %p107 = scmp.eq.s32.totalorder %s22, 1
    %p108 = scmp.ne.s32.totalorder %s103, %s105
    %p109 = scmp.eq.s32.totalorder %s22, 0
    %p110 = por %p108, %p109
    %p111 = scmp.ne.s32.totalorder %s103, %s105
    %p112 = scmp.eq.s32.totalorder %s27, 1
    %p113 = por %p111, %p112
    %p114 = scmp.ne.s32.totalorder %s105, %s106
    %p115 = scmp.eq.s32.totalorder %s27, 0
    %p116 = por %p114, %p115
    %p117 = scmp.ne.s32.totalorder %s105, %s106
    %p118 = scmp.eq.s32.totalorder %s28, 1
    %p119 = por %p117, %p118
    %p121 = scmp.ne.s32.totalorder %s106, %s120
    %p122 = scmp.eq.s32.totalorder %s28, 0
    %p123 = por %p121, %p122
    %s125 = sadd.s32 %s124, 1
    %p128 = scmp.eq.s32.totalorder %s22, 1
    %p129 = scmp.ne.s32.totalorder %s124, %s126
    %p130 = scmp.eq.s32.totalorder %s22, 0
    %p131 = por %p129, %p130
    %p132 = scmp.ne.s32.totalorder %s124, %s126
    %p133 = scmp.eq.s32.totalorder %s27, 1
    %p134 = por %p132, %p133
    %p135 = scmp.ne.s32.totalorder %s126, %s127
    %p136 = scmp.eq.s32.totalorder %s27, 0
    %p137 = por %p135, %p136
    %p138 = scmp.ne.s32.totalorder %s126, %s127
    %p139 = scmp.eq.s32.totalorder %s28, 1
    %p140 = por %p138, %p139
    %p142 = scmp.ne.s32.totalorder %s127, %s141
    %p143 = scmp.eq.s32.totalorder %s28, 0
    %p144 = por %p142, %p143
    %s146 = sadd.s32 %s145, 1
    %p149 = scmp.eq.s32.totalorder %s22, 1
    %p150 = scmp.ne.s32.totalorder %s145, %s147
    %p151 = scmp.eq.s32.totalorder %s22, 0
    %p152 = por %p150, %p151
    %p153 = scmp.ne.s32.totalorder %s145, %s147
    %p154 = scmp.eq.s32.totalorder %s27, 1
    %p155 = por %p153, %p154
    %p156 = scmp.ne.s32.totalorder %s147, %s148
    %p157 = scmp.eq.s32.totalorder %s27, 0
    %p158 = por %p156, %p157
    %p159 = scmp.ne.s32.totalorder %s147, %s148
    %p160 = scmp.eq.s32.totalorder %s28, 1
    %p161 = por %p159, %p160
    %p163 = scmp.ne.s32.totalorder %s148, %s162
    %p164 = scmp.eq.s32.totalorder %s28, 0
    %p165 = por %p163, %p164
    %s167 = sadd.s32 %s166, 1
    %p170 = scmp.eq.s32.totalorder %s22, 1
    %p171 = scmp.ne.s32.totalorder %s166, %s168
    %p172 = scmp.eq.s32.totalorder %s22, 0
    %p173 = por %p171, %p172
    %p174 = scmp.ne.s32.totalorder %s166, %s168
    %p175 = scmp.eq.s32.totalorder %s27, 1
    %p176 = por %p174, %p175
    %p177 = scmp.ne.s32.totalorder %s168, %s169
    %p178 = scmp.eq.s32.totalorder %s27, 0
    %p179 = por %p177, %p178
    %p180 = scmp.ne.s32.totalorder %s168, %s169
    %p181 = scmp.eq.s32.totalorder %s28, 1
    %p182 = por %p180, %p181
    %p184 = scmp.ne.s32.totalorder %s169, %s183
    %p185 = scmp.eq.s32.totalorder %s28, 0
    %p186 = por %p184, %p185
    %s188 = sadd.s32 %s187, 1
    %p191 = scmp.eq.s32.totalorder %s22, 1
    %p192 = scmp.ne.s32.totalorder %s187, %s189
    %p193 = scmp.eq.s32.totalorder %s22, 0
    %p194 = por %p192, %p193
    %p195 = scmp.ne.s32.totalorder %s187, %s189
    %p196 = scmp.eq.s32.totalorder %s27, 1
    %p197 = por %p195, %p196
    %p198 = scmp.ne.s32.totalorder %s189, %s190
    %p199 = scmp.eq.s32.totalorder %s27, 0
    %p200 = por %p198, %p199
    %p201 = scmp.ne.s32.totalorder %s189, %s190
    %p202 = scmp.eq.s32.totalorder %s28, 1
    %p203 = por %p201, %p202
    %p205 = scmp.ne.s32.totalorder %s190, %s204
    %p206 = scmp.eq.s32.totalorder %s28, 0
    %p207 = por %p205, %p206
    %s209 = sadd.s32 %s208, 1
    %p212 = scmp.eq.s32.totalorder %s22, 1
    %p213 = scmp.ne.s32.totalorder %s208, %s210
    %p214 = scmp.eq.s32.totalorder %s22, 0
    %p215 = por %p213, %p214
    %p216 = scmp.ne.s32.totalorder %s208, %s210
    %p217 = scmp.eq.s32.totalorder %s27, 1
    %p218 = por %p216, %p217
    %p219 = scmp.ne.s32.totalorder %s210, %s211
    %p220 = scmp.eq.s32.totalorder %s27, 0
    %p221 = por %p219, %p220
    %p222 = scmp.ne.s32.totalorder %s210, %s211
    %p223 = scmp.eq.s32.totalorder %s28, 1
    %p224 = por %p222, %p223
    %p226 = scmp.ne.s32.totalorder %s211, %s225
    %p227 = scmp.eq.s32.totalorder %s28, 0
    %p228 = por %p226, %p227
    %s230 = sadd.s32 %s229, 1
    %p233 = scmp.eq.s32.totalorder %s22, 1
    %p234 = scmp.ne.s32.totalorder %s229, %s231
    %p235 = scmp.eq.s32.totalorder %s22, 0
    %p236 = por %p234, %p235
    %p237 = scmp.ne.s32.totalorder %s229, %s231
    %p238 = scmp.eq.s32.totalorder %s27, 1
    %p239 = por %p237, %p238
    %p240 = scmp.ne.s32.totalorder %s231, %s232
    %p241 = scmp.eq.s32.totalorder %s27, 0
    %p242 = por %p240, %p241
    %p243 = scmp.ne.s32.totalorder %s231, %s232
    %p244 = scmp.eq.s32.totalorder %s28, 1
    %p245 = por %p243, %p244
    %p247 = scmp.ne.s32.totalorder %s232, %s246
    %p248 = scmp.eq.s32.totalorder %s28, 0
    %p249 = por %p247, %p248
    %s251 = sadd.s32 %s250, 1
    %p254 = scmp.eq.s32.totalorder %s22, 1
    %p255 = scmp.ne.s32.totalorder %s250, %s252
    %p256 = scmp.eq.s32.totalorder %s22, 0
    %p257 = por %p255, %p256
    %p258 = scmp.ne.s32.totalorder %s250, %s252
    %p259 = scmp.eq.s32.totalorder %s27, 1
    %p260 = por %p258, %p259
    %p261 = scmp.ne.s32.totalorder %s252, %s253
    %p262 = scmp.eq.s32.totalorder %s27, 0
    %p263 = por %p261, %p262
    %p264 = scmp.ne.s32.totalorder %s252, %s253
    %p265 = scmp.eq.s32.totalorder %s28, 1
    %p266 = por %p264, %p265
    %p268 = scmp.ne.s32.totalorder %s253, %s267
    %p269 = scmp.eq.s32.totalorder %s28, 0
    %p270 = por %p268, %p269
    %s272 = sadd.s32 %s271, 1
    %p275 = scmp.eq.s32.totalorder %s22, 1
    %p276 = scmp.ne.s32.totalorder %s271, %s273
    %p277 = scmp.eq.s32.totalorder %s22, 0
    %p278 = por %p276, %p277
    %p279 = scmp.ne.s32.totalorder %s271, %s273
    %p280 = scmp.eq.s32.totalorder %s27, 1
    %p281 = por %p279, %p280
    %p282 = scmp.ne.s32.totalorder %s273, %s274
    %p283 = scmp.eq.s32.totalorder %s27, 0
    %p284 = por %p282, %p283
    %p285 = scmp.ne.s32.totalorder %s273, %s274
    %p286 = scmp.eq.s32.totalorder %s28, 1
    %p287 = por %p285, %p286
    %p289 = scmp.ne.s32.totalorder %s274, %s288
    %p290 = scmp.eq.s32.totalorder %s28, 0
    %p291 = por %p289, %p290
    %s293 = sadd.s32 %s292, 1
    %p296 = scmp.eq.s32.totalorder %s22, 1
    %p297 = scmp.ne.s32.totalorder %s292, %s294
    %p298 = scmp.eq.s32.totalorder %s22, 0
    %p299 = por %p297, %p298
    %p300 = scmp.ne.s32.totalorder %s292, %s294
    %p301 = scmp.eq.s32.totalorder %s27, 1
    %p302 = por %p300, %p301
    %p303 = scmp.ne.s32.totalorder %s294, %s295
    %p304 = scmp.eq.s32.totalorder %s27, 0
    %p305 = por %p303, %p304
    %p306 = scmp.ne.s32.totalorder %s294, %s295
    %p307 = scmp.eq.s32.totalorder %s28, 1
    %p308 = por %p306, %p307
    %p310 = scmp.ne.s32.totalorder %s295, %s309
    %p311 = scmp.eq.s32.totalorder %s28, 0
    %p312 = por %p310, %p311
    %s314 = sadd.s32 %s313, 1
    %p317 = scmp.eq.s32.totalorder %s22, 1
    %p318 = scmp.ne.s32.totalorder %s313, %s315
    %p319 = scmp.eq.s32.totalorder %s22, 0
    %p320 = por %p318, %p319
    %p321 = scmp.ne.s32.totalorder %s313, %s315
    %p322 = scmp.eq.s32.totalorder %s27, 1
    %p323 = por %p321, %p322
    %p324 = scmp.ne.s32.totalorder %s315, %s316
    %p325 = scmp.eq.s32.totalorder %s27, 0
    %p326 = por %p324, %p325
    %p327 = scmp.ne.s32.totalorder %s315, %s316
    %p328 = scmp.eq.s32.totalorder %s28, 1
    %p329 = por %p327, %p328
    %p331 = scmp.ne.s32.totalorder %s316, %s330
    %p332 = scmp.eq.s32.totalorder %s28, 0
    %p333 = por %p331, %p332
    %s335 = sadd.s32 %s334, 1
    %p338 = scmp.eq.s32.totalorder %s22, 1
    %p339 = scmp.ne.s32.totalorder %s334, %s336
    %p340 = scmp.eq.s32.totalorder %s22, 0
    %p341 = por %p339, %p340
    %p342 = scmp.ne.s32.totalorder %s334, %s336
    %p343 = scmp.eq.s32.totalorder %s27, 1
    %p344 = por %p342, %p343
    %p345 = scmp.ne.s32.totalorder %s336, %s337
    %p346 = scmp.eq.s32.totalorder %s27, 0
    %p347 = por %p345, %p346
    %p348 = scmp.ne.s32.totalorder %s336, %s337
    %p349 = scmp.eq.s32.totalorder %s28, 1
    %p350 = por %p348, %p349
    %p352 = scmp.ne.s32.totalorder %s337, %s351
    %p353 = scmp.eq.s32.totalorder %s28, 0
    %p354 = por %p352, %p353
    %s356 = sadd.s32 %s355, 1
    %p359 = scmp.eq.s32.totalorder %s22, 1
    %p360 = scmp.ne.s32.totalorder %s355, %s357
    %p361 = scmp.eq.s32.totalorder %s22, 0
    %p362 = por %p360, %p361
    %p363 = scmp.ne.s32.totalorder %s355, %s357
    %p364 = scmp.eq.s32.totalorder %s27, 1
    %p365 = por %p363, %p364
    %p366 = scmp.ne.s32.totalorder %s357, %s358
    %p367 = scmp.eq.s32.totalorder %s27, 0
    %p368 = por %p366, %p367
    %p369 = scmp.ne.s32.totalorder %s357, %s358
    %p370 = scmp.eq.s32.totalorder %s28, 1
    %p371 = por %p369, %p370
    %p373 = scmp.ne.s32.totalorder %s358, %s372
    %p374 = scmp.eq.s32.totalorder %s28, 0
    %p375 = por %p373, %p374
    %s376 = ssub.s32 %s22, %s29
    %p377 = scmp.eq.s32.totalorder %s376, 0
    %s379 = sadd.s32 %s378, 1
    %s380 = scalar_select %p377, %s378, %s379
    %p383 = pneg %p377
    %p384 = scmp.eq.s32.totalorder %s22, 1
    %p385 = por %p383, %p384
    %p386 = scmp.ne.s32.totalorder %s378, %s381
    %p387 = scmp.eq.s32.totalorder %s22, 0
    %p388 = por %p386, %p387
    %p389 = scmp.ne.s32.totalorder %s378, %s381
    %p390 = scmp.eq.s32.totalorder %s27, 1
    %p391 = por %p389, %p390
    %p392 = scmp.ne.s32.totalorder %s381, %s382
    %p393 = scmp.eq.s32.totalorder %s27, 0
    %p394 = por %p392, %p393
    %p395 = scmp.ne.s32.totalorder %s381, %s382
    %p396 = scmp.eq.s32.totalorder %s28, 1
    %p397 = por %p395, %p396
    %p399 = scmp.ne.s32.totalorder %s382, %s398
    %p400 = scmp.eq.s32.totalorder %s28, 0
    %p401 = por %p399, %p400
    %p402 = scmp.le.s32.totalorder 1, %s22
    %p403 = scmp.lt.s32.totalorder %s22, 3
    %p404 = pnand %p402, %p403
    %p405 = pneg %p404
    // Predicated region
    $region9: #{model_forward.5} parent=5 // pred_check
      _
    $region10: #{model_forward.5} parent=5 // pred_check_branch
      %407 = sbr.rel (%p404) target = $region12
    $region11: #{model_forward.5} parent=5 // pred_region
      %s408 = ssub.s32 %s22, 1
      // Predicated region
      $region13: #{model_forward.5} parent=11 // pred_check
        %p409 = pneg %p95
      $region14: #{model_forward.5} parent=11 // pred_check_branch
        %411 = sbr.rel (%p409) target = $region16
      $region15: #{model_forward.5} parent=11 // pred_region
        _
      $region16: #{model_forward.5} parent=11 // pred_fallthru
        _
      // Predicated region
      $region17: #{model_forward.5} parent=11 // pred_check
        %p412 = pneg %p116
      $region18: #{model_forward.5} parent=11 // pred_check_branch
        %414 = sbr.rel (%p412) target = $region20
      $region19: #{model_forward.5} parent=11 // pred_region
        _
      $region20: #{model_forward.5} parent=11 // pred_fallthru
        _
      // Predicated region
      $region21: #{model_forward.5} parent=11 // pred_check
        %p415 = pneg %p137
      $region22: #{model_forward.5} parent=11 // pred_check_branch
        %417 = sbr.rel (%p415) target = $region24
      $region23: #{model_forward.5} parent=11 // pred_region
        _
      $region24: #{model_forward.5} parent=11 // pred_fallthru
        _
      // Predicated region
      $region25: #{model_forward.5} parent=11 // pred_check
        %p418 = pneg %p158
      $region26: #{model_forward.5} parent=11 // pred_check_branch
        %420 = sbr.rel (%p418) target = $region28
      $region27: #{model_forward.5} parent=11 // pred_region
        _
      $region28: #{model_forward.5} parent=11 // pred_fallthru
        _
      // Predicated region
      $region29: #{model_forward.5} parent=11 // pred_check
        %p421 = pneg %p179
      $region30: #{model_forward.5} parent=11 // pred_check_branch
        %423 = sbr.rel (%p421) target = $region32
      $region31: #{model_forward.5} parent=11 // pred_region
        _
      $region32: #{model_forward.5} parent=11 // pred_fallthru
        _
      // Predicated region
      $region33: #{model_forward.5} parent=11 // pred_check
        %p424 = pneg %p200
      $region34: #{model_forward.5} parent=11 // pred_check_branch
        %426 = sbr.rel (%p424) target = $region36
      $region35: #{model_forward.5} parent=11 // pred_region
        _
      $region36: #{model_forward.5} parent=11 // pred_fallthru
        _
      // Predicated region
      $region37: #{model_forward.5} parent=11 // pred_check
        %p427 = pneg %p221
      $region38: #{model_forward.5} parent=11 // pred_check_branch
        %429 = sbr.rel (%p427) target = $region40
      $region39: #{model_forward.5} parent=11 // pred_region
        _
      $region40: #{model_forward.5} parent=11 // pred_fallthru
        _
      // Predicated region
      $region41: #{model_forward.5} parent=11 // pred_check
        %p430 = pneg %p242
      $region42: #{model_forward.5} parent=11 // pred_check_branch
        %432 = sbr.rel (%p430) target = $region44
      $region43: #{model_forward.5} parent=11 // pred_region
        _
      $region44: #{model_forward.5} parent=11 // pred_fallthru
        _
      // Predicated region
      $region45: #{model_forward.5} parent=11 // pred_check
        %p433 = pneg %p263
      $region46: #{model_forward.5} parent=11 // pred_check_branch
        %435 = sbr.rel (%p433) target = $region48
      $region47: #{model_forward.5} parent=11 // pred_region
        _
      $region48: #{model_forward.5} parent=11 // pred_fallthru
        _
      // Predicated region
      $region49: #{model_forward.5} parent=11 // pred_check
        %p436 = pneg %p284
      $region50: #{model_forward.5} parent=11 // pred_check_branch
        %438 = sbr.rel (%p436) target = $region52
      $region51: #{model_forward.5} parent=11 // pred_region
        _
      $region52: #{model_forward.5} parent=11 // pred_fallthru
        _
      // Predicated region
      $region53: #{model_forward.5} parent=11 // pred_check
        %p439 = pneg %p305
      $region54: #{model_forward.5} parent=11 // pred_check_branch
        %441 = sbr.rel (%p439) target = $region56
      $region55: #{model_forward.5} parent=11 // pred_region
        _
      $region56: #{model_forward.5} parent=11 // pred_fallthru
        _
      // Predicated region
      $region57: #{model_forward.5} parent=11 // pred_check
        %p442 = pneg %p326
      $region58: #{model_forward.5} parent=11 // pred_check_branch
        %444 = sbr.rel (%p442) target = $region60
      $region59: #{model_forward.5} parent=11 // pred_region
        _
      $region60: #{model_forward.5} parent=11 // pred_fallthru
        _
      // Predicated region
      $region61: #{model_forward.5} parent=11 // pred_check
        %p445 = pneg %p347
      $region62: #{model_forward.5} parent=11 // pred_check_branch
        %447 = sbr.rel (%p445) target = $region64
      $region63: #{model_forward.5} parent=11 // pred_region
        _
      $region64: #{model_forward.5} parent=11 // pred_fallthru
        _
      // Predicated region
      $region65: #{model_forward.5} parent=11 // pred_check
        %p448 = pneg %p368
      $region66: #{model_forward.5} parent=11 // pred_check_branch
        %450 = sbr.rel (%p448) target = $region68
      $region67: #{model_forward.5} parent=11 // pred_region
        _
      $region68: #{model_forward.5} parent=11 // pred_fallthru
        _
    $region12: #{model_forward.5} parent=5 // pred_fallthru
      _
    %p451 = scmp.lt.s32.totalorder %s22, 2
    // Predicated region
    $region69: #{model_forward.5} parent=5 // pred_check
      %p452 = pneg %p451
    $region70: #{model_forward.5} parent=5 // pred_check_branch
      %454 = sbr.rel (%p452) target = $region72
    $region71: #{model_forward.5} parent=5 // pred_region
      // Predicated region
      $region73: #{model_forward.5} parent=71 // pred_check
        %p455 = pneg %p42
      $region74: #{model_forward.5} parent=71 // pred_check_branch
        %457 = sbr.rel (%p455) target = $region76
      $region75: #{model_forward.5} parent=71 // pred_region
        %p458 = scmp.lt.s32.totalorder %s22, 1
        %s459 = scalar_select %p458, %s22, 1
        %s460 = smul.addr %s459, 8
        %s461 = scalar_lea.vmem %s0, %s460
      $region76: #{model_forward.5} parent=71 // pred_fallthru
        _
      // Predicated region
      $region77: #{model_forward.5} parent=71 // pred_check
        %p462 = pneg %p68
      $region78: #{model_forward.5} parent=71 // pred_check_branch
        %464 = sbr.rel (%p462) target = $region80
      $region79: #{model_forward.5} parent=71 // pred_region
        %p465 = scmp.lt.s32.totalorder %s22, 1
        %s466 = scalar_select %p465, %s22, 1
        %s467 = scalar_lea.vmem %s1, %s466
      $region80: #{model_forward.5} parent=71 // pred_fallthru
        _
    $region72: #{model_forward.5} parent=5 // pred_fallthru
      _
    %p468 = scmp.le.s32.totalorder 1, %s22
    %p469 = scmp.lt.s32.totalorder %s22, 3
    %p470 = pnand %p468, %p469
    %p471 = pneg %p470
    // Predicated region
    $region81: #{model_forward.5} parent=5 // pred_check
      _
    $region82: #{model_forward.5} parent=5 // pred_check_branch
      %473 = sbr.rel (%p470) target = $region84
    $region83: #{model_forward.5} parent=5 // pred_region
      %s474 = ssub.s32 %s22, 1
      %p475 = scmp.lt.s32.totalorder %s27, 1
      %s476 = scalar_select %p475, %s27, 1
      %s477 = smul.addr %s476, 8
      %s478 = scalar_lea.vmem %s0, %s477
      %p479 = pneg %p48
      %p480 = pneg %p45
      %p481 = scmp.lt.s32.totalorder %s27, 1
      %s482 = scalar_select %p481, %s27, 1
      %s483 = scalar_lea.vmem %s1, %s482
      %p484 = pneg %p74
      %p485 = pneg %p71
      %p486 = pneg %p95
      %p487 = pneg %p92
      %p488 = pneg %p116
      %p489 = pneg %p113
      %p490 = pneg %p137
      %p491 = pneg %p134
      %p492 = pneg %p158
      %p493 = pneg %p155
      %p494 = pneg %p179
      %p495 = pneg %p176
      %p496 = pneg %p200
      %p497 = pneg %p197
      %p498 = pneg %p221
      %p499 = pneg %p218
      %p500 = pneg %p242
      %p501 = pneg %p239
      %p502 = pneg %p263
      %p503 = pneg %p260
      %p504 = pneg %p284
      %p505 = pneg %p281
      %p506 = pneg %p305
      %p507 = pneg %p302
      %p508 = pneg %p326
      %p509 = pneg %p323
      %p510 = pneg %p347
      %p511 = pneg %p344
      %p512 = pneg %p368
      %p513 = pneg %p365
      %p514 = pneg %p394
      %p515 = pneg %p391
      %p516 = scmp.lt.s32.totalorder %s27, 1
      %s517 = scalar_select %p516, %s27, 1
      %s518 = smul.addr %s517, 8
      %s519 = scalar_lea.vmem %s16, %s518
      %p520 = scmp.lt.s32.totalorder %s27, 1
      %s521 = scalar_select %p520, %s27, 1
      %s522 = smul.addr %s521, 8
      %s523 = scalar_lea.vmem %s0, %s522
      %p524 = scmp.lt.s32.totalorder %s27, 1
      %s525 = scalar_select %p524, %s27, 1
      %s526 = scalar_lea.vmem %s1, %s525
      %p527 = scmp.lt.s32.totalorder %s27, 1
      %s528 = scalar_select %p527, %s27, 1
      %s529 = smul.addr %s528, 8
      %s530 = scalar_lea.vmem %s16, %s529
      %v531 = vld [vmem:[%s523] sm:$0xff]
      %v532 = vld [vmem:[%s6] sm:$0x1]
      %v533 = vld [vmem:[%s7] sm:$0x1]
      %vm534 = vcmask 261120
      %v535 = vsel %vm534, %v531, 0.0
      %536 = vadd.xlane.f32.xlu0 %v535
      %v537 = vpop.xlane.xlu0 %536
      %v538 = vrcp.pop 32.0
      %v539 = vmul.f32 %v537, %v538
      %v540 = vsub.f32 %v531, %v539
      %v541 = vmul.f32 %v540, %v540
      %v542 = vsel %vm534, %v541, 0.0
      %543 = vadd.xlane.f32.xlu0 %v542
      %v544 = vpop.xlane.xlu0 %543
      %v545 = vmul.f32 %v544, %v538
      %v546 = vadd.f32 %v545, 1e-12
      %v547 = vrsqrt.pop %v546
      %v548 = vmul.f32 %v540, %v547
      %v550 = vlaneseq
      %v551 = vshrl.u32 %v550, 7
      %v552 = vsub.s32 0, %v551
      %v553 = vrot.slane %v532, %v552
      %v555 = vmul.f32 %v548, %v553
      %v557 = vlaneseq
      %v558 = vshrl.u32 %v557, 7
      %v559 = vsub.s32 0, %v558
      %v560 = vrot.slane %v533, %v559
      %v562 = vadd.f32 %v555, %v560
      %v563 = vld [vmem:[%s526] sm:$0x1]
      %v564 = vld [vmem:[%s2] sm:$0xff]
      %v565 = vld [vmem:[%s2 + $0x8] sm:$0xff]
      %v566 = vld [vmem:[%s2 + $0x10] sm:$0xff]
      %v567 = vld [vmem:[%s2 + $0x18] sm:$0xff]
      %v568 = vld [vmem:[%s3] sm:$0x1]
      %v570 = vlaneseq
      %v571 = vshrl.u32 %v570, 7
      %v572 = vsub.s32 0, %v571
      %v573 = vrot.slane %v568, %v572
      %v576 = vsel %vm534, %v562, 0
      %578 = vmatprep.subr.mxu0 0.0
      %579 = vmatpush1.msra.mxu0 %v564
      %580 = vmatprep.subr.mxu0 0.0
      %581 = vmatpush1.msra.mxu0 %v565
      %582 = vmatprep.subr.mxu0 0.0
      %583 = vmatpush1.msra.mxu0 %v566
      %584 = vmatprep.subr.mxu0 0.0
      %585 = vmatpush1.msra.mxu0 %v567
      %586 = vmatprep.subr.mxu0 0.0
      %587 = vmatpush1.msra.mxu0 0.0
      %588 = vmatprep.subr.mxu0 0.0
      %589 = vmatpush1.msra.mxu0 0.0
      %590 = vmatprep.subr.mxu0 0.0
      %591 = vmatpush1.msra.mxu0 0.0
      %592 = vmatprep.subr.mxu0 0.0
      %593 = vmatpush1.msra.mxu0 0.0
      %594 = vmatprep.subr.mxu0 0.0
      %595 = vmatpush1.msra.mxu0 0.0
      %596 = vmatprep.subr.mxu0 0.0
      %597 = vmatpush1.msra.mxu0 0.0
      %598 = vmatprep.subr.mxu0 0.0
      %599 = vmatpush1.msra.mxu0 0.0
      %600 = vmatprep.subr.mxu0 0.0
      %601 = vmatpush1.msra.mxu0 0.0
      %602 = vmatprep.subr.mxu0 0.0
      %603 = vmatpush1.msra.mxu0 0.0
      %604 = vmatprep.subr.mxu0 0.0
      %605 = vmatpush1.msra.mxu0 0.0
      %606 = vmatprep.subr.mxu0 0.0
      %607 = vmatpush1.msra.mxu0 0.0
      %608 = vmatprep.subr.mxu0 0.0
      %609 = vmatpush1.msra.mxu0 0.0
      %610 = vmatprep.subr.mxu0 0.0
      %611 = vmatpush1.msra.mxu0 0.0
      %612 = vmatprep.subr.mxu0 0.0
      %613 = vmatpush1.msra.mxu0 0.0
      %614 = vmatprep.subr.mxu0 0.0
      %615 = vmatpush1.msra.mxu0 0.0
      %616 = vmatprep.subr.mxu0 0.0
      %617 = vmatpush1.msra.mxu0 0.0
      %618 = vmatprep.subr.mxu0 0.0
      %619 = vmatpush1.msra.mxu0 0.0
      %620 = vmatprep.subr.mxu0 0.0
      %621 = vmatpush1.msra.mxu0 0.0
      %622 = vmatprep.subr.mxu0 0.0
      %623 = vmatpush1.msra.mxu0 0.0
      %624 = vmatprep.subr.mxu0 0.0
      %625 = vmatpush1.msra.mxu0 0.0
      %626 = vmatprep.subr.mxu0 0.0
      %627 = vmatpush1.msra.mxu0 0.0
      %628 = vmatprep.subr.mxu0 0.0
      %629 = vmatpush1.msra.mxu0 0.0
      %630 = vmatprep.subr.mxu0 0.0
      %631 = vmatpush1.msra.mxu0 0.0
      %632 = vmatprep.subr.mxu0 0.0
      %633 = vmatpush1.msra.mxu0 0.0
      %634 = vmatprep.subr.mxu0 0.0
      %635 = vmatpush1.msra.mxu0 0.0
      %636 = vmatprep.subr.mxu0 0.0
      %637 = vmatpush1.msra.mxu0 0.0
      %638 = vmatprep.subr.mxu0 0.0
      %639 = vmatpush1.msra.mxu0 0.0
      %640 = vmatprep.subr.mxu0 0.0
      %641 = vmatpush1.msra.mxu0 0.0
      %642 = vmatprep.mubr.f32.mxu0 0.0
      %643 = vmatmul.mubr.f32.gmra.mrb[0].mxu0 %v576
      %v644 = vpop.f32.mrb[0].mxu0
      %v645 = vadd.f32 %v573, %v644
      %v646 = vpop.f32.mrb[0].mxu0
      %647 = vdwg.mxu0
      %649 = vrot.lane.b32.xlu0 %v645, 96
      %v650 = vpop.permute.xlu0 %649
      %vm651 = vcmask 64512
      %v652 = vsel %vm651, %v645, 0
      %v654 = vsel %vm651, %v650, 0
      %656 = vmatprep.subr.mxu0 0.0
      %657 = vmatpush1.xpose.msra.mxu0 %v654
      %658 = vmatprep.subr.mxu0 0.0
      %659 = vmatpush1.xpose.msra.mxu0 0.0
      %660 = vmatprep.subr.mxu0 0.0
      %661 = vmatpush1.xpose.msra.mxu0 0.0
      %662 = vmatprep.subr.mxu0 0.0
      %663 = vmatpush1.xpose.msra.mxu0 0.0
      %664 = vmatprep.subr.mxu0 0.0
      %665 = vmatpush1.xpose.msra.mxu0 0.0
      %666 = vmatprep.subr.mxu0 0.0
      %667 = vmatpush1.xpose.msra.mxu0 0.0
      %668 = vmatprep.subr.mxu0 0.0
      %669 = vmatpush1.xpose.msra.mxu0 0.0
      %670 = vmatprep.subr.mxu0 0.0
      %671 = vmatpush1.xpose.msra.mxu0 0.0
      %672 = vmatprep.subr.mxu0 0.0
      %673 = vmatpush1.xpose.msra.mxu0 0.0
      %674 = vmatprep.subr.mxu0 0.0
      %675 = vmatpush1.xpose.msra.mxu0 0.0
      %676 = vmatprep.subr.mxu0 0.0
      %677 = vmatpush1.xpose.msra.mxu0 0.0
      %678 = vmatprep.subr.mxu0 0.0
      %679 = vmatpush1.xpose.msra.mxu0 0.0
      %680 = vmatprep.subr.mxu0 0.0
      %681 = vmatpush1.xpose.msra.mxu0 0.0
      %682 = vmatprep.subr.mxu0 0.0
      %683 = vmatpush1.xpose.msra.mxu0 0.0
      %684 = vmatprep.subr.mxu0 0.0
      %685 = vmatpush1.xpose.msra.mxu0 0.0
      %686 = vmatprep.subr.mxu0 0.0
      %687 = vmatpush1.xpose.msra.mxu0 0.0
      %688 = vmatprep.subr.mxu0 0.0
      %689 = vmatpush1.xpose.msra.mxu0 0.0
      %690 = vmatprep.subr.mxu0 0.0
      %691 = vmatpush1.xpose.msra.mxu0 0.0
      %692 = vmatprep.subr.mxu0 0.0
      %693 = vmatpush1.xpose.msra.mxu0 0.0
      %694 = vmatprep.subr.mxu0 0.0
      %695 = vmatpush1.xpose.msra.mxu0 0.0
      %696 = vmatprep.subr.mxu0 0.0
      %697 = vmatpush1.xpose.msra.mxu0 0.0
      %698 = vmatprep.subr.mxu0 0.0
      %699 = vmatpush1.xpose.msra.mxu0 0.0
      %700 = vmatprep.subr.mxu0 0.0
      %701 = vmatpush1.xpose.msra.mxu0 0.0
      %702 = vmatprep.subr.mxu0 0.0
      %703 = vmatpush1.xpose.msra.mxu0 0.0
      %704 = vmatprep.subr.mxu0 0.0
      %705 = vmatpush1.xpose.msra.mxu0 0.0
      %706 = vmatprep.subr.mxu0 0.0
      %707 = vmatpush1.xpose.msra.mxu0 0.0
      %708 = vmatprep.subr.mxu0 0.0
      %709 = vmatpush1.xpose.msra.mxu0 0.0
      %710 = vmatprep.subr.mxu0 0.0
      %711 = vmatpush1.xpose.msra.mxu0 0.0
      %712 = vmatprep.subr.mxu0 0.0
      %713 = vmatpush1.xpose.msra.mxu0 0.0
      %714 = vmatprep.subr.mxu0 0.0
      %715 = vmatpush1.xpose.msra.mxu0 0.0
      %716 = vmatprep.subr.mxu0 0.0
      %717 = vmatpush1.xpose.msra.mxu0 0.0
      %718 = vmatprep.subr.mxu0 0.0
      %719 = vmatpush1.xpose.msra.mxu0 0.0
      %720 = vmatprep.mubr.f32.mxu0 0.0
      %721 = vmatmul.mubr.f32.gmra.mrb[0].mxu0 %v652
      %v722 = vpop.f32.mrb[0].mxu0
      %v723 = vadd.f32 0.0, %v722
      %v724 = vpop.f32.mrb[0].mxu0
      %725 = vdwg.mxu0
      %v726 = vmul.f32 %v723, 0.35355338
      %v728 = vlaneseq
      %v729 = vshrl.u32 %v728, 7
      %v730 = vsub.s32 0, %v729
      %v731 = vrot.slane %v563, %v730
      %v733 = vadd.f32 %v726, %v731
      %v734 = vsel %vm651, %v733, -inf
      %735 = vmax.xlane.f32.xlu0 %v734
      %v736 = vpop.xlane.xlu0 %735
      %v737 = vsub.f32 %v733, %v736
      %v738 = vmul.f32 %v737, 1.442695
      %v739 = vpow.pop %v738
      %v740 = vsel %vm651, %v739, 0.0
      %741 = vadd.xlane.f32.xlu0 %v740
      %v742 = vpop.xlane.xlu0 %741
      %v743 = vrcp.pop %v742
      %v744 = vmul.f32 %v739, %v743
      %745 = vrot.lane.b32.xlu0 %v645, 64
      %v746 = vpop.permute.xlu0 %745
      %v749 = vsel %vm651, %v744, 0
      %751 = vmatprep.subr.mxu0 0.0
      %752 = vmatpush1.msra.mxu0 %v746
      %753 = vmatprep.subr.mxu0 0.0
      %754 = vmatpush1.msra.mxu0 0.0
      %755 = vmatprep.subr.mxu0 0.0
      %756 = vmatpush1.msra.mxu0 0.0
      %757 = vmatprep.subr.mxu0 0.0
      %758 = vmatpush1.msra.mxu0 0.0
      %759 = vmatprep.subr.mxu0 0.0
      %760 = vmatpush1.msra.mxu0 0.0
      %761 = vmatprep.subr.mxu0 0.0
      %762 = vmatpush1.msra.mxu0 0.0
      %763 = vmatprep.subr.mxu0 0.0
      %764 = vmatpush1.msra.mxu0 0.0
      %765 = vmatprep.subr.mxu0 0.0
      %766 = vmatpush1.msra.mxu0 0.0
      %767 = vmatprep.subr.mxu0 0.0
      %768 = vmatpush1.msra.mxu0 0.0
      %769 = vmatprep.subr.mxu0 0.0
      %770 = vmatpush1.msra.mxu0 0.0
      %771 = vmatprep.subr.mxu0 0.0
      %772 = vmatpush1.msra.mxu0 0.0
      %773 = vmatprep.subr.mxu0 0.0
      %774 = vmatpush1.msra.mxu0 0.0
      %775 = vmatprep.subr.mxu0 0.0
      %776 = vmatpush1.msra.mxu0 0.0
      %777 = vmatprep.subr.mxu0 0.0
      %778 = vmatpush1.msra.mxu0 0.0
      %779 = vmatprep.subr.mxu0 0.0
      %780 = vmatpush1.msra.mxu0 0.0
      %781 = vmatprep.subr.mxu0 0.0
      %782 = vmatpush1.msra.mxu0 0.0
      %783 = vmatprep.subr.mxu0 0.0
      %784 = vmatpush1.msra.mxu0 0.0
      %785 = vmatprep.subr.mxu0 0.0
      %786 = vmatpush1.msra.mxu0 0.0
      %787 = vmatprep.subr.mxu0 0.0
      %788 = vmatpush1.msra.mxu0 0.0
      %789 = vmatprep.subr.mxu0 0.0
      %790 = vmatpush1.msra.mxu0 0.0
      %791 = vmatprep.subr.mxu0 0.0
      %792 = vmatpush1.msra.mxu0 0.0
      %793 = vmatprep.subr.mxu0 0.0
      %794 = vmatpush1.msra.mxu0 0.0
      %795 = vmatprep.subr.mxu0 0.0
      %796 = vmatpush1.msra.mxu0 0.0
      %797 = vmatprep.subr.mxu0 0.0
      %798 = vmatpush1.msra.mxu0 0.0
      %799 = vmatprep.subr.mxu0 0.0
      %800 = vmatpush1.msra.mxu0 0.0
      %801 = vmatprep.subr.mxu0 0.0
      %802 = vmatpush1.msra.mxu0 0.0
      %803 = vmatprep.subr.mxu0 0.0
      %804 = vmatpush1.msra.mxu0 0.0
      %805 = vmatprep.subr.mxu0 0.0
      %806 = vmatpush1.msra.mxu0 0.0
      %807 = vmatprep.subr.mxu0 0.0
      %808 = vmatpush1.msra.mxu0 0.0
      %809 = vmatprep.subr.mxu0 0.0
      %810 = vmatpush1.msra.mxu0 0.0
      %811 = vmatprep.subr.mxu0 0.0
      %812 = vmatpush1.msra.mxu0 0.0
      %813 = vmatprep.subr.mxu0 0.0
      %814 = vmatpush1.msra.mxu0 0.0
      %815 = vmatprep.mubr.f32.mxu0 0.0
      %816 = vmatmul.mubr.f32.gmra.mrb[0].mxu0 %v749
      %v817 = vpop.f32.mrb[0].mxu0
      %v818 = vadd.f32 0.0, %v817
      %v819 = vpop.f32.mrb[0].mxu0
      %820 = vdwg.mxu0
      %v821 = vld [vmem:[%s4] sm:$0xff]
      %822 = vrot.lane.b32.xlu0 %v645, 120
      %v823 = vpop.permute.xlu0 %822
      %824 = vrot.lane.b32.xlu0 %v645, 88
      %v825 = vpop.permute.xlu0 %824
      %v826 = vsel %vm651, %v823, 0
      %v828 = vsel %vm651, %v825, 0
      %830 = vmatprep.subr.mxu0 0.0
      %831 = vmatpush1.xpose.msra.mxu0 %v828
      %832 = vmatprep.subr.mxu0 0.0
      %833 = vmatpush1.xpose.msra.mxu0 0.0
      %834 = vmatprep.subr.mxu0 0.0
      %835 = vmatpush1.xpose.msra.mxu0 0.0
      %836 = vmatprep.subr.mxu0 0.0
      %837 = vmatpush1.xpose.msra.mxu0 0.0
      %838 = vmatprep.subr.mxu0 0.0
      %839 = vmatpush1.xpose.msra.mxu0 0.0
      %840 = vmatprep.subr.mxu0 0.0
      %841 = vmatpush1.xpose.msra.mxu0 0.0
      %842 = vmatprep.subr.mxu0 0.0
      %843 = vmatpush1.xpose.msra.mxu0 0.0
      %844 = vmatprep.subr.mxu0 0.0
      %845 = vmatpush1.xpose.msra.mxu0 0.0
      %846 = vmatprep.subr.mxu0 0.0
      %847 = vmatpush1.xpose.msra.mxu0 0.0
      %848 = vmatprep.subr.mxu0 0.0
      %849 = vmatpush1.xpose.msra.mxu0 0.0
      %850 = vmatprep.subr.mxu0 0.0
      %851 = vmatpush1.xpose.msra.mxu0 0.0
      %852 = vmatprep.subr.mxu0 0.0
      %853 = vmatpush1.xpose.msra.mxu0 0.0
      %854 = vmatprep.subr.mxu0 0.0
      %855 = vmatpush1.xpose.msra.mxu0 0.0
      %856 = vmatprep.subr.mxu0 0.0
      %857 = vmatpush1.xpose.msra.mxu0 0.0
      %858 = vmatprep.subr.mxu0 0.0
      %859 = vmatpush1.xpose.msra.mxu0 0.0
      %860 = vmatprep.subr.mxu0 0.0
      %861 = vmatpush1.xpose.msra.mxu0 0.0
      %862 = vmatprep.subr.mxu0 0.0
      %863 = vmatpush1.xpose.msra.mxu0 0.0
      %864 = vmatprep.subr.mxu0 0.0
      %865 = vmatpush1.xpose.msra.mxu0 0.0
      %866 = vmatprep.subr.mxu0 0.0
      %867 = vmatpush1.xpose.msra.mxu0 0.0
      %868 = vmatprep.subr.mxu0 0.0
      %869 = vmatpush1.xpose.msra.mxu0 0.0
      %870 = vmatprep.subr.mxu0 0.0
      %871 = vmatpush1.xpose.msra.mxu0 0.0
      %872 = vmatprep.subr.mxu0 0.0
      %873 = vmatpush1.xpose.msra.mxu0 0.0
      %874 = vmatprep.subr.mxu0 0.0
      %875 = vmatpush1.xpose.msra.mxu0 0.0
      %876 = vmatprep.subr.mxu0 0.0
      %877 = vmatpush1.xpose.msra.mxu0 0.0
      %878 = vmatprep.subr.mxu0 0.0
      %879 = vmatpush1.xpose.msra.mxu0 0.0
      %880 = vmatprep.subr.mxu0 0.0
      %881 = vmatpush1.xpose.msra.mxu0 0.0
      %882 = vmatprep.subr.mxu0 0.0
      %883 = vmatpush1.xpose.msra.mxu0 0.0
      %884 = vmatprep.subr.mxu0 0.0
      %885 = vmatpush1.xpose.msra.mxu0 0.0
      %886 = vmatprep.subr.mxu0 0.0
      %887 = vmatpush1.xpose.msra.mxu0 0.0
      %888 = vmatprep.subr.mxu0 0.0
      %889 = vmatpush1.xpose.msra.mxu0 0.0
      %890 = vmatprep.subr.mxu0 0.0
      %891 = vmatpush1.xpose.msra.mxu0 0.0
      %892 = vmatprep.subr.mxu0 0.0
      %893 = vmatpush1.xpose.msra.mxu0 0.0
      %894 = vmatprep.mubr.f32.mxu0 0.0
      %895 = vmatmul.mubr.f32.gmra.mrb[0].mxu0 %v826
      %v896 = vpop.f32.mrb[0].mxu0
      %v897 = vadd.f32 0.0, %v896
      %v898 = vpop.f32.mrb[0].mxu0
      %899 = vdwg.mxu0
      %v900 = vmul.f32 %v897, 0.35355338
      %v901 = vadd.f32 %v900, %v731
      %v902 = vsel %vm651, %v901, -inf
      %903 = vmax.xlane.f32.xlu0 %v902
      %v904 = vpop.xlane.xlu0 %903
      %v905 = vsub.f32 %v901, %v904
      %v906 = vmul.f32 %v905, 1.442695
      %v907 = vpow.pop %v906
      %v908 = vsel %vm651, %v907, 0.0
      %909 = vadd.xlane.f32.xlu0 %v908
      %v910 = vpop.xlane.xlu0 %909
      %v911 = vrcp.pop %v910
      %v912 = vmul.f32 %v907, %v911
      %913 = vrot.lane.b32.xlu0 %v645, 56
      %v914 = vpop.permute.xlu0 %913
      %v917 = vsel %vm651, %v912, 0
      %919 = vmatprep.subr.mxu0 0.0
      %920 = vmatpush1.msra.mxu0 %v914
      %921 = vmatprep.subr.mxu0 0.0
      %922 = vmatpush1.msra.mxu0 0.0
      %923 = vmatprep.subr.mxu0 0.0
      %924 = vmatpush1.msra.mxu0 0.0
      %925 = vmatprep.subr.mxu0 0.0
      %926 = vmatpush1.msra.mxu0 0.0
      %927 = vmatprep.subr.mxu0 0.0
      %928 = vmatpush1.msra.mxu0 0.0
      %929 = vmatprep.subr.mxu0 0.0
      %930 = vmatpush1.msra.mxu0 0.0
      %931 = vmatprep.subr.mxu0 0.0
      %932 = vmatpush1.msra.mxu0 0.0
      %933 = vmatprep.subr.mxu0 0.0
      %934 = vmatpush1.msra.mxu0 0.0
      %935 = vmatprep.subr.mxu0 0.0
      %936 = vmatpush1.msra.mxu0 0.0
      %937 = vmatprep.subr.mxu0 0.0
      %938 = vmatpush1.msra.mxu0 0.0
      %939 = vmatprep.subr.mxu0 0.0
      %940 = vmatpush1.msra.mxu0 0.0
      %941 = vmatprep.subr.mxu0 0.0
      %942 = vmatpush1.msra.mxu0 0.0
      %943 = vmatprep.subr.mxu0 0.0
      %944 = vmatpush1.msra.mxu0 0.0
      %945 = vmatprep.subr.mxu0 0.0
      %946 = vmatpush1.msra.mxu0 0.0
      %947 = vmatprep.subr.mxu0 0.0
      %948 = vmatpush1.msra.mxu0 0.0
      %949 = vmatprep.subr.mxu0 0.0
      %950 = vmatpush1.msra.mxu0 0.0
      %951 = vmatprep.subr.mxu0 0.0
      %952 = vmatpush1.msra.mxu0 0.0
      %953 = vmatprep.subr.mxu0 0.0
      %954 = vmatpush1.msra.mxu0 0.0
      %955 = vmatprep.subr.mxu0 0.0
      %956 = vmatpush1.msra.mxu0 0.0
      %957 = vmatprep.subr.mxu0 0.0
      %958 = vmatpush1.msra.mxu0 0.0
      %959 = vmatprep.subr.mxu0 0.0
      %960 = vmatpush1.msra.mxu0 0.0
      %961 = vmatprep.subr.mxu0 0.0
      %962 = vmatpush1.msra.mxu0 0.0
      %963 = vmatprep.subr.mxu0 0.0
      %964 = vmatpush1.msra.mxu0 0.0
      %965 = vmatprep.subr.mxu0 0.0
      %966 = vmatpush1.msra.mxu0 0.0
      %967 = vmatprep.subr.mxu0 0.0
      %968 = vmatpush1.msra.mxu0 0.0
      %969 = vmatprep.subr.mxu0 0.0
      %970 = vmatpush1.msra.mxu0 0.0
      %971 = vmatprep.subr.mxu0 0.0
      %972 = vmatpush1.msra.mxu0 0.0
      %973 = vmatprep.subr.mxu0 0.0
      %974 = vmatpush1.msra.mxu0 0.0
      %975 = vmatprep.subr.mxu0 0.0
      %976 = vmatpush1.msra.mxu0 0.0
      %977 = vmatprep.subr.mxu0 0.0
      %978 = vmatpush1.msra.mxu0 0.0
      %979 = vmatprep.subr.mxu0 0.0
      %980 = vmatpush1.msra.mxu0 0.0
      %981 = vmatprep.subr.mxu0 0.0
      %982 = vmatpush1.msra.mxu0 0.0
      %983 = vmatprep.mubr.f32.mxu0 0.0
      %984 = vmatmul.mubr.f32.gmra.mrb[0].mxu0 %v917
      %v985 = vpop.f32.mrb[0].mxu0
      %v986 = vadd.f32 0.0, %v985
      %v987 = vpop.f32.mrb[0].mxu0
      %988 = vdwg.mxu0
      %v989 = vld [vmem:[%s4 + $0x8] sm:$0xff]
      %v991 = vsel %vm651, %v986, 0
      %993 = vmatprep.subr.mxu0 0.0
      %994 = vmatpush1.msra.mxu0 %v989
      %995 = vmatprep.subr.mxu0 0.0
      %996 = vmatpush1.msra.mxu0 0.0
      %997 = vmatprep.subr.mxu0 0.0
      %998 = vmatpush1.msra.mxu0 0.0
      %999 = vmatprep.subr.mxu0 0.0
      %1000 = vmatpush1.msra.mxu0 0.0
      %1001 = vmatprep.subr.mxu0 0.0
      %1002 = vmatpush1.msra.mxu0 0.0
      %1003 = vmatprep.subr.mxu0 0.0
      %1004 = vmatpush1.msra.mxu0 0.0
      %1005 = vmatprep.subr.mxu0 0.0
      %1006 = vmatpush1.msra.mxu0 0.0
      %1007 = vmatprep.subr.mxu0 0.0
      %1008 = vmatpush1.msra.mxu0 0.0
      %1009 = vmatprep.subr.mxu0 0.0
      %1010 = vmatpush1.msra.mxu0 0.0
      %1011 = vmatprep.subr.mxu0 0.0
      %1012 = vmatpush1.msra.mxu0 0.0
      %1013 = vmatprep.subr.mxu0 0.0
      %1014 = vmatpush1.msra.mxu0 0.0
      %1015 = vmatprep.subr.mxu0 0.0
      %1016 = vmatpush1.msra.mxu0 0.0
      %1017 = vmatprep.subr.mxu0 0.0
      %1018 = vmatpush1.msra.mxu0 0.0
      %1019 = vmatprep.subr.mxu0 0.0
      %1020 = vmatpush1.msra.mxu0 0.0
      %1021 = vmatprep.subr.mxu0 0.0
      %1022 = vmatpush1.msra.mxu0 0.0
      %1023 = vmatprep.subr.mxu0 0.0
      %1024 = vmatpush1.msra.mxu0 0.0
      %1025 = vmatprep.subr.mxu0 0.0
      %1026 = vmatpush1.msra.mxu0 0.0
      %1027 = vmatprep.subr.mxu0 0.0
      %1028 = vmatpush1.msra.mxu0 0.0
      %1029 = vmatprep.subr.mxu0 0.0
      %1030 = vmatpush1.msra.mxu0 0.0
      %1031 = vmatprep.subr.mxu0 0.0
      %1032 = vmatpush1.msra.mxu0 0.0
      %1033 = vmatprep.subr.mxu0 0.0
      %1034 = vmatpush1.msra.mxu0 0.0
      %1035 = vmatprep.subr.mxu0 0.0
      %1036 = vmatpush1.msra.mxu0 0.0
      %1037 = vmatprep.subr.mxu0 0.0
      %1038 = vmatpush1.msra.mxu0 0.0
      %1039 = vmatprep.subr.mxu0 0.0
      %1040 = vmatpush1.msra.mxu0 0.0
      %1041 = vmatprep.subr.mxu0 0.0
      %1042 = vmatpush1.msra.mxu0 0.0
      %1043 = vmatprep.subr.mxu0 0.0
      %1044 = vmatpush1.msra.mxu0 0.0
      %1045 = vmatprep.subr.mxu0 0.0
      %1046 = vmatpush1.msra.mxu0 0.0
      %1047 = vmatprep.subr.mxu0 0.0
      %1048 = vmatpush1.msra.mxu0 0.0
      %1049 = vmatprep.subr.mxu0 0.0
      %1050 = vmatpush1.msra.mxu0 0.0
      %1051 = vmatprep.subr.mxu0 0.0
      %1052 = vmatpush1.msra.mxu0 0.0
      %1053 = vmatprep.subr.mxu0 0.0
      %1054 = vmatpush1.msra.mxu0 0.0
      %1055 = vmatprep.subr.mxu0 0.0
      %1056 = vmatpush1.msra.mxu0 0.0
      %1057 = vmatprep.mubr.f32.mxu0 0.0
      %1058 = vmatmul.mubr.f32.gmra.mrb[0].mxu0 %v991
      %v1059 = vpop.f32.mrb[0].mxu0
      %v1060 = vadd.f32 0.0, %v1059
      %v1061 = vpop.f32.mrb[0].mxu0
      %1062 = vdwg.mxu0
      %v1064 = vsel %vm651, %v818, 0
      %1066 = vmatprep.subr.mxu0 0.0
      %1067 = vmatpush1.msra.mxu0 %v821
      %1068 = vmatprep.subr.mxu0 0.0
      %1069 = vmatpush1.msra.mxu0 0.0
      %1070 = vmatprep.subr.mxu0 0.0
      %1071 = vmatpush1.msra.mxu0 0.0
      %1072 = vmatprep.subr.mxu0 0.0
      %1073 = vmatpush1.msra.mxu0 0.0
      %1074 = vmatprep.subr.mxu0 0.0
      %1075 = vmatpush1.msra.mxu0 0.0
      %1076 = vmatprep.subr.mxu0 0.0
      %1077 = vmatpush1.msra.mxu0 0.0
      %1078 = vmatprep.subr.mxu0 0.0
      %1079 = vmatpush1.msra.mxu0 0.0
      %1080 = vmatprep.subr.mxu0 0.0
      %1081 = vmatpush1.msra.mxu0 0.0
      %1082 = vmatprep.subr.mxu0 0.0
      %1083 = vmatpush1.msra.mxu0 0.0
      %1084 = vmatprep.subr.mxu0 0.0
      %1085 = vmatpush1.msra.mxu0 0.0
      %1086 = vmatprep.subr.mxu0 0.0
      %1087 = vmatpush1.msra.mxu0 0.0
      %1088 = vmatprep.subr.mxu0 0.0
      %1089 = vmatpush1.msra.mxu0 0.0
      %1090 = vmatprep.subr.mxu0 0.0
      %1091 = vmatpush1.msra.mxu0 0.0
      %1092 = vmatprep.subr.mxu0 0.0
      %1093 = vmatpush1.msra.mxu0 0.0
      %1094 = vmatprep.subr.mxu0 0.0
      %1095 = vmatpush1.msra.mxu0 0.0
      %1096 = vmatprep.subr.mxu0 0.0
      %1097 = vmatpush1.msra.mxu0 0.0
      %1098 = vmatprep.subr.mxu0 0.0
      %1099 = vmatpush1.msra.mxu0 0.0
      %1100 = vmatprep.subr.mxu0 0.0
      %1101 = vmatpush1.msra.mxu0 0.0
      %1102 = vmatprep.subr.mxu0 0.0
      %1103 = vmatpush1.msra.mxu0 0.0
      %1104 = vmatprep.subr.mxu0 0.0
      %1105 = vmatpush1.msra.mxu0 0.0
      %1106 = vmatprep.subr.mxu0 0.0
      %1107 = vmatpush1.msra.mxu0 0.0
      %1108 = vmatprep.subr.mxu0 0.0
      %1109 = vmatpush1.msra.mxu0 0.0
      %1110 = vmatprep.subr.mxu0 0.0
      %1111 = vmatpush1.msra.mxu0 0.0
      %1112 = vmatprep.subr.mxu0 0.0
      %1113 = vmatpush1.msra.mxu0 0.0
      %1114 = vmatprep.subr.mxu0 0.0
      %1115 = vmatpush1.msra.mxu0 0.0
      %1116 = vmatprep.subr.mxu0 0.0
      %1117 = vmatpush1.msra.mxu0 0.0
      %1118 = vmatprep.subr.mxu0 0.0
      %1119 = vmatpush1.msra.mxu0 0.0
      %1120 = vmatprep.subr.mxu0 0.0
      %1121 = vmatpush1.msra.mxu0 0.0
      %1122 = vmatprep.subr.mxu0 0.0
      %1123 = vmatpush1.msra.mxu0 0.0
      %1124 = vmatprep.subr.mxu0 0.0
      %1125 = vmatpush1.msra.mxu0 0.0
      %1126 = vmatprep.subr.mxu0 0.0
      %1127 = vmatpush1.msra.mxu0 0.0
      %1128 = vmatprep.subr.mxu0 0.0
      %1129 = vmatpush1.msra.mxu0 0.0
      %1130 = vmatprep.mubr.f32.mxu0 0.0
      %1131 = vmatmul.mubr.f32.gmra.mrb[0].mxu0 %v1064
      %v1132 = vpop.f32.mrb[0].mxu0
      %v1133 = vadd.f32 %v1060, %v1132
      %v1134 = vpop.f32.mrb[0].mxu0
      %1135 = vdwg.mxu0
      %1136 = vrot.lane.b32.xlu0 %v645, 112
      %v1137 = vpop.permute.xlu0 %1136
      %1138 = vrot.lane.b32.xlu0 %v645, 80
      %v1139 = vpop.permute.xlu0 %1138
      %v1140 = vsel %vm651, %v1137, 0
      %v1142 = vsel %vm651, %v1139, 0
      %1144 = vmatprep.subr.mxu0 0.0
      %1145 = vmatpush1.xpose.msra.mxu0 %v1142
      %1146 = vmatprep.subr.mxu0 0.0
      %1147 = vmatpush1.xpose.msra.mxu0 0.0
      %1148 = vmatprep.subr.mxu0 0.0
      %1149 = vmatpush1.xpose.msra.mxu0 0.0
      %1150 = vmatprep.subr.mxu0 0.0
      %1151 = vmatpush1.xpose.msra.mxu0 0.0
      %1152 = vmatprep.subr.mxu0 0.0
      %1153 = vmatpush1.xpose.msra.mxu0 0.0
      %1154 = vmatprep.subr.mxu0 0.0
      %1155 = vmatpush1.xpose.msra.mxu0 0.0
      %1156 = vmatprep.subr.mxu0 0.0
      %1157 = vmatpush1.xpose.msra.mxu0 0.0
      %1158 = vmatprep.subr.mxu0 0.0
      %1159 = vmatpush1.xpose.msra.mxu0 0.0
      %1160 = vmatprep.subr.mxu0 0.0
      %1161 = vmatpush1.xpose.msra.mxu0 0.0
      %1162 = vmatprep.subr.mxu0 0.0
      %1163 = vmatpush1.xpose.msra.mxu0 0.0
      %1164 = vmatprep.subr.mxu0 0.0
      %1165 = vmatpush1.xpose.msra.mxu0 0.0
      %1166 = vmatprep.subr.mxu0 0.0
      %1167 = vmatpush1.xpose.msra.mxu0 0.0
      %1168 = vmatprep.subr.mxu0 0.0
      %1169 = vmatpush1.xpose.msra.mxu0 0.0
      %1170 = vmatprep.subr.mxu0 0.0
      %1171 = vmatpush1.xpose.msra.mxu0 0.0
      %1172 = vmatprep.subr.mxu0 0.0
      %1173 = vmatpush1.xpose.msra.mxu0 0.0
      %1174 = vmatprep.subr.mxu0 0.0
      %1175 = vmatpush1.xpose.msra.mxu0 0.0
      %1176 = vmatprep.subr.mxu0 0.0
      %1177 = vmatpush1.xpose.msra.mxu0 0.0
      %1178 = vmatprep.subr.mxu0 0.0
      %1179 = vmatpush1.xpose.msra.mxu0 0.0
      %1180 = vmatprep.subr.mxu0 0.0
      %1181 = vmatpush1.xpose.msra.mxu0 0.0
      %1182 = vmatprep.subr.mxu0 0.0
      %1183 = vmatpush1.xpose.msra.mxu0 0.0
      %1184 = vmatprep.subr.mxu0 0.0
      %1185 = vmatpush1.xpose.msra.mxu0 0.0
      %1186 = vmatprep.subr.mxu0 0.0
      %1187 = vmatpush1.xpose.msra.mxu0 0.0
      %1188 = vmatprep.subr.mxu0 0.0
      %1189 = vmatpush1.xpose.msra.mxu0 0.0
      %1190 = vmatprep.subr.mxu0 0.0
      %1191 = vmatpush1.xpose.msra.mxu0 0.0
      %1192 = vmatprep.subr.mxu0 0.0
      %1193 = vmatpush1.xpose.msra.mxu0 0.0
      %1194 = vmatprep.subr.mxu0 0.0
      %1195 = vmatpush1.xpose.msra.mxu0 0.0
      %1196 = vmatprep.subr.mxu0 0.0
      %1197 = vmatpush1.xpose.msra.mxu0 0.0
      %1198 = vmatprep.subr.mxu0 0.0
      %1199 = vmatpush1.xpose.msra.mxu0 0.0
      %1200 = vmatprep.subr.mxu0 0.0
      %1201 = vmatpush1.xpose.msra.mxu0 0.0
      %1202 = vmatprep.subr.mxu0 0.0
      %1203 = vmatpush1.xpose.msra.mxu0 0.0
      %1204 = vmatprep.subr.mxu0 0.0
      %1205 = vmatpush1.xpose.msra.mxu0 0.0
      %1206 = vmatprep.subr.mxu0 0.0
      %1207 = vmatpush1.xpose.msra.mxu0 0.0
      %1208 = vmatprep.mubr.f32.mxu0 0.0
      %1209 = vmatmul.mubr.f32.gmra.mrb[0].mxu0 %v1140
      %v1210 = vpop.f32.mrb[0].mxu0
      %v1211 = vadd.f32 0.0, %v1210
      %v1212 = vpop.f32.mrb[0].mxu0
      %1213 = vdwg.mxu0
      %v1214 = vmul.f32 %v1211, 0.35355338
      %v1215 = vadd.f32 %v1214, %v731
      %v1216 = vsel %vm651, %v1215, -inf
      %1217 = vmax.xlane.f32.xlu0 %v1216
      %v1218 = vpop.xlane.xlu0 %1217
      %v1219 = vsub.f32 %v1215, %v1218
      %v1220 = vmul.f32 %v1219, 1.442695
      %v1221 = vpow.pop %v1220
      %v1222 = vsel %vm651, %v1221, 0.0
      %1223 = vadd.xlane.f32.xlu0 %v1222
      %v1224 = vpop.xlane.xlu0 %1223
      %v1225 = vrcp.pop %v1224
      %v1226 = vmul.f32 %v1221, %v1225
      %1227 = vrot.lane.b32.xlu0 %v645, 48
      %v1228 = vpop.permute.xlu0 %1227
      %v1231 = vsel %vm651, %v1226, 0
      %1233 = vmatprep.subr.mxu0 0.0
      %1234 = vmatpush1.msra.mxu0 %v1228
      %1235 = vmatprep.subr.mxu0 0.0
      %1236 = vmatpush1.msra.mxu0 0.0
      %1237 = vmatprep.subr.mxu0 0.0
      %1238 = vmatpush1.msra.mxu0 0.0
      %1239 = vmatprep.subr.mxu0 0.0
      %1240 = vmatpush1.msra.mxu0 0.0
      %1241 = vmatprep.subr.mxu0 0.0
      %1242 = vmatpush1.msra.mxu0 0.0
      %1243 = vmatprep.subr.mxu0 0.0
      %1244 = vmatpush1.msra.mxu0 0.0
      %1245 = vmatprep.subr.mxu0 0.0
      %1246 = vmatpush1.msra.mxu0 0.0
      %1247 = vmatprep.subr.mxu0 0.0
      %1248 = vmatpush1.msra.mxu0 0.0
      %1249 = vmatprep.subr.mxu0 0.0
      %1250 = vmatpush1.msra.mxu0 0.0
      %1251 = vmatprep.subr.mxu0 0.0
      %1252 = vmatpush1.msra.mxu0 0.0
      %1253 = vmatprep.subr.mxu0 0.0
      %1254 = vmatpush1.msra.mxu0 0.0
      %1255 = vmatprep.subr.mxu0 0.0
      %1256 = vmatpush1.msra.mxu0 0.0
      %1257 = vmatprep.subr.mxu0 0.0
      %1258 = vmatpush1.msra.mxu0 0.0
      %1259 = vmatprep.subr.mxu0 0.0
      %1260 = vmatpush1.msra.mxu0 0.0
      %1261 = vmatprep.subr.mxu0 0.0
      %1262 = vmatpush1.msra.mxu0 0.0
      %1263 = vmatprep.subr.mxu0 0.0
      %1264 = vmatpush1.msra.mxu0 0.0
      %1265 = vmatprep.subr.mxu0 0.0
      %1266 = vmatpush1.msra.mxu0 0.0
      %1267 = vmatprep.subr.mxu0 0.0
      %1268 = vmatpush1.msra.mxu0 0.0
      %1269 = vmatprep.subr.mxu0 0.0
      %1270 = vmatpush1.msra.mxu0 0.0
      %1271 = vmatprep.subr.mxu0 0.0
      %1272 = vmatpush1.msra.mxu0 0.0
      %1273 = vmatprep.subr.mxu0 0.0
      %1274 = vmatpush1.msra.mxu0 0.0
      %1275 = vmatprep.subr.mxu0 0.0
      %1276 = vmatpush1.msra.mxu0 0.0
      %1277 = vmatprep.subr.mxu0 0.0
      %1278 = vmatpush1.msra.mxu0 0.0
      %1279 = vmatprep.subr.mxu0 0.0
      %1280 = vmatpush1.msra.mxu0 0.0
      %1281 = vmatprep.subr.mxu0 0.0
      %1282 = vmatpush1.msra.mxu0 0.0
      %1283 = vmatprep.subr.mxu0 0.0
      %1284 = vmatpush1.msra.mxu0 0.0
      %1285 = vmatprep.subr.mxu0 0.0
      %1286 = vmatpush1.msra.mxu0 0.0
      %1287 = vmatprep.subr.mxu0 0.0
      %1288 = vmatpush1.msra.mxu0 0.0
      %1289 = vmatprep.subr.mxu0 0.0
      %1290 = vmatpush1.msra.mxu0 0.0
      %1291 = vmatprep.subr.mxu0 0.0
      %1292 = vmatpush1.msra.mxu0 0.0
      %1293 = vmatprep.subr.mxu0 0.0
      %1294 = vmatpush1.msra.mxu0 0.0
      %1295 = vmatprep.subr.mxu0 0.0
      %1296 = vmatpush1.msra.mxu0 0.0
      %1297 = vmatprep.mubr.f32.mxu0 0.0
      %1298 = vmatmul.mubr.f32.gmra.mrb[0].mxu0 %v1231
      %v1299 = vpop.f32.mrb[0].mxu0
      %v1300 = vadd.f32 0.0, %v1299
      %v1301 = vpop.f32.mrb[0].mxu0
      %1302 = vdwg.mxu0
      %v1303 = vld [vmem:[%s4 + $0x10] sm:$0xff]
      %v1305 = vsel %vm651, %v1300, 0
      %1307 = vmatprep.subr.mxu0 0.0
      %1308 = vmatpush1.msra.mxu0 %v1303
      %1309 = vmatprep.subr.mxu0 0.0
      %1310 = vmatpush1.msra.mxu0 0.0
      %1311 = vmatprep.subr.mxu0 0.0
      %1312 = vmatpush1.msra.mxu0 0.0
      %1313 = vmatprep.subr.mxu0 0.0
      %1314 = vmatpush1.msra.mxu0 0.0
      %1315 = vmatprep.subr.mxu0 0.0
      %1316 = vmatpush1.msra.mxu0 0.0
      %1317 = vmatprep.subr.mxu0 0.0
      %1318 = vmatpush1.msra.mxu0 0.0
      %1319 = vmatprep.subr.mxu0 0.0
      %1320 = vmatpush1.msra.mxu0 0.0
      %1321 = vmatprep.subr.mxu0 0.0
      %1322 = vmatpush1.msra.mxu0 0.0
      %1323 = vmatprep.subr.mxu0 0.0
      %1324 = vmatpush1.msra.mxu0 0.0
      %1325 = vmatprep.subr.mxu0 0.0
      %1326 = vmatpush1.msra.mxu0 0.0
      %1327 = vmatprep.subr.mxu0 0.0
      %1328 = vmatpush1.msra.mxu0 0.0
      %1329 = vmatprep.subr.mxu0 0.0
      %1330 = vmatpush1.msra.mxu0 0.0
      %1331 = vmatprep.subr.mxu0 0.0
      %1332 = vmatpush1.msra.mxu0 0.0
      %1333 = vmatprep.subr.mxu0 0.0
      %1334 = vmatpush1.msra.mxu0 0.0
      %1335 = vmatprep.subr.mxu0 0.0
      %1336 = vmatpush1.msra.mxu0 0.0
      %1337 = vmatprep.subr.mxu0 0.0
      %1338 = vmatpush1.msra.mxu0 0.0
      %1339 = vmatprep.subr.mxu0 0.0
      %1340 = vmatpush1.msra.mxu0 0.0
      %1341 = vmatprep.subr.mxu0 0.0
      %1342 = vmatpush1.msra.mxu0 0.0
      %1343 = vmatprep.subr.mxu0 0.0
      %1344 = vmatpush1.msra.mxu0 0.0
      %1345 = vmatprep.subr.mxu0 0.0
      %1346 = vmatpush1.msra.mxu0 0.0
      %1347 = vmatprep.subr.mxu0 0.0
      %1348 = vmatpush1.msra.mxu0 0.0
      %1349 = vmatprep.subr.mxu0 0.0
      %1350 = vmatpush1.msra.mxu0 0.0
      %1351 = vmatprep.subr.mxu0 0.0
      %1352 = vmatpush1.msra.mxu0 0.0
      %1353 = vmatprep.subr.mxu0 0.0
      %1354 = vmatpush1.msra.mxu0 0.0
      %1355 = vmatprep.subr.mxu0 0.0
      %1356 = vmatpush1.msra.mxu0 0.0
      %1357 = vmatprep.subr.mxu0 0.0
      %1358 = vmatpush1.msra.mxu0 0.0
      %1359 = vmatprep.subr.mxu0 0.0
      %1360 = vmatpush1.msra.mxu0 0.0
      %1361 = vmatprep.subr.mxu0 0.0
      %1362 = vmatpush1.msra.mxu0 0.0
      %1363 = vmatprep.subr.mxu0 0.0
      %1364 = vmatpush1.msra.mxu0 0.0
      %1365 = vmatprep.subr.mxu0 0.0
      %1366 = vmatpush1.msra.mxu0 0.0
      %1367 = vmatprep.subr.mxu0 0.0
      %1368 = vmatpush1.msra.mxu0 0.0
      %1369 = vmatprep.subr.mxu0 0.0
      %1370 = vmatpush1.msra.mxu0 0.0
      %1371 = vmatprep.mubr.f32.mxu0 0.0
      %1372 = vmatmul.mubr.f32.gmra.mrb[0].mxu0 %v1305
      %v1373 = vpop.f32.mrb[0].mxu0
      %v1374 = vadd.f32 0.0, %v1373
      %v1375 = vpop.f32.mrb[0].mxu0
      %1376 = vdwg.mxu0
      %v1377 = vadd.f32 %v1133, %v1374
      %1378 = vrot.lane.b32.xlu0 %v645, 104
      %v1379 = vpop.permute.xlu0 %1378
      %1380 = vrot.lane.b32.xlu0 %v645, 72
      %v1381 = vpop.permute.xlu0 %1380
      %v1382 = vsel %vm651, %v1379, 0
      %v1384 = vsel %vm651, %v1381, 0
      %1386 = vmatprep.subr.mxu0 0.0
      %1387 = vmatpush1.xpose.msra.mxu0 %v1384
      %1388 = vmatprep.subr.mxu0 0.0
      %1389 = vmatpush1.xpose.msra.mxu0 0.0
      %1390 = vmatprep.subr.mxu0 0.0
      %1391 = vmatpush1.xpose.msra.mxu0 0.0
      %1392 = vmatprep.subr.mxu0 0.0
      %1393 = vmatpush1.xpose.msra.mxu0 0.0
      %1394 = vmatprep.subr.mxu0 0.0
      %1395 = vmatpush1.xpose.msra.mxu0 0.0
      %1396 = vmatprep.subr.mxu0 0.0
      %1397 = vmatpush1.xpose.msra.mxu0 0.0
      %1398 = vmatprep.subr.mxu0 0.0
      %1399 = vmatpush1.xpose.msra.mxu0 0.0
      %1400 = vmatprep.subr.mxu0 0.0
      %1401 = vmatpush1.xpose.msra.mxu0 0.0
      %1402 = vmatprep.subr.mxu0 0.0
      %1403 = vmatpush1.xpose.msra.mxu0 0.0
      %1404 = vmatprep.subr.mxu0 0.0
      %1405 = vmatpush1.xpose.msra.mxu0 0.0
      %1406 = vmatprep.subr.mxu0 0.0
      %1407 = vmatpush1.xpose.msra.mxu0 0.0
      %1408 = vmatprep.subr.mxu0 0.0
      %1409 = vmatpush1.xpose.msra.mxu0 0.0
      %1410 = vmatprep.subr.mxu0 0.0
      %1411 = vmatpush1.xpose.msra.mxu0 0.0
      %1412 = vmatprep.subr.mxu0 0.0
      %1413 = vmatpush1.xpose.msra.mxu0 0.0
      %1414 = vmatprep.subr.mxu0 0.0
      %1415 = vmatpush1.xpose.msra.mxu0 0.0
      %1416 = vmatprep.subr.mxu0 0.0
      %1417 = vmatpush1.xpose.msra.mxu0 0.0
      %1418 = vmatprep.subr.mxu0 0.0
      %1419 = vmatpush1.xpose.msra.mxu0 0.0
      %1420 = vmatprep.subr.mxu0 0.0
      %1421 = vmatpush1.xpose.msra.mxu0 0.0
      %1422 = vmatprep.subr.mxu0 0.0
      %1423 = vmatpush1.xpose.msra.mxu0 0.0
      %1424 = vmatprep.subr.mxu0 0.0
      %1425 = vmatpush1.xpose.msra.mxu0 0.0
      %1426 = vmatprep.subr.mxu0 0.0
      %1427 = vmatpush1.xpose.msra.mxu0 0.0
      %1428 = vmatprep.subr.mxu0 0.0
      %1429 = vmatpush1.xpose.msra.mxu0 0.0
      %1430 = vmatprep.subr.mxu0 0.0
      %1431 = vmatpush1.xpose.msra.mxu0 0.0
      %1432 = vmatprep.subr.mxu0 0.0
      %1433 = vmatpush1.xpose.msra.mxu0 0.0
      %1434 = vmatprep.subr.mxu0 0.0
      %1435 = vmatpush1.xpose.msra.mxu0 0.0
      %1436 = vmatprep.subr.mxu0 0.0
      %1437 = vmatpush1.xpose.msra.mxu0 0.0
      %1438 = vmatprep.subr.mxu0 0.0
      %1439 = vmatpush1.xpose.msra.mxu0 0.0
      %1440 = vmatprep.subr.mxu0 0.0
      %1441 = vmatpush1.xpose.msra.mxu0 0.0
      %1442 = vmatprep.subr.mxu0 0.0
      %1443 = vmatpush1.xpose.msra.mxu0 0.0
      %1444 = vmatprep.subr.mxu0 0.0
      %1445 = vmatpush1.xpose.msra.mxu0 0.0
      %1446 = vmatprep.subr.mxu0 0.0
      %1447 = vmatpush1.xpose.msra.mxu0 0.0
      %1448 = vmatprep.subr.mxu0 0.0
      %1449 = vmatpush1.xpose.msra.mxu0 0.0
      %1450 = vmatprep.mubr.f32.mxu0 0.0
      %1451 = vmatmul.mubr.f32.gmra.mrb[0].mxu0 %v1382
      %v1452 = vpop.f32.mrb[0].mxu0
      %v1453 = vadd.f32 0.0, %v1452
      %v1454 = vpop.f32.mrb[0].mxu0
      %1455 = vdwg.mxu0
      %v1456 = vmul.f32 %v1453, 0.35355338
      %v1457 = vadd.f32 %v1456, %v731
      %v1458 = vsel %vm651, %v1457, -inf
      %1459 = vmax.xlane.f32.xlu0 %v1458
      %v1460 = vpop.xlane.xlu0 %1459
      %v1461 = vsub.f32 %v1457, %v1460
      %v1462 = vmul.f32 %v1461, 1.442695
      %v1463 = vpow.pop %v1462
      %v1464 = vsel %vm651, %v1463, 0.0
      %1465 = vadd.xlane.f32.xlu0 %v1464
      %v1466 = vpop.xlane.xlu0 %1465
      %v1467 = vrcp.pop %v1466
      %v1468 = vmul.f32 %v1463, %v1467
      %1469 = vrot.lane.b32.xlu0 %v645, 40
      %v1470 = vpop.permute.xlu0 %1469
      %v1473 = vsel %vm651, %v1468, 0
      %1475 = vmatprep.subr.mxu0 0.0
      %1476 = vmatpush1.msra.mxu0 %v1470
      %1477 = vmatprep.subr.mxu0 0.0
      %1478 = vmatpush1.msra.mxu0 0.0
      %1479 = vmatprep.subr.mxu0 0.0
      %1480 = vmatpush1.msra.mxu0 0.0
      %1481 = vmatprep.subr.mxu0 0.0
      %1482 = vmatpush1.msra.mxu0 0.0
      %1483 = vmatprep.subr.mxu0 0.0
      %1484 = vmatpush1.msra.mxu0 0.0
      %1485 = vmatprep.subr.mxu0 0.0
      %1486 = vmatpush1.msra.mxu0 0.0
      %1487 = vmatprep.subr.mxu0 0.0
      %1488 = vmatpush1.msra.mxu0 0.0
      %1489 = vmatprep.subr.mxu0 0.0
      %1490 = vmatpush1.msra.mxu0 0.0
      %1491 = vmatprep.subr.mxu0 0.0
      %1492 = vmatpush1.msra.mxu0 0.0
      %1493 = vmatprep.subr.mxu0 0.0
      %1494 = vmatpush1.msra.mxu0 0.0
      %1495 = vmatprep.subr.mxu0 0.0
      %1496 = vmatpush1.msra.mxu0 0.0
      %1497 = vmatprep.subr.mxu0 0.0
      %1498 = vmatpush1.msra.mxu0 0.0
      %1499 = vmatprep.subr.mxu0 0.0
      %1500 = vmatpush1.msra.mxu0 0.0
      %1501 = vmatprep.subr.mxu0 0.0
      %1502 = vmatpush1.msra.mxu0 0.0
      %1503 = vmatprep.subr.mxu0 0.0
      %1504 = vmatpush1.msra.mxu0 0.0
      %1505 = vmatprep.subr.mxu0 0.0
      %1506 = vmatpush1.msra.mxu0 0.0
      %1507 = vmatprep.subr.mxu0 0.0
      %1508 = vmatpush1.msra.mxu0 0.0
      %1509 = vmatprep.subr.mxu0 0.0
      %1510 = vmatpush1.msra.mxu0 0.0
      %1511 = vmatprep.subr.mxu0 0.0
      %1512 = vmatpush1.msra.mxu0 0.0
      %1513 = vmatprep.subr.mxu0 0.0
      %1514 = vmatpush1.msra.mxu0 0.0
      %1515 = vmatprep.subr.mxu0 0.0
      %1516 = vmatpush1.msra.mxu0 0.0
      %1517 = vmatprep.subr.mxu0 0.0
      %1518 = vmatpush1.msra.mxu0 0.0
      %1519 = vmatprep.subr.mxu0 0.0
      %1520 = vmatpush1.msra.mxu0 0.0
      %1521 = vmatprep.subr.mxu0 0.0
      %1522 = vmatpush1.msra.mxu0 0.0
      %1523 = vmatprep.subr.mxu0 0.0
      %1524 = vmatpush1.msra.mxu0 0.0
      %1525 = vmatprep.subr.mxu0 0.0
      %1526 = vmatpush1.msra.mxu0 0.0
      %1527 = vmatprep.subr.mxu0 0.0
      %1528 = vmatpush1.msra.mxu0 0.0
      %1529 = vmatprep.subr.mxu0 0.0
      %1530 = vmatpush1.msra.mxu0 0.0
      %1531 = vmatprep.subr.mxu0 0.0
      %1532 = vmatpush1.msra.mxu0 0.0
      %1533 = vmatprep.subr.mxu0 0.0
      %1534 = vmatpush1.msra.mxu0 0.0
      %1535 = vmatprep.subr.mxu0 0.0
      %1536 = vmatpush1.msra.mxu0 0.0
      %1537 = vmatprep.subr.mxu0 0.0
      %1538 = vmatpush1.msra.mxu0 0.0
      %1539 = vmatprep.mubr.f32.mxu0 0.0
      %1540 = vmatmul.mubr.f32.gmra.mrb[0].mxu0 %v1473
      %v1541 = vpop.f32.mrb[0].mxu0
      %v1542 = vadd.f32 0.0, %v1541
      %v1543 = vpop.f32.mrb[0].mxu0
      %1544 = vdwg.mxu0
      %v1545 = vld [vmem:[%s4 + $0x18] sm:$0xff]
      %v1547 = vsel %vm651, %v1542, 0
      %1549 = vmatprep.subr.mxu0 0.0
      %1550 = vmatpush1.msra.mxu0 %v1545
      %1551 = vmatprep.subr.mxu0 0.0
      %1552 = vmatpush1.msra.mxu0 0.0
      %1553 = vmatprep.subr.mxu0 0.0
      %1554 = vmatpush1.msra.mxu0 0.0
      %1555 = vmatprep.subr.mxu0 0.0
      %1556 = vmatpush1.msra.mxu0 0.0
      %1557 = vmatprep.subr.mxu0 0.0
      %1558 = vmatpush1.msra.mxu0 0.0
      %1559 = vmatprep.subr.mxu0 0.0
      %1560 = vmatpush1.msra.mxu0 0.0
      %1561 = vmatprep.subr.mxu0 0.0
      %1562 = vmatpush1.msra.mxu0 0.0
      %1563 = vmatprep.subr.mxu0 0.0
      %1564 = vmatpush1.msra.mxu0 0.0
      %1565 = vmatprep.subr.mxu0 0.0
      %1566 = vmatpush1.msra.mxu0 0.0
      %1567 = vmatprep.subr.mxu0 0.0
      %1568 = vmatpush1.msra.mxu0 0.0
      %1569 = vmatprep.subr.mxu0 0.0
      %1570 = vmatpush1.msra.mxu0 0.0
      %1571 = vmatprep.subr.mxu0 0.0
      %1572 = vmatpush1.msra.mxu0 0.0
      %1573 = vmatprep.subr.mxu0 0.0
      %1574 = vmatpush1.msra.mxu0 0.0
      %1575 = vmatprep.subr.mxu0 0.0
      %1576 = vmatpush1.msra.mxu0 0.0
      %1577 = vmatprep.subr.mxu0 0.0
      %1578 = vmatpush1.msra.mxu0 0.0
      %1579 = vmatprep.subr.mxu0 0.0
      %1580 = vmatpush1.msra.mxu0 0.0
      %1581 = vmatprep.subr.mxu0 0.0
      %1582 = vmatpush1.msra.mxu0 0.0
      %1583 = vmatprep.subr.mxu0 0.0
      %1584 = vmatpush1.msra.mxu0 0.0
      %1585 = vmatprep.subr.mxu0 0.0
      %1586 = vmatpush1.msra.mxu0 0.0
      %1587 = vmatprep.subr.mxu0 0.0
      %1588 = vmatpush1.msra.mxu0 0.0
      %1589 = vmatprep.subr.mxu0 0.0
      %1590 = vmatpush1.msra.mxu0 0.0
      %1591 = vmatprep.subr.mxu0 0.0
      %1592 = vmatpush1.msra.mxu0 0.0
      %1593 = vmatprep.subr.mxu0 0.0
      %1594 = vmatpush1.msra.mxu0 0.0
      %1595 = vmatprep.subr.mxu0 0.0
      %1596 = vmatpush1.msra.mxu0 0.0
      %1597 = vmatprep.subr.mxu0 0.0
      %1598 = vmatpush1.msra.mxu0 0.0
      %1599 = vmatprep.subr.mxu0 0.0
      %1600 = vmatpush1.msra.mxu0 0.0
      %1601 = vmatprep.subr.mxu0 0.0
      %1602 = vmatpush1.msra.mxu0 0.0
      %1603 = vmatprep.subr.mxu0 0.0
      %1604 = vmatpush1.msra.mxu0 0.0
      %1605 = vmatprep.subr.mxu0 0.0
      %1606 = vmatpush1.msra.mxu0 0.0
      %1607 = vmatprep.subr.mxu0 0.0
      %1608 = vmatpush1.msra.mxu0 0.0
      %1609 = vmatprep.subr.mxu0 0.0
      %1610 = vmatpush1.msra.mxu0 0.0
      %1611 = vmatprep.subr.mxu0 0.0
      %1612 = vmatpush1.msra.mxu0 0.0
      %1613 = vmatprep.mubr.f32.mxu0 0.0
      %1614 = vmatmul.mubr.f32.gmra.mrb[0].mxu0 %v1547
      %v1615 = vpop.f32.mrb[0].mxu0
      %v1616 = vadd.f32 0.0, %v1615
      %v1617 = vpop.f32.mrb[0].mxu0
      %1618 = vdwg.mxu0
      %v1619 = vadd.f32 %v1377, %v1616
      %v1620 = vld [vmem:[%s5] sm:$0x1]
      %v1622 = vlaneseq
      %v1623 = vshrl.u32 %v1622, 7
      %v1624 = vsub.s32 0, %v1623
      %v1625 = vrot.slane %v1620, %v1624
      %v1627 = vadd.f32 %v1619, %v1625
      %v1628 = vadd.f32 %v1627, %v562
      %v1629 = vld [vmem:[%s8] sm:$0x1]
      %v1630 = vld [vmem:[%s9] sm:$0x1]
      %v1631 = vsel %vm534, %v1628, 0.0
      %1632 = vadd.xlane.f32.xlu0 %v1631
      %v1633 = vpop.xlane.xlu0 %1632
      %v1634 = vmul.f32 %v1633, %v538
      %v1635 = vsub.f32 %v1628, %v1634
      %v1636 = vmul.f32 %v1635, %v1635
      %v1637 = vsel %vm534, %v1636, 0.0
      %1638 = vadd.xlane.f32.xlu0 %v1637
      %v1639 = vpop.xlane.xlu0 %1638
      %v1640 = vmul.f32 %v1639, %v538
      %v1641 = vadd.f32 %v1640, 1e-12
      %v1642 = vrsqrt.pop %v1641
      %v1643 = vmul.f32 %v1635, %v1642
      %v1645 = vlaneseq
      %v1646 = vshrl.u32 %v1645, 7
      %v1647 = vsub.s32 0, %v1646
      %v1648 = vrot.slane %v1629, %v1647
      %v1650 = vmul.f32 %v1643, %v1648
      %v1652 = vlaneseq
      %v1653 = vshrl.u32 %v1652, 7
      %v1654 = vsub.s32 0, %v1653
      %v1655 = vrot.slane %v1630, %v1654
      %v1657 = vadd.f32 %v1650, %v1655
      %v1658 = vld [vmem:[%s10] sm:$0xff]
      %v1659 = vld [vmem:[%s10 + $0x8] sm:$0xff]
      %v1660 = vld [vmem:[%s10 + $0x10] sm:$0xff]
      %v1661 = vld [vmem:[%s10 + $0x18] sm:$0xff]
      %v1662 = vld [vmem:[%s11] sm:$0x1]
      %v1664 = vlaneseq
      %v1665 = vshrl.u32 %v1664, 7
      %v1666 = vsub.s32 0, %v1665
      %v1667 = vrot.slane %v1662, %v1666
      %v1670 = vsel %vm534, %v1657, 0
      %1672 = vmatprep.subr.mxu0 0.0
      %1673 = vmatpush1.msra.mxu0 %v1658
      %1674 = vmatprep.subr.mxu0 0.0
      %1675 = vmatpush1.msra.mxu0 %v1659
      %1676 = vmatprep.subr.mxu0 0.0
      %1677 = vmatpush1.msra.mxu0 %v1660
      %1678 = vmatprep.subr.mxu0 0.0
      %1679 = vmatpush1.msra.mxu0 %v1661
      %1680 = vmatprep.subr.mxu0 0.0
      %1681 = vmatpush1.msra.mxu0 0.0
      %1682 = vmatprep.subr.mxu0 0.0
      %1683 = vmatpush1.msra.mxu0 0.0
      %1684 = vmatprep.subr.mxu0 0.0
      %1685 = vmatpush1.msra.mxu0 0.0
      %1686 = vmatprep.subr.mxu0 0.0
      %1687 = vmatpush1.msra.mxu0 0.0
      %1688 = vmatprep.subr.mxu0 0.0
      %1689 = vmatpush1.msra.mxu0 0.0
      %1690 = vmatprep.subr.mxu0 0.0
      %1691 = vmatpush1.msra.mxu0 0.0
      %1692 = vmatprep.subr.mxu0 0.0
      %1693 = vmatpush1.msra.mxu0 0.0
      %1694 = vmatprep.subr.mxu0 0.0
      %1695 = vmatpush1.msra.mxu0 0.0
      %1696 = vmatprep.subr.mxu0 0.0
      %1697 = vmatpush1.msra.mxu0 0.0
      %1698 = vmatprep.subr.mxu0 0.0
      %1699 = vmatpush1.msra.mxu0 0.0
      %1700 = vmatprep.subr.mxu0 0.0
      %1701 = vmatpush1.msra.mxu0 0.0
      %1702 = vmatprep.subr.mxu0 0.0
      %1703 = vmatpush1.msra.mxu0 0.0
      %1704 = vmatprep.subr.mxu0 0.0
      %1705 = vmatpush1.msra.mxu0 0.0
      %1706 = vmatprep.subr.mxu0 0.0
      %1707 = vmatpush1.msra.mxu0 0.0
      %1708 = vmatprep.subr.mxu0 0.0
      %1709 = vmatpush1.msra.mxu0 0.0
      %1710 = vmatprep.subr.mxu0 0.0
      %1711 = vmatpush1.msra.mxu0 0.0
      %1712 = vmatprep.subr.mxu0 0.0
      %1713 = vmatpush1.msra.mxu0 0.0
      %1714 = vmatprep.subr.mxu0 0.0
      %1715 = vmatpush1.msra.mxu0 0.0
      %1716 = vmatprep.subr.mxu0 0.0
      %1717 = vmatpush1.msra.mxu0 0.0
      %1718 = vmatprep.subr.mxu0 0.0
      %1719 = vmatpush1.msra.mxu0 0.0
      %1720 = vmatprep.subr.mxu0 0.0
      %1721 = vmatpush1.msra.mxu0 0.0
      %1722 = vmatprep.subr.mxu0 0.0
      %1723 = vmatpush1.msra.mxu0 0.0
      %1724 = vmatprep.subr.mxu0 0.0
      %1725 = vmatpush1.msra.mxu0 0.0
      %1726 = vmatprep.subr.mxu0 0.0
      %1727 = vmatpush1.msra.mxu0 0.0
      %1728 = vmatprep.subr.mxu0 0.0
      %1729 = vmatpush1.msra.mxu0 0.0
      %1730 = vmatprep.subr.mxu0 0.0
      %1731 = vmatpush1.msra.mxu0 0.0
      %1732 = vmatprep.subr.mxu0 0.0
      %1733 = vmatpush1.msra.mxu0 0.0
      %1734 = vmatprep.subr.mxu0 0.0
      %1735 = vmatpush1.msra.mxu0 0.0
      %1736 = vmatprep.mubr.f32.mxu0 0.0
      %1737 = vmatmul.mubr.f32.gmra.mrb[0].mxu0 %v1670
      %v1738 = vpop.f32.mrb[0].mxu0
      %v1739 = vadd.f32 %v1667, %v1738
      %v1740 = vpop.f32.mrb[0].mxu0
      %1741 = vdwg.mxu0
      %v1742 = vmul.f32 %v1739, 0.5
      %v1743 = vmul.f32 %v1739, 0.044715
      %v1744 = vmul.f32 %v1743, %v1739
      %v1745 = vmul.f32 %v1744, %v1739
      %v1746 = vadd.f32 %v1739, %v1745
      %v1747 = vmul.f32 %v1746, 0.7978846
      %v1748 = vtanh.pop %v1747
      %v1749 = vadd.f32 %v1748, 1.0
      %v1750 = vmul.f32 %v1742, %v1749
      %v1751 = vld [vmem:[%s12] sm:$0xff]
      %v1752 = vld [vmem:[%s12 + $0x8] sm:$0xff]
      %v1753 = vld [vmem:[%s12 + $0x10] sm:$0xff]
      %v1754 = vld [vmem:[%s12 + $0x18] sm:$0xff]
      %v1755 = vld [vmem:[%s12 + $0x20] sm:$0xff]
      %v1756 = vld [vmem:[%s12 + $0x28] sm:$0xff]
      %v1757 = vld [vmem:[%s12 + $0x30] sm:$0xff]
      %v1758 = vld [vmem:[%s12 + $0x38] sm:$0xff]
      %v1759 = vld [vmem:[%s13] sm:$0x1]
      %v1761 = vlaneseq
      %v1762 = vshrl.u32 %v1761, 7
      %v1763 = vsub.s32 0, %v1762
      %v1764 = vrot.slane %v1759, %v1763
      %vm1766 = vcmask 523264
      %v1768 = vsel %vm1766, %v1750, 0
      %1770 = vmatprep.subr.mxu0 0.0
      %1771 = vmatpush1.msra.mxu0 %v1751
      %1772 = vmatprep.subr.mxu0 0.0
      %1773 = vmatpush1.msra.mxu0 %v1752
      %1774 = vmatprep.subr.mxu0 0.0
      %1775 = vmatpush1.msra.mxu0 %v1753
      %1776 = vmatprep.subr.mxu0 0.0
      %1777 = vmatpush1.msra.mxu0 %v1754
      %1778 = vmatprep.subr.mxu0 0.0
      %1779 = vmatpush1.msra.mxu0 %v1755
      %1780 = vmatprep.subr.mxu0 0.0
      %1781 = vmatpush1.msra.mxu0 %v1756
      %1782 = vmatprep.subr.mxu0 0.0
      %1783 = vmatpush1.msra.mxu0 %v1757
      %1784 = vmatprep.subr.mxu0 0.0
      %1785 = vmatpush1.msra.mxu0 %v1758
      %1786 = vmatprep.subr.mxu0 0.0
      %1787 = vmatpush1.msra.mxu0 0.0
      %1788 = vmatprep.subr.mxu0 0.0
      %1789 = vmatpush1.msra.mxu0 0.0
      %1790 = vmatprep.subr.mxu0 0.0
      %1791 = vmatpush1.msra.mxu0 0.0
      %1792 = vmatprep.subr.mxu0 0.0
      %1793 = vmatpush1.msra.mxu0 0.0
      %1794 = vmatprep.subr.mxu0 0.0
      %1795 = vmatpush1.msra.mxu0 0.0
      %1796 = vmatprep.subr.mxu0 0.0
      %1797 = vmatpush1.msra.mxu0 0.0
      %1798 = vmatprep.subr.mxu0 0.0
      %1799 = vmatpush1.msra.mxu0 0.0
      %1800 = vmatprep.subr.mxu0 0.0
      %1801 = vmatpush1.msra.mxu0 0.0
      %1802 = vmatprep.subr.mxu0 0.0
      %1803 = vmatpush1.msra.mxu0 0.0
      %1804 = vmatprep.subr.mxu0 0.0
      %1805 = vmatpush1.msra.mxu0 0.0
      %1806 = vmatprep.subr.mxu0 0.0
      %1807 = vmatpush1.msra.mxu0 0.0
      %1808 = vmatprep.subr.mxu0 0.0
      %1809 = vmatpush1.msra.mxu0 0.0
      %1810 = vmatprep.subr.mxu0 0.0
      %1811 = vmatpush1.msra.mxu0 0.0
      %1812 = vmatprep.subr.mxu0 0.0
      %1813 = vmatpush1.msra.mxu0 0.0
      %1814 = vmatprep.subr.mxu0 0.0
      %1815 = vmatpush1.msra.mxu0 0.0
      %1816 = vmatprep.subr.mxu0 0.0
      %1817 = vmatpush1.msra.mxu0 0.0
      %1818 = vmatprep.subr.mxu0 0.0
      %1819 = vmatpush1.msra.mxu0 0.0
      %1820 = vmatprep.subr.mxu0 0.0
      %1821 = vmatpush1.msra.mxu0 0.0
      %1822 = vmatprep.subr.mxu0 0.0
      %1823 = vmatpush1.msra.mxu0 0.0
      %1824 = vmatprep.subr.mxu0 0.0
      %1825 = vmatpush1.msra.mxu0 0.0
      %1826 = vmatprep.subr.mxu0 0.0
      %1827 = vmatpush1.msra.mxu0 0.0
      %1828 = vmatprep.subr.mxu0 0.0
      %1829 = vmatpush1.msra.mxu0 0.0
      %1830 = vmatprep.subr.mxu0 0.0
      %1831 = vmatpush1.msra.mxu0 0.0
      %1832 = vmatprep.subr.mxu0 0.0
      %1833 = vmatpush1.msra.mxu0 0.0
      %1834 = vmatprep.mubr.f32.mxu0 0.0
      %1835 = vmatmul.mubr.f32.gmra.mrb[0].mxu0 %v1768
      %v1836 = vpop.f32.mrb[0].mxu0
      %v1837 = vadd.f32 %v1764, %v1836
      %v1838 = vpop.f32.mrb[0].mxu0
      %1839 = vdwg.mxu0
      %v1840 = vadd.f32 %v1837, %v1657
      %v1841 = vld [vmem:[%s14] sm:$0x1]
      %v1842 = vld [vmem:[%s15] sm:$0x1]
      %v1843 = vsel %vm534, %v1840, 0.0
      %1844 = vadd.xlane.f32.xlu0 %v1843
      %v1845 = vpop.xlane.xlu0 %1844
      %v1846 = vmul.f32 %v1845, %v538
      %v1847 = vsub.f32 %v1840, %v1846
      %v1848 = vmul.f32 %v1847, %v1847
      %v1849 = vsel %vm534, %v1848, 0.0
      %1850 = vadd.xlane.f32.xlu0 %v1849
      %v1851 = vpop.xlane.xlu0 %1850
      %v1852 = vmul.f32 %v1851, %v538
      %v1853 = vadd.f32 %v1852, 1e-12
      %v1854 = vrsqrt.pop %v1853
      %v1855 = vmul.f32 %v1847, %v1854
      %v1857 = vlaneseq
      %v1858 = vshrl.u32 %v1857, 7
      %v1859 = vsub.s32 0, %v1858
      %v1860 = vrot.slane %v1841, %v1859
      %v1862 = vmul.f32 %v1855, %v1860
      %v1864 = vlaneseq
      %v1865 = vshrl.u32 %v1864, 7
      %v1866 = vsub.s32 0, %v1865
      %v1867 = vrot.slane %v1842, %v1866
      %v1869 = vadd.f32 %v1862, %v1867
      %1870 = vst.msk [vmem:[%s530] sm:$0xff] %vm534, %v1869
      %p1871 = scmp.lt.s32.totalorder %s27, 1
      %s1872 = scalar_select %p1871, %s27, 1
      %s1873 = smul.addr %s1872, 8
      %s1874 = scalar_lea.vmem %s16, %s1873
      // Predicated region
      $region85: #{model_forward.5} parent=83 // pred_check
        %p1875 = pneg %p391
      $region86: #{model_forward.5} parent=83 // pred_check_branch
        %1877 = sbr.rel (%p1875) target = $region88
      $region87: #{model_forward.5} parent=83 // pred_region
        _
      $region88: #{model_forward.5} parent=83 // pred_fallthru
        _
    $region84: #{model_forward.5} parent=5 // pred_fallthru
      _
    %p1878 = scmp.le.s32.totalorder 2, %s22
    // Predicated region
    $region89: #{model_forward.5} parent=5 // pred_check
      %p1879 = pneg %p1878
    $region90: #{model_forward.5} parent=5 // pred_check_branch
      %1881 = sbr.rel (%p1879) target = $region92
    $region91: #{model_forward.5} parent=5 // pred_region
      %s1882 = ssub.s32 %s22, 2
      // Predicated region
      $region93: #{model_forward.5} parent=91 // pred_check
        %p1883 = pneg %p397
      $region94: #{model_forward.5} parent=91 // pred_check_branch
        %1885 = sbr.rel (%p1883) target = $region96
      $region95: #{model_forward.5} parent=91 // pred_region
        %p1886 = scmp.lt.s32.totalorder %s28, 1
        %s1887 = scalar_select %p1886, %s28, 1
        %s1888 = smul.addr %s1887, 8
        %s1889 = scalar_lea.vmem %s16, %s1888
      $region96: #{model_forward.5} parent=91 // pred_fallthru
        _
    $region92: #{model_forward.5} parent=5 // pred_fallthru
      _
  $region6: #{model_forward.5} parent=0 // loop_footer
    %s26 = sadd.s32 1, %s22
  $region7: #{model_forward.5} parent=0 // loop_footer_branch
    %21 = sbr.rel target = $region3
  $region8: #{model_forward.5} parent=0 // loop_exit
    _

// kernel: model_forward.7
$region0: #{model_forward.7}
  #allocation0 [shape = 'u32[]', space=smem, size = 0x4, offset = 0x4, fixed_abs, tag = 'smem constant byte address 0x4 - core index']
  #allocation1 [shape = 'u32[144,128]{1,0:T(1,128)}', space=vmem, size = 0x12000, scoped, tag = 'internal scratch']
  #allocation2 [shape = 'f32[16,64]{1,0:T(8,128)}', space=vmem, size = 0x2000, scoped, tag = 'scratch operand']
  %s0 = inlined_call_operand.vmem [shape: f32[16,32], index: 0, kind: input, shape index: {}]
  %s1 = inlined_call_operand.vmem [shape: f32[2,32,64], index: 1, kind: input, shape index: {}]
  %s2 = inlined_call_operand.vmem [shape: f32[2,1,64], index: 2, kind: input, shape index: {}]
  %s3 = inlined_call_operand.vmem [shape: f32[2,16,64], index: 3, kind: input, shape index: {}]
  %s4 = inlined_call_operand.vmem [shape: f32[2,16,16], index: 4, kind: output, shape index: {}]
  %s5 = sld [smem:[#allocation0]]
  $region49: #{model_forward.7} parent=0
    _
  %s7 = ssub.s32 1, %s5
  %s8 = scalar_select 0, %s7, %s5
  loop: start=0, step=1, limit=4
  $region2: #{model_forward.7} parent=0 // loop_pre_header
    _
  $region3: #{model_forward.7} parent=0 // loop_header
    %s10 = sphi 0, %s14
    %p11 = scmp.ge.s32.totalorder %s10, 4
    %s18 = sphi 0, %s18
    %s20 = sphi 0, %s18
    %s21 = sphi 0, %s20
    %s35 = sphi 0, %s21
    %s41 = sphi 0, %s43
    %s44 = sphi 0, %s41
    %s45 = sphi 0, %s44
    %s61 = sphi 0, %s45
    %s67 = sphi 0, %s69
    %s70 = sphi 0, %s67
    %s71 = sphi 0, %s70
    %s87 = sphi 0, %s71
    %s93 = sphi 0, %s95
    %s96 = sphi 0, %s93
    %s97 = sphi 0, %s96
    %s113 = sphi 0, %s97
    %s119 = sphi 0, %s121
    %s122 = sphi 0, %s119
    %s123 = sphi 0, %s122
    %s139 = sphi 0, %s123
  $region4: #{model_forward.7} parent=0 // loop_header_branch
    %13 = sbr.rel (%p11) target = $region8
  $region5: #{model_forward.7} parent=0 // loop_body
    %s15 = ssub.s32 %s10, 1
    %s16 = ssub.s32 %s10, 2
    %s17 = sadd.s32 %s10, 1
    %s19 = sadd.s32 %s18, 1
    %p22 = scmp.eq.s32.totalorder %s10, 1
    %p23 = scmp.ne.s32.totalorder %s18, %s20
    %p24 = scmp.eq.s32.totalorder %s10, 0
    %p25 = por %p23, %p24
    %p26 = scmp.ne.s32.totalorder %s18, %s20
    %p27 = scmp.eq.s32.totalorder %s15, 1
    %p28 = por %p26, %p27
    %p29 = scmp.ne.s32.totalorder %s20, %s21
    %p30 = scmp.eq.s32.totalorder %s15, 0
    %p31 = por %p29, %p30
    %p32 = scmp.ne.s32.totalorder %s20, %s21
    %p33 = scmp.eq.s32.totalorder %s16, 1
    %p34 = por %p32, %p33
    %p36 = scmp.ne.s32.totalorder %s21, %s35
    %p37 = scmp.eq.s32.totalorder %s16, 0
    %p38 = por %p36, %p37
    %s39 = ssub.s32 %s10, %s17
    %p40 = scmp.eq.s32.totalorder %s39, 0
    %s42 = sadd.s32 %s41, 1
    %s43 = scalar_select %p40, %s41, %s42
    %p46 = pneg %p40
    %p47 = scmp.eq.s32.totalorder %s10, 1
    %p48 = por %p46, %p47
    %p49 = scmp.ne.s32.totalorder %s41, %s44
    %p50 = scmp.eq.s32.totalorder %s10, 0
    %p51 = por %p49, %p50
    %p52 = scmp.ne.s32.totalorder %s41, %s44
    %p53 = scmp.eq.s32.totalorder %s15, 1
    %p54 = por %p52, %p53
    %p55 = scmp.ne.s32.totalorder %s44, %s45
    %p56 = scmp.eq.s32.totalorder %s15, 0
    %p57 = por %p55, %p56
    %p58 = scmp.ne.s32.totalorder %s44, %s45
    %p59 = scmp.eq.s32.totalorder %s16, 1
    %p60 = por %p58, %p59
    %p62 = scmp.ne.s32.totalorder %s45, %s61
    %p63 = scmp.eq.s32.totalorder %s16, 0
    %p64 = por %p62, %p63
    %s65 = ssub.s32 %s10, %s17
    %p66 = scmp.eq.s32.totalorder %s65, 0
    %s68 = sadd.s32 %s67, 1
    %s69 = scalar_select %p66, %s67, %s68
    %p72 = pneg %p66
    %p73 = scmp.eq.s32.totalorder %s10, 1
    %p74 = por %p72, %p73
    %p75 = scmp.ne.s32.totalorder %s67, %s70
    %p76 = scmp.eq.s32.totalorder %s10, 0
    %p77 = por %p75, %p76
    %p78 = scmp.ne.s32.totalorder %s67, %s70
    %p79 = scmp.eq.s32.totalorder %s15, 1
    %p80 = por %p78, %p79
    %p81 = scmp.ne.s32.totalorder %s70, %s71
    %p82 = scmp.eq.s32.totalorder %s15, 0
    %p83 = por %p81, %p82
    %p84 = scmp.ne.s32.totalorder %s70, %s71
    %p85 = scmp.eq.s32.totalorder %s16, 1
    %p86 = por %p84, %p85
    %p88 = scmp.ne.s32.totalorder %s71, %s87
    %p89 = scmp.eq.s32.totalorder %s16, 0
    %p90 = por %p88, %p89
    %s91 = ssub.s32 %s10, %s17
    %p92 = scmp.eq.s32.totalorder %s91, 0
    %s94 = sadd.s32 %s93, 1
    %s95 = scalar_select %p92, %s93, %s94
    %p98 = pneg %p92
    %p99 = scmp.eq.s32.totalorder %s10, 1
    %p100 = por %p98, %p99
    %p101 = scmp.ne.s32.totalorder %s93, %s96
    %p102 = scmp.eq.s32.totalorder %s10, 0
    %p103 = por %p101, %p102
    %p104 = scmp.ne.s32.totalorder %s93, %s96
    %p105 = scmp.eq.s32.totalorder %s15, 1
    %p106 = por %p104, %p105
    %p107 = scmp.ne.s32.totalorder %s96, %s97
    %p108 = scmp.eq.s32.totalorder %s15, 0
    %p109 = por %p107, %p108
    %p110 = scmp.ne.s32.totalorder %s96, %s97
    %p111 = scmp.eq.s32.totalorder %s16, 1
    %p112 = por %p110, %p111
    %p114 = scmp.ne.s32.totalorder %s97, %s113
    %p115 = scmp.eq.s32.totalorder %s16, 0
    %p116 = por %p114, %p115
    %s117 = ssub.s32 %s10, %s17
    %p118 = scmp.eq.s32.totalorder %s117, 0
    %s120 = sadd.s32 %s119, 1
    %s121 = scalar_select %p118, %s119, %s120
    %p124 = pneg %p118
    %p125 = scmp.eq.s32.totalorder %s10, 1
    %p126 = por %p124, %p125
    %p127 = scmp.ne.s32.totalorder %s119, %s122
    %p128 = scmp.eq.s32.totalorder %s10, 0
    %p129 = por %p127, %p128
    %p130 = scmp.ne.s32.totalorder %s119, %s122
    %p131 = scmp.eq.s32.totalorder %s15, 1
    %p132 = por %p130, %p131
    %p133 = scmp.ne.s32.totalorder %s122, %s123
    %p134 = scmp.eq.s32.totalorder %s15, 0
    %p135 = por %p133, %p134
    %p136 = scmp.ne.s32.totalorder %s122, %s123
    %p137 = scmp.eq.s32.totalorder %s16, 1
    %p138 = por %p136, %p137
    %p140 = scmp.ne.s32.totalorder %s123, %s139
    %p141 = scmp.eq.s32.totalorder %s16, 0
    %p142 = por %p140, %p141
    %p143 = scmp.le.s32.totalorder 1, %s10
    %p144 = scmp.lt.s32.totalorder %s10, 3
    %p145 = pnand %p143, %p144
    %p146 = pneg %p145
    // Predicated region
    $region9: #{model_forward.7} parent=5 // pred_check
      _
    $region10: #{model_forward.7} parent=5 // pred_check_branch
      %148 = sbr.rel (%p145) target = $region12
    $region11: #{model_forward.7} parent=5 // pred_region
      %s149 = ssub.s32 %s10, 1
      // Predicated region
      $region13: #{model_forward.7} parent=11 // pred_check
        %p150 = pneg %p31
      $region14: #{model_forward.7} parent=11 // pred_check_branch
        %152 = sbr.rel (%p150) target = $region16
      $region15: #{model_forward.7} parent=11 // pred_region
        _
      $region16: #{model_forward.7} parent=11 // pred_fallthru
        _
    $region12: #{model_forward.7} parent=5 // pred_fallthru
      _
    %p153 = scmp.lt.s32.totalorder %s10, 2
    // Predicated region
    $region17: #{model_forward.7} parent=5 // pred_check
      %p154 = pneg %p153
    $region18: #{model_forward.7} parent=5 // pred_check_branch
      %156 = sbr.rel (%p154) target = $region20
    $region19: #{model_forward.7} parent=5 // pred_region
      // Predicated region
      $region21: #{model_forward.7} parent=19 // pred_check
        %p157 = pneg %p51
      $region22: #{model_forward.7} parent=19 // pred_check_branch
        %159 = sbr.rel (%p157) target = $region24
      $region23: #{model_forward.7} parent=19 // pred_region
        %p160 = scmp.lt.s32.totalorder %s10, 1
        %s161 = scalar_select %p160, %s10, 1
        %s162 = smul.addr %s161, 4
        %s163 = smul.addr %s162, 8
        %s164 = scalar_lea.vmem %s1, %s163
      $region24: #{model_forward.7} parent=19 // pred_fallthru
        _
      // Predicated region
      $region25: #{model_forward.7} parent=19 // pred_check
        %p165 = pneg %p77
      $region26: #{model_forward.7} parent=19 // pred_check_branch
        %167 = sbr.rel (%p165) target = $region28
      $region27: #{model_forward.7} parent=19 // pred_region
        %p168 = scmp.lt.s32.totalorder %s10, 1
        %s169 = scalar_select %p168, %s10, 1
        %s170 = scalar_lea.vmem %s2, %s169
      $region28: #{model_forward.7} parent=19 // pred_fallthru
        _
      // Predicated region
      $region29: #{model_forward.7} parent=19 // pred_check
        %p171 = pneg %p103
      $region30: #{model_forward.7} parent=19 // pred_check_branch
        %173 = sbr.rel (%p171) target = $region32
      $region31: #{model_forward.7} parent=19 // pred_region
        %p174 = scmp.lt.s32.totalorder %s10, 1
        %s175 = scalar_select %p174, %s10, 1
        %s176 = smul.addr %s175, 2
        %s177 = smul.addr %s176, 8
        %s178 = scalar_lea.vmem %s3, %s177
      $region32: #{model_forward.7} parent=19 // pred_fallthru
        _
    $region20: #{model_forward.7} parent=5 // pred_fallthru
      _
    %p179 = scmp.le.s32.totalorder 1, %s10
    %p180 = scmp.lt.s32.totalorder %s10, 3
    %p181 = pnand %p179, %p180
    %p182 = pneg %p181
    // Predicated region
    $region33: #{model_forward.7} parent=5 // pred_check
      _
    $region34: #{model_forward.7} parent=5 // pred_check_branch
      %184 = sbr.rel (%p181) target = $region36
    $region35: #{model_forward.7} parent=5 // pred_region
      %s185 = ssub.s32 %s10, 1
      %p186 = pneg %p31
      %p187 = pneg %p28
      %p188 = scmp.lt.s32.totalorder %s15, 1
      %s189 = scalar_select %p188, %s15, 1
      %s190 = smul.addr %s189, 4
      %s191 = smul.addr %s190, 8
      %s192 = scalar_lea.vmem %s1, %s191
      %p193 = pneg %p57
      %p194 = pneg %p54
      %p195 = scmp.lt.s32.totalorder %s15, 1
      %s196 = scalar_select %p195, %s15, 1
      %s197 = scalar_lea.vmem %s2, %s196
      %p198 = pneg %p83
      %p199 = pneg %p80
      %p200 = scmp.lt.s32.totalorder %s15, 1
      %s201 = scalar_select %p200, %s15, 1
      %s202 = smul.addr %s201, 2
      %s203 = smul.addr %s202, 8
      %s204 = scalar_lea.vmem %s3, %s203
      %p205 = pneg %p109
      %p206 = pneg %p106
      %p207 = pneg %p135
      %p208 = pneg %p132
      %p209 = scmp.lt.s32.totalorder %s15, 1
      %s210 = scalar_select %p209, %s15, 1
      %s211 = smul.addr %s210, 2
      %s212 = smul.addr %s211, 8
      %s213 = scalar_lea.vmem %s4, %s212
      %p214 = scmp.lt.s32.totalorder %s15, 1
      %s215 = scalar_select %p214, %s15, 1
      %s216 = smul.addr %s215, 4
      %s217 = smul.addr %s216, 8
      %s218 = scalar_lea.vmem %s1, %s217
      %p219 = scmp.lt.s32.totalorder %s15, 1
      %s220 = scalar_select %p219, %s15, 1
      %s221 = scalar_lea.vmem %s2, %s220
      %p222 = scmp.lt.s32.totalorder %s15, 1
      %s223 = scalar_select %p222, %s15, 1
      %s224 = smul.addr %s223, 2
      %s225 = smul.addr %s224, 8
      %s226 = scalar_lea.vmem %s3, %s225
      %p227 = scmp.lt.s32.totalorder %s15, 1
      %s228 = scalar_select %p227, %s15, 1
      %s229 = smul.addr %s228, 2
      %s230 = smul.addr %s229, 8
      %s231 = scalar_lea.vmem %s4, %s230
      %v232 = vld [vmem:[%s0] sm:$0xff]
      %v233 = vld [vmem:[%s0 + $0x8] sm:$0xff]
      %v234 = vld [vmem:[%s218] sm:$0xff]
      %v235 = vld [vmem:[%s218 + $0x8] sm:$0xff]
      %v236 = vld [vmem:[%s218 + $0x10] sm:$0xff]
      %v237 = vld [vmem:[%s218 + $0x18] sm:$0xff]
      %v238 = vld [vmem:[%s221] sm:$0x1]
      %v240 = vlaneseq
      %v241 = vshrl.u32 %v240, 7
      %v242 = vsub.s32 0, %v241
      %v243 = vrot.slane %v238, %v242
      %vm245 = vcmask 261120
      %v247 = vsel %vm245, %v232, 0
      %v250 = vsel %vm245, %v233, 0
      %252 = vmatprep.subr.mxu0 0.0
      %253 = vmatpush1.msra.mxu0 %v234
      %254 = vmatprep.subr.mxu0 0.0
      %255 = vmatpush1.msra.mxu0 %v235
      %256 = vmatprep.subr.mxu0 0.0
      %257 = vmatpush1.msra.mxu0 %v236
      %258 = vmatprep.subr.mxu0 0.0
      %259 = vmatpush1.msra.mxu0 %v237
      %260 = vmatprep.subr.mxu0 0.0
      %261 = vmatpush1.msra.mxu0 0.0
      %262 = vmatprep.subr.mxu0 0.0
      %263 = vmatpush1.msra.mxu0 0.0
      %264 = vmatprep.subr.mxu0 0.0
      %265 = vmatpush1.msra.mxu0 0.0
      %266 = vmatprep.subr.mxu0 0.0
      %267 = vmatpush1.msra.mxu0 0.0
      %268 = vmatprep.subr.mxu0 0.0
      %269 = vmatpush1.msra.mxu0 0.0
      %270 = vmatprep.subr.mxu0 0.0
      %271 = vmatpush1.msra.mxu0 0.0
      %272 = vmatprep.subr.mxu0 0.0
      %273 = vmatpush1.msra.mxu0 0.0
      %274 = vmatprep.subr.mxu0 0.0
      %275 = vmatpush1.msra.mxu0 0.0
      %276 = vmatprep.subr.mxu0 0.0
      %277 = vmatpush1.msra.mxu0 0.0
      %278 = vmatprep.subr.mxu0 0.0
      %279 = vmatpush1.msra.mxu0 0.0
      %280 = vmatprep.subr.mxu0 0.0
      %281 = vmatpush1.msra.mxu0 0.0
      %282 = vmatprep.subr.mxu0 0.0
      %283 = vmatpush1.msra.mxu0 0.0
      %284 = vmatprep.subr.mxu0 0.0
      %285 = vmatpush1.msra.mxu0 0.0
      %286 = vmatprep.subr.mxu0 0.0
      %287 = vmatpush1.msra.mxu0 0.0
      %288 = vmatprep.subr.mxu0 0.0
      %289 = vmatpush1.msra.mxu0 0.0
      %290 = vmatprep.subr.mxu0 0.0
      %291 = vmatpush1.msra.mxu0 0.0
      %292 = vmatprep.subr.mxu0 0.0
      %293 = vmatpush1.msra.mxu0 0.0
      %294 = vmatprep.subr.mxu0 0.0
      %295 = vmatpush1.msra.mxu0 0.0
      %296 = vmatprep.subr.mxu0 0.0
      %297 = vmatpush1.msra.mxu0 0.0
      %298 = vmatprep.subr.mxu0 0.0
      %299 = vmatpush1.msra.mxu0 0.0
      %300 = vmatprep.subr.mxu0 0.0
      %301 = vmatpush1.msra.mxu0 0.0
      %302 = vmatprep.subr.mxu0 0.0
      %303 = vmatpush1.msra.mxu0 0.0
      %304 = vmatprep.subr.mxu0 0.0
      %305 = vmatpush1.msra.mxu0 0.0
      %306 = vmatprep.subr.mxu0 0.0
      %307 = vmatpush1.msra.mxu0 0.0
      %308 = vmatprep.subr.mxu0 0.0
      %309 = vmatpush1.msra.mxu0 0.0
      %310 = vmatprep.subr.mxu0 0.0
      %311 = vmatpush1.msra.mxu0 0.0
      %312 = vmatprep.subr.mxu0 0.0
      %313 = vmatpush1.msra.mxu0 0.0
      %314 = vmatprep.subr.mxu0 0.0
      %315 = vmatpush1.msra.mxu0 0.0
      %316 = vmatprep.mubr.f32.mxu0 0.0
      %317 = vmatmul.mubr.f32.gmra.mrb[0].mxu0 %v247
      %v318 = vpop.f32.mrb[0].mxu0
      %v319 = vadd.f32 %v243, %v318
      %v320 = vpop.f32.mrb[0].mxu0
      %321 = vmatprep.mubr.f32.mxu0 0.0
      %322 = vmatmul.mubr.f32.gmra.mrb[0].mxu0 %v250
      %v323 = vpop.f32.mrb[0].mxu0
      %v324 = vadd.f32 %v243, %v323
      %v325 = vpop.f32.mrb[0].mxu0
      %326 = vdwg.mxu0
      %vm327 = vcmask 523264
      %328 = vst.msk [vmem:[#allocation2] sm:$0xff] %vm327, %v319
      %329 = vst.msk [vmem:[#allocation2 + $0x8] sm:$0xff] %vm327, %v324
      %v330 = vld [vmem:[%s226] sm:$0xff]
      %v331 = vld [vmem:[%s226 + $0x8] sm:$0xff]
      %s332 = smul.u32 %s15, 7
      %s333 = scalar_lea.vmem [#allocation2], %s332
      %v334 = vld [vmem:[%s333] sm:$0x1]
      %vm335 = vcmask 130048
      %v337 = vsel %vm335, 0.0, 0
      %339 = vmatprep.subr.mxu0 0.0
      %340 = vmatpush1.msra.mxu0 %v330
      %341 = vmatprep.subr.mxu0 0.0
      %342 = vmatpush1.msra.mxu0 %v331
      %343 = vmatprep.subr.mxu0 0.0
      %344 = vmatpush1.msra.mxu0 0.0
      %345 = vmatprep.subr.mxu0 0.0
      %346 = vmatpush1.msra.mxu0 0.0
      %347 = vmatprep.subr.mxu0 0.0
      %348 = vmatpush1.msra.mxu0 0.0
      %349 = vmatprep.subr.mxu0 0.0
      %350 = vmatpush1.msra.mxu0 0.0
      %351 = vmatprep.subr.mxu0 0.0
      %352 = vmatpush1.msra.mxu0 0.0
      %353 = vmatprep.subr.mxu0 0.0
      %354 = vmatpush1.msra.mxu0 0.0
      %355 = vmatprep.subr.mxu0 0.0
      %356 = vmatpush1.msra.mxu0 0.0
      %357 = vmatprep.subr.mxu0 0.0
      %358 = vmatpush1.msra.mxu0 0.0
      %359 = vmatprep.subr.mxu0 0.0
      %360 = vmatpush1.msra.mxu0 0.0
      %361 = vmatprep.subr.mxu0 0.0
      %362 = vmatpush1.msra.mxu0 0.0
      %363 = vmatprep.subr.mxu0 0.0
      %364 = vmatpush1.msra.mxu0 0.0
      %365 = vmatprep.subr.mxu0 0.0
      %366 = vmatpush1.msra.mxu0 0.0
      %367 = vmatprep.subr.mxu0 0.0
      %368 = vmatpush1.msra.mxu0 0.0
      %369 = vmatprep.subr.mxu0 0.0
      %370 = vmatpush1.msra.mxu0 0.0
      %371 = vmatprep.subr.mxu0 0.0
      %372 = vmatpush1.msra.mxu0 0.0
      %373 = vmatprep.subr.mxu0 0.0
      %374 = vmatpush1.msra.mxu0 0.0
      %375 = vmatprep.subr.mxu0 0.0
      %376 = vmatpush1.msra.mxu0 0.0
      %377 = vmatprep.subr.mxu0 0.0
      %378 = vmatpush1.msra.mxu0 0.0
      %379 = vmatprep.subr.mxu0 0.0
      %380 = vmatpush1.msra.mxu0 0.0
      %381 = vmatprep.subr.mxu0 0.0
      %382 = vmatpush1.msra.mxu0 0.0
      %383 = vmatprep.subr.mxu0 0.0
      %384 = vmatpush1.msra.mxu0 0.0
      %385 = vmatprep.subr.mxu0 0.0
      %386 = vmatpush1.msra.mxu0 0.0
      %387 = vmatprep.subr.mxu0 0.0
      %388 = vmatpush1.msra.mxu0 0.0
      %389 = vmatprep.subr.mxu0 0.0
      %390 = vmatpush1.msra.mxu0 0.0
      %391 = vmatprep.subr.mxu0 0.0
      %392 = vmatpush1.msra.mxu0 0.0
      %393 = vmatprep.subr.mxu0 0.0
      %394 = vmatpush1.msra.mxu0 0.0
      %395 = vmatprep.subr.mxu0 0.0
      %396 = vmatpush1.msra.mxu0 0.0
      %397 = vmatprep.subr.mxu0 0.0
      %398 = vmatpush1.msra.mxu0 0.0
      %399 = vmatprep.subr.mxu0 0.0
      %400 = vmatpush1.msra.mxu0 0.0
      %401 = vmatprep.subr.mxu0 0.0
      %402 = vmatpush1.msra.mxu0 0.0
      %403 = vmatprep.mubr.f32.mxu0 0.0
      %404 = vmatmul.mubr.f32.gmra.mrb[0].mxu0 %v337
      %v405 = vpop.f32.mrb[0].mxu0
      %v406 = vadd.f32 0.0, %v405
      %v407 = vpop.f32.mrb[0].mxu0
      %408 = vdwg.mxu0
      %v409 = vadd.f32 %v334, %v406
      %v410 = vsub.f32 0.0, %v409
      %v411 = vmul.f32 %v410, 1.442695
      %v412 = vpow.pop %v411
      %v413 = vadd.f32 %v412, 1.0
      %v414 = vrcp.pop %v413
      %v415 = vmul.f32 1.0, %v414
      %v416 = vtanh.pop %v409
      %v417 = vmul.f32 %v415, 0.0
      %419 = vrot.lane.b32.xlu0 %v416, 96
      %v420 = vpop.permute.xlu0 %419
      %v422 = vmul.f32 %v415, %v420
      %424 = vrot.lane.b32.xlu0 %v422, 16
      %v425 = vpop.permute.xlu0 %424
      %v427 = vadd.f32 %v417, %v425
      %v428 = vtanh.pop %v427
      %430 = vrot.lane.b32.xlu0 %v428, 32
      %v431 = vpop.permute.xlu0 %430
      %v433 = vmul.f32 %v415, %v431
      %435 = vrot.lane.b32.xlu0 %v433, 80
      %v436 = vpop.permute.xlu0 %435
      %s438 = scalar_lea.vmem %s231, %s332
      %vm439 = vcmask 122880
      %440 = vst.msk [vmem:[%s438] sm:$0x1] %vm439, %v436
      %s441 = sadd.s32 %s332, 8
      %s442 = scalar_lea.vmem [#allocation2], %s441
      %v443 = vld [vmem:[%s442] sm:$0x1]
      %v444 = vadd.f32 %v443, %v406
      %v445 = vsub.f32 0.0, %v444
      %v446 = vmul.f32 %v445, 1.442695
      %v447 = vpow.pop %v446
      %v448 = vadd.f32 %v447, 1.0
      %v449 = vrcp.pop %v448
      %v450 = vmul.f32 1.0, %v449
      %v451 = vtanh.pop %v444
      %v452 = vmul.f32 %v450, 0.0
      %454 = vrot.lane.b32.xlu0 %v451, 96
      %v455 = vpop.permute.xlu0 %454
      %v457 = vmul.f32 %v450, %v455
      %459 = vrot.lane.b32.xlu0 %v457, 16
      %v460 = vpop.permute.xlu0 %459
      %v462 = vadd.f32 %v452, %v460
      %v463 = vtanh.pop %v462
      %465 = vrot.lane.b32.xlu0 %v463, 32
      %v466 = vpop.permute.xlu0 %465
      %v468 = vmul.f32 %v450, %v466
      %470 = vrot.lane.b32.xlu0 %v468, 80
      %v471 = vpop.permute.xlu0 %470
      %s473 = scalar_lea.vmem %s231, %s441
      %474 = vst.msk [vmem:[%s473] sm:$0x1] %vm439, %v471
      %s475 = smul.u32 %s15, 2
      %s476 = ssub.s32 1, %s475
      %s477 = sadd.s32 %s476, %s332
      %s478 = scalar_lea.vmem [#allocation2], %s477
      %v479 = vld [vmem:[%s478] sm:$0x1]
      %v480 = vsel %vm335, %v436, 0
      %482 = vmatprep.subr.mxu0 0.0
      %483 = vmatpush1.msra.mxu0 %v330
      %484 = vmatprep.subr.mxu0 0.0
      %485 = vmatpush1.msra.mxu0 %v331
      %486 = vmatprep.subr.mxu0 0.0
      %487 = vmatpush1.msra.mxu0 0.0
      %488 = vmatprep.subr.mxu0 0.0
      %489 = vmatpush1.msra.mxu0 0.0
      %490 = vmatprep.subr.mxu0 0.0
      %491 = vmatpush1.msra.mxu0 0.0
      %492 = vmatprep.subr.mxu0 0.0
      %493 = vmatpush1.msra.mxu0 0.0
      %494 = vmatprep.subr.mxu0 0.0
      %495 = vmatpush1.msra.mxu0 0.0
      %496 = vmatprep.subr.mxu0 0.0
      %497 = vmatpush1.msra.mxu0 0.0
      %498 = vmatprep.subr.mxu0 0.0
      %499 = vmatpush1.msra.mxu0 0.0
      %500 = vmatprep.subr.mxu0 0.0
      %501 = vmatpush1.msra.mxu0 0.0
      %502 = vmatprep.subr.mxu0 0.0
      %503 = vmatpush1.msra.mxu0 0.0
      %504 = vmatprep.subr.mxu0 0.0
      %505 = vmatpush1.msra.mxu0 0.0
      %506 = vmatprep.subr.mxu0 0.0
      %507 = vmatpush1.msra.mxu0 0.0
      %508 = vmatprep.subr.mxu0 0.0
      %509 = vmatpush1.msra.mxu0 0.0
      %510 = vmatprep.subr.mxu0 0.0
      %511 = vmatpush1.msra.mxu0 0.0
      %512 = vmatprep.subr.mxu0 0.0
      %513 = vmatpush1.msra.mxu0 0.0
      %514 = vmatprep.subr.mxu0 0.0
      %515 = vmatpush1.msra.mxu0 0.0
      %516 = vmatprep.subr.mxu0 0.0
      %517 = vmatpush1.msra.mxu0 0.0
      %518 = vmatprep.subr.mxu0 0.0
      %519 = vmatpush1.msra.mxu0 0.0
      %520 = vmatprep.subr.mxu0 0.0
      %521 = vmatpush1.msra.mxu0 0.0
      %522 = vmatprep.subr.mxu0 0.0
      %523 = vmatpush1.msra.mxu0 0.0
      %524 = vmatprep.subr.mxu0 0.0
      %525 = vmatpush1.msra.mxu0 0.0
      %526 = vmatprep.subr.mxu0 0.0
      %527 = vmatpush1.msra.mxu0 0.0
      %528 = vmatprep.subr.mxu0 0.0
      %529 = vmatpush1.msra.mxu0 0.0
      %530 = vmatprep.subr.mxu0 0.0
      %531 = vmatpush1.msra.mxu0 0.0
      %532 = vmatprep.subr.mxu0 0.0
      %533 = vmatpush1.msra.mxu0 0.0
      %534 = vmatprep.subr.mxu0 0.0
      %535 = vmatpush1.msra.mxu0 0.0
      %536 = vmatprep.subr.mxu0 0.0
      %537 = vmatpush1.msra.mxu0 0.0
      %538 = vmatprep.subr.mxu0 0.0
      %539 = vmatpush1.msra.mxu0 0.0
      %540 = vmatprep.subr.mxu0 0.0
      %541 = vmatpush1.msra.mxu0 0.0
      %542 = vmatprep.subr.mxu0 0.0
      %543 = vmatpush1.msra.mxu0 0.0
      %544 = vmatprep.subr.mxu0 0.0
      %545 = vmatpush1.msra.mxu0 0.0
      %546 = vmatprep.mubr.f32.mxu0 0.0
      %547 = vmatmul.mubr.f32.gmra.mrb[0].mxu0 %v480
      %v548 = vpop.f32.mrb[0].mxu0
      %v549 = vadd.f32 0.0, %v548
      %v550 = vpop.f32.mrb[0].mxu0
      %551 = vdwg.mxu0
      %v552 = vadd.f32 %v479, %v549
      %v553 = vsub.f32 0.0, %v552
      %v554 = vmul.f32 %v553, 1.442695
      %v555 = vpow.pop %v554
      %v556 = vadd.f32 %v555, 1.0
      %v557 = vrcp.pop %v556
      %v558 = vmul.f32 1.0, %v557
      %v559 = vtanh.pop %v552
      %v560 = vmul.f32 %v558, %v427
      %562 = vrot.lane.b32.xlu0 %v559, 96
      %v563 = vpop.permute.xlu0 %562
      %v565 = vmul.f32 %v558, %v563
      %567 = vrot.lane.b32.xlu0 %v565, 16
      %v568 = vpop.permute.xlu0 %567
      %v570 = vadd.f32 %v560, %v568
      %v571 = vtanh.pop %v570
      %573 = vrot.lane.b32.xlu0 %v571, 32
      %v574 = vpop.permute.xlu0 %573
      %v576 = vmul.f32 %v558, %v574
      %578 = vrot.lane.b32.xlu0 %v576, 80
      %v579 = vpop.permute.xlu0 %578
      %s581 = scalar_lea.vmem %s231, %s477
      %582 = vst.msk [vmem:[%s581] sm:$0x1] %vm439, %v579
      %s583 = sadd.s32 %s477, 8
      %s584 = scalar_lea.vmem [#allocation2], %s583
      %v585 = vld [vmem:[%s584] sm:$0x1]
      %v586 = vsel %vm335, %v471, 0
      %588 = vmatprep.subr.mxu0 0.0
      %589 = vmatpush1.msra.mxu0 %v330
      %590 = vmatprep.subr.mxu0 0.0
      %591 = vmatpush1.msra.mxu0 %v331
      %592 = vmatprep.subr.mxu0 0.0
      %593 = vmatpush1.msra.mxu0 0.0
      %594 = vmatprep.subr.mxu0 0.0
      %595 = vmatpush1.msra.mxu0 0.0
      %596 = vmatprep.subr.mxu0 0.0
      %597 = vmatpush1.msra.mxu0 0.0
      %598 = vmatprep.subr.mxu0 0.0
      %599 = vmatpush1.msra.mxu0 0.0
      %600 = vmatprep.subr.mxu0 0.0
      %601 = vmatpush1.msra.mxu0 0.0
      %602 = vmatprep.subr.mxu0 0.0
      %603 = vmatpush1.msra.mxu0 0.0
      %604 = vmatprep.subr.mxu0 0.0
      %605 = vmatpush1.msra.mxu0 0.0
      %606 = vmatprep.subr.mxu0 0.0
      %607 = vmatpush1.msra.mxu0 0.0
      %608 = vmatprep.subr.mxu0 0.0
      %609 = vmatpush1.msra.mxu0 0.0
      %610 = vmatprep.subr.mxu0 0.0
      %611 = vmatpush1.msra.mxu0 0.0
      %612 = vmatprep.subr.mxu0 0.0
      %613 = vmatpush1.msra.mxu0 0.0
      %614 = vmatprep.subr.mxu0 0.0
      %615 = vmatpush1.msra.mxu0 0.0
      %616 = vmatprep.subr.mxu0 0.0
      %617 = vmatpush1.msra.mxu0 0.0
      %618 = vmatprep.subr.mxu0 0.0
      %619 = vmatpush1.msra.mxu0 0.0
      %620 = vmatprep.subr.mxu0 0.0
      %621 = vmatpush1.msra.mxu0 0.0
      %622 = vmatprep.subr.mxu0 0.0
      %623 = vmatpush1.msra.mxu0 0.0
      %624 = vmatprep.subr.mxu0 0.0
      %625 = vmatpush1.msra.mxu0 0.0
      %626 = vmatprep.subr.mxu0 0.0
      %627 = vmatpush1.msra.mxu0 0.0
      %628 = vmatprep.subr.mxu0 0.0
      %629 = vmatpush1.msra.mxu0 0.0
      %630 = vmatprep.subr.mxu0 0.0
      %631 = vmatpush1.msra.mxu0 0.0
      %632 = vmatprep.subr.mxu0 0.0
      %633 = vmatpush1.msra.mxu0 0.0
      %634 = vmatprep.subr.mxu0 0.0
      %635 = vmatpush1.msra.mxu0 0.0
      %636 = vmatprep.subr.mxu0 0.0
      %637 = vmatpush1.msra.mxu0 0.0
      %638 = vmatprep.subr.mxu0 0.0
      %639 = vmatpush1.msra.mxu0 0.0
      %640 = vmatprep.subr.mxu0 0.0
      %641 = vmatpush1.msra.mxu0 0.0
      %642 = vmatprep.subr.mxu0 0.0
      %643 = vmatpush1.msra.mxu0 0.0
      %644 = vmatprep.subr.mxu0 0.0
      %645 = vmatpush1.msra.mxu0 0.0
      %646 = vmatprep.subr.mxu0 0.0
      %647 = vmatpush1.msra.mxu0 0.0
      %648 = vmatprep.subr.mxu0 0.0
      %649 = vmatpush1.msra.mxu0 0.0
      %650 = vmatprep.subr.mxu0 0.0
      %651 = vmatpush1.msra.mxu0 0.0
      %652 = vmatprep.mubr.f32.mxu0 0.0
      %653 = vmatmul.mubr.f32.gmra.mrb[0].mxu0 %v586
      %v654 = vpop.f32.mrb[0].mxu0
      %v655 = vadd.f32 0.0, %v654
      %v656 = vpop.f32.mrb[0].mxu0
      %657 = vdwg.mxu0
      %v658 = vadd.f32 %v585, %v655
      %v659 = vsub.f32 0.0, %v658
      %v660 = vmul.f32 %v659, 1.442695
      %v661 = vpow.pop %v660
      %v662 = vadd.f32 %v661, 1.0
      %v663 = vrcp.pop %v662
      %v664 = vmul.f32 1.0, %v663
      %v665 = vtanh.pop %v658
      %v666 = vmul.f32 %v664, %v462
      %668 = vrot.lane.b32.xlu0 %v665, 96
      %v669 = vpop.permute.xlu0 %668
      %v671 = vmul.f32 %v664, %v669
      %673 = vrot.lane.b32.xlu0 %v671, 16
      %v674 = vpop.permute.xlu0 %673
      %v676 = vadd.f32 %v666, %v674
      %v677 = vtanh.pop %v676
      %679 = vrot.lane.b32.xlu0 %v677, 32
      %v680 = vpop.permute.xlu0 %679
      %v682 = vmul.f32 %v664, %v680
      %684 = vrot.lane.b32.xlu0 %v682, 80
      %v685 = vpop.permute.xlu0 %684
      %s687 = scalar_lea.vmem %s231, %s583
      %688 = vst.msk [vmem:[%s687] sm:$0x1] %vm439, %v685
      %s689 = smul.u32 %s476, 2
      %s690 = sadd.s32 %s689, %s332
      %s691 = scalar_lea.vmem [#allocation2], %s690
      %v692 = vld [vmem:[%s691] sm:$0x1]
      %v693 = vsel %vm335, %v579, 0
      %695 = vmatprep.subr.mxu0 0.0
      %696 = vmatpush1.msra.mxu0 %v330
      %697 = vmatprep.subr.mxu0 0.0
      %698 = vmatpush1.msra.mxu0 %v331
      %699 = vmatprep.subr.mxu0 0.0
      %700 = vmatpush1.msra.mxu0 0.0
      %701 = vmatprep.subr.mxu0 0.0
      %702 = vmatpush1.msra.mxu0 0.0
      %703 = vmatprep.subr.mxu0 0.0
      %704 = vmatpush1.msra.mxu0 0.0
      %705 = vmatprep.subr.mxu0 0.0
      %706 = vmatpush1.msra.mxu0 0.0
      %707 = vmatprep.subr.mxu0 0.0
      %708 = vmatpush1.msra.mxu0 0.0
      %709 = vmatprep.subr.mxu0 0.0
      %710 = vmatpush1.msra.mxu0 0.0
      %711 = vmatprep.subr.mxu0 0.0
      %712 = vmatpush1.msra.mxu0 0.0
      %713 = vmatprep.subr.mxu0 0.0
      %714 = vmatpush1.msra.mxu0 0.0
      %715 = vmatprep.subr.mxu0 0.0
      %716 = vmatpush1.msra.mxu0 0.0
      %717 = vmatprep.subr.mxu0 0.0
      %718 = vmatpush1.msra.mxu0 0.0
      %719 = vmatprep.subr.mxu0 0.0
      %720 = vmatpush1.msra.mxu0 0.0
      %721 = vmatprep.subr.mxu0 0.0
      %722 = vmatpush1.msra.mxu0 0.0
      %723 = vmatprep.subr.mxu0 0.0
      %724 = vmatpush1.msra.mxu0 0.0
      %725 = vmatprep.subr.mxu0 0.0
      %726 = vmatpush1.msra.mxu0 0.0
      %727 = vmatprep.subr.mxu0 0.0
      %728 = vmatpush1.msra.mxu0 0.0
      %729 = vmatprep.subr.mxu0 0.0
      %730 = vmatpush1.msra.mxu0 0.0
      %731 = vmatprep.subr.mxu0 0.0
      %732 = vmatpush1.msra.mxu0 0.0
      %733 = vmatprep.subr.mxu0 0.0
      %734 = vmatpush1.msra.mxu0 0.0
      %735 = vmatprep.subr.mxu0 0.0
      %736 = vmatpush1.msra.mxu0 0.0
      %737 = vmatprep.subr.mxu0 0.0
      %738 = vmatpush1.msra.mxu0 0.0
      %739 = vmatprep.subr.mxu0 0.0
      %740 = vmatpush1.msra.mxu0 0.0
      %741 = vmatprep.subr.mxu0 0.0
      %742 = vmatpush1.msra.mxu0 0.0
      %743 = vmatprep.subr.mxu0 0.0
      %744 = vmatpush1.msra.mxu0 0.0
      %745 = vmatprep.subr.mxu0 0.0
      %746 = vmatpush1.msra.mxu0 0.0
      %747 = vmatprep.subr.mxu0 0.0
      %748 = vmatpush1.msra.mxu0 0.0
      %749 = vmatprep.subr.mxu0 0.0
      %750 = vmatpush1.msra.mxu0 0.0
      %751 = vmatprep.subr.mxu0 0.0
      %752 = vmatpush1.msra.mxu0 0.0
      %753 = vmatprep.subr.mxu0 0.0
      %754 = vmatpush1.msra.mxu0 0.0
      %755 = vmatprep.subr.mxu0 0.0
      %756 = vmatpush1.msra.mxu0 0.0
      %757 = vmatprep.subr.mxu0 0.0
      %758 = vmatpush1.msra.mxu0 0.0
      %759 = vmatprep.mubr.f32.mxu0 0.0
      %760 = vmatmul.mubr.f32.gmra.mrb[0].mxu0 %v693
      %v761 = vpop.f32.mrb[0].mxu0
      %v762 = vadd.f32 0.0, %v761
      %v763 = vpop.f32.mrb[0].mxu0
      %764 = vdwg.mxu0
      %v765 = vadd.f32 %v692, %v762
      %v766 = vsub.f32 0.0, %v765
      %v767 = vmul.f32 %v766, 1.442695
      %v768 = vpow.pop %v767
      %v769 = vadd.f32 %v768, 1.0
      %v770 = vrcp.pop %v769
      %v771 = vmul.f32 1.0, %v770
      %v772 = vtanh.pop %v765
      %v773 = vmul.f32 %v771, %v570
      %775 = vrot.lane.b32.xlu0 %v772, 96
      %v776 = vpop.permute.xlu0 %775
      %v778 = vmul.f32 %v771, %v776
      %780 = vrot.lane.b32.xlu0 %v778, 16
      %v781 = vpop.permute.xlu0 %780
      %v783 = vadd.f32 %v773, %v781
      %v784 = vtanh.pop %v783
      %786 = vrot.lane.b32.xlu0 %v784, 32
      %v787 = vpop.permute.xlu0 %786
      %v789 = vmul.f32 %v771, %v787
      %791 = vrot.lane.b32.xlu0 %v789, 80
      %v792 = vpop.permute.xlu0 %791
      %s794 = scalar_lea.vmem %s231, %s690
      %795 = vst.msk [vmem:[%s794] sm:$0x1] %vm439, %v792
      %s796 = sadd.s32 %s690, 8
      %s797 = scalar_lea.vmem [#allocation2], %s796
      %v798 = vld [vmem:[%s797] sm:$0x1]
      %v799 = vsel %vm335, %v685, 0
      %801 = vmatprep.subr.mxu0 0.0
      %802 = vmatpush1.msra.mxu0 %v330
      %803 = vmatprep.subr.mxu0 0.0
      %804 = vmatpush1.msra.mxu0 %v331
      %805 = vmatprep.subr.mxu0 0.0
      %806 = vmatpush1.msra.mxu0 0.0
      %807 = vmatprep.subr.mxu0 0.0
      %808 = vmatpush1.msra.mxu0 0.0
      %809 = vmatprep.subr.mxu0 0.0
      %810 = vmatpush1.msra.mxu0 0.0
      %811 = vmatprep.subr.mxu0 0.0
      %812 = vmatpush1.msra.mxu0 0.0
      %813 = vmatprep.subr.mxu0 0.0
      %814 = vmatpush1.msra.mxu0 0.0
      %815 = vmatprep.subr.mxu0 0.0
      %816 = vmatpush1.msra.mxu0 0.0
      %817 = vmatprep.subr.mxu0 0.0
      %818 = vmatpush1.msra.mxu0 0.0
      %819 = vmatprep.subr.mxu0 0.0
      %820 = vmatpush1.msra.mxu0 0.0
      %821 = vmatprep.subr.mxu0 0.0
      %822 = vmatpush1.msra.mxu0 0.0
      %823 = vmatprep.subr.mxu0 0.0
      %824 = vmatpush1.msra.mxu0 0.0
      %825 = vmatprep.subr.mxu0 0.0
      %826 = vmatpush1.msra.mxu0 0.0
      %827 = vmatprep.subr.mxu0 0.0
      %828 = vmatpush1.msra.mxu0 0.0
      %829 = vmatprep.subr.mxu0 0.0
      %830 = vmatpush1.msra.mxu0 0.0
      %831 = vmatprep.subr.mxu0 0.0
      %832 = vmatpush1.msra.mxu0 0.0
      %833 = vmatprep.subr.mxu0 0.0
      %834 = vmatpush1.msra.mxu0 0.0
      %835 = vmatprep.subr.mxu0 0.0
      %836 = vmatpush1.msra.mxu0 0.0
      %837 = vmatprep.subr.mxu0 0.0
      %838 = vmatpush1.msra.mxu0 0.0
      %839 = vmatprep.subr.mxu0 0.0
      %840 = vmatpush1.msra.mxu0 0.0
      %841 = vmatprep.subr.mxu0 0.0
      %842 = vmatpush1.msra.mxu0 0.0
      %843 = vmatprep.subr.mxu0 0.0
      %844 = vmatpush1.msra.mxu0 0.0
      %845 = vmatprep.subr.mxu0 0.0
      %846 = vmatpush1.msra.mxu0 0.0
      %847 = vmatprep.subr.mxu0 0.0
      %848 = vmatpush1.msra.mxu0 0.0
      %849 = vmatprep.subr.mxu0 0.0
      %850 = vmatpush1.msra.mxu0 0.0
      %851 = vmatprep.subr.mxu0 0.0
      %852 = vmatpush1.msra.mxu0 0.0
      %853 = vmatprep.subr.mxu0 0.0
      %854 = vmatpush1.msra.mxu0 0.0
      %855 = vmatprep.subr.mxu0 0.0
      %856 = vmatpush1.msra.mxu0 0.0
      %857 = vmatprep.subr.mxu0 0.0
      %858 = vmatpush1.msra.mxu0 0.0
      %859 = vmatprep.subr.mxu0 0.0
      %860 = vmatpush1.msra.mxu0 0.0
      %861 = vmatprep.subr.mxu0 0.0
      %862 = vmatpush1.msra.mxu0 0.0
      %863 = vmatprep.subr.mxu0 0.0
      %864 = vmatpush1.msra.mxu0 0.0
      %865 = vmatprep.mubr.f32.mxu0 0.0
      %866 = vmatmul.mubr.f32.gmra.mrb[0].mxu0 %v799
      %v867 = vpop.f32.mrb[0].mxu0
      %v868 = vadd.f32 0.0, %v867
      %v869 = vpop.f32.mrb[0].mxu0
      %870 = vdwg.mxu0
      %v871 = vadd.f32 %v798, %v868
      %v872 = vsub.f32 0.0, %v871
      %v873 = vmul.f32 %v872, 1.442695
      %v874 = vpow.pop %v873
      %v875 = vadd.f32 %v874, 1.0
      %v876 = vrcp.pop %v875
      %v877 = vmul.f32 1.0, %v876
      %v878 = vtanh.pop %v871
      %v879 = vmul.f32 %v877, %v676
      %881 = vrot.lane.b32.xlu0 %v878, 96
      %v882 = vpop.permute.xlu0 %881
      %v884 = vmul.f32 %v877, %v882
      %886 = vrot.lane.b32.xlu0 %v884, 16
      %v887 = vpop.permute.xlu0 %886
      %v889 = vadd.f32 %v879, %v887
      %v890 = vtanh.pop %v889
      %892 = vrot.lane.b32.xlu0 %v890, 32
      %v893 = vpop.permute.xlu0 %892
      %v895 = vmul.f32 %v877, %v893
      %897 = vrot.lane.b32.xlu0 %v895, 80
      %v898 = vpop.permute.xlu0 %897
      %s900 = scalar_lea.vmem %s231, %s796
      %901 = vst.msk [vmem:[%s900] sm:$0x1] %vm439, %v898
      %s902 = smul.u32 %s476, 3
      %s903 = sadd.s32 %s902, %s332
      %s904 = scalar_lea.vmem [#allocation2], %s903
      %v905 = vld [vmem:[%s904] sm:$0x1]
      %v906 = vsel %vm335, %v792, 0
      %908 = vmatprep.subr.mxu0 0.0
      %909 = vmatpush1.msra.mxu0 %v330
      %910 = vmatprep.subr.mxu0 0.0
      %911 = vmatpush1.msra.mxu0 %v331
      %912 = vmatprep.subr.mxu0 0.0
      %913 = vmatpush1.msra.mxu0 0.0
      %914 = vmatprep.subr.mxu0 0.0
      %915 = vmatpush1.msra.mxu0 0.0
      %916 = vmatprep.subr.mxu0 0.0
      %917 = vmatpush1.msra.mxu0 0.0
      %918 = vmatprep.subr.mxu0 0.0
      %919 = vmatpush1.msra.mxu0 0.0
      %920 = vmatprep.subr.mxu0 0.0
      %921 = vmatpush1.msra.mxu0 0.0
      %922 = vmatprep.subr.mxu0 0.0
      %923 = vmatpush1.msra.mxu0 0.0
      %924 = vmatprep.subr.mxu0 0.0
      %925 = vmatpush1.msra.mxu0 0.0
      %926 = vmatprep.subr.mxu0 0.0
      %927 = vmatpush1.msra.mxu0 0.0
      %928 = vmatprep.subr.mxu0 0.0
      %929 = vmatpush1.msra.mxu0 0.0
      %930 = vmatprep.subr.mxu0 0.0
      %931 = vmatpush1.msra.mxu0 0.0
      %932 = vmatprep.subr.mxu0 0.0
      %933 = vmatpush1.msra.mxu0 0.0
      %934 = vmatprep.subr.mxu0 0.0
      %935 = vmatpush1.msra.mxu0 0.0
      %936 = vmatprep.subr.mxu0 0.0
      %937 = vmatpush1.msra.mxu0 0.0
      %938 = vmatprep.subr.mxu0 0.0
      %939 = vmatpush1.msra.mxu0 0.0
      %940 = vmatprep.subr.mxu0 0.0
      %941 = vmatpush1.msra.mxu0 0.0
      %942 = vmatprep.subr.mxu0 0.0
      %943 = vmatpush1.msra.mxu0 0.0
      %944 = vmatprep.subr.mxu0 0.0
      %945 = vmatpush1.msra.mxu0 0.0
      %946 = vmatprep.subr.mxu0 0.0
      %947 = vmatpush1.msra.mxu0 0.0
      %948 = vmatprep.subr.mxu0 0.0
      %949 = vmatpush1.msra.mxu0 0.0
      %950 = vmatprep.subr.mxu0 0.0
      %951 = vmatpush1.msra.mxu0 0.0
      %952 = vmatprep.subr.mxu0 0.0
      %953 = vmatpush1.msra.mxu0 0.0
      %954 = vmatprep.subr.mxu0 0.0
      %955 = vmatpush1.msra.mxu0 0.0
      %956 = vmatprep.subr.mxu0 0.0
      %957 = vmatpush1.msra.mxu0 0.0
      %958 = vmatprep.subr.mxu0 0.0
      %959 = vmatpush1.msra.mxu0 0.0
      %960 = vmatprep.subr.mxu0 0.0
      %961 = vmatpush1.msra.mxu0 0.0
      %962 = vmatprep.subr.mxu0 0.0
      %963 = vmatpush1.msra.mxu0 0.0
      %964 = vmatprep.subr.mxu0 0.0
      %965 = vmatpush1.msra.mxu0 0.0
      %966 = vmatprep.subr.mxu0 0.0
      %967 = vmatpush1.msra.mxu0 0.0
      %968 = vmatprep.subr.mxu0 0.0
      %969 = vmatpush1.msra.mxu0 0.0
      %970 = vmatprep.subr.mxu0 0.0
      %971 = vmatpush1.msra.mxu0 0.0
      %972 = vmatprep.mubr.f32.mxu0 0.0
      %973 = vmatmul.mubr.f32.gmra.mrb[0].mxu0 %v906
      %v974 = vpop.f32.mrb[0].mxu0
      %v975 = vadd.f32 0.0, %v974
      %v976 = vpop.f32.mrb[0].mxu0
      %977 = vdwg.mxu0
      %v978 = vadd.f32 %v905, %v975
      %v979 = vsub.f32 0.0, %v978
      %v980 = vmul.f32 %v979, 1.442695
      %v981 = vpow.pop %v980
      %v982 = vadd.f32 %v981, 1.0
      %v983 = vrcp.pop %v982
      %v984 = vmul.f32 1.0, %v983
      %v985 = vtanh.pop %v978
      %v986 = vmul.f32 %v984, %v783
      %988 = vrot.lane.b32.xlu0 %v985, 96
      %v989 = vpop.permute.xlu0 %988
      %v991 = vmul.f32 %v984, %v989
      %993 = vrot.lane.b32.xlu0 %v991, 16
      %v994 = vpop.permute.xlu0 %993
      %v996 = vadd.f32 %v986, %v994
      %v997 = vtanh.pop %v996
      %999 = vrot.lane.b32.xlu0 %v997, 32
      %v1000 = vpop.permute.xlu0 %999
      %v1002 = vmul.f32 %v984, %v1000
      %1004 = vrot.lane.b32.xlu0 %v1002, 80
      %v1005 = vpop.permute.xlu0 %1004
      %s1007 = scalar_lea.vmem %s231, %s903
      %1008 = vst.msk [vmem:[%s1007] sm:$0x1] %vm439, %v1005
      %s1009 = sadd.s32 %s903, 8
      %s1010 = scalar_lea.vmem [#allocation2], %s1009
      %v1011 = vld [vmem:[%s1010] sm:$0x1]
      %v1012 = vsel %vm335, %v898, 0
      %1014 = vmatprep.subr.mxu0 0.0
      %1015 = vmatpush1.msra.mxu0 %v330
      %1016 = vmatprep.subr.mxu0 0.0
      %1017 = vmatpush1.msra.mxu0 %v331
      %1018 = vmatprep.subr.mxu0 0.0
      %1019 = vmatpush1.msra.mxu0 0.0
      %1020 = vmatprep.subr.mxu0 0.0
      %1021 = vmatpush1.msra.mxu0 0.0
      %1022 = vmatprep.subr.mxu0 0.0
      %1023 = vmatpush1.msra.mxu0 0.0
      %1024 = vmatprep.subr.mxu0 0.0
      %1025 = vmatpush1.msra.mxu0 0.0
      %1026 = vmatprep.subr.mxu0 0.0
      %1027 = vmatpush1.msra.mxu0 0.0
      %1028 = vmatprep.subr.mxu0 0.0
      %1029 = vmatpush1.msra.mxu0 0.0
      %1030 = vmatprep.subr.mxu0 0.0
      %1031 = vmatpush1.msra.mxu0 0.0
      %1032 = vmatprep.subr.mxu0 0.0
      %1033 = vmatpush1.msra.mxu0 0.0
      %1034 = vmatprep.subr.mxu0 0.0
      %1035 = vmatpush1.msra.mxu0 0.0
      %1036 = vmatprep.subr.mxu0 0.0
      %1037 = vmatpush1.msra.mxu0 0.0
      %1038 = vmatprep.subr.mxu0 0.0
      %1039 = vmatpush1.msra.mxu0 0.0
      %1040 = vmatprep.subr.mxu0 0.0
      %1041 = vmatpush1.msra.mxu0 0.0
      %1042 = vmatprep.subr.mxu0 0.0
      %1043 = vmatpush1.msra.mxu0 0.0
      %1044 = vmatprep.subr.mxu0 0.0
      %1045 = vmatpush1.msra.mxu0 0.0
      %1046 = vmatprep.subr.mxu0 0.0
      %1047 = vmatpush1.msra.mxu0 0.0
      %1048 = vmatprep.subr.mxu0 0.0
      %1049 = vmatpush1.msra.mxu0 0.0
      %1050 = vmatprep.subr.mxu0 0.0
      %1051 = vmatpush1.msra.mxu0 0.0
      %1052 = vmatprep.subr.mxu0 0.0
      %1053 = vmatpush1.msra.mxu0 0.0
      %1054 = vmatprep.subr.mxu0 0.0
      %1055 = vmatpush1.msra.mxu0 0.0
      %1056 = vmatprep.subr.mxu0 0.0
      %1057 = vmatpush1.msra.mxu0 0.0
      %1058 = vmatprep.subr.mxu0 0.0
      %1059 = vmatpush1.msra.mxu0 0.0
      %1060 = vmatprep.subr.mxu0 0.0
      %1061 = vmatpush1.msra.mxu0 0.0
      %1062 = vmatprep.subr.mxu0 0.0
      %1063 = vmatpush1.msra.mxu0 0.0
      %1064 = vmatprep.subr.mxu0 0.0
      %1065 = vmatpush1.msra.mxu0 0.0
      %1066 = vmatprep.subr.mxu0 0.0
      %1067 = vmatpush1.msra.mxu0 0.0
      %1068 = vmatprep.subr.mxu0 0.0
      %1069 = vmatpush1.msra.mxu0 0.0
      %1070 = vmatprep.subr.mxu0 0.0
      %1071 = vmatpush1.msra.mxu0 0.0
      %1072 = vmatprep.subr.mxu0 0.0
      %1073 = vmatpush1.msra.mxu0 0.0
      %1074 = vmatprep.subr.mxu0 0.0
      %1075 = vmatpush1.msra.mxu0 0.0
      %1076 = vmatprep.subr.mxu0 0.0
      %1077 = vmatpush1.msra.mxu0 0.0
      %1078 = vmatprep.mubr.f32.mxu0 0.0
      %1079 = vmatmul.mubr.f32.gmra.mrb[0].mxu0 %v1012
      %v1080 = vpop.f32.mrb[0].mxu0
      %v1081 = vadd.f32 0.0, %v1080
      %v1082 = vpop.f32.mrb[0].mxu0
      %1083 = vdwg.mxu0
      %v1084 = vadd.f32 %v1011, %v1081
      %v1085 = vsub.f32 0.0, %v1084
      %v1086 = vmul.f32 %v1085, 1.442695
      %v1087 = vpow.pop %v1086
      %v1088 = vadd.f32 %v1087, 1.0
      %v1089 = vrcp.pop %v1088
      %v1090 = vmul.f32 1.0, %v1089
      %v1091 = vtanh.pop %v1084
      %v1092 = vmul.f32 %v1090, %v889
      %1094 = vrot.lane.b32.xlu0 %v1091, 96
      %v1095 = vpop.permute.xlu0 %1094
      %v1097 = vmul.f32 %v1090, %v1095
      %1099 = vrot.lane.b32.xlu0 %v1097, 16
      %v1100 = vpop.permute.xlu0 %1099
      %v1102 = vadd.f32 %v1092, %v1100
      %v1103 = vtanh.pop %v1102
      %1105 = vrot.lane.b32.xlu0 %v1103, 32
      %v1106 = vpop.permute.xlu0 %1105
      %v1108 = vmul.f32 %v1090, %v1106
      %1110 = vrot.lane.b32.xlu0 %v1108, 80
      %v1111 = vpop.permute.xlu0 %1110
      %s1113 = scalar_lea.vmem %s231, %s1009
      %1114 = vst.msk [vmem:[%s1113] sm:$0x1] %vm439, %v1111
      %s1115 = smul.u32 %s476, 4
      %s1116 = sadd.s32 %s1115, %s332
      %s1117 = scalar_lea.vmem [#allocation2], %s1116
      %v1118 = vld [vmem:[%s1117] sm:$0x1]
      %v1119 = vsel %vm335, %v1005, 0
      %1121 = vmatprep.subr.mxu0 0.0
      %1122 = vmatpush1.msra.mxu0 %v330
      %1123 = vmatprep.subr.mxu0 0.0
      %1124 = vmatpush1.msra.mxu0 %v331
      %1125 = vmatprep.subr.mxu0 0.0
      %1126 = vmatpush1.msra.mxu0 0.0
      %1127 = vmatprep.subr.mxu0 0.0
      %1128 = vmatpush1.msra.mxu0 0.0
      %1129 = vmatprep.subr.mxu0 0.0
      %1130 = vmatpush1.msra.mxu0 0.0
      %1131 = vmatprep.subr.mxu0 0.0
      %1132 = vmatpush1.msra.mxu0 0.0
      %1133 = vmatprep.subr.mxu0 0.0
      %1134 = vmatpush1.msra.mxu0 0.0
      %1135 = vmatprep.subr.mxu0 0.0
      %1136 = vmatpush1.msra.mxu0 0.0
      %1137 = vmatprep.subr.mxu0 0.0
      %1138 = vmatpush1.msra.mxu0 0.0
      %1139 = vmatprep.subr.mxu0 0.0
      %1140 = vmatpush1.msra.mxu0 0.0
      %1141 = vmatprep.subr.mxu0 0.0
      %1142 = vmatpush1.msra.mxu0 0.0
      %1143 = vmatprep.subr.mxu0 0.0
      %1144 = vmatpush1.msra.mxu0 0.0
      %1145 = vmatprep.subr.mxu0 0.0
      %1146 = vmatpush1.msra.mxu0 0.0
      %1147 = vmatprep.subr.mxu0 0.0
      %1148 = vmatpush1.msra.mxu0 0.0
      %1149 = vmatprep.subr.mxu0 0.0
      %1150 = vmatpush1.msra.mxu0 0.0
      %1151 = vmatprep.subr.mxu0 0.0
      %1152 = vmatpush1.msra.mxu0 0.0
      %1153 = vmatprep.subr.mxu0 0.0
      %1154 = vmatpush1.msra.mxu0 0.0
      %1155 = vmatprep.subr.mxu0 0.0
      %1156 = vmatpush1.msra.mxu0 0.0
      %1157 = vmatprep.subr.mxu0 0.0
      %1158 = vmatpush1.msra.mxu0 0.0
      %1159 = vmatprep.subr.mxu0 0.0
      %1160 = vmatpush1.msra.mxu0 0.0
      %1161 = vmatprep.subr.mxu0 0.0
      %1162 = vmatpush1.msra.mxu0 0.0
      %1163 = vmatprep.subr.mxu0 0.0
      %1164 = vmatpush1.msra.mxu0 0.0
      %1165 = vmatprep.subr.mxu0 0.0
      %1166 = vmatpush1.msra.mxu0 0.0
      %1167 = vmatprep.subr.mxu0 0.0
      %1168 = vmatpush1.msra.mxu0 0.0
      %1169 = vmatprep.subr.mxu0 0.0
      %1170 = vmatpush1.msra.mxu0 0.0
      %1171 = vmatprep.subr.mxu0 0.0
      %1172 = vmatpush1.msra.mxu0 0.0
      %1173 = vmatprep.subr.mxu0 0.0
      %1174 = vmatpush1.msra.mxu0 0.0
      %1175 = vmatprep.subr.mxu0 0.0
      %1176 = vmatpush1.msra.mxu0 0.0
      %1177 = vmatprep.subr.mxu0 0.0
      %1178 = vmatpush1.msra.mxu0 0.0
      %1179 = vmatprep.subr.mxu0 0.0
      %1180 = vmatpush1.msra.mxu0 0.0
      %1181 = vmatprep.subr.mxu0 0.0
      %1182 = vmatpush1.msra.mxu0 0.0
      %1183 = vmatprep.subr.mxu0 0.0
      %1184 = vmatpush1.msra.mxu0 0.0
      %1185 = vmatprep.mubr.f32.mxu0 0.0
      %1186 = vmatmul.mubr.f32.gmra.mrb[0].mxu0 %v1119
      %v1187 = vpop.f32.mrb[0].mxu0
      %v1188 = vadd.f32 0.0, %v1187
      %v1189 = vpop.f32.mrb[0].mxu0
      %1190 = vdwg.mxu0
      %v1191 = vadd.f32 %v1118, %v1188
      %v1192 = vsub.f32 0.0, %v1191
      %v1193 = vmul.f32 %v1192, 1.442695
      %v1194 = vpow.pop %v1193
      %v1195 = vadd.f32 %v1194, 1.0
      %v1196 = vrcp.pop %v1195
      %v1197 = vmul.f32 1.0, %v1196
      %v1198 = vtanh.pop %v1191
      %v1199 = vmul.f32 %v1197, %v996
      %1201 = vrot.lane.b32.xlu0 %v1198, 96
      %v1202 = vpop.permute.xlu0 %1201
      %v1204 = vmul.f32 %v1197, %v1202
      %1206 = vrot.lane.b32.xlu0 %v1204, 16
      %v1207 = vpop.permute.xlu0 %1206
      %v1209 = vadd.f32 %v1199, %v1207
      %v1210 = vtanh.pop %v1209
      %1212 = vrot.lane.b32.xlu0 %v1210, 32
      %v1213 = vpop.permute.xlu0 %1212
      %v1215 = vmul.f32 %v1197, %v1213
      %1217 = vrot.lane.b32.xlu0 %v1215, 80
      %v1218 = vpop.permute.xlu0 %1217
      %s1220 = scalar_lea.vmem %s231, %s1116
      %1221 = vst.msk [vmem:[%s1220] sm:$0x1] %vm439, %v1218
      %s1222 = sadd.s32 %s1116, 8
      %s1223 = scalar_lea.vmem [#allocation2], %s1222
      %v1224 = vld [vmem:[%s1223] sm:$0x1]
      %v1225 = vsel %vm335, %v1111, 0
      %1227 = vmatprep.subr.mxu0 0.0
      %1228 = vmatpush1.msra.mxu0 %v330
      %1229 = vmatprep.subr.mxu0 0.0
      %1230 = vmatpush1.msra.mxu0 %v331
      %1231 = vmatprep.subr.mxu0 0.0
      %1232 = vmatpush1.msra.mxu0 0.0
      %1233 = vmatprep.subr.mxu0 0.0
      %1234 = vmatpush1.msra.mxu0 0.0
      %1235 = vmatprep.subr.mxu0 0.0
      %1236 = vmatpush1.msra.mxu0 0.0
      %1237 = vmatprep.subr.mxu0 0.0
      %1238 = vmatpush1.msra.mxu0 0.0
      %1239 = vmatprep.subr.mxu0 0.0
      %1240 = vmatpush1.msra.mxu0 0.0
      %1241 = vmatprep.subr.mxu0 0.0
      %1242 = vmatpush1.msra.mxu0 0.0
      %1243 = vmatprep.subr.mxu0 0.0
      %1244 = vmatpush1.msra.mxu0 0.0
      %1245 = vmatprep.subr.mxu0 0.0
      %1246 = vmatpush1.msra.mxu0 0.0
      %1247 = vmatprep.subr.mxu0 0.0
      %1248 = vmatpush1.msra.mxu0 0.0
      %1249 = vmatprep.subr.mxu0 0.0
      %1250 = vmatpush1.msra.mxu0 0.0
      %1251 = vmatprep.subr.mxu0 0.0
      %1252 = vmatpush1.msra.mxu0 0.0
      %1253 = vmatprep.subr.mxu0 0.0
      %1254 = vmatpush1.msra.mxu0 0.0
      %1255 = vmatprep.subr.mxu0 0.0
      %1256 = vmatpush1.msra.mxu0 0.0
      %1257 = vmatprep.subr.mxu0 0.0
      %1258 = vmatpush1.msra.mxu0 0.0
      %1259 = vmatprep.subr.mxu0 0.0
      %1260 = vmatpush1.msra.mxu0 0.0
      %1261 = vmatprep.subr.mxu0 0.0
      %1262 = vmatpush1.msra.mxu0 0.0
      %1263 = vmatprep.subr.mxu0 0.0
      %1264 = vmatpush1.msra.mxu0 0.0
      %1265 = vmatprep.subr.mxu0 0.0
      %1266 = vmatpush1.msra.mxu0 0.0
      %1267 = vmatprep.subr.mxu0 0.0
      %1268 = vmatpush1.msra.mxu0 0.0
      %1269 = vmatprep.subr.mxu0 0.0
      %1270 = vmatpush1.msra.mxu0 0.0
      %1271 = vmatprep.subr.mxu0 0.0
      %1272 = vmatpush1.msra.mxu0 0.0
      %1273 = vmatprep.subr.mxu0 0.0
      %1274 = vmatpush1.msra.mxu0 0.0
      %1275 = vmatprep.subr.mxu0 0.0
      %1276 = vmatpush1.msra.mxu0 0.0
      %1277 = vmatprep.subr.mxu0 0.0
      %1278 = vmatpush1.msra.mxu0 0.0
      %1279 = vmatprep.subr.mxu0 0.0
      %1280 = vmatpush1.msra.mxu0 0.0
      %1281 = vmatprep.subr.mxu0 0.0
      %1282 = vmatpush1.msra.mxu0 0.0
      %1283 = vmatprep.subr.mxu0 0.0
      %1284 = vmatpush1.msra.mxu0 0.0
      %1285 = vmatprep.subr.mxu0 0.0
      %1286 = vmatpush1.msra.mxu0 0.0
      %1287 = vmatprep.subr.mxu0 0.0
      %1288 = vmatpush1.msra.mxu0 0.0
      %1289 = vmatprep.subr.mxu0 0.0
      %1290 = vmatpush1.msra.mxu0 0.0
      %1291 = vmatprep.mubr.f32.mxu0 0.0
      %1292 = vmatmul.mubr.f32.gmra.mrb[0].mxu0 %v1225
      %v1293 = vpop.f32.mrb[0].mxu0
      %v1294 = vadd.f32 0.0, %v1293
      %v1295 = vpop.f32.mrb[0].mxu0
      %1296 = vdwg.mxu0
      %v1297 = vadd.f32 %v1224, %v1294
      %v1298 = vsub.f32 0.0, %v1297
      %v1299 = vmul.f32 %v1298, 1.442695
      %v1300 = vpow.pop %v1299
      %v1301 = vadd.f32 %v1300, 1.0
      %v1302 = vrcp.pop %v1301
      %v1303 = vmul.f32 1.0, %v1302
      %v1304 = vtanh.pop %v1297
      %v1305 = vmul.f32 %v1303, %v1102
      %1307 = vrot.lane.b32.xlu0 %v1304, 96
      %v1308 = vpop.permute.xlu0 %1307
      %v1310 = vmul.f32 %v1303, %v1308
      %1312 = vrot.lane.b32.xlu0 %v1310, 16
      %v1313 = vpop.permute.xlu0 %1312
      %v1315 = vadd.f32 %v1305, %v1313
      %v1316 = vtanh.pop %v1315
      %1318 = vrot.lane.b32.xlu0 %v1316, 32
      %v1319 = vpop.permute.xlu0 %1318
      %v1321 = vmul.f32 %v1303, %v1319
      %1323 = vrot.lane.b32.xlu0 %v1321, 80
      %v1324 = vpop.permute.xlu0 %1323
      %s1326 = scalar_lea.vmem %s231, %s1222
      %1327 = vst.msk [vmem:[%s1326] sm:$0x1] %vm439, %v1324
      %s1328 = smul.u32 %s476, 5
      %s1329 = sadd.s32 %s1328, %s332
      %s1330 = scalar_lea.vmem [#allocation2], %s1329
      %v1331 = vld [vmem:[%s1330] sm:$0x1]
      %v1332 = vsel %vm335, %v1218, 0
      %1334 = vmatprep.subr.mxu0 0.0
      %1335 = vmatpush1.msra.mxu0 %v330
      %1336 = vmatprep.subr.mxu0 0.0
      %1337 = vmatpush1.msra.mxu0 %v331
      %1338 = vmatprep.subr.mxu0 0.0
      %1339 = vmatpush1.msra.mxu0 0.0
      %1340 = vmatprep.subr.mxu0 0.0
      %1341 = vmatpush1.msra.mxu0 0.0
      %1342 = vmatprep.subr.mxu0 0.0
      %1343 = vmatpush1.msra.mxu0 0.0
      %1344 = vmatprep.subr.mxu0 0.0
      %1345 = vmatpush1.msra.mxu0 0.0
      %1346 = vmatprep.subr.mxu0 0.0
      %1347 = vmatpush1.msra.mxu0 0.0
      %1348 = vmatprep.subr.mxu0 0.0
      %1349 = vmatpush1.msra.mxu0 0.0
      %1350 = vmatprep.subr.mxu0 0.0
      %1351 = vmatpush1.msra.mxu0 0.0
      %1352 = vmatprep.subr.mxu0 0.0
      %1353 = vmatpush1.msra.mxu0 0.0
      %1354 = vmatprep.subr.mxu0 0.0
      %1355 = vmatpush1.msra.mxu0 0.0
      %1356 = vmatprep.subr.mxu0 0.0
      %1357 = vmatpush1.msra.mxu0 0.0
      %1358 = vmatprep.subr.mxu0 0.0
      %1359 = vmatpush1.msra.mxu0 0.0
      %1360 = vmatprep.subr.mxu0 0.0
      %1361 = vmatpush1.msra.mxu0 0.0
      %1362 = vmatprep.subr.mxu0 0.0
      %1363 = vmatpush1.msra.mxu0 0.0
      %1364 = vmatprep.subr.mxu0 0.0
      %1365 = vmatpush1.msra.mxu0 0.0
      %1366 = vmatprep.subr.mxu0 0.0
      %1367 = vmatpush1.msra.mxu0 0.0
      %1368 = vmatprep.subr.mxu0 0.0
      %1369 = vmatpush1.msra.mxu0 0.0
      %1370 = vmatprep.subr.mxu0 0.0
      %1371 = vmatpush1.msra.mxu0 0.0
      %1372 = vmatprep.subr.mxu0 0.0
      %1373 = vmatpush1.msra.mxu0 0.0
      %1374 = vmatprep.subr.mxu0 0.0
      %1375 = vmatpush1.msra.mxu0 0.0
      %1376 = vmatprep.subr.mxu0 0.0
      %1377 = vmatpush1.msra.mxu0 0.0
      %1378 = vmatprep.subr.mxu0 0.0
      %1379 = vmatpush1.msra.mxu0 0.0
      %1380 = vmatprep.subr.mxu0 0.0
      %1381 = vmatpush1.msra.mxu0 0.0
      %1382 = vmatprep.subr.mxu0 0.0
      %1383 = vmatpush1.msra.mxu0 0.0
      %1384 = vmatprep.subr.mxu0 0.0
      %1385 = vmatpush1.msra.mxu0 0.0
      %1386 = vmatprep.subr.mxu0 0.0
      %1387 = vmatpush1.msra.mxu0 0.0
      %1388 = vmatprep.subr.mxu0 0.0
      %1389 = vmatpush1.msra.mxu0 0.0
      %1390 = vmatprep.subr.mxu0 0.0
      %1391 = vmatpush1.msra.mxu0 0.0
      %1392 = vmatprep.subr.mxu0 0.0
      %1393 = vmatpush1.msra.mxu0 0.0
      %1394 = vmatprep.subr.mxu0 0.0
      %1395 = vmatpush1.msra.mxu0 0.0
      %1396 = vmatprep.subr.mxu0 0.0
      %1397 = vmatpush1.msra.mxu0 0.0
      %1398 = vmatprep.mubr.f32.mxu0 0.0
      %1399 = vmatmul.mubr.f32.gmra.mrb[0].mxu0 %v1332
      %v1400 = vpop.f32.mrb[0].mxu0
      %v1401 = vadd.f32 0.0, %v1400
      %v1402 = vpop.f32.mrb[0].mxu0
      %1403 = vdwg.mxu0
      %v1404 = vadd.f32 %v1331, %v1401
      %v1405 = vsub.f32 0.0, %v1404
      %v1406 = vmul.f32 %v1405, 1.442695
      %v1407 = vpow.pop %v1406
      %v1408 = vadd.f32 %v1407, 1.0
      %v1409 = vrcp.pop %v1408
      %v1410 = vmul.f32 1.0, %v1409
      %v1411 = vtanh.pop %v1404
      %v1412 = vmul.f32 %v1410, %v1209
      %1414 = vrot.lane.b32.xlu0 %v1411, 96
      %v1415 = vpop.permute.xlu0 %1414
      %v1417 = vmul.f32 %v1410, %v1415
      %1419 = vrot.lane.b32.xlu0 %v1417, 16
      %v1420 = vpop.permute.xlu0 %1419
      %v1422 = vadd.f32 %v1412, %v1420
      %v1423 = vtanh.pop %v1422
      %1425 = vrot.lane.b32.xlu0 %v1423, 32
      %v1426 = vpop.permute.xlu0 %1425
      %v1428 = vmul.f32 %v1410, %v1426
      %1430 = vrot.lane.b32.xlu0 %v1428, 80
      %v1431 = vpop.permute.xlu0 %1430
      %s1433 = scalar_lea.vmem %s231, %s1329
      %1434 = vst.msk [vmem:[%s1433] sm:$0x1] %vm439, %v1431
      %s1435 = sadd.s32 %s1329, 8
      %s1436 = scalar_lea.vmem [#allocation2], %s1435
      %v1437 = vld [vmem:[%s1436] sm:$0x1]
      %v1438 = vsel %vm335, %v1324, 0
      %1440 = vmatprep.subr.mxu0 0.0
      %1441 = vmatpush1.msra.mxu0 %v330
      %1442 = vmatprep.subr.mxu0 0.0
      %1443 = vmatpush1.msra.mxu0 %v331
      %1444 = vmatprep.subr.mxu0 0.0
      %1445 = vmatpush1.msra.mxu0 0.0
      %1446 = vmatprep.subr.mxu0 0.0
      %1447 = vmatpush1.msra.mxu0 0.0
      %1448 = vmatprep.subr.mxu0 0.0
      %1449 = vmatpush1.msra.mxu0 0.0
      %1450 = vmatprep.subr.mxu0 0.0
      %1451 = vmatpush1.msra.mxu0 0.0
      %1452 = vmatprep.subr.mxu0 0.0
      %1453 = vmatpush1.msra.mxu0 0.0
      %1454 = vmatprep.subr.mxu0 0.0
      %1455 = vmatpush1.msra.mxu0 0.0
      %1456 = vmatprep.subr.mxu0 0.0
      %1457 = vmatpush1.msra.mxu0 0.0
      %1458 = vmatprep.subr.mxu0 0.0
      %1459 = vmatpush1.msra.mxu0 0.0
      %1460 = vmatprep.subr.mxu0 0.0
      %1461 = vmatpush1.msra.mxu0 0.0
      %1462 = vmatprep.subr.mxu0 0.0
      %1463 = vmatpush1.msra.mxu0 0.0
      %1464 = vmatprep.subr.mxu0 0.0
      %1465 = vmatpush1.msra.mxu0 0.0
      %1466 = vmatprep.subr.mxu0 0.0
      %1467 = vmatpush1.msra.mxu0 0.0
      %1468 = vmatprep.subr.mxu0 0.0
      %1469 = vmatpush1.msra.mxu0 0.0
      %1470 = vmatprep.subr.mxu0 0.0
      %1471 = vmatpush1.msra.mxu0 0.0
      %1472 = vmatprep.subr.mxu0 0.0
      %1473 = vmatpush1.msra.mxu0 0.0
      %1474 = vmatprep.subr.mxu0 0.0
      %1475 = vmatpush1.msra.mxu0 0.0
      %1476 = vmatprep.subr.mxu0 0.0
      %1477 = vmatpush1.msra.mxu0 0.0
      %1478 = vmatprep.subr.mxu0 0.0
      %1479 = vmatpush1.msra.mxu0 0.0
      %1480 = vmatprep.subr.mxu0 0.0
      %1481 = vmatpush1.msra.mxu0 0.0
      %1482 = vmatprep.subr.mxu0 0.0
      %1483 = vmatpush1.msra.mxu0 0.0
      %1484 = vmatprep.subr.mxu0 0.0
      %1485 = vmatpush1.msra.mxu0 0.0
      %1486 = vmatprep.subr.mxu0 0.0
      %1487 = vmatpush1.msra.mxu0 0.0
      %1488 = vmatprep.subr.mxu0 0.0
      %1489 = vmatpush1.msra.mxu0 0.0
      %1490 = vmatprep.subr.mxu0 0.0
      %1491 = vmatpush1.msra.mxu0 0.0
      %1492 = vmatprep.subr.mxu0 0.0
      %1493 = vmatpush1.msra.mxu0 0.0
      %1494 = vmatprep.subr.mxu0 0.0
      %1495 = vmatpush1.msra.mxu0 0.0
      %1496 = vmatprep.subr.mxu0 0.0
      %1497 = vmatpush1.msra.mxu0 0.0
      %1498 = vmatprep.subr.mxu0 0.0
      %1499 = vmatpush1.msra.mxu0 0.0
      %1500 = vmatprep.subr.mxu0 0.0
      %1501 = vmatpush1.msra.mxu0 0.0
      %1502 = vmatprep.subr.mxu0 0.0
      %1503 = vmatpush1.msra.mxu0 0.0
      %1504 = vmatprep.mubr.f32.mxu0 0.0
      %1505 = vmatmul.mubr.f32.gmra.mrb[0].mxu0 %v1438
      %v1506 = vpop.f32.mrb[0].mxu0
      %v1507 = vadd.f32 0.0, %v1506
      %v1508 = vpop.f32.mrb[0].mxu0
      %1509 = vdwg.mxu0
      %v1510 = vadd.f32 %v1437, %v1507
      %v1511 = vsub.f32 0.0, %v1510
      %v1512 = vmul.f32 %v1511, 1.442695
      %v1513 = vpow.pop %v1512
      %v1514 = vadd.f32 %v1513, 1.0
      %v1515 = vrcp.pop %v1514
      %v1516 = vmul.f32 1.0, %v1515
      %v1517 = vtanh.pop %v1510
      %v1518 = vmul.f32 %v1516, %v1315
      %1520 = vrot.lane.b32.xlu0 %v1517, 96
      %v1521 = vpop.permute.xlu0 %1520
      %v1523 = vmul.f32 %v1516, %v1521
      %1525 = vrot.lane.b32.xlu0 %v1523, 16
      %v1526 = vpop.permute.xlu0 %1525
      %v1528 = vadd.f32 %v1518, %v1526
      %v1529 = vtanh.pop %v1528
      %1531 = vrot.lane.b32.xlu0 %v1529, 32
      %v1532 = vpop.permute.xlu0 %1531
      %v1534 = vmul.f32 %v1516, %v1532
      %1536 = vrot.lane.b32.xlu0 %v1534, 80
      %v1537 = vpop.permute.xlu0 %1536
      %s1539 = scalar_lea.vmem %s231, %s1435
      %1540 = vst.msk [vmem:[%s1539] sm:$0x1] %vm439, %v1537
      %s1541 = smul.u32 %s476, 6
      %s1542 = sadd.s32 %s1541, %s332
      %s1543 = scalar_lea.vmem [#allocation2], %s1542
      %v1544 = vld [vmem:[%s1543] sm:$0x1]
      %v1545 = vsel %vm335, %v1431, 0
      %1547 = vmatprep.subr.mxu0 0.0
      %1548 = vmatpush1.msra.mxu0 %v330
      %1549 = vmatprep.subr.mxu0 0.0
      %1550 = vmatpush1.msra.mxu0 %v331
      %1551 = vmatprep.subr.mxu0 0.0
      %1552 = vmatpush1.msra.mxu0 0.0
      %1553 = vmatprep.subr.mxu0 0.0
      %1554 = vmatpush1.msra.mxu0 0.0
      %1555 = vmatprep.subr.mxu0 0.0
      %1556 = vmatpush1.msra.mxu0 0.0
      %1557 = vmatprep.subr.mxu0 0.0
      %1558 = vmatpush1.msra.mxu0 0.0
      %1559 = vmatprep.subr.mxu0 0.0
      %1560 = vmatpush1.msra.mxu0 0.0
      %1561 = vmatprep.subr.mxu0 0.0
      %1562 = vmatpush1.msra.mxu0 0.0
      %1563 = vmatprep.subr.mxu0 0.0
      %1564 = vmatpush1.msra.mxu0 0.0
      %1565 = vmatprep.subr.mxu0 0.0
      %1566 = vmatpush1.msra.mxu0 0.0
      %1567 = vmatprep.subr.mxu0 0.0
      %1568 = vmatpush1.msra.mxu0 0.0
      %1569 = vmatprep.subr.mxu0 0.0
      %1570 = vmatpush1.msra.mxu0 0.0
      %1571 = vmatprep.subr.mxu0 0.0
      %1572 = vmatpush1.msra.mxu0 0.0
      %1573 = vmatprep.subr.mxu0 0.0
      %1574 = vmatpush1.msra.mxu0 0.0
      %1575 = vmatprep.subr.mxu0 0.0
      %1576 = vmatpush1.msra.mxu0 0.0
      %1577 = vmatprep.subr.mxu0 0.0
      %1578 = vmatpush1.msra.mxu0 0.0
      %1579 = vmatprep.subr.mxu0 0.0
      %1580 = vmatpush1.msra.mxu0 0.0
      %1581 = vmatprep.subr.mxu0 0.0
      %1582 = vmatpush1.msra.mxu0 0.0
      %1583 = vmatprep.subr.mxu0 0.0
      %1584 = vmatpush1.msra.mxu0 0.0
      %1585 = vmatprep.subr.mxu0 0.0
      %1586 = vmatpush1.msra.mxu0 0.0
      %1587 = vmatprep.subr.mxu0 0.0
      %1588 = vmatpush1.msra.mxu0 0.0
      %1589 = vmatprep.subr.mxu0 0.0
      %1590 = vmatpush1.msra.mxu0 0.0
      %1591 = vmatprep.subr.mxu0 0.0
      %1592 = vmatpush1.msra.mxu0 0.0
      %1593 = vmatprep.subr.mxu0 0.0
      %1594 = vmatpush1.msra.mxu0 0.0
      %1595 = vmatprep.subr.mxu0 0.0
      %1596 = vmatpush1.msra.mxu0 0.0
      %1597 = vmatprep.subr.mxu0 0.0
      %1598 = vmatpush1.msra.mxu0 0.0
      %1599 = vmatprep.subr.mxu0 0.0
      %1600 = vmatpush1.msra.mxu0 0.0
      %1601 = vmatprep.subr.mxu0 0.0
      %1602 = vmatpush1.msra.mxu0 0.0
      %1603 = vmatprep.subr.mxu0 0.0
      %1604 = vmatpush1.msra.mxu0 0.0
      %1605 = vmatprep.subr.mxu0 0.0
      %1606 = vmatpush1.msra.mxu0 0.0
      %1607 = vmatprep.subr.mxu0 0.0
      %1608 = vmatpush1.msra.mxu0 0.0
      %1609 = vmatprep.subr.mxu0 0.0
      %1610 = vmatpush1.msra.mxu0 0.0
      %1611 = vmatprep.mubr.f32.mxu0 0.0
      %1612 = vmatmul.mubr.f32.gmra.mrb[0].mxu0 %v1545
      %v1613 = vpop.f32.mrb[0].mxu0
      %v1614 = vadd.f32 0.0, %v1613
      %v1615 = vpop.f32.mrb[0].mxu0
      %1616 = vdwg.mxu0
      %v1617 = vadd.f32 %v1544, %v1614
      %v1618 = vsub.f32 0.0, %v1617
      %v1619 = vmul.f32 %v1618, 1.442695
      %v1620 = vpow.pop %v1619
      %v1621 = vadd.f32 %v1620, 1.0
      %v1622 = vrcp.pop %v1621
      %v1623 = vmul.f32 1.0, %v1622
      %v1624 = vtanh.pop %v1617
      %v1625 = vmul.f32 %v1623, %v1422
      %1627 = vrot.lane.b32.xlu0 %v1624, 96
      %v1628 = vpop.permute.xlu0 %1627
      %v1630 = vmul.f32 %v1623, %v1628
      %1632 = vrot.lane.b32.xlu0 %v1630, 16
      %v1633 = vpop.permute.xlu0 %1632
      %v1635 = vadd.f32 %v1625, %v1633
      %v1636 = vtanh.pop %v1635
      %1638 = vrot.lane.b32.xlu0 %v1636, 32
      %v1639 = vpop.permute.xlu0 %1638
      %v1641 = vmul.f32 %v1623, %v1639
      %1643 = vrot.lane.b32.xlu0 %v1641, 80
      %v1644 = vpop.permute.xlu0 %1643
      %s1646 = scalar_lea.vmem %s231, %s1542
      %1647 = vst.msk [vmem:[%s1646] sm:$0x1] %vm439, %v1644
      %s1648 = sadd.s32 %s1542, 8
      %s1649 = scalar_lea.vmem [#allocation2], %s1648
      %v1650 = vld [vmem:[%s1649] sm:$0x1]
      %v1651 = vsel %vm335, %v1537, 0
      %1653 = vmatprep.subr.mxu0 0.0
      %1654 = vmatpush1.msra.mxu0 %v330
      %1655 = vmatprep.subr.mxu0 0.0
      %1656 = vmatpush1.msra.mxu0 %v331
      %1657 = vmatprep.subr.mxu0 0.0
      %1658 = vmatpush1.msra.mxu0 0.0
      %1659 = vmatprep.subr.mxu0 0.0
      %1660 = vmatpush1.msra.mxu0 0.0
      %1661 = vmatprep.subr.mxu0 0.0
      %1662 = vmatpush1.msra.mxu0 0.0
      %1663 = vmatprep.subr.mxu0 0.0
      %1664 = vmatpush1.msra.mxu0 0.0
      %1665 = vmatprep.subr.mxu0 0.0
      %1666 = vmatpush1.msra.mxu0 0.0
      %1667 = vmatprep.subr.mxu0 0.0
      %1668 = vmatpush1.msra.mxu0 0.0
      %1669 = vmatprep.subr.mxu0 0.0
      %1670 = vmatpush1.msra.mxu0 0.0
      %1671 = vmatprep.subr.mxu0 0.0
      %1672 = vmatpush1.msra.mxu0 0.0
      %1673 = vmatprep.subr.mxu0 0.0
      %1674 = vmatpush1.msra.mxu0 0.0
      %1675 = vmatprep.subr.mxu0 0.0
      %1676 = vmatpush1.msra.mxu0 0.0
      %1677 = vmatprep.subr.mxu0 0.0
      %1678 = vmatpush1.msra.mxu0 0.0
      %1679 = vmatprep.subr.mxu0 0.0
      %1680 = vmatpush1.msra.mxu0 0.0
      %1681 = vmatprep.subr.mxu0 0.0
      %1682 = vmatpush1.msra.mxu0 0.0
      %1683 = vmatprep.subr.mxu0 0.0
      %1684 = vmatpush1.msra.mxu0 0.0
      %1685 = vmatprep.subr.mxu0 0.0
      %1686 = vmatpush1.msra.mxu0 0.0
      %1687 = vmatprep.subr.mxu0 0.0
      %1688 = vmatpush1.msra.mxu0 0.0
      %1689 = vmatprep.subr.mxu0 0.0
      %1690 = vmatpush1.msra.mxu0 0.0
      %1691 = vmatprep.subr.mxu0 0.0
      %1692 = vmatpush1.msra.mxu0 0.0
      %1693 = vmatprep.subr.mxu0 0.0
      %1694 = vmatpush1.msra.mxu0 0.0
      %1695 = vmatprep.subr.mxu0 0.0
      %1696 = vmatpush1.msra.mxu0 0.0
      %1697 = vmatprep.subr.mxu0 0.0
      %1698 = vmatpush1.msra.mxu0 0.0
      %1699 = vmatprep.subr.mxu0 0.0
      %1700 = vmatpush1.msra.mxu0 0.0
      %1701 = vmatprep.subr.mxu0 0.0
      %1702 = vmatpush1.msra.mxu0 0.0
      %1703 = vmatprep.subr.mxu0 0.0
      %1704 = vmatpush1.msra.mxu0 0.0
      %1705 = vmatprep.subr.mxu0 0.0
      %1706 = vmatpush1.msra.mxu0 0.0
      %1707 = vmatprep.subr.mxu0 0.0
      %1708 = vmatpush1.msra.mxu0 0.0
      %1709 = vmatprep.subr.mxu0 0.0
      %1710 = vmatpush1.msra.mxu0 0.0
      %1711 = vmatprep.subr.mxu0 0.0
      %1712 = vmatpush1.msra.mxu0 0.0
      %1713 = vmatprep.subr.mxu0 0.0
      %1714 = vmatpush1.msra.mxu0 0.0
      %1715 = vmatprep.subr.mxu0 0.0
      %1716 = vmatpush1.msra.mxu0 0.0
      %1717 = vmatprep.mubr.f32.mxu0 0.0
      %1718 = vmatmul.mubr.f32.gmra.mrb[0].mxu0 %v1651
      %v1719 = vpop.f32.mrb[0].mxu0
      %v1720 = vadd.f32 0.0, %v1719
      %v1721 = vpop.f32.mrb[0].mxu0
      %1722 = vdwg.mxu0
      %v1723 = vadd.f32 %v1650, %v1720
      %v1724 = vsub.f32 0.0, %v1723
      %v1725 = vmul.f32 %v1724, 1.442695
      %v1726 = vpow.pop %v1725
      %v1727 = vadd.f32 %v1726, 1.0
      %v1728 = vrcp.pop %v1727
      %v1729 = vmul.f32 1.0, %v1728
      %v1730 = vtanh.pop %v1723
      %v1731 = vmul.f32 %v1729, %v1528
      %1733 = vrot.lane.b32.xlu0 %v1730, 96
      %v1734 = vpop.permute.xlu0 %1733
      %v1736 = vmul.f32 %v1729, %v1734
      %1738 = vrot.lane.b32.xlu0 %v1736, 16
      %v1739 = vpop.permute.xlu0 %1738
      %v1741 = vadd.f32 %v1731, %v1739
      %v1742 = vtanh.pop %v1741
      %1744 = vrot.lane.b32.xlu0 %v1742, 32
      %v1745 = vpop.permute.xlu0 %1744
      %v1747 = vmul.f32 %v1729, %v1745
      %1749 = vrot.lane.b32.xlu0 %v1747, 80
      %v1750 = vpop.permute.xlu0 %1749
      %s1752 = scalar_lea.vmem %s231, %s1648
      %1753 = vst.msk [vmem:[%s1752] sm:$0x1] %vm439, %v1750
      %s1754 = smul.u32 %s476, 7
      %s1755 = sadd.s32 %s1754, %s332
      %s1756 = scalar_lea.vmem [#allocation2], %s1755
      %v1757 = vld [vmem:[%s1756] sm:$0x1]
      %v1758 = vsel %vm335, %v1644, 0
      %1760 = vmatprep.subr.mxu0 0.0
      %1761 = vmatpush1.msra.mxu0 %v330
      %1762 = vmatprep.subr.mxu0 0.0
      %1763 = vmatpush1.msra.mxu0 %v331
      %1764 = vmatprep.subr.mxu0 0.0
      %1765 = vmatpush1.msra.mxu0 0.0
      %1766 = vmatprep.subr.mxu0 0.0
      %1767 = vmatpush1.msra.mxu0 0.0
      %1768 = vmatprep.subr.mxu0 0.0
      %1769 = vmatpush1.msra.mxu0 0.0
      %1770 = vmatprep.subr.mxu0 0.0
      %1771 = vmatpush1.msra.mxu0 0.0
      %1772 = vmatprep.subr.mxu0 0.0
      %1773 = vmatpush1.msra.mxu0 0.0
      %1774 = vmatprep.subr.mxu0 0.0
      %1775 = vmatpush1.msra.mxu0 0.0
      %1776 = vmatprep.subr.mxu0 0.0
      %1777 = vmatpush1.msra.mxu0 0.0
      %1778 = vmatprep.subr.mxu0 0.0
      %1779 = vmatpush1.msra.mxu0 0.0
      %1780 = vmatprep.subr.mxu0 0.0
      %1781 = vmatpush1.msra.mxu0 0.0
      %1782 = vmatprep.subr.mxu0 0.0
      %1783 = vmatpush1.msra.mxu0 0.0
      %1784 = vmatprep.subr.mxu0 0.0
      %1785 = vmatpush1.msra.mxu0 0.0
      %1786 = vmatprep.subr.mxu0 0.0
      %1787 = vmatpush1.msra.mxu0 0.0
      %1788 = vmatprep.subr.mxu0 0.0
      %1789 = vmatpush1.msra.mxu0 0.0
      %1790 = vmatprep.subr.mxu0 0.0
      %1791 = vmatpush1.msra.mxu0 0.0
      %1792 = vmatprep.subr.mxu0 0.0
      %1793 = vmatpush1.msra.mxu0 0.0
      %1794 = vmatprep.subr.mxu0 0.0
      %1795 = vmatpush1.msra.mxu0 0.0
      %1796 = vmatprep.subr.mxu0 0.0
      %1797 = vmatpush1.msra.mxu0 0.0
      %1798 = vmatprep.subr.mxu0 0.0
      %1799 = vmatpush1.msra.mxu0 0.0
      %1800 = vmatprep.subr.mxu0 0.0
      %1801 = vmatpush1.msra.mxu0 0.0
      %1802 = vmatprep.subr.mxu0 0.0
      %1803 = vmatpush1.msra.mxu0 0.0
      %1804 = vmatprep.subr.mxu0 0.0
      %1805 = vmatpush1.msra.mxu0 0.0
      %1806 = vmatprep.subr.mxu0 0.0
      %1807 = vmatpush1.msra.mxu0 0.0
      %1808 = vmatprep.subr.mxu0 0.0
      %1809 = vmatpush1.msra.mxu0 0.0
      %1810 = vmatprep.subr.mxu0 0.0
      %1811 = vmatpush1.msra.mxu0 0.0
      %1812 = vmatprep.subr.mxu0 0.0
      %1813 = vmatpush1.msra.mxu0 0.0
      %1814 = vmatprep.subr.mxu0 0.0
      %1815 = vmatpush1.msra.mxu0 0.0
      %1816 = vmatprep.subr.mxu0 0.0
      %1817 = vmatpush1.msra.mxu0 0.0
      %1818 = vmatprep.subr.mxu0 0.0
      %1819 = vmatpush1.msra.mxu0 0.0
      %1820 = vmatprep.subr.mxu0 0.0
      %1821 = vmatpush1.msra.mxu0 0.0
      %1822 = vmatprep.subr.mxu0 0.0
      %1823 = vmatpush1.msra.mxu0 0.0
      %1824 = vmatprep.mubr.f32.mxu0 0.0
      %1825 = vmatmul.mubr.f32.gmra.mrb[0].mxu0 %v1758
      %v1826 = vpop.f32.mrb[0].mxu0
      %v1827 = vadd.f32 0.0, %v1826
      %v1828 = vpop.f32.mrb[0].mxu0
      %1829 = vdwg.mxu0
      %v1830 = vadd.f32 %v1757, %v1827
      %v1831 = vsub.f32 0.0, %v1830
      %v1832 = vmul.f32 %v1831, 1.442695
      %v1833 = vpow.pop %v1832
      %v1834 = vadd.f32 %v1833, 1.0
      %v1835 = vrcp.pop %v1834
      %v1836 = vmul.f32 1.0, %v1835
      %v1837 = vtanh.pop %v1830
      %v1838 = vmul.f32 %v1836, %v1635
      %1840 = vrot.lane.b32.xlu0 %v1837, 96
      %v1841 = vpop.permute.xlu0 %1840
      %v1843 = vmul.f32 %v1836, %v1841
      %1845 = vrot.lane.b32.xlu0 %v1843, 16
      %v1846 = vpop.permute.xlu0 %1845
      %v1848 = vadd.f32 %v1838, %v1846
      %v1849 = vtanh.pop %v1848
      %1851 = vrot.lane.b32.xlu0 %v1849, 32
      %v1852 = vpop.permute.xlu0 %1851
      %v1854 = vmul.f32 %v1836, %v1852
      %1856 = vrot.lane.b32.xlu0 %v1854, 80
      %v1857 = vpop.permute.xlu0 %1856
      %s1859 = scalar_lea.vmem %s231, %s1755
      %1860 = vst.msk [vmem:[%s1859] sm:$0x1] %vm439, %v1857
      %s1861 = sadd.s32 %s1755, 8
      %s1862 = scalar_lea.vmem [#allocation2], %s1861
      %v1863 = vld [vmem:[%s1862] sm:$0x1]
      %v1864 = vsel %vm335, %v1750, 0
      %1866 = vmatprep.subr.mxu0 0.0
      %1867 = vmatpush1.msra.mxu0 %v330
      %1868 = vmatprep.subr.mxu0 0.0
      %1869 = vmatpush1.msra.mxu0 %v331
      %1870 = vmatprep.subr.mxu0 0.0
      %1871 = vmatpush1.msra.mxu0 0.0
      %1872 = vmatprep.subr.mxu0 0.0
      %1873 = vmatpush1.msra.mxu0 0.0
      %1874 = vmatprep.subr.mxu0 0.0
      %1875 = vmatpush1.msra.mxu0 0.0
      %1876 = vmatprep.subr.mxu0 0.0
      %1877 = vmatpush1.msra.mxu0 0.0
      %1878 = vmatprep.subr.mxu0 0.0
      %1879 = vmatpush1.msra.mxu0 0.0
      %1880 = vmatprep.subr.mxu0 0.0
      %1881 = vmatpush1.msra.mxu0 0.0
      %1882 = vmatprep.subr.mxu0 0.0
      %1883 = vmatpush1.msra.mxu0 0.0
      %1884 = vmatprep.subr.mxu0 0.0
      %1885 = vmatpush1.msra.mxu0 0.0
      %1886 = vmatprep.subr.mxu0 0.0
      %1887 = vmatpush1.msra.mxu0 0.0
      %1888 = vmatprep.subr.mxu0 0.0
      %1889 = vmatpush1.msra.mxu0 0.0
      %1890 = vmatprep.subr.mxu0 0.0
      %1891 = vmatpush1.msra.mxu0 0.0
      %1892 = vmatprep.subr.mxu0 0.0
      %1893 = vmatpush1.msra.mxu0 0.0
      %1894 = vmatprep.subr.mxu0 0.0
      %1895 = vmatpush1.msra.mxu0 0.0
      %1896 = vmatprep.subr.mxu0 0.0
      %1897 = vmatpush1.msra.mxu0 0.0
      %1898 = vmatprep.subr.mxu0 0.0
      %1899 = vmatpush1.msra.mxu0 0.0
      %1900 = vmatprep.subr.mxu0 0.0
      %1901 = vmatpush1.msra.mxu0 0.0
      %1902 = vmatprep.subr.mxu0 0.0
      %1903 = vmatpush1.msra.mxu0 0.0
      %1904 = vmatprep.subr.mxu0 0.0
      %1905 = vmatpush1.msra.mxu0 0.0
      %1906 = vmatprep.subr.mxu0 0.0
      %1907 = vmatpush1.msra.mxu0 0.0
      %1908 = vmatprep.subr.mxu0 0.0
      %1909 = vmatpush1.msra.mxu0 0.0
      %1910 = vmatprep.subr.mxu0 0.0
      %1911 = vmatpush1.msra.mxu0 0.0
      %1912 = vmatprep.subr.mxu0 0.0
      %1913 = vmatpush1.msra.mxu0 0.0
      %1914 = vmatprep.subr.mxu0 0.0
      %1915 = vmatpush1.msra.mxu0 0.0
      %1916 = vmatprep.subr.mxu0 0.0
      %1917 = vmatpush1.msra.mxu0 0.0
      %1918 = vmatprep.subr.mxu0 0.0
      %1919 = vmatpush1.msra.mxu0 0.0
      %1920 = vmatprep.subr.mxu0 0.0
      %1921 = vmatpush1.msra.mxu0 0.0
      %1922 = vmatprep.subr.mxu0 0.0
      %1923 = vmatpush1.msra.mxu0 0.0
      %1924 = vmatprep.subr.mxu0 0.0
      %1925 = vmatpush1.msra.mxu0 0.0
      %1926 = vmatprep.subr.mxu0 0.0
      %1927 = vmatpush1.msra.mxu0 0.0
      %1928 = vmatprep.subr.mxu0 0.0
      %1929 = vmatpush1.msra.mxu0 0.0
      %1930 = vmatprep.mubr.f32.mxu0 0.0
      %1931 = vmatmul.mubr.f32.gmra.mrb[0].mxu0 %v1864
      %v1932 = vpop.f32.mrb[0].mxu0
      %v1933 = vadd.f32 0.0, %v1932
      %v1934 = vpop.f32.mrb[0].mxu0
      %1935 = vdwg.mxu0
      %v1936 = vadd.f32 %v1863, %v1933
      %v1937 = vsub.f32 0.0, %v1936
      %v1938 = vmul.f32 %v1937, 1.442695
      %v1939 = vpow.pop %v1938
      %v1940 = vadd.f32 %v1939, 1.0
      %v1941 = vrcp.pop %v1940
      %v1942 = vmul.f32 1.0, %v1941
      %v1943 = vtanh.pop %v1936
      %v1944 = vmul.f32 %v1942, %v1741
      %1946 = vrot.lane.b32.xlu0 %v1943, 96
      %v1947 = vpop.permute.xlu0 %1946
      %v1949 = vmul.f32 %v1942, %v1947
      %1951 = vrot.lane.b32.xlu0 %v1949, 16
      %v1952 = vpop.permute.xlu0 %1951
      %v1954 = vadd.f32 %v1944, %v1952
      %v1955 = vtanh.pop %v1954
      %1957 = vrot.lane.b32.xlu0 %v1955, 32
      %v1958 = vpop.permute.xlu0 %1957
      %v1960 = vmul.f32 %v1942, %v1958
      %1962 = vrot.lane.b32.xlu0 %v1960, 80
      %v1963 = vpop.permute.xlu0 %1962
      %s1965 = scalar_lea.vmem %s231, %s1861
      %1966 = vst.msk [vmem:[%s1965] sm:$0x1] %vm439, %v1963
      %p1967 = scmp.lt.s32.totalorder %s15, 1
      %s1968 = scalar_select %p1967, %s15, 1
      %s1969 = smul.addr %s1968, 2
      %s1970 = smul.addr %s1969, 8
      %s1971 = scalar_lea.vmem %s4, %s1970
      // Predicated region
      $region37: #{model_forward.7} parent=35 // pred_check
        %p1972 = pneg %p132
      $region38: #{model_forward.7} parent=35 // pred_check_branch
        %1974 = sbr.rel (%p1972) target = $region40
      $region39: #{model_forward.7} parent=35 // pred_region
        _
      $region40: #{model_forward.7} parent=35 // pred_fallthru
        _
    $region36: #{model_forward.7} parent=5 // pred_fallthru
      _
    %p1975 = scmp.le.s32.totalorder 2, %s10
    // Predicated region
    $region41: #{model_forward.7} parent=5 // pred_check
      %p1976 = pneg %p1975
    $region42: #{model_forward.7} parent=5 // pred_check_branch
      %1978 = sbr.rel (%p1976) target = $region44
    $region43: #{model_forward.7} parent=5 // pred_region
      %s1979 = ssub.s32 %s10, 2
      // Predicated region
      $region45: #{model_forward.7} parent=43 // pred_check
        %p1980 = pneg %p138
      $region46: #{model_forward.7} parent=43 // pred_check_branch
        %1982 = sbr.rel (%p1980) target = $region48
      $region47: #{model_forward.7} parent=43 // pred_region
        %p1983 = scmp.lt.s32.totalorder %s16, 1
        %s1984 = scalar_select %p1983, %s16, 1
        %s1985 = smul.addr %s1984, 2
        %s1986 = smul.addr %s1985, 8
        %s1987 = scalar_lea.vmem %s4, %s1986
      $region48: #{model_forward.7} parent=43 // pred_fallthru
        _
    $region44: #{model_forward.7} parent=5 // pred_fallthru
      _
  $region6: #{model_forward.7} parent=0 // loop_footer
    %s14 = sadd.s32 1, %s10
  $region7: #{model_forward.7} parent=0 // loop_footer_branch
    %9 = sbr.rel target = $region3
  $region8: #{model_forward.7} parent=0 // loop_exit
    _

</llo_original>
